<compile_context>
chip_gen: v5e
topology: v5e:2x2
jax: 0.10.0
libtpu: 0.0.40
codegen_flags: <defaults>
</compile_context>

<pallas_src>
import math
import numpy as np
import jax
import jax.numpy as jnp
from jax import lax
from jax.experimental import pallas as pl
from jax.experimental.pallas import tpu as pltpu

# ------------------------- small, module-consistent config -------------------------
D = 4              # d: input feature dim
N = 8              # n: sequence length (max_len of PositionalEncoding)
E = 32             # embed_dim
H = 4              # num_heads
HD = E // H        # head dim
F = 64             # ff_dim
NUM_ENC = 3
NUM_DEC = 3
B = 2              # batch
BN = B * N         # 16
BHN = B * H * N    # 64  (spread rows: batch-major, then head, then key position)
LN_EPS = 1e-5
LANES = 128


# ----------------------------- packed parameter layout -----------------------------
def _entries():
    ents = []

    def add(name, nr, nc):
        ents.append((name, nr, nc))

    def add_mha(prefix):
        add(prefix + "w_q", E, E); add(prefix + "b_q", 1, E)
        add(prefix + "w_k", E, E); add(prefix + "b_k", 1, E)
        add(prefix + "w_v", E, E); add(prefix + "b_v", 1, E)
        add(prefix + "w_o", E, E); add(prefix + "b_o", 1, E)

    def add_ffn(prefix):
        add(prefix + "w_ff1", E, F); add(prefix + "b_ff1", 1, F)
        add(prefix + "w_ff2", F, E); add(prefix + "b_ff2", 1, E)

    def add_ln(name):
        add(name + "_g", 1, E); add(name + "_b", 1, E)

    # attention relayout constants (precomputed host-side, live in the slab)
    add("c.dup", BHN, BN)      # 0/1 row-duplication matrix
    add("c.hmask", BHN, E)     # per-spread-row head lane mask (also the denom matmul)
    add("c.sbias", BN, BHN)    # 0 for same-batch columns, -1e30 for cross-batch

    # embedding / positional / output head
    add("m.w_emb", D, E)
    add("m.pe_eff", BN, E)
    add("m.w_out", E, D)
    add("m.b_out", 1, D)

    for l in range(NUM_ENC):
        add_mha(f"e{l}.a."); add_ln(f"e{l}.ln1")
        add_ffn(f"e{l}.");   add_ln(f"e{l}.ln2")
    for l in range(NUM_DEC):
        add_mha(f"d{l}.sa."); add_ln(f"d{l}.ln1")
        add_mha(f"d{l}.ca."); add_ln(f"d{l}.ln2")
        add_ffn(f"d{l}.");    add_ln(f"d{l}.ln3")
    return ents


def _make_layout():
    layout, r = {}, 0
    for name, nr, nc in _entries():
        layout[name] = (r, nr, nc)
        r += ((nr + 7) // 8) * 8       # keep every entry 8-sublane aligned
    return layout, ((r + 7) // 8) * 8


LAYOUT, SLAB_ROWS = _make_layout()


# ------------------------------ in-kernel math helpers -----------------------------
_GELU_C = math.sqrt(2.0 / math.pi)


def _gelu(x):
    # tanh-approx GELU: one EUP tanh instead of the erf polynomial chain.
    return 0.5 * x * (1.0 + jnp.tanh(_GELU_C * (x + 0.044715 * x * x * x)))


def _layer_norm(x, g, b):
    # var = E[x^2] - mu^2: two independent reductions instead of reduce->sub->reduce.
    mu = jnp.mean(x, axis=-1, keepdims=True)
    ms = jnp.mean(x * x, axis=-1, keepdims=True)
    var = ms - mu * mu
    return (x - mu) * lax.rsqrt(var + LN_EPS) * g + b


# ------------------------------------ the kernel -----------------------------------
def denoiser_kernel(x_ref, t_ref, w_ref, out_ref):
    f32 = jnp.float32

    def P(name):
        r, nr, nc = LAYOUT[name]
        return w_ref[r:r + nr, :nc]

    def mm(a, b):
        return jnp.dot(a, b, preferred_element_type=f32)

    def attn_core(q, k, v):
        # q is already scaled by 1/sqrt(HD) (folded into W_q host-side).
        dup = P("c.dup")        # (BHN, BN) 0/1
        hmask = P("c.hmask")    # (BHN, E)  0/1 head lane mask
        sbias = P("c.sbias")    # (BN, BHN) 0 / -1e30 batch-block bias
        ks = mm(dup, k) * hmask                       # (BHN, E) keys spread over rows
        vs = mm(dup, v) * hmask                       # (BHN, E)
        # scores: rows = query tokens, cols = (batch, head, key position)
        s = lax.dot_general(q, ks, (((1,), (1,)), ((), ())),
                            preferred_element_type=f32) + sbias   # (BN, BHN)
        # shared row max (exact softmax; cross-batch cols are ~-1e30 -> exp == 0)
        m = jnp.max(s, axis=-1, keepdims=True)
        e = jnp.exp(s - m)
        num = mm(e, vs)                               # (BN, E) per-head numerators
        den = mm(e, hmask)                            # (BN, E) per-head denominators
        return num * pl.reciprocal(den, approx=True)

    def attn_block(prefix, q_in, kv_in):
        q = mm(q_in, P(prefix + "w_q")) + P(prefix + "b_q")
        k = mm(kv_in, P(prefix + "w_k")) + P(prefix + "b_k")
        v = mm(kv_in, P(prefix + "w_v")) + P(prefix + "b_v")
        o = attn_core(q, k, v)
        return mm(o, P(prefix + "w_o")) + P(prefix + "b_o")

    def ffn_block(prefix, z):
        g = _gelu(mm(z, P(prefix + "w_ff1")) + P(prefix + "b_ff1"))
        return mm(g, P(prefix + "w_ff2")) + P(prefix + "b_ff2")

    # ---- embedding + (0.5*pe + b_emb) (folded) + timestep channel (col E-1) ----
    x = x_ref[...]                                    # (BN, D)
    emb = mm(x, P("m.w_emb"))                         # (BN, E), col E-1 is 0
    row = lax.broadcasted_iota(jnp.int32, (BN, E), 0)
    col = lax.broadcasted_iota(jnp.int32, (BN, E), 1)
    tval = jnp.where(row < N, t_ref[0], t_ref[1])     # per-batch timestep scalar
    h = emb + P("m.pe_eff") + jnp.where(col == E - 1, tval, 0.0)

    # ------------------------------- encoder stack ---------------------------------
    for l in range(NUM_ENC):
        h = _layer_norm(h + attn_block(f"e{l}.a.", h, h),
                        P(f"e{l}.ln1_g"), P(f"e{l}.ln1_b"))
        h = _layer_norm(h + ffn_block(f"e{l}.", h),
                        P(f"e{l}.ln2_g"), P(f"e{l}.ln2_b"))

    memory = h

    # ------------------------------- decoder stack ---------------------------------
    for l in range(NUM_DEC):
        h = _layer_norm(h + attn_block(f"d{l}.sa.", h, h),
                        P(f"d{l}.ln1_g"), P(f"d{l}.ln1_b"))
        h = _layer_norm(h + attn_block(f"d{l}.ca.", h, memory),
                        P(f"d{l}.ln2_g"), P(f"d{l}.ln2_b"))
        h = _layer_norm(h + ffn_block(f"d{l}.", h),
                        P(f"d{l}.ln3_g"), P(f"d{l}.ln3_b"))

    # --------------------- lane-dense (BN, 128) output projection -------------------
    # Columns >= D are exactly zero because the slab is zero-padded -> unmasked stores.
    r_o, _, _ = LAYOUT["m.w_out"]
    r_b, _, _ = LAYOUT["m.b_out"]
    out_ref[...] = mm(h, w_ref[r_o:r_o + E, :]) + w_ref[r_b:r_b + 1, :]


# ------------------------------------ wrapper ---------------------------------------
def transformer_denoiser_forward(x, t, slab):
    # (B,1,d,n) -> (B*n, d)  (row order: batch-major, then sequence position)
    x_seq = jnp.transpose(x[:, 0, :, :], (0, 2, 1)).reshape(BN, D).astype(jnp.float32)
    t_vec = t.reshape(B).astype(jnp.float32)

    out = pl.pallas_call(
        denoiser_kernel,
        out_shape=jax.ShapeDtypeStruct((BN, LANES), jnp.float32),
        in_specs=[
            pl.BlockSpec(memory_space=pltpu.MemorySpace.VMEM),   # x (16,4)
            pl.BlockSpec(memory_space=pltpu.MemorySpace.SMEM),   # t scalars
            pl.BlockSpec(memory_space=pltpu.MemorySpace.VMEM),   # packed weight slab
        ],
        out_specs=pl.BlockSpec(memory_space=pltpu.MemorySpace.VMEM),
    )(x_seq, t_vec, slab)

    out = out[:, :D]                                             # drop lane padding
    # (B*n, d) -> (B, 1, d, n)
    return jnp.transpose(out.reshape(B, N, D), (0, 2, 1))[:, None, :, :]


# --------------------------- deterministic parameter init ---------------------------
def init_params(key):
    s = 0.05
    keys = iter(jax.random.split(key, 64))

    def lin(out_dim, in_dim):
        kw, kb = jax.random.split(next(keys))
        return (jax.random.normal(kw, (out_dim, in_dim), jnp.float32) * s,
                jax.random.normal(kb, (out_dim,), jnp.float32) * s)

    w_emb, b_emb = lin(E - 1, D)            # Linear(d, embed_dim-1)
    w_out, b_out = lin(D, E)                # Linear(embed_dim, d)

    # PositionalEncoding buffer (matches the PyTorch __init__)
    pe = np.zeros((N, E - 1), dtype=np.float32)
    position = np.arange(N, dtype=np.float32)[:, None]
    div_term = np.exp(np.arange(0, E - 1, 2, dtype=np.float32) * (-math.log(10000.0) / (E - 1)))
    pe[:, 0::2] = np.sin(position * div_term)
    pe[:, 1::2] = np.cos(position * div_term[:(E - 1) // 2])

    ones = jnp.ones((E,), jnp.float32)
    zeros = jnp.zeros((E,), jnp.float32)

    enc = []
    for _ in range(NUM_ENC):
        w_qkv, b_qkv = lin(3 * E, E)
        w_o, b_o = lin(E, E)
        w_ff1, b_ff1 = lin(F, E)
        w_ff2, b_ff2 = lin(E, F)
        enc.append(dict(w_qkv=w_qkv, b_qkv=b_qkv, w_o=w_o, b_o=b_o,
                        w_ff1=w_ff1, b_ff1=b_ff1, w_ff2=w_ff2, b_ff2=b_ff2,
                        ln1_g=ones, ln1_b=zeros, ln2_g=ones, ln2_b=zeros))

    dec = []
    for _ in range(NUM_DEC):
        w_sa_qkv, b_sa_qkv = lin(3 * E, E)
        w_sa_o, b_sa_o = lin(E, E)
        w_ca_in, b_ca_in = lin(3 * E, E)
        w_ca_o, b_ca_o = lin(E, E)
        w_ff1, b_ff1 = lin(F, E)
        w_ff2, b_ff2 = lin(E, F)
        dec.append(dict(w_sa_qkv=w_sa_qkv, b_sa_qkv=b_sa_qkv, w_sa_o=w_sa_o, b_sa_o=b_sa_o,
                        w_ca_in=w_ca_in, b_ca_in=b_ca_in, w_ca_o=w_ca_o, b_ca_o=b_ca_o,
                        w_ff1=w_ff1, b_ff1=b_ff1, w_ff2=w_ff2, b_ff2=b_ff2,
                        ln1_g=ones, ln1_b=zeros, ln2_g=ones, ln2_b=zeros,
                        ln3_g=ones, ln3_b=zeros))

    return dict(w_emb=w_emb, b_emb=b_emb, pe=jnp.asarray(pe),
                w_out=w_out, b_out=b_out, enc=enc, dec=dec)


def pack_params(p):
    slab = np.zeros((SLAB_ROWS, LANES), np.float32)

    def put(name, a):
        r, nr, nc = LAYOUT[name]
        slab[r:r + nr, :nc] = np.asarray(a, np.float32).reshape(nr, nc)

    # ---- attention relayout constants ----
    dup = np.zeros((BHN, BN), np.float32)
    hmask = np.zeros((BHN, E), np.float32)
    sbias = np.full((BN, BHN), -1e30, np.float32)
    for r in range(BHN):
        b, hh, j = r // (H * N), (r % (H * N)) // N, r % N
        dup[r, b * N + j] = 1.0
        hmask[r, hh * HD:(hh + 1) * HD] = 1.0
    for row in range(BN):
        b = row // N
        sbias[row, b * H * N:(b + 1) * H * N] = 0.0
    put("c.dup", dup); put("c.hmask", hmask); put("c.sbias", sbias)

    # ---- embedding (padded to E cols; col E-1 reserved for timestep), folded bias ----
    w_emb_pad = np.zeros((D, E), np.float32)
    w_emb_pad[:, :E - 1] = np.asarray(p["w_emb"]).T
    pe_pad = np.zeros((N, E), np.float32)
    pe_pad[:, :E - 1] = np.asarray(p["pe"])
    b_emb_pad = np.zeros((E,), np.float32)
    b_emb_pad[:E - 1] = np.asarray(p["b_emb"])
    put("m.w_emb", w_emb_pad)
    put("m.pe_eff", np.tile(0.5 * pe_pad + b_emb_pad[None, :], (B, 1)))
    put("m.w_out", np.asarray(p["w_out"]).T)
    put("m.b_out", p["b_out"])

    qscale = 1.0 / math.sqrt(HD)   # folded into the Q projection

    def put_mha(prefix, w_in, b_in, w_o, b_o):
        w_in = np.asarray(w_in, np.float32); b_in = np.asarray(b_in, np.float32)
        put(prefix + "w_q", w_in[:E].T * qscale); put(prefix + "b_q", b_in[:E] * qscale)
        put(prefix + "w_k", w_in[E:2 * E].T);     put(prefix + "b_k", b_in[E:2 * E])
        put(prefix + "w_v", w_in[2 * E:].T);      put(prefix + "b_v", b_in[2 * E:])
        put(prefix + "w_o", np.asarray(w_o).T);   put(prefix + "b_o", b_o)

    def put_ffn(prefix, lp):
        put(prefix + "w_ff1", np.asarray(lp["w_ff1"]).T); put(prefix + "b_ff1", lp["b_ff1"])
        put(prefix + "w_ff2", np.asarray(lp["w_ff2"]).T); put(prefix + "b_ff2", lp["b_ff2"])

    def put_ln(name, g, b):
        put(name + "_g", g); put(name + "_b", b)

    for l, lp in enumerate(p["enc"]):
        put_mha(f"e{l}.a.", lp["w_qkv"], lp["b_qkv"], lp["w_o"], lp["b_o"])
        put_ln(f"e{l}.ln1", lp["ln1_g"], lp["ln1_b"])
        put_ffn(f"e{l}.", lp)
        put_ln(f"e{l}.ln2", lp["ln2_g"], lp["ln2_b"])
    for l, lp in enumerate(p["dec"]):
        put_mha(f"d{l}.sa.", lp["w_sa_qkv"], lp["b_sa_qkv"], lp["w_sa_o"], lp["b_sa_o"])
        put_ln(f"d{l}.ln1", lp["ln1_g"], lp["ln1_b"])
        put_mha(f"d{l}.ca.", lp["w_ca_in"], lp["b_ca_in"], lp["w_ca_o"], lp["b_ca_o"])
        put_ln(f"d{l}.ln2", lp["ln2_g"], lp["ln2_b"])
        put_ffn(f"d{l}.", lp)
        put_ln(f"d{l}.ln3", lp["ln3_g"], lp["ln3_b"])

    return jnp.asarray(slab)


# -------------------------------- pure-JAX reference --------------------------------
def reference_forward(x, t, p):
    xs = jnp.transpose(x[:, 0, :, :], (0, 2, 1))                      # (B, N, D)
    h = xs @ p["w_emb"].T + p["b_emb"]                                 # (B, N, E-1)
    tt = jnp.broadcast_to(t.reshape(B, 1, 1), (B, N, 1))
    h = jnp.concatenate([h + 0.5 * p["pe"][None], tt], axis=-1)        # (B, N, E)

    def mha(q_in, kv_in, w_in, b_in, w_o, b_o):
        wq, wk, wv = w_in[:E], w_in[E:2 * E], w_in[2 * E:]
        bq, bk, bv = b_in[:E], b_in[E:2 * E], b_in[2 * E:]
        q = q_in @ wq.T + bq
        k = kv_in @ wk.T + bk
        v = kv_in @ wv.T + bv
        qh = q.reshape(B, N, H, HD).transpose(0, 2, 1, 3)
        kh = k.reshape(B, N, H, HD).transpose(0, 2, 1, 3)
        vh = v.reshape(B, N, H, HD).transpose(0, 2, 1, 3)
        s = jnp.einsum("bhqd,bhkd->bhqk", qh, kh) / math.sqrt(HD)
        pr = jax.nn.softmax(s, axis=-1)
        o = jnp.einsum("bhqk,bhkd->bhqd", pr, vh).transpose(0, 2, 1, 3).reshape(B, N, E)
        return o @ w_o.T + b_o

    def ln(z, g, b):
        mu = z.mean(-1, keepdims=True)
        var = ((z - mu) ** 2).mean(-1, keepdims=True)
        return (z - mu) / jnp.sqrt(var + LN_EPS) * g + b

    def ffn(z, lp):
        f = jax.nn.gelu(z @ lp["w_ff1"].T + lp["b_ff1"], approximate=False)
        return f @ lp["w_ff2"].T + lp["b_ff2"]

    for lp in p["enc"]:
        h = ln(h + mha(h, h, lp["w_qkv"], lp["b_qkv"], lp["w_o"], lp["b_o"]),
               lp["ln1_g"], lp["ln1_b"])
        h = ln(h + ffn(h, lp), lp["ln2_g"], lp["ln2_b"])
    memory = h
    for lp in p["dec"]:
        h = ln(h + mha(h, h, lp["w_sa_qkv"], lp["b_sa_qkv"], lp["w_sa_o"], lp["b_sa_o"]),
               lp["ln1_g"], lp["ln1_b"])
        h = ln(h + mha(h, memory, lp["w_ca_in"], lp["b_ca_in"], lp["w_ca_o"], lp["b_ca_o"]),
               lp["ln2_g"], lp["ln2_b"])
        h = ln(h + ffn(h, lp), lp["ln3_g"], lp["ln3_b"])

    out = h @ p["w_out"].T + p["b_out"]                                # (B, N, D)
    return jnp.transpose(out, (0, 2, 1))[:, None, :, :]                # (B, 1, D, N)


# --------------------------------------- main ----------------------------------------
if __name__ == "__main__":
    key = jax.random.PRNGKey(0)
    kx, kt, kp = jax.random.split(key, 3)

    params = init_params(kp)
    slab = pack_params(params)

    x = jax.random.normal(kx, (B, 1, D, N), jnp.float32)     # PyTorch-style (B,1,d,n)
    t = jax.random.uniform(kt, (B, 1), jnp.float32)          # timesteps in [0,1)

    out = transformer_denoiser_forward(x, t, slab)
    out = jax.block_until_ready(out)

    ref = reference_forward(x, t, params)
    assert out.shape == (B, 1, D, N)
    if not np.allclose(np.asarray(out), np.asarray(ref), atol=1e-2):
        raise AssertionError("Pallas kernel output mismatch vs JAX reference")
    print("KERNEL_OK")
</pallas_src>

<mosaic_0001>
module attributes {stable_mosaic.version = 11 : i64} {
  func.func @denoiser_kernel(%arg0: memref<16x4xf32, #tpu.memory_space<vmem>>, %arg1: memref<2xf32, #tpu.memory_space<smem>>, %arg2: memref<2560x128xf32, #tpu.memory_space<vmem>>, %arg3: memref<16x128xf32, #tpu.memory_space<vmem>>) attributes {dimension_semantics = [], scalar_prefetch = 0 : i64, scratch_operands = 0 : i64, tpu.core_type = #tpu.core_type<tc>} {
    %c0 = arith.constant 0 : index
    %c0_0 = arith.constant 0 : index
    %0 = vector.load %arg0[%c0, %c0_0] : memref<16x4xf32, #tpu.memory_space<vmem>>, vector<16x4xf32>
    %c144 = arith.constant 144 : index
    %c0_1 = arith.constant 0 : index
    %1 = vector.load %arg2[%c144, %c0_1] : memref<2560x128xf32, #tpu.memory_space<vmem>>, vector<4x32xf32>
    %cst = arith.constant dense<0.000000e+00> : vector<16x32xf32>
    %2 = tpu.matmul %0, %1, %cst {dimension_numbers = #tpu.dot_dimension_numbers<[1], [0], [0], [1], [0, 0, 1, 1], [], []>} : vector<16x4xf32>, vector<4x32xf32>, vector<16x32xf32> -> vector<16x32xf32>
    %3 = tpu.iota {dimensions = array<i32: 0>} : vector<16x32xi32>
    %4 = tpu.iota {dimensions = array<i32: 1>} : vector<16x32xi32>
    %c8_i32 = arith.constant 8 : i32
    %5 = vector.broadcast %c8_i32 : i32 to vector<16x32xi32>
    %6 = arith.cmpi slt, %3, %5 : vector<16x32xi32>
    %c0_2 = arith.constant 0 : index
    %7 = memref.load %arg1[%c0_2] : memref<2xf32, #tpu.memory_space<smem>>
    %c1 = arith.constant 1 : index
    %8 = memref.load %arg1[%c1] : memref<2xf32, #tpu.memory_space<smem>>
    %9 = vector.broadcast %7 : f32 to vector<16x32xf32>
    %10 = vector.broadcast %8 : f32 to vector<16x32xf32>
    %11 = arith.select %6, %9, %10 : vector<16x32xi1>, vector<16x32xf32>
    %c152 = arith.constant 152 : index
    %c0_3 = arith.constant 0 : index
    %12 = vector.load %arg2[%c152, %c0_3] : memref<2560x128xf32, #tpu.memory_space<vmem>>, vector<16x32xf32>
    %13 = arith.addf %2, %12 : vector<16x32xf32>
    %c31_i32 = arith.constant 31 : i32
    %14 = vector.broadcast %c31_i32 : i32 to vector<16x32xi32>
    %15 = arith.cmpi eq, %4, %14 : vector<16x32xi32>
    %cst_4 = arith.constant 0.000000e+00 : f32
    %16 = vector.broadcast %cst_4 : f32 to vector<16x32xf32>
    %17 = arith.select %15, %11, %16 : vector<16x32xi1>, vector<16x32xf32>
    %18 = arith.addf %13, %17 : vector<16x32xf32>
    %c208 = arith.constant 208 : index
    %c0_5 = arith.constant 0 : index
    %19 = vector.load %arg2[%c208, %c0_5] : memref<2560x128xf32, #tpu.memory_space<vmem>>, vector<32x32xf32>
    %cst_6 = arith.constant dense<0.000000e+00> : vector<16x32xf32>
    %20 = tpu.matmul %18, %19, %cst_6 {dimension_numbers = #tpu.dot_dimension_numbers<[1], [0], [0], [1], [0, 0, 1, 1], [], []>} : vector<16x32xf32>, vector<32x32xf32>, vector<16x32xf32> -> vector<16x32xf32>
    %c240 = arith.constant 240 : index
    %c0_7 = arith.constant 0 : index
    %21 = vector.load %arg2[%c240, %c0_7] : memref<2560x128xf32, #tpu.memory_space<vmem>>, vector<1x32xf32>
    %22 = vector.broadcast %21 : vector<1x32xf32> to vector<16x32xf32>
    %23 = arith.addf %20, %22 : vector<16x32xf32>
    %c248 = arith.constant 248 : index
    %c0_8 = arith.constant 0 : index
    %24 = vector.load %arg2[%c248, %c0_8] : memref<2560x128xf32, #tpu.memory_space<vmem>>, vector<32x32xf32>
    %cst_9 = arith.constant dense<0.000000e+00> : vector<16x32xf32>
    %25 = tpu.matmul %18, %24, %cst_9 {dimension_numbers = #tpu.dot_dimension_numbers<[1], [0], [0], [1], [0, 0, 1, 1], [], []>} : vector<16x32xf32>, vector<32x32xf32>, vector<16x32xf32> -> vector<16x32xf32>
    %c280 = arith.constant 280 : index
    %c0_10 = arith.constant 0 : index
    %26 = vector.load %arg2[%c280, %c0_10] : memref<2560x128xf32, #tpu.memory_space<vmem>>, vector<1x32xf32>
    %27 = vector.broadcast %26 : vector<1x32xf32> to vector<16x32xf32>
    %28 = arith.addf %25, %27 : vector<16x32xf32>
    %c288 = arith.constant 288 : index
    %c0_11 = arith.constant 0 : index
    %29 = vector.load %arg2[%c288, %c0_11] : memref<2560x128xf32, #tpu.memory_space<vmem>>, vector<32x32xf32>
    %cst_12 = arith.constant dense<0.000000e+00> : vector<16x32xf32>
    %30 = tpu.matmul %18, %29, %cst_12 {dimension_numbers = #tpu.dot_dimension_numbers<[1], [0], [0], [1], [0, 0, 1, 1], [], []>} : vector<16x32xf32>, vector<32x32xf32>, vector<16x32xf32> -> vector<16x32xf32>
    %c320 = arith.constant 320 : index
    %c0_13 = arith.constant 0 : index
    %31 = vector.load %arg2[%c320, %c0_13] : memref<2560x128xf32, #tpu.memory_space<vmem>>, vector<1x32xf32>
    %32 = vector.broadcast %31 : vector<1x32xf32> to vector<16x32xf32>
    %33 = arith.addf %30, %32 : vector<16x32xf32>
    %c0_14 = arith.constant 0 : index
    %c0_15 = arith.constant 0 : index
    %34 = vector.load %arg2[%c0_14, %c0_15] : memref<2560x128xf32, #tpu.memory_space<vmem>>, vector<64x16xf32>
    %c64 = arith.constant 64 : index
    %c0_16 = arith.constant 0 : index
    %35 = vector.load %arg2[%c64, %c0_16] : memref<2560x128xf32, #tpu.memory_space<vmem>>, vector<64x32xf32>
    %c128 = arith.constant 128 : index
    %c0_17 = arith.constant 0 : index
    %36 = vector.load %arg2[%c128, %c0_17] : memref<2560x128xf32, #tpu.memory_space<vmem>>, vector<16x64xf32>
    %cst_18 = arith.constant dense<0.000000e+00> : vector<64x32xf32>
    %37 = tpu.matmul %34, %28, %cst_18 {dimension_numbers = #tpu.dot_dimension_numbers<[1], [0], [0], [1], [0, 0, 1, 1], [], []>} : vector<64x16xf32>, vector<16x32xf32>, vector<64x32xf32> -> vector<64x32xf32>
    %38 = arith.mulf %37, %35 : vector<64x32xf32>
    %cst_19 = arith.constant dense<0.000000e+00> : vector<64x32xf32>
    %39 = tpu.matmul %34, %33, %cst_19 {dimension_numbers = #tpu.dot_dimension_numbers<[1], [0], [0], [1], [0, 0, 1, 1], [], []>} : vector<64x16xf32>, vector<16x32xf32>, vector<64x32xf32> -> vector<64x32xf32>
    %40 = arith.mulf %39, %35 : vector<64x32xf32>
    %cst_20 = arith.constant dense<0.000000e+00> : vector<16x64xf32>
    %41 = tpu.matmul %23, %38, %cst_20 {dimension_numbers = #tpu.dot_dimension_numbers<[1], [1], [0], [0], [0, 0, 1, 0], [], []>} : vector<16x32xf32>, vector<64x32xf32>, vector<16x64xf32> -> vector<16x64xf32>
    %42 = arith.addf %41, %36 : vector<16x64xf32>
    %cst_21 = arith.constant dense<0xFF800000> : vector<16xf32>
    %43 = vector.multi_reduction <maximumf>, %42, %cst_21 [1] : vector<16x64xf32> to vector<16xf32>
    %44 = vector.shape_cast %43 : vector<16xf32> to vector<16x1xf32>
    %45 = vector.broadcast %44 : vector<16x1xf32> to vector<16x64xf32>
    %46 = arith.subf %42, %45 : vector<16x64xf32>
    %47 = math.exp %46 : vector<16x64xf32>
    %cst_22 = arith.constant dense<0.000000e+00> : vector<16x32xf32>
    %48 = tpu.matmul %47, %40, %cst_22 {dimension_numbers = #tpu.dot_dimension_numbers<[1], [0], [0], [1], [0, 0, 1, 1], [], []>} : vector<16x64xf32>, vector<64x32xf32>, vector<16x32xf32> -> vector<16x32xf32>
    %cst_23 = arith.constant dense<0.000000e+00> : vector<16x32xf32>
    %49 = tpu.matmul %47, %35, %cst_23 {dimension_numbers = #tpu.dot_dimension_numbers<[1], [0], [0], [1], [0, 0, 1, 1], [], []>} : vector<16x64xf32>, vector<64x32xf32>, vector<16x32xf32> -> vector<16x32xf32>
    %50 = tpu.reciprocal %49 {approx = true} : vector<16x32xf32> -> vector<16x32xf32>
    %51 = arith.mulf %48, %50 : vector<16x32xf32>
    %c328 = arith.constant 328 : index
    %c0_24 = arith.constant 0 : index
    %52 = vector.load %arg2[%c328, %c0_24] : memref<2560x128xf32, #tpu.memory_space<vmem>>, vector<32x32xf32>
    %cst_25 = arith.constant dense<0.000000e+00> : vector<16x32xf32>
    %53 = tpu.matmul %51, %52, %cst_25 {dimension_numbers = #tpu.dot_dimension_numbers<[1], [0], [0], [1], [0, 0, 1, 1], [], []>} : vector<16x32xf32>, vector<32x32xf32>, vector<16x32xf32> -> vector<16x32xf32>
    %c360 = arith.constant 360 : index
    %c0_26 = arith.constant 0 : index
    %54 = vector.load %arg2[%c360, %c0_26] : memref<2560x128xf32, #tpu.memory_space<vmem>>, vector<1x32xf32>
    %55 = vector.broadcast %54 : vector<1x32xf32> to vector<16x32xf32>
    %56 = arith.addf %53, %55 : vector<16x32xf32>
    %57 = arith.addf %18, %56 : vector<16x32xf32>
    %c368 = arith.constant 368 : index
    %c0_27 = arith.constant 0 : index
    %58 = vector.load %arg2[%c368, %c0_27] : memref<2560x128xf32, #tpu.memory_space<vmem>>, vector<1x32xf32>
    %c376 = arith.constant 376 : index
    %c0_28 = arith.constant 0 : index
    %59 = vector.load %arg2[%c376, %c0_28] : memref<2560x128xf32, #tpu.memory_space<vmem>>, vector<1x32xf32>
    %cst_29 = arith.constant dense<0.000000e+00> : vector<16xf32>
    %60 = vector.multi_reduction <add>, %57, %cst_29 [1] : vector<16x32xf32> to vector<16xf32>
    %61 = vector.shape_cast %60 : vector<16xf32> to vector<16x1xf32>
    %cst_30 = arith.constant 3.200000e+01 : f32
    %62 = vector.broadcast %cst_30 : f32 to vector<16x1xf32>
    %63 = arith.divf %61, %62 : vector<16x1xf32>
    %64 = arith.mulf %57, %57 : vector<16x32xf32>
    %cst_31 = arith.constant dense<0.000000e+00> : vector<16xf32>
    %65 = vector.multi_reduction <add>, %64, %cst_31 [1] : vector<16x32xf32> to vector<16xf32>
    %66 = vector.shape_cast %65 : vector<16xf32> to vector<16x1xf32>
    %cst_32 = arith.constant 3.200000e+01 : f32
    %67 = vector.broadcast %cst_32 : f32 to vector<16x1xf32>
    %68 = arith.divf %66, %67 : vector<16x1xf32>
    %69 = arith.mulf %63, %63 : vector<16x1xf32>
    %70 = arith.subf %68, %69 : vector<16x1xf32>
    %71 = vector.broadcast %63 : vector<16x1xf32> to vector<16x32xf32>
    %72 = arith.subf %57, %71 : vector<16x32xf32>
    %cst_33 = arith.constant 9.99999974E-6 : f32
    %73 = vector.broadcast %cst_33 : f32 to vector<16x1xf32>
    %74 = arith.addf %70, %73 : vector<16x1xf32>
    %75 = math.rsqrt %74 : vector<16x1xf32>
    %76 = vector.broadcast %75 : vector<16x1xf32> to vector<16x32xf32>
    %77 = arith.mulf %72, %76 : vector<16x32xf32>
    %78 = vector.broadcast %58 : vector<1x32xf32> to vector<16x32xf32>
    %79 = arith.mulf %77, %78 : vector<16x32xf32>
    %80 = vector.broadcast %59 : vector<1x32xf32> to vector<16x32xf32>
    %81 = arith.addf %79, %80 : vector<16x32xf32>
    %c384 = arith.constant 384 : index
    %c0_34 = arith.constant 0 : index
    %82 = vector.load %arg2[%c384, %c0_34] : memref<2560x128xf32, #tpu.memory_space<vmem>>, vector<32x64xf32>
    %cst_35 = arith.constant dense<0.000000e+00> : vector<16x64xf32>
    %83 = tpu.matmul %81, %82, %cst_35 {dimension_numbers = #tpu.dot_dimension_numbers<[1], [0], [0], [1], [0, 0, 1, 1], [], []>} : vector<16x32xf32>, vector<32x64xf32>, vector<16x64xf32> -> vector<16x64xf32>
    %c416 = arith.constant 416 : index
    %c0_36 = arith.constant 0 : index
    %84 = vector.load %arg2[%c416, %c0_36] : memref<2560x128xf32, #tpu.memory_space<vmem>>, vector<1x64xf32>
    %85 = vector.broadcast %84 : vector<1x64xf32> to vector<16x64xf32>
    %86 = arith.addf %83, %85 : vector<16x64xf32>
    %cst_37 = arith.constant 5.000000e-01 : f32
    %87 = vector.broadcast %cst_37 : f32 to vector<16x64xf32>
    %88 = arith.mulf %87, %86 : vector<16x64xf32>
    %cst_38 = arith.constant 4.471500e-02 : f32
    %89 = vector.broadcast %cst_38 : f32 to vector<16x64xf32>
    %90 = arith.mulf %89, %86 : vector<16x64xf32>
    %91 = arith.mulf %90, %86 : vector<16x64xf32>
    %92 = arith.mulf %91, %86 : vector<16x64xf32>
    %93 = arith.addf %86, %92 : vector<16x64xf32>
    %cst_39 = arith.constant 0.797884583 : f32
    %94 = vector.broadcast %cst_39 : f32 to vector<16x64xf32>
    %95 = arith.mulf %94, %93 : vector<16x64xf32>
    %96 = math.tanh %95 : vector<16x64xf32>
    %cst_40 = arith.constant 1.000000e+00 : f32
    %97 = vector.broadcast %cst_40 : f32 to vector<16x64xf32>
    %98 = arith.addf %97, %96 : vector<16x64xf32>
    %99 = arith.mulf %88, %98 : vector<16x64xf32>
    %c424 = arith.constant 424 : index
    %c0_41 = arith.constant 0 : index
    %100 = vector.load %arg2[%c424, %c0_41] : memref<2560x128xf32, #tpu.memory_space<vmem>>, vector<64x32xf32>
    %cst_42 = arith.constant dense<0.000000e+00> : vector<16x32xf32>
    %101 = tpu.matmul %99, %100, %cst_42 {dimension_numbers = #tpu.dot_dimension_numbers<[1], [0], [0], [1], [0, 0, 1, 1], [], []>} : vector<16x64xf32>, vector<64x32xf32>, vector<16x32xf32> -> vector<16x32xf32>
    %c488 = arith.constant 488 : index
    %c0_43 = arith.constant 0 : index
    %102 = vector.load %arg2[%c488, %c0_43] : memref<2560x128xf32, #tpu.memory_space<vmem>>, vector<1x32xf32>
    %103 = vector.broadcast %102 : vector<1x32xf32> to vector<16x32xf32>
    %104 = arith.addf %101, %103 : vector<16x32xf32>
    %105 = arith.addf %81, %104 : vector<16x32xf32>
    %c496 = arith.constant 496 : index
    %c0_44 = arith.constant 0 : index
    %106 = vector.load %arg2[%c496, %c0_44] : memref<2560x128xf32, #tpu.memory_space<vmem>>, vector<1x32xf32>
    %c504 = arith.constant 504 : index
    %c0_45 = arith.constant 0 : index
    %107 = vector.load %arg2[%c504, %c0_45] : memref<2560x128xf32, #tpu.memory_space<vmem>>, vector<1x32xf32>
    %cst_46 = arith.constant dense<0.000000e+00> : vector<16xf32>
    %108 = vector.multi_reduction <add>, %105, %cst_46 [1] : vector<16x32xf32> to vector<16xf32>
    %109 = vector.shape_cast %108 : vector<16xf32> to vector<16x1xf32>
    %cst_47 = arith.constant 3.200000e+01 : f32
    %110 = vector.broadcast %cst_47 : f32 to vector<16x1xf32>
    %111 = arith.divf %109, %110 : vector<16x1xf32>
    %112 = arith.mulf %105, %105 : vector<16x32xf32>
    %cst_48 = arith.constant dense<0.000000e+00> : vector<16xf32>
    %113 = vector.multi_reduction <add>, %112, %cst_48 [1] : vector<16x32xf32> to vector<16xf32>
    %114 = vector.shape_cast %113 : vector<16xf32> to vector<16x1xf32>
    %cst_49 = arith.constant 3.200000e+01 : f32
    %115 = vector.broadcast %cst_49 : f32 to vector<16x1xf32>
    %116 = arith.divf %114, %115 : vector<16x1xf32>
    %117 = arith.mulf %111, %111 : vector<16x1xf32>
    %118 = arith.subf %116, %117 : vector<16x1xf32>
    %119 = vector.broadcast %111 : vector<16x1xf32> to vector<16x32xf32>
    %120 = arith.subf %105, %119 : vector<16x32xf32>
    %cst_50 = arith.constant 9.99999974E-6 : f32
    %121 = vector.broadcast %cst_50 : f32 to vector<16x1xf32>
    %122 = arith.addf %118, %121 : vector<16x1xf32>
    %123 = math.rsqrt %122 : vector<16x1xf32>
    %124 = vector.broadcast %123 : vector<16x1xf32> to vector<16x32xf32>
    %125 = arith.mulf %120, %124 : vector<16x32xf32>
    %126 = vector.broadcast %106 : vector<1x32xf32> to vector<16x32xf32>
    %127 = arith.mulf %125, %126 : vector<16x32xf32>
    %128 = vector.broadcast %107 : vector<1x32xf32> to vector<16x32xf32>
    %129 = arith.addf %127, %128 : vector<16x32xf32>
    %c512 = arith.constant 512 : index
    %c0_51 = arith.constant 0 : index
    %130 = vector.load %arg2[%c512, %c0_51] : memref<2560x128xf32, #tpu.memory_space<vmem>>, vector<32x32xf32>
    %cst_52 = arith.constant dense<0.000000e+00> : vector<16x32xf32>
    %131 = tpu.matmul %129, %130, %cst_52 {dimension_numbers = #tpu.dot_dimension_numbers<[1], [0], [0], [1], [0, 0, 1, 1], [], []>} : vector<16x32xf32>, vector<32x32xf32>, vector<16x32xf32> -> vector<16x32xf32>
    %c544 = arith.constant 544 : index
    %c0_53 = arith.constant 0 : index
    %132 = vector.load %arg2[%c544, %c0_53] : memref<2560x128xf32, #tpu.memory_space<vmem>>, vector<1x32xf32>
    %133 = vector.broadcast %132 : vector<1x32xf32> to vector<16x32xf32>
    %134 = arith.addf %131, %133 : vector<16x32xf32>
    %c552 = arith.constant 552 : index
    %c0_54 = arith.constant 0 : index
    %135 = vector.load %arg2[%c552, %c0_54] : memref<2560x128xf32, #tpu.memory_space<vmem>>, vector<32x32xf32>
    %cst_55 = arith.constant dense<0.000000e+00> : vector<16x32xf32>
    %136 = tpu.matmul %129, %135, %cst_55 {dimension_numbers = #tpu.dot_dimension_numbers<[1], [0], [0], [1], [0, 0, 1, 1], [], []>} : vector<16x32xf32>, vector<32x32xf32>, vector<16x32xf32> -> vector<16x32xf32>
    %c584 = arith.constant 584 : index
    %c0_56 = arith.constant 0 : index
    %137 = vector.load %arg2[%c584, %c0_56] : memref<2560x128xf32, #tpu.memory_space<vmem>>, vector<1x32xf32>
    %138 = vector.broadcast %137 : vector<1x32xf32> to vector<16x32xf32>
    %139 = arith.addf %136, %138 : vector<16x32xf32>
    %c592 = arith.constant 592 : index
    %c0_57 = arith.constant 0 : index
    %140 = vector.load %arg2[%c592, %c0_57] : memref<2560x128xf32, #tpu.memory_space<vmem>>, vector<32x32xf32>
    %cst_58 = arith.constant dense<0.000000e+00> : vector<16x32xf32>
    %141 = tpu.matmul %129, %140, %cst_58 {dimension_numbers = #tpu.dot_dimension_numbers<[1], [0], [0], [1], [0, 0, 1, 1], [], []>} : vector<16x32xf32>, vector<32x32xf32>, vector<16x32xf32> -> vector<16x32xf32>
    %c624 = arith.constant 624 : index
    %c0_59 = arith.constant 0 : index
    %142 = vector.load %arg2[%c624, %c0_59] : memref<2560x128xf32, #tpu.memory_space<vmem>>, vector<1x32xf32>
    %143 = vector.broadcast %142 : vector<1x32xf32> to vector<16x32xf32>
    %144 = arith.addf %141, %143 : vector<16x32xf32>
    %c0_60 = arith.constant 0 : index
    %c0_61 = arith.constant 0 : index
    %145 = vector.load %arg2[%c0_60, %c0_61] : memref<2560x128xf32, #tpu.memory_space<vmem>>, vector<64x16xf32>
    %c64_62 = arith.constant 64 : index
    %c0_63 = arith.constant 0 : index
    %146 = vector.load %arg2[%c64_62, %c0_63] : memref<2560x128xf32, #tpu.memory_space<vmem>>, vector<64x32xf32>
    %c128_64 = arith.constant 128 : index
    %c0_65 = arith.constant 0 : index
    %147 = vector.load %arg2[%c128_64, %c0_65] : memref<2560x128xf32, #tpu.memory_space<vmem>>, vector<16x64xf32>
    %cst_66 = arith.constant dense<0.000000e+00> : vector<64x32xf32>
    %148 = tpu.matmul %145, %139, %cst_66 {dimension_numbers = #tpu.dot_dimension_numbers<[1], [0], [0], [1], [0, 0, 1, 1], [], []>} : vector<64x16xf32>, vector<16x32xf32>, vector<64x32xf32> -> vector<64x32xf32>
    %149 = arith.mulf %148, %146 : vector<64x32xf32>
    %cst_67 = arith.constant dense<0.000000e+00> : vector<64x32xf32>
    %150 = tpu.matmul %145, %144, %cst_67 {dimension_numbers = #tpu.dot_dimension_numbers<[1], [0], [0], [1], [0, 0, 1, 1], [], []>} : vector<64x16xf32>, vector<16x32xf32>, vector<64x32xf32> -> vector<64x32xf32>
    %151 = arith.mulf %150, %146 : vector<64x32xf32>
    %cst_68 = arith.constant dense<0.000000e+00> : vector<16x64xf32>
    %152 = tpu.matmul %134, %149, %cst_68 {dimension_numbers = #tpu.dot_dimension_numbers<[1], [1], [0], [0], [0, 0, 1, 0], [], []>} : vector<16x32xf32>, vector<64x32xf32>, vector<16x64xf32> -> vector<16x64xf32>
    %153 = arith.addf %152, %147 : vector<16x64xf32>
    %cst_69 = arith.constant dense<0xFF800000> : vector<16xf32>
    %154 = vector.multi_reduction <maximumf>, %153, %cst_69 [1] : vector<16x64xf32> to vector<16xf32>
    %155 = vector.shape_cast %154 : vector<16xf32> to vector<16x1xf32>
    %156 = vector.broadcast %155 : vector<16x1xf32> to vector<16x64xf32>
    %157 = arith.subf %153, %156 : vector<16x64xf32>
    %158 = math.exp %157 : vector<16x64xf32>
    %cst_70 = arith.constant dense<0.000000e+00> : vector<16x32xf32>
    %159 = tpu.matmul %158, %151, %cst_70 {dimension_numbers = #tpu.dot_dimension_numbers<[1], [0], [0], [1], [0, 0, 1, 1], [], []>} : vector<16x64xf32>, vector<64x32xf32>, vector<16x32xf32> -> vector<16x32xf32>
    %cst_71 = arith.constant dense<0.000000e+00> : vector<16x32xf32>
    %160 = tpu.matmul %158, %146, %cst_71 {dimension_numbers = #tpu.dot_dimension_numbers<[1], [0], [0], [1], [0, 0, 1, 1], [], []>} : vector<16x64xf32>, vector<64x32xf32>, vector<16x32xf32> -> vector<16x32xf32>
    %161 = tpu.reciprocal %160 {approx = true} : vector<16x32xf32> -> vector<16x32xf32>
    %162 = arith.mulf %159, %161 : vector<16x32xf32>
    %c632 = arith.constant 632 : index
    %c0_72 = arith.constant 0 : index
    %163 = vector.load %arg2[%c632, %c0_72] : memref<2560x128xf32, #tpu.memory_space<vmem>>, vector<32x32xf32>
    %cst_73 = arith.constant dense<0.000000e+00> : vector<16x32xf32>
    %164 = tpu.matmul %162, %163, %cst_73 {dimension_numbers = #tpu.dot_dimension_numbers<[1], [0], [0], [1], [0, 0, 1, 1], [], []>} : vector<16x32xf32>, vector<32x32xf32>, vector<16x32xf32> -> vector<16x32xf32>
    %c664 = arith.constant 664 : index
    %c0_74 = arith.constant 0 : index
    %165 = vector.load %arg2[%c664, %c0_74] : memref<2560x128xf32, #tpu.memory_space<vmem>>, vector<1x32xf32>
    %166 = vector.broadcast %165 : vector<1x32xf32> to vector<16x32xf32>
    %167 = arith.addf %164, %166 : vector<16x32xf32>
    %168 = arith.addf %129, %167 : vector<16x32xf32>
    %c672 = arith.constant 672 : index
    %c0_75 = arith.constant 0 : index
    %169 = vector.load %arg2[%c672, %c0_75] : memref<2560x128xf32, #tpu.memory_space<vmem>>, vector<1x32xf32>
    %c680 = arith.constant 680 : index
    %c0_76 = arith.constant 0 : index
    %170 = vector.load %arg2[%c680, %c0_76] : memref<2560x128xf32, #tpu.memory_space<vmem>>, vector<1x32xf32>
    %cst_77 = arith.constant dense<0.000000e+00> : vector<16xf32>
    %171 = vector.multi_reduction <add>, %168, %cst_77 [1] : vector<16x32xf32> to vector<16xf32>
    %172 = vector.shape_cast %171 : vector<16xf32> to vector<16x1xf32>
    %cst_78 = arith.constant 3.200000e+01 : f32
    %173 = vector.broadcast %cst_78 : f32 to vector<16x1xf32>
    %174 = arith.divf %172, %173 : vector<16x1xf32>
    %175 = arith.mulf %168, %168 : vector<16x32xf32>
    %cst_79 = arith.constant dense<0.000000e+00> : vector<16xf32>
    %176 = vector.multi_reduction <add>, %175, %cst_79 [1] : vector<16x32xf32> to vector<16xf32>
    %177 = vector.shape_cast %176 : vector<16xf32> to vector<16x1xf32>
    %cst_80 = arith.constant 3.200000e+01 : f32
    %178 = vector.broadcast %cst_80 : f32 to vector<16x1xf32>
    %179 = arith.divf %177, %178 : vector<16x1xf32>
    %180 = arith.mulf %174, %174 : vector<16x1xf32>
    %181 = arith.subf %179, %180 : vector<16x1xf32>
    %182 = vector.broadcast %174 : vector<16x1xf32> to vector<16x32xf32>
    %183 = arith.subf %168, %182 : vector<16x32xf32>
    %cst_81 = arith.constant 9.99999974E-6 : f32
    %184 = vector.broadcast %cst_81 : f32 to vector<16x1xf32>
    %185 = arith.addf %181, %184 : vector<16x1xf32>
    %186 = math.rsqrt %185 : vector<16x1xf32>
    %187 = vector.broadcast %186 : vector<16x1xf32> to vector<16x32xf32>
    %188 = arith.mulf %183, %187 : vector<16x32xf32>
    %189 = vector.broadcast %169 : vector<1x32xf32> to vector<16x32xf32>
    %190 = arith.mulf %188, %189 : vector<16x32xf32>
    %191 = vector.broadcast %170 : vector<1x32xf32> to vector<16x32xf32>
    %192 = arith.addf %190, %191 : vector<16x32xf32>
    %c688 = arith.constant 688 : index
    %c0_82 = arith.constant 0 : index
    %193 = vector.load %arg2[%c688, %c0_82] : memref<2560x128xf32, #tpu.memory_space<vmem>>, vector<32x64xf32>
    %cst_83 = arith.constant dense<0.000000e+00> : vector<16x64xf32>
    %194 = tpu.matmul %192, %193, %cst_83 {dimension_numbers = #tpu.dot_dimension_numbers<[1], [0], [0], [1], [0, 0, 1, 1], [], []>} : vector<16x32xf32>, vector<32x64xf32>, vector<16x64xf32> -> vector<16x64xf32>
    %c720 = arith.constant 720 : index
    %c0_84 = arith.constant 0 : index
    %195 = vector.load %arg2[%c720, %c0_84] : memref<2560x128xf32, #tpu.memory_space<vmem>>, vector<1x64xf32>
    %196 = vector.broadcast %195 : vector<1x64xf32> to vector<16x64xf32>
    %197 = arith.addf %194, %196 : vector<16x64xf32>
    %cst_85 = arith.constant 5.000000e-01 : f32
    %198 = vector.broadcast %cst_85 : f32 to vector<16x64xf32>
    %199 = arith.mulf %198, %197 : vector<16x64xf32>
    %cst_86 = arith.constant 4.471500e-02 : f32
    %200 = vector.broadcast %cst_86 : f32 to vector<16x64xf32>
    %201 = arith.mulf %200, %197 : vector<16x64xf32>
    %202 = arith.mulf %201, %197 : vector<16x64xf32>
    %203 = arith.mulf %202, %197 : vector<16x64xf32>
    %204 = arith.addf %197, %203 : vector<16x64xf32>
    %cst_87 = arith.constant 0.797884583 : f32
    %205 = vector.broadcast %cst_87 : f32 to vector<16x64xf32>
    %206 = arith.mulf %205, %204 : vector<16x64xf32>
    %207 = math.tanh %206 : vector<16x64xf32>
    %cst_88 = arith.constant 1.000000e+00 : f32
    %208 = vector.broadcast %cst_88 : f32 to vector<16x64xf32>
    %209 = arith.addf %208, %207 : vector<16x64xf32>
    %210 = arith.mulf %199, %209 : vector<16x64xf32>
    %c728 = arith.constant 728 : index
    %c0_89 = arith.constant 0 : index
    %211 = vector.load %arg2[%c728, %c0_89] : memref<2560x128xf32, #tpu.memory_space<vmem>>, vector<64x32xf32>
    %cst_90 = arith.constant dense<0.000000e+00> : vector<16x32xf32>
    %212 = tpu.matmul %210, %211, %cst_90 {dimension_numbers = #tpu.dot_dimension_numbers<[1], [0], [0], [1], [0, 0, 1, 1], [], []>} : vector<16x64xf32>, vector<64x32xf32>, vector<16x32xf32> -> vector<16x32xf32>
    %c792 = arith.constant 792 : index
    %c0_91 = arith.constant 0 : index
    %213 = vector.load %arg2[%c792, %c0_91] : memref<2560x128xf32, #tpu.memory_space<vmem>>, vector<1x32xf32>
    %214 = vector.broadcast %213 : vector<1x32xf32> to vector<16x32xf32>
    %215 = arith.addf %212, %214 : vector<16x32xf32>
    %216 = arith.addf %192, %215 : vector<16x32xf32>
    %c800 = arith.constant 800 : index
    %c0_92 = arith.constant 0 : index
    %217 = vector.load %arg2[%c800, %c0_92] : memref<2560x128xf32, #tpu.memory_space<vmem>>, vector<1x32xf32>
    %c808 = arith.constant 808 : index
    %c0_93 = arith.constant 0 : index
    %218 = vector.load %arg2[%c808, %c0_93] : memref<2560x128xf32, #tpu.memory_space<vmem>>, vector<1x32xf32>
    %cst_94 = arith.constant dense<0.000000e+00> : vector<16xf32>
    %219 = vector.multi_reduction <add>, %216, %cst_94 [1] : vector<16x32xf32> to vector<16xf32>
    %220 = vector.shape_cast %219 : vector<16xf32> to vector<16x1xf32>
    %cst_95 = arith.constant 3.200000e+01 : f32
    %221 = vector.broadcast %cst_95 : f32 to vector<16x1xf32>
    %222 = arith.divf %220, %221 : vector<16x1xf32>
    %223 = arith.mulf %216, %216 : vector<16x32xf32>
    %cst_96 = arith.constant dense<0.000000e+00> : vector<16xf32>
    %224 = vector.multi_reduction <add>, %223, %cst_96 [1] : vector<16x32xf32> to vector<16xf32>
    %225 = vector.shape_cast %224 : vector<16xf32> to vector<16x1xf32>
    %cst_97 = arith.constant 3.200000e+01 : f32
    %226 = vector.broadcast %cst_97 : f32 to vector<16x1xf32>
    %227 = arith.divf %225, %226 : vector<16x1xf32>
    %228 = arith.mulf %222, %222 : vector<16x1xf32>
    %229 = arith.subf %227, %228 : vector<16x1xf32>
    %230 = vector.broadcast %222 : vector<16x1xf32> to vector<16x32xf32>
    %231 = arith.subf %216, %230 : vector<16x32xf32>
    %cst_98 = arith.constant 9.99999974E-6 : f32
    %232 = vector.broadcast %cst_98 : f32 to vector<16x1xf32>
    %233 = arith.addf %229, %232 : vector<16x1xf32>
    %234 = math.rsqrt %233 : vector<16x1xf32>
    %235 = vector.broadcast %234 : vector<16x1xf32> to vector<16x32xf32>
    %236 = arith.mulf %231, %235 : vector<16x32xf32>
    %237 = vector.broadcast %217 : vector<1x32xf32> to vector<16x32xf32>
    %238 = arith.mulf %236, %237 : vector<16x32xf32>
    %239 = vector.broadcast %218 : vector<1x32xf32> to vector<16x32xf32>
    %240 = arith.addf %238, %239 : vector<16x32xf32>
    %c816 = arith.constant 816 : index
    %c0_99 = arith.constant 0 : index
    %241 = vector.load %arg2[%c816, %c0_99] : memref<2560x128xf32, #tpu.memory_space<vmem>>, vector<32x32xf32>
    %cst_100 = arith.constant dense<0.000000e+00> : vector<16x32xf32>
    %242 = tpu.matmul %240, %241, %cst_100 {dimension_numbers = #tpu.dot_dimension_numbers<[1], [0], [0], [1], [0, 0, 1, 1], [], []>} : vector<16x32xf32>, vector<32x32xf32>, vector<16x32xf32> -> vector<16x32xf32>
    %c848 = arith.constant 848 : index
    %c0_101 = arith.constant 0 : index
    %243 = vector.load %arg2[%c848, %c0_101] : memref<2560x128xf32, #tpu.memory_space<vmem>>, vector<1x32xf32>
    %244 = vector.broadcast %243 : vector<1x32xf32> to vector<16x32xf32>
    %245 = arith.addf %242, %244 : vector<16x32xf32>
    %c856 = arith.constant 856 : index
    %c0_102 = arith.constant 0 : index
    %246 = vector.load %arg2[%c856, %c0_102] : memref<2560x128xf32, #tpu.memory_space<vmem>>, vector<32x32xf32>
    %cst_103 = arith.constant dense<0.000000e+00> : vector<16x32xf32>
    %247 = tpu.matmul %240, %246, %cst_103 {dimension_numbers = #tpu.dot_dimension_numbers<[1], [0], [0], [1], [0, 0, 1, 1], [], []>} : vector<16x32xf32>, vector<32x32xf32>, vector<16x32xf32> -> vector<16x32xf32>
    %c888 = arith.constant 888 : index
    %c0_104 = arith.constant 0 : index
    %248 = vector.load %arg2[%c888, %c0_104] : memref<2560x128xf32, #tpu.memory_space<vmem>>, vector<1x32xf32>
    %249 = vector.broadcast %248 : vector<1x32xf32> to vector<16x32xf32>
    %250 = arith.addf %247, %249 : vector<16x32xf32>
    %c896 = arith.constant 896 : index
    %c0_105 = arith.constant 0 : index
    %251 = vector.load %arg2[%c896, %c0_105] : memref<2560x128xf32, #tpu.memory_space<vmem>>, vector<32x32xf32>
    %cst_106 = arith.constant dense<0.000000e+00> : vector<16x32xf32>
    %252 = tpu.matmul %240, %251, %cst_106 {dimension_numbers = #tpu.dot_dimension_numbers<[1], [0], [0], [1], [0, 0, 1, 1], [], []>} : vector<16x32xf32>, vector<32x32xf32>, vector<16x32xf32> -> vector<16x32xf32>
    %c928 = arith.constant 928 : index
    %c0_107 = arith.constant 0 : index
    %253 = vector.load %arg2[%c928, %c0_107] : memref<2560x128xf32, #tpu.memory_space<vmem>>, vector<1x32xf32>
    %254 = vector.broadcast %253 : vector<1x32xf32> to vector<16x32xf32>
    %255 = arith.addf %252, %254 : vector<16x32xf32>
    %c0_108 = arith.constant 0 : index
    %c0_109 = arith.constant 0 : index
    %256 = vector.load %arg2[%c0_108, %c0_109] : memref<2560x128xf32, #tpu.memory_space<vmem>>, vector<64x16xf32>
    %c64_110 = arith.constant 64 : index
    %c0_111 = arith.constant 0 : index
    %257 = vector.load %arg2[%c64_110, %c0_111] : memref<2560x128xf32, #tpu.memory_space<vmem>>, vector<64x32xf32>
    %c128_112 = arith.constant 128 : index
    %c0_113 = arith.constant 0 : index
    %258 = vector.load %arg2[%c128_112, %c0_113] : memref<2560x128xf32, #tpu.memory_space<vmem>>, vector<16x64xf32>
    %cst_114 = arith.constant dense<0.000000e+00> : vector<64x32xf32>
    %259 = tpu.matmul %256, %250, %cst_114 {dimension_numbers = #tpu.dot_dimension_numbers<[1], [0], [0], [1], [0, 0, 1, 1], [], []>} : vector<64x16xf32>, vector<16x32xf32>, vector<64x32xf32> -> vector<64x32xf32>
    %260 = arith.mulf %259, %257 : vector<64x32xf32>
    %cst_115 = arith.constant dense<0.000000e+00> : vector<64x32xf32>
    %261 = tpu.matmul %256, %255, %cst_115 {dimension_numbers = #tpu.dot_dimension_numbers<[1], [0], [0], [1], [0, 0, 1, 1], [], []>} : vector<64x16xf32>, vector<16x32xf32>, vector<64x32xf32> -> vector<64x32xf32>
    %262 = arith.mulf %261, %257 : vector<64x32xf32>
    %cst_116 = arith.constant dense<0.000000e+00> : vector<16x64xf32>
    %263 = tpu.matmul %245, %260, %cst_116 {dimension_numbers = #tpu.dot_dimension_numbers<[1], [1], [0], [0], [0, 0, 1, 0], [], []>} : vector<16x32xf32>, vector<64x32xf32>, vector<16x64xf32> -> vector<16x64xf32>
    %264 = arith.addf %263, %258 : vector<16x64xf32>
    %cst_117 = arith.constant dense<0xFF800000> : vector<16xf32>
    %265 = vector.multi_reduction <maximumf>, %264, %cst_117 [1] : vector<16x64xf32> to vector<16xf32>
    %266 = vector.shape_cast %265 : vector<16xf32> to vector<16x1xf32>
    %267 = vector.broadcast %266 : vector<16x1xf32> to vector<16x64xf32>
    %268 = arith.subf %264, %267 : vector<16x64xf32>
    %269 = math.exp %268 : vector<16x64xf32>
    %cst_118 = arith.constant dense<0.000000e+00> : vector<16x32xf32>
    %270 = tpu.matmul %269, %262, %cst_118 {dimension_numbers = #tpu.dot_dimension_numbers<[1], [0], [0], [1], [0, 0, 1, 1], [], []>} : vector<16x64xf32>, vector<64x32xf32>, vector<16x32xf32> -> vector<16x32xf32>
    %cst_119 = arith.constant dense<0.000000e+00> : vector<16x32xf32>
    %271 = tpu.matmul %269, %257, %cst_119 {dimension_numbers = #tpu.dot_dimension_numbers<[1], [0], [0], [1], [0, 0, 1, 1], [], []>} : vector<16x64xf32>, vector<64x32xf32>, vector<16x32xf32> -> vector<16x32xf32>
    %272 = tpu.reciprocal %271 {approx = true} : vector<16x32xf32> -> vector<16x32xf32>
    %273 = arith.mulf %270, %272 : vector<16x32xf32>
    %c936 = arith.constant 936 : index
    %c0_120 = arith.constant 0 : index
    %274 = vector.load %arg2[%c936, %c0_120] : memref<2560x128xf32, #tpu.memory_space<vmem>>, vector<32x32xf32>
    %cst_121 = arith.constant dense<0.000000e+00> : vector<16x32xf32>
    %275 = tpu.matmul %273, %274, %cst_121 {dimension_numbers = #tpu.dot_dimension_numbers<[1], [0], [0], [1], [0, 0, 1, 1], [], []>} : vector<16x32xf32>, vector<32x32xf32>, vector<16x32xf32> -> vector<16x32xf32>
    %c968 = arith.constant 968 : index
    %c0_122 = arith.constant 0 : index
    %276 = vector.load %arg2[%c968, %c0_122] : memref<2560x128xf32, #tpu.memory_space<vmem>>, vector<1x32xf32>
    %277 = vector.broadcast %276 : vector<1x32xf32> to vector<16x32xf32>
    %278 = arith.addf %275, %277 : vector<16x32xf32>
    %279 = arith.addf %240, %278 : vector<16x32xf32>
    %c976 = arith.constant 976 : index
    %c0_123 = arith.constant 0 : index
    %280 = vector.load %arg2[%c976, %c0_123] : memref<2560x128xf32, #tpu.memory_space<vmem>>, vector<1x32xf32>
    %c984 = arith.constant 984 : index
    %c0_124 = arith.constant 0 : index
    %281 = vector.load %arg2[%c984, %c0_124] : memref<2560x128xf32, #tpu.memory_space<vmem>>, vector<1x32xf32>
    %cst_125 = arith.constant dense<0.000000e+00> : vector<16xf32>
    %282 = vector.multi_reduction <add>, %279, %cst_125 [1] : vector<16x32xf32> to vector<16xf32>
    %283 = vector.shape_cast %282 : vector<16xf32> to vector<16x1xf32>
    %cst_126 = arith.constant 3.200000e+01 : f32
    %284 = vector.broadcast %cst_126 : f32 to vector<16x1xf32>
    %285 = arith.divf %283, %284 : vector<16x1xf32>
    %286 = arith.mulf %279, %279 : vector<16x32xf32>
    %cst_127 = arith.constant dense<0.000000e+00> : vector<16xf32>
    %287 = vector.multi_reduction <add>, %286, %cst_127 [1] : vector<16x32xf32> to vector<16xf32>
    %288 = vector.shape_cast %287 : vector<16xf32> to vector<16x1xf32>
    %cst_128 = arith.constant 3.200000e+01 : f32
    %289 = vector.broadcast %cst_128 : f32 to vector<16x1xf32>
    %290 = arith.divf %288, %289 : vector<16x1xf32>
    %291 = arith.mulf %285, %285 : vector<16x1xf32>
    %292 = arith.subf %290, %291 : vector<16x1xf32>
    %293 = vector.broadcast %285 : vector<16x1xf32> to vector<16x32xf32>
    %294 = arith.subf %279, %293 : vector<16x32xf32>
    %cst_129 = arith.constant 9.99999974E-6 : f32
    %295 = vector.broadcast %cst_129 : f32 to vector<16x1xf32>
    %296 = arith.addf %292, %295 : vector<16x1xf32>
    %297 = math.rsqrt %296 : vector<16x1xf32>
    %298 = vector.broadcast %297 : vector<16x1xf32> to vector<16x32xf32>
    %299 = arith.mulf %294, %298 : vector<16x32xf32>
    %300 = vector.broadcast %280 : vector<1x32xf32> to vector<16x32xf32>
    %301 = arith.mulf %299, %300 : vector<16x32xf32>
    %302 = vector.broadcast %281 : vector<1x32xf32> to vector<16x32xf32>
    %303 = arith.addf %301, %302 : vector<16x32xf32>
    %c992 = arith.constant 992 : index
    %c0_130 = arith.constant 0 : index
    %304 = vector.load %arg2[%c992, %c0_130] : memref<2560x128xf32, #tpu.memory_space<vmem>>, vector<32x64xf32>
    %cst_131 = arith.constant dense<0.000000e+00> : vector<16x64xf32>
    %305 = tpu.matmul %303, %304, %cst_131 {dimension_numbers = #tpu.dot_dimension_numbers<[1], [0], [0], [1], [0, 0, 1, 1], [], []>} : vector<16x32xf32>, vector<32x64xf32>, vector<16x64xf32> -> vector<16x64xf32>
    %c1024 = arith.constant 1024 : index
    %c0_132 = arith.constant 0 : index
    %306 = vector.load %arg2[%c1024, %c0_132] : memref<2560x128xf32, #tpu.memory_space<vmem>>, vector<1x64xf32>
    %307 = vector.broadcast %306 : vector<1x64xf32> to vector<16x64xf32>
    %308 = arith.addf %305, %307 : vector<16x64xf32>
    %cst_133 = arith.constant 5.000000e-01 : f32
    %309 = vector.broadcast %cst_133 : f32 to vector<16x64xf32>
    %310 = arith.mulf %309, %308 : vector<16x64xf32>
    %cst_134 = arith.constant 4.471500e-02 : f32
    %311 = vector.broadcast %cst_134 : f32 to vector<16x64xf32>
    %312 = arith.mulf %311, %308 : vector<16x64xf32>
    %313 = arith.mulf %312, %308 : vector<16x64xf32>
    %314 = arith.mulf %313, %308 : vector<16x64xf32>
    %315 = arith.addf %308, %314 : vector<16x64xf32>
    %cst_135 = arith.constant 0.797884583 : f32
    %316 = vector.broadcast %cst_135 : f32 to vector<16x64xf32>
    %317 = arith.mulf %316, %315 : vector<16x64xf32>
    %318 = math.tanh %317 : vector<16x64xf32>
    %cst_136 = arith.constant 1.000000e+00 : f32
    %319 = vector.broadcast %cst_136 : f32 to vector<16x64xf32>
    %320 = arith.addf %319, %318 : vector<16x64xf32>
    %321 = arith.mulf %310, %320 : vector<16x64xf32>
    %c1032 = arith.constant 1032 : index
    %c0_137 = arith.constant 0 : index
    %322 = vector.load %arg2[%c1032, %c0_137] : memref<2560x128xf32, #tpu.memory_space<vmem>>, vector<64x32xf32>
    %cst_138 = arith.constant dense<0.000000e+00> : vector<16x32xf32>
    %323 = tpu.matmul %321, %322, %cst_138 {dimension_numbers = #tpu.dot_dimension_numbers<[1], [0], [0], [1], [0, 0, 1, 1], [], []>} : vector<16x64xf32>, vector<64x32xf32>, vector<16x32xf32> -> vector<16x32xf32>
    %c1096 = arith.constant 1096 : index
    %c0_139 = arith.constant 0 : index
    %324 = vector.load %arg2[%c1096, %c0_139] : memref<2560x128xf32, #tpu.memory_space<vmem>>, vector<1x32xf32>
    %325 = vector.broadcast %324 : vector<1x32xf32> to vector<16x32xf32>
    %326 = arith.addf %323, %325 : vector<16x32xf32>
    %327 = arith.addf %303, %326 : vector<16x32xf32>
    %c1104 = arith.constant 1104 : index
    %c0_140 = arith.constant 0 : index
    %328 = vector.load %arg2[%c1104, %c0_140] : memref<2560x128xf32, #tpu.memory_space<vmem>>, vector<1x32xf32>
    %c1112 = arith.constant 1112 : index
    %c0_141 = arith.constant 0 : index
    %329 = vector.load %arg2[%c1112, %c0_141] : memref<2560x128xf32, #tpu.memory_space<vmem>>, vector<1x32xf32>
    %cst_142 = arith.constant dense<0.000000e+00> : vector<16xf32>
    %330 = vector.multi_reduction <add>, %327, %cst_142 [1] : vector<16x32xf32> to vector<16xf32>
    %331 = vector.shape_cast %330 : vector<16xf32> to vector<16x1xf32>
    %cst_143 = arith.constant 3.200000e+01 : f32
    %332 = vector.broadcast %cst_143 : f32 to vector<16x1xf32>
    %333 = arith.divf %331, %332 : vector<16x1xf32>
    %334 = arith.mulf %327, %327 : vector<16x32xf32>
    %cst_144 = arith.constant dense<0.000000e+00> : vector<16xf32>
    %335 = vector.multi_reduction <add>, %334, %cst_144 [1] : vector<16x32xf32> to vector<16xf32>
    %336 = vector.shape_cast %335 : vector<16xf32> to vector<16x1xf32>
    %cst_145 = arith.constant 3.200000e+01 : f32
    %337 = vector.broadcast %cst_145 : f32 to vector<16x1xf32>
    %338 = arith.divf %336, %337 : vector<16x1xf32>
    %339 = arith.mulf %333, %333 : vector<16x1xf32>
    %340 = arith.subf %338, %339 : vector<16x1xf32>
    %341 = vector.broadcast %333 : vector<16x1xf32> to vector<16x32xf32>
    %342 = arith.subf %327, %341 : vector<16x32xf32>
    %cst_146 = arith.constant 9.99999974E-6 : f32
    %343 = vector.broadcast %cst_146 : f32 to vector<16x1xf32>
    %344 = arith.addf %340, %343 : vector<16x1xf32>
    %345 = math.rsqrt %344 : vector<16x1xf32>
    %346 = vector.broadcast %345 : vector<16x1xf32> to vector<16x32xf32>
    %347 = arith.mulf %342, %346 : vector<16x32xf32>
    %348 = vector.broadcast %328 : vector<1x32xf32> to vector<16x32xf32>
    %349 = arith.mulf %347, %348 : vector<16x32xf32>
    %350 = vector.broadcast %329 : vector<1x32xf32> to vector<16x32xf32>
    %351 = arith.addf %349, %350 : vector<16x32xf32>
    %c1120 = arith.constant 1120 : index
    %c0_147 = arith.constant 0 : index
    %352 = vector.load %arg2[%c1120, %c0_147] : memref<2560x128xf32, #tpu.memory_space<vmem>>, vector<32x32xf32>
    %cst_148 = arith.constant dense<0.000000e+00> : vector<16x32xf32>
    %353 = tpu.matmul %351, %352, %cst_148 {dimension_numbers = #tpu.dot_dimension_numbers<[1], [0], [0], [1], [0, 0, 1, 1], [], []>} : vector<16x32xf32>, vector<32x32xf32>, vector<16x32xf32> -> vector<16x32xf32>
    %c1152 = arith.constant 1152 : index
    %c0_149 = arith.constant 0 : index
    %354 = vector.load %arg2[%c1152, %c0_149] : memref<2560x128xf32, #tpu.memory_space<vmem>>, vector<1x32xf32>
    %355 = vector.broadcast %354 : vector<1x32xf32> to vector<16x32xf32>
    %356 = arith.addf %353, %355 : vector<16x32xf32>
    %c1160 = arith.constant 1160 : index
    %c0_150 = arith.constant 0 : index
    %357 = vector.load %arg2[%c1160, %c0_150] : memref<2560x128xf32, #tpu.memory_space<vmem>>, vector<32x32xf32>
    %cst_151 = arith.constant dense<0.000000e+00> : vector<16x32xf32>
    %358 = tpu.matmul %351, %357, %cst_151 {dimension_numbers = #tpu.dot_dimension_numbers<[1], [0], [0], [1], [0, 0, 1, 1], [], []>} : vector<16x32xf32>, vector<32x32xf32>, vector<16x32xf32> -> vector<16x32xf32>
    %c1192 = arith.constant 1192 : index
    %c0_152 = arith.constant 0 : index
    %359 = vector.load %arg2[%c1192, %c0_152] : memref<2560x128xf32, #tpu.memory_space<vmem>>, vector<1x32xf32>
    %360 = vector.broadcast %359 : vector<1x32xf32> to vector<16x32xf32>
    %361 = arith.addf %358, %360 : vector<16x32xf32>
    %c1200 = arith.constant 1200 : index
    %c0_153 = arith.constant 0 : index
    %362 = vector.load %arg2[%c1200, %c0_153] : memref<2560x128xf32, #tpu.memory_space<vmem>>, vector<32x32xf32>
    %cst_154 = arith.constant dense<0.000000e+00> : vector<16x32xf32>
    %363 = tpu.matmul %351, %362, %cst_154 {dimension_numbers = #tpu.dot_dimension_numbers<[1], [0], [0], [1], [0, 0, 1, 1], [], []>} : vector<16x32xf32>, vector<32x32xf32>, vector<16x32xf32> -> vector<16x32xf32>
    %c1232 = arith.constant 1232 : index
    %c0_155 = arith.constant 0 : index
    %364 = vector.load %arg2[%c1232, %c0_155] : memref<2560x128xf32, #tpu.memory_space<vmem>>, vector<1x32xf32>
    %365 = vector.broadcast %364 : vector<1x32xf32> to vector<16x32xf32>
    %366 = arith.addf %363, %365 : vector<16x32xf32>
    %c0_156 = arith.constant 0 : index
    %c0_157 = arith.constant 0 : index
    %367 = vector.load %arg2[%c0_156, %c0_157] : memref<2560x128xf32, #tpu.memory_space<vmem>>, vector<64x16xf32>
    %c64_158 = arith.constant 64 : index
    %c0_159 = arith.constant 0 : index
    %368 = vector.load %arg2[%c64_158, %c0_159] : memref<2560x128xf32, #tpu.memory_space<vmem>>, vector<64x32xf32>
    %c128_160 = arith.constant 128 : index
    %c0_161 = arith.constant 0 : index
    %369 = vector.load %arg2[%c128_160, %c0_161] : memref<2560x128xf32, #tpu.memory_space<vmem>>, vector<16x64xf32>
    %cst_162 = arith.constant dense<0.000000e+00> : vector<64x32xf32>
    %370 = tpu.matmul %367, %361, %cst_162 {dimension_numbers = #tpu.dot_dimension_numbers<[1], [0], [0], [1], [0, 0, 1, 1], [], []>} : vector<64x16xf32>, vector<16x32xf32>, vector<64x32xf32> -> vector<64x32xf32>
    %371 = arith.mulf %370, %368 : vector<64x32xf32>
    %cst_163 = arith.constant dense<0.000000e+00> : vector<64x32xf32>
    %372 = tpu.matmul %367, %366, %cst_163 {dimension_numbers = #tpu.dot_dimension_numbers<[1], [0], [0], [1], [0, 0, 1, 1], [], []>} : vector<64x16xf32>, vector<16x32xf32>, vector<64x32xf32> -> vector<64x32xf32>
    %373 = arith.mulf %372, %368 : vector<64x32xf32>
    %cst_164 = arith.constant dense<0.000000e+00> : vector<16x64xf32>
    %374 = tpu.matmul %356, %371, %cst_164 {dimension_numbers = #tpu.dot_dimension_numbers<[1], [1], [0], [0], [0, 0, 1, 0], [], []>} : vector<16x32xf32>, vector<64x32xf32>, vector<16x64xf32> -> vector<16x64xf32>
    %375 = arith.addf %374, %369 : vector<16x64xf32>
    %cst_165 = arith.constant dense<0xFF800000> : vector<16xf32>
    %376 = vector.multi_reduction <maximumf>, %375, %cst_165 [1] : vector<16x64xf32> to vector<16xf32>
    %377 = vector.shape_cast %376 : vector<16xf32> to vector<16x1xf32>
    %378 = vector.broadcast %377 : vector<16x1xf32> to vector<16x64xf32>
    %379 = arith.subf %375, %378 : vector<16x64xf32>
    %380 = math.exp %379 : vector<16x64xf32>
    %cst_166 = arith.constant dense<0.000000e+00> : vector<16x32xf32>
    %381 = tpu.matmul %380, %373, %cst_166 {dimension_numbers = #tpu.dot_dimension_numbers<[1], [0], [0], [1], [0, 0, 1, 1], [], []>} : vector<16x64xf32>, vector<64x32xf32>, vector<16x32xf32> -> vector<16x32xf32>
    %cst_167 = arith.constant dense<0.000000e+00> : vector<16x32xf32>
    %382 = tpu.matmul %380, %368, %cst_167 {dimension_numbers = #tpu.dot_dimension_numbers<[1], [0], [0], [1], [0, 0, 1, 1], [], []>} : vector<16x64xf32>, vector<64x32xf32>, vector<16x32xf32> -> vector<16x32xf32>
    %383 = tpu.reciprocal %382 {approx = true} : vector<16x32xf32> -> vector<16x32xf32>
    %384 = arith.mulf %381, %383 : vector<16x32xf32>
    %c1240 = arith.constant 1240 : index
    %c0_168 = arith.constant 0 : index
    %385 = vector.load %arg2[%c1240, %c0_168] : memref<2560x128xf32, #tpu.memory_space<vmem>>, vector<32x32xf32>
    %cst_169 = arith.constant dense<0.000000e+00> : vector<16x32xf32>
    %386 = tpu.matmul %384, %385, %cst_169 {dimension_numbers = #tpu.dot_dimension_numbers<[1], [0], [0], [1], [0, 0, 1, 1], [], []>} : vector<16x32xf32>, vector<32x32xf32>, vector<16x32xf32> -> vector<16x32xf32>
    %c1272 = arith.constant 1272 : index
    %c0_170 = arith.constant 0 : index
    %387 = vector.load %arg2[%c1272, %c0_170] : memref<2560x128xf32, #tpu.memory_space<vmem>>, vector<1x32xf32>
    %388 = vector.broadcast %387 : vector<1x32xf32> to vector<16x32xf32>
    %389 = arith.addf %386, %388 : vector<16x32xf32>
    %390 = arith.addf %351, %389 : vector<16x32xf32>
    %c1280 = arith.constant 1280 : index
    %c0_171 = arith.constant 0 : index
    %391 = vector.load %arg2[%c1280, %c0_171] : memref<2560x128xf32, #tpu.memory_space<vmem>>, vector<1x32xf32>
    %c1288 = arith.constant 1288 : index
    %c0_172 = arith.constant 0 : index
    %392 = vector.load %arg2[%c1288, %c0_172] : memref<2560x128xf32, #tpu.memory_space<vmem>>, vector<1x32xf32>
    %cst_173 = arith.constant dense<0.000000e+00> : vector<16xf32>
    %393 = vector.multi_reduction <add>, %390, %cst_173 [1] : vector<16x32xf32> to vector<16xf32>
    %394 = vector.shape_cast %393 : vector<16xf32> to vector<16x1xf32>
    %cst_174 = arith.constant 3.200000e+01 : f32
    %395 = vector.broadcast %cst_174 : f32 to vector<16x1xf32>
    %396 = arith.divf %394, %395 : vector<16x1xf32>
    %397 = arith.mulf %390, %390 : vector<16x32xf32>
    %cst_175 = arith.constant dense<0.000000e+00> : vector<16xf32>
    %398 = vector.multi_reduction <add>, %397, %cst_175 [1] : vector<16x32xf32> to vector<16xf32>
    %399 = vector.shape_cast %398 : vector<16xf32> to vector<16x1xf32>
    %cst_176 = arith.constant 3.200000e+01 : f32
    %400 = vector.broadcast %cst_176 : f32 to vector<16x1xf32>
    %401 = arith.divf %399, %400 : vector<16x1xf32>
    %402 = arith.mulf %396, %396 : vector<16x1xf32>
    %403 = arith.subf %401, %402 : vector<16x1xf32>
    %404 = vector.broadcast %396 : vector<16x1xf32> to vector<16x32xf32>
    %405 = arith.subf %390, %404 : vector<16x32xf32>
    %cst_177 = arith.constant 9.99999974E-6 : f32
    %406 = vector.broadcast %cst_177 : f32 to vector<16x1xf32>
    %407 = arith.addf %403, %406 : vector<16x1xf32>
    %408 = math.rsqrt %407 : vector<16x1xf32>
    %409 = vector.broadcast %408 : vector<16x1xf32> to vector<16x32xf32>
    %410 = arith.mulf %405, %409 : vector<16x32xf32>
    %411 = vector.broadcast %391 : vector<1x32xf32> to vector<16x32xf32>
    %412 = arith.mulf %410, %411 : vector<16x32xf32>
    %413 = vector.broadcast %392 : vector<1x32xf32> to vector<16x32xf32>
    %414 = arith.addf %412, %413 : vector<16x32xf32>
    %c1296 = arith.constant 1296 : index
    %c0_178 = arith.constant 0 : index
    %415 = vector.load %arg2[%c1296, %c0_178] : memref<2560x128xf32, #tpu.memory_space<vmem>>, vector<32x32xf32>
    %cst_179 = arith.constant dense<0.000000e+00> : vector<16x32xf32>
    %416 = tpu.matmul %414, %415, %cst_179 {dimension_numbers = #tpu.dot_dimension_numbers<[1], [0], [0], [1], [0, 0, 1, 1], [], []>} : vector<16x32xf32>, vector<32x32xf32>, vector<16x32xf32> -> vector<16x32xf32>
    %c1328 = arith.constant 1328 : index
    %c0_180 = arith.constant 0 : index
    %417 = vector.load %arg2[%c1328, %c0_180] : memref<2560x128xf32, #tpu.memory_space<vmem>>, vector<1x32xf32>
    %418 = vector.broadcast %417 : vector<1x32xf32> to vector<16x32xf32>
    %419 = arith.addf %416, %418 : vector<16x32xf32>
    %c1336 = arith.constant 1336 : index
    %c0_181 = arith.constant 0 : index
    %420 = vector.load %arg2[%c1336, %c0_181] : memref<2560x128xf32, #tpu.memory_space<vmem>>, vector<32x32xf32>
    %cst_182 = arith.constant dense<0.000000e+00> : vector<16x32xf32>
    %421 = tpu.matmul %351, %420, %cst_182 {dimension_numbers = #tpu.dot_dimension_numbers<[1], [0], [0], [1], [0, 0, 1, 1], [], []>} : vector<16x32xf32>, vector<32x32xf32>, vector<16x32xf32> -> vector<16x32xf32>
    %c1368 = arith.constant 1368 : index
    %c0_183 = arith.constant 0 : index
    %422 = vector.load %arg2[%c1368, %c0_183] : memref<2560x128xf32, #tpu.memory_space<vmem>>, vector<1x32xf32>
    %423 = vector.broadcast %422 : vector<1x32xf32> to vector<16x32xf32>
    %424 = arith.addf %421, %423 : vector<16x32xf32>
    %c1376 = arith.constant 1376 : index
    %c0_184 = arith.constant 0 : index
    %425 = vector.load %arg2[%c1376, %c0_184] : memref<2560x128xf32, #tpu.memory_space<vmem>>, vector<32x32xf32>
    %cst_185 = arith.constant dense<0.000000e+00> : vector<16x32xf32>
    %426 = tpu.matmul %351, %425, %cst_185 {dimension_numbers = #tpu.dot_dimension_numbers<[1], [0], [0], [1], [0, 0, 1, 1], [], []>} : vector<16x32xf32>, vector<32x32xf32>, vector<16x32xf32> -> vector<16x32xf32>
    %c1408 = arith.constant 1408 : index
    %c0_186 = arith.constant 0 : index
    %427 = vector.load %arg2[%c1408, %c0_186] : memref<2560x128xf32, #tpu.memory_space<vmem>>, vector<1x32xf32>
    %428 = vector.broadcast %427 : vector<1x32xf32> to vector<16x32xf32>
    %429 = arith.addf %426, %428 : vector<16x32xf32>
    %c0_187 = arith.constant 0 : index
    %c0_188 = arith.constant 0 : index
    %430 = vector.load %arg2[%c0_187, %c0_188] : memref<2560x128xf32, #tpu.memory_space<vmem>>, vector<64x16xf32>
    %c64_189 = arith.constant 64 : index
    %c0_190 = arith.constant 0 : index
    %431 = vector.load %arg2[%c64_189, %c0_190] : memref<2560x128xf32, #tpu.memory_space<vmem>>, vector<64x32xf32>
    %c128_191 = arith.constant 128 : index
    %c0_192 = arith.constant 0 : index
    %432 = vector.load %arg2[%c128_191, %c0_192] : memref<2560x128xf32, #tpu.memory_space<vmem>>, vector<16x64xf32>
    %cst_193 = arith.constant dense<0.000000e+00> : vector<64x32xf32>
    %433 = tpu.matmul %430, %424, %cst_193 {dimension_numbers = #tpu.dot_dimension_numbers<[1], [0], [0], [1], [0, 0, 1, 1], [], []>} : vector<64x16xf32>, vector<16x32xf32>, vector<64x32xf32> -> vector<64x32xf32>
    %434 = arith.mulf %433, %431 : vector<64x32xf32>
    %cst_194 = arith.constant dense<0.000000e+00> : vector<64x32xf32>
    %435 = tpu.matmul %430, %429, %cst_194 {dimension_numbers = #tpu.dot_dimension_numbers<[1], [0], [0], [1], [0, 0, 1, 1], [], []>} : vector<64x16xf32>, vector<16x32xf32>, vector<64x32xf32> -> vector<64x32xf32>
    %436 = arith.mulf %435, %431 : vector<64x32xf32>
    %cst_195 = arith.constant dense<0.000000e+00> : vector<16x64xf32>
    %437 = tpu.matmul %419, %434, %cst_195 {dimension_numbers = #tpu.dot_dimension_numbers<[1], [1], [0], [0], [0, 0, 1, 0], [], []>} : vector<16x32xf32>, vector<64x32xf32>, vector<16x64xf32> -> vector<16x64xf32>
    %438 = arith.addf %437, %432 : vector<16x64xf32>
    %cst_196 = arith.constant dense<0xFF800000> : vector<16xf32>
    %439 = vector.multi_reduction <maximumf>, %438, %cst_196 [1] : vector<16x64xf32> to vector<16xf32>
    %440 = vector.shape_cast %439 : vector<16xf32> to vector<16x1xf32>
    %441 = vector.broadcast %440 : vector<16x1xf32> to vector<16x64xf32>
    %442 = arith.subf %438, %441 : vector<16x64xf32>
    %443 = math.exp %442 : vector<16x64xf32>
    %cst_197 = arith.constant dense<0.000000e+00> : vector<16x32xf32>
    %444 = tpu.matmul %443, %436, %cst_197 {dimension_numbers = #tpu.dot_dimension_numbers<[1], [0], [0], [1], [0, 0, 1, 1], [], []>} : vector<16x64xf32>, vector<64x32xf32>, vector<16x32xf32> -> vector<16x32xf32>
    %cst_198 = arith.constant dense<0.000000e+00> : vector<16x32xf32>
    %445 = tpu.matmul %443, %431, %cst_198 {dimension_numbers = #tpu.dot_dimension_numbers<[1], [0], [0], [1], [0, 0, 1, 1], [], []>} : vector<16x64xf32>, vector<64x32xf32>, vector<16x32xf32> -> vector<16x32xf32>
    %446 = tpu.reciprocal %445 {approx = true} : vector<16x32xf32> -> vector<16x32xf32>
    %447 = arith.mulf %444, %446 : vector<16x32xf32>
    %c1416 = arith.constant 1416 : index
    %c0_199 = arith.constant 0 : index
    %448 = vector.load %arg2[%c1416, %c0_199] : memref<2560x128xf32, #tpu.memory_space<vmem>>, vector<32x32xf32>
    %cst_200 = arith.constant dense<0.000000e+00> : vector<16x32xf32>
    %449 = tpu.matmul %447, %448, %cst_200 {dimension_numbers = #tpu.dot_dimension_numbers<[1], [0], [0], [1], [0, 0, 1, 1], [], []>} : vector<16x32xf32>, vector<32x32xf32>, vector<16x32xf32> -> vector<16x32xf32>
    %c1448 = arith.constant 1448 : index
    %c0_201 = arith.constant 0 : index
    %450 = vector.load %arg2[%c1448, %c0_201] : memref<2560x128xf32, #tpu.memory_space<vmem>>, vector<1x32xf32>
    %451 = vector.broadcast %450 : vector<1x32xf32> to vector<16x32xf32>
    %452 = arith.addf %449, %451 : vector<16x32xf32>
    %453 = arith.addf %414, %452 : vector<16x32xf32>
    %c1456 = arith.constant 1456 : index
    %c0_202 = arith.constant 0 : index
    %454 = vector.load %arg2[%c1456, %c0_202] : memref<2560x128xf32, #tpu.memory_space<vmem>>, vector<1x32xf32>
    %c1464 = arith.constant 1464 : index
    %c0_203 = arith.constant 0 : index
    %455 = vector.load %arg2[%c1464, %c0_203] : memref<2560x128xf32, #tpu.memory_space<vmem>>, vector<1x32xf32>
    %cst_204 = arith.constant dense<0.000000e+00> : vector<16xf32>
    %456 = vector.multi_reduction <add>, %453, %cst_204 [1] : vector<16x32xf32> to vector<16xf32>
    %457 = vector.shape_cast %456 : vector<16xf32> to vector<16x1xf32>
    %cst_205 = arith.constant 3.200000e+01 : f32
    %458 = vector.broadcast %cst_205 : f32 to vector<16x1xf32>
    %459 = arith.divf %457, %458 : vector<16x1xf32>
    %460 = arith.mulf %453, %453 : vector<16x32xf32>
    %cst_206 = arith.constant dense<0.000000e+00> : vector<16xf32>
    %461 = vector.multi_reduction <add>, %460, %cst_206 [1] : vector<16x32xf32> to vector<16xf32>
    %462 = vector.shape_cast %461 : vector<16xf32> to vector<16x1xf32>
    %cst_207 = arith.constant 3.200000e+01 : f32
    %463 = vector.broadcast %cst_207 : f32 to vector<16x1xf32>
    %464 = arith.divf %462, %463 : vector<16x1xf32>
    %465 = arith.mulf %459, %459 : vector<16x1xf32>
    %466 = arith.subf %464, %465 : vector<16x1xf32>
    %467 = vector.broadcast %459 : vector<16x1xf32> to vector<16x32xf32>
    %468 = arith.subf %453, %467 : vector<16x32xf32>
    %cst_208 = arith.constant 9.99999974E-6 : f32
    %469 = vector.broadcast %cst_208 : f32 to vector<16x1xf32>
    %470 = arith.addf %466, %469 : vector<16x1xf32>
    %471 = math.rsqrt %470 : vector<16x1xf32>
    %472 = vector.broadcast %471 : vector<16x1xf32> to vector<16x32xf32>
    %473 = arith.mulf %468, %472 : vector<16x32xf32>
    %474 = vector.broadcast %454 : vector<1x32xf32> to vector<16x32xf32>
    %475 = arith.mulf %473, %474 : vector<16x32xf32>
    %476 = vector.broadcast %455 : vector<1x32xf32> to vector<16x32xf32>
    %477 = arith.addf %475, %476 : vector<16x32xf32>
    %c1472 = arith.constant 1472 : index
    %c0_209 = arith.constant 0 : index
    %478 = vector.load %arg2[%c1472, %c0_209] : memref<2560x128xf32, #tpu.memory_space<vmem>>, vector<32x64xf32>
    %cst_210 = arith.constant dense<0.000000e+00> : vector<16x64xf32>
    %479 = tpu.matmul %477, %478, %cst_210 {dimension_numbers = #tpu.dot_dimension_numbers<[1], [0], [0], [1], [0, 0, 1, 1], [], []>} : vector<16x32xf32>, vector<32x64xf32>, vector<16x64xf32> -> vector<16x64xf32>
    %c1504 = arith.constant 1504 : index
    %c0_211 = arith.constant 0 : index
    %480 = vector.load %arg2[%c1504, %c0_211] : memref<2560x128xf32, #tpu.memory_space<vmem>>, vector<1x64xf32>
    %481 = vector.broadcast %480 : vector<1x64xf32> to vector<16x64xf32>
    %482 = arith.addf %479, %481 : vector<16x64xf32>
    %cst_212 = arith.constant 5.000000e-01 : f32
    %483 = vector.broadcast %cst_212 : f32 to vector<16x64xf32>
    %484 = arith.mulf %483, %482 : vector<16x64xf32>
    %cst_213 = arith.constant 4.471500e-02 : f32
    %485 = vector.broadcast %cst_213 : f32 to vector<16x64xf32>
    %486 = arith.mulf %485, %482 : vector<16x64xf32>
    %487 = arith.mulf %486, %482 : vector<16x64xf32>
    %488 = arith.mulf %487, %482 : vector<16x64xf32>
    %489 = arith.addf %482, %488 : vector<16x64xf32>
    %cst_214 = arith.constant 0.797884583 : f32
    %490 = vector.broadcast %cst_214 : f32 to vector<16x64xf32>
    %491 = arith.mulf %490, %489 : vector<16x64xf32>
    %492 = math.tanh %491 : vector<16x64xf32>
    %cst_215 = arith.constant 1.000000e+00 : f32
    %493 = vector.broadcast %cst_215 : f32 to vector<16x64xf32>
    %494 = arith.addf %493, %492 : vector<16x64xf32>
    %495 = arith.mulf %484, %494 : vector<16x64xf32>
    %c1512 = arith.constant 1512 : index
    %c0_216 = arith.constant 0 : index
    %496 = vector.load %arg2[%c1512, %c0_216] : memref<2560x128xf32, #tpu.memory_space<vmem>>, vector<64x32xf32>
    %cst_217 = arith.constant dense<0.000000e+00> : vector<16x32xf32>
    %497 = tpu.matmul %495, %496, %cst_217 {dimension_numbers = #tpu.dot_dimension_numbers<[1], [0], [0], [1], [0, 0, 1, 1], [], []>} : vector<16x64xf32>, vector<64x32xf32>, vector<16x32xf32> -> vector<16x32xf32>
    %c1576 = arith.constant 1576 : index
    %c0_218 = arith.constant 0 : index
    %498 = vector.load %arg2[%c1576, %c0_218] : memref<2560x128xf32, #tpu.memory_space<vmem>>, vector<1x32xf32>
    %499 = vector.broadcast %498 : vector<1x32xf32> to vector<16x32xf32>
    %500 = arith.addf %497, %499 : vector<16x32xf32>
    %501 = arith.addf %477, %500 : vector<16x32xf32>
    %c1584 = arith.constant 1584 : index
    %c0_219 = arith.constant 0 : index
    %502 = vector.load %arg2[%c1584, %c0_219] : memref<2560x128xf32, #tpu.memory_space<vmem>>, vector<1x32xf32>
    %c1592 = arith.constant 1592 : index
    %c0_220 = arith.constant 0 : index
    %503 = vector.load %arg2[%c1592, %c0_220] : memref<2560x128xf32, #tpu.memory_space<vmem>>, vector<1x32xf32>
    %cst_221 = arith.constant dense<0.000000e+00> : vector<16xf32>
    %504 = vector.multi_reduction <add>, %501, %cst_221 [1] : vector<16x32xf32> to vector<16xf32>
    %505 = vector.shape_cast %504 : vector<16xf32> to vector<16x1xf32>
    %cst_222 = arith.constant 3.200000e+01 : f32
    %506 = vector.broadcast %cst_222 : f32 to vector<16x1xf32>
    %507 = arith.divf %505, %506 : vector<16x1xf32>
    %508 = arith.mulf %501, %501 : vector<16x32xf32>
    %cst_223 = arith.constant dense<0.000000e+00> : vector<16xf32>
    %509 = vector.multi_reduction <add>, %508, %cst_223 [1] : vector<16x32xf32> to vector<16xf32>
    %510 = vector.shape_cast %509 : vector<16xf32> to vector<16x1xf32>
    %cst_224 = arith.constant 3.200000e+01 : f32
    %511 = vector.broadcast %cst_224 : f32 to vector<16x1xf32>
    %512 = arith.divf %510, %511 : vector<16x1xf32>
    %513 = arith.mulf %507, %507 : vector<16x1xf32>
    %514 = arith.subf %512, %513 : vector<16x1xf32>
    %515 = vector.broadcast %507 : vector<16x1xf32> to vector<16x32xf32>
    %516 = arith.subf %501, %515 : vector<16x32xf32>
    %cst_225 = arith.constant 9.99999974E-6 : f32
    %517 = vector.broadcast %cst_225 : f32 to vector<16x1xf32>
    %518 = arith.addf %514, %517 : vector<16x1xf32>
    %519 = math.rsqrt %518 : vector<16x1xf32>
    %520 = vector.broadcast %519 : vector<16x1xf32> to vector<16x32xf32>
    %521 = arith.mulf %516, %520 : vector<16x32xf32>
    %522 = vector.broadcast %502 : vector<1x32xf32> to vector<16x32xf32>
    %523 = arith.mulf %521, %522 : vector<16x32xf32>
    %524 = vector.broadcast %503 : vector<1x32xf32> to vector<16x32xf32>
    %525 = arith.addf %523, %524 : vector<16x32xf32>
    %c1600 = arith.constant 1600 : index
    %c0_226 = arith.constant 0 : index
    %526 = vector.load %arg2[%c1600, %c0_226] : memref<2560x128xf32, #tpu.memory_space<vmem>>, vector<32x32xf32>
    %cst_227 = arith.constant dense<0.000000e+00> : vector<16x32xf32>
    %527 = tpu.matmul %525, %526, %cst_227 {dimension_numbers = #tpu.dot_dimension_numbers<[1], [0], [0], [1], [0, 0, 1, 1], [], []>} : vector<16x32xf32>, vector<32x32xf32>, vector<16x32xf32> -> vector<16x32xf32>
    %c1632 = arith.constant 1632 : index
    %c0_228 = arith.constant 0 : index
    %528 = vector.load %arg2[%c1632, %c0_228] : memref<2560x128xf32, #tpu.memory_space<vmem>>, vector<1x32xf32>
    %529 = vector.broadcast %528 : vector<1x32xf32> to vector<16x32xf32>
    %530 = arith.addf %527, %529 : vector<16x32xf32>
    %c1640 = arith.constant 1640 : index
    %c0_229 = arith.constant 0 : index
    %531 = vector.load %arg2[%c1640, %c0_229] : memref<2560x128xf32, #tpu.memory_space<vmem>>, vector<32x32xf32>
    %cst_230 = arith.constant dense<0.000000e+00> : vector<16x32xf32>
    %532 = tpu.matmul %525, %531, %cst_230 {dimension_numbers = #tpu.dot_dimension_numbers<[1], [0], [0], [1], [0, 0, 1, 1], [], []>} : vector<16x32xf32>, vector<32x32xf32>, vector<16x32xf32> -> vector<16x32xf32>
    %c1672 = arith.constant 1672 : index
    %c0_231 = arith.constant 0 : index
    %533 = vector.load %arg2[%c1672, %c0_231] : memref<2560x128xf32, #tpu.memory_space<vmem>>, vector<1x32xf32>
    %534 = vector.broadcast %533 : vector<1x32xf32> to vector<16x32xf32>
    %535 = arith.addf %532, %534 : vector<16x32xf32>
    %c1680 = arith.constant 1680 : index
    %c0_232 = arith.constant 0 : index
    %536 = vector.load %arg2[%c1680, %c0_232] : memref<2560x128xf32, #tpu.memory_space<vmem>>, vector<32x32xf32>
    %cst_233 = arith.constant dense<0.000000e+00> : vector<16x32xf32>
    %537 = tpu.matmul %525, %536, %cst_233 {dimension_numbers = #tpu.dot_dimension_numbers<[1], [0], [0], [1], [0, 0, 1, 1], [], []>} : vector<16x32xf32>, vector<32x32xf32>, vector<16x32xf32> -> vector<16x32xf32>
    %c1712 = arith.constant 1712 : index
    %c0_234 = arith.constant 0 : index
    %538 = vector.load %arg2[%c1712, %c0_234] : memref<2560x128xf32, #tpu.memory_space<vmem>>, vector<1x32xf32>
    %539 = vector.broadcast %538 : vector<1x32xf32> to vector<16x32xf32>
    %540 = arith.addf %537, %539 : vector<16x32xf32>
    %c0_235 = arith.constant 0 : index
    %c0_236 = arith.constant 0 : index
    %541 = vector.load %arg2[%c0_235, %c0_236] : memref<2560x128xf32, #tpu.memory_space<vmem>>, vector<64x16xf32>
    %c64_237 = arith.constant 64 : index
    %c0_238 = arith.constant 0 : index
    %542 = vector.load %arg2[%c64_237, %c0_238] : memref<2560x128xf32, #tpu.memory_space<vmem>>, vector<64x32xf32>
    %c128_239 = arith.constant 128 : index
    %c0_240 = arith.constant 0 : index
    %543 = vector.load %arg2[%c128_239, %c0_240] : memref<2560x128xf32, #tpu.memory_space<vmem>>, vector<16x64xf32>
    %cst_241 = arith.constant dense<0.000000e+00> : vector<64x32xf32>
    %544 = tpu.matmul %541, %535, %cst_241 {dimension_numbers = #tpu.dot_dimension_numbers<[1], [0], [0], [1], [0, 0, 1, 1], [], []>} : vector<64x16xf32>, vector<16x32xf32>, vector<64x32xf32> -> vector<64x32xf32>
    %545 = arith.mulf %544, %542 : vector<64x32xf32>
    %cst_242 = arith.constant dense<0.000000e+00> : vector<64x32xf32>
    %546 = tpu.matmul %541, %540, %cst_242 {dimension_numbers = #tpu.dot_dimension_numbers<[1], [0], [0], [1], [0, 0, 1, 1], [], []>} : vector<64x16xf32>, vector<16x32xf32>, vector<64x32xf32> -> vector<64x32xf32>
    %547 = arith.mulf %546, %542 : vector<64x32xf32>
    %cst_243 = arith.constant dense<0.000000e+00> : vector<16x64xf32>
    %548 = tpu.matmul %530, %545, %cst_243 {dimension_numbers = #tpu.dot_dimension_numbers<[1], [1], [0], [0], [0, 0, 1, 0], [], []>} : vector<16x32xf32>, vector<64x32xf32>, vector<16x64xf32> -> vector<16x64xf32>
    %549 = arith.addf %548, %543 : vector<16x64xf32>
    %cst_244 = arith.constant dense<0xFF800000> : vector<16xf32>
    %550 = vector.multi_reduction <maximumf>, %549, %cst_244 [1] : vector<16x64xf32> to vector<16xf32>
    %551 = vector.shape_cast %550 : vector<16xf32> to vector<16x1xf32>
    %552 = vector.broadcast %551 : vector<16x1xf32> to vector<16x64xf32>
    %553 = arith.subf %549, %552 : vector<16x64xf32>
    %554 = math.exp %553 : vector<16x64xf32>
    %cst_245 = arith.constant dense<0.000000e+00> : vector<16x32xf32>
    %555 = tpu.matmul %554, %547, %cst_245 {dimension_numbers = #tpu.dot_dimension_numbers<[1], [0], [0], [1], [0, 0, 1, 1], [], []>} : vector<16x64xf32>, vector<64x32xf32>, vector<16x32xf32> -> vector<16x32xf32>
    %cst_246 = arith.constant dense<0.000000e+00> : vector<16x32xf32>
    %556 = tpu.matmul %554, %542, %cst_246 {dimension_numbers = #tpu.dot_dimension_numbers<[1], [0], [0], [1], [0, 0, 1, 1], [], []>} : vector<16x64xf32>, vector<64x32xf32>, vector<16x32xf32> -> vector<16x32xf32>
    %557 = tpu.reciprocal %556 {approx = true} : vector<16x32xf32> -> vector<16x32xf32>
    %558 = arith.mulf %555, %557 : vector<16x32xf32>
    %c1720 = arith.constant 1720 : index
    %c0_247 = arith.constant 0 : index
    %559 = vector.load %arg2[%c1720, %c0_247] : memref<2560x128xf32, #tpu.memory_space<vmem>>, vector<32x32xf32>
    %cst_248 = arith.constant dense<0.000000e+00> : vector<16x32xf32>
    %560 = tpu.matmul %558, %559, %cst_248 {dimension_numbers = #tpu.dot_dimension_numbers<[1], [0], [0], [1], [0, 0, 1, 1], [], []>} : vector<16x32xf32>, vector<32x32xf32>, vector<16x32xf32> -> vector<16x32xf32>
    %c1752 = arith.constant 1752 : index
    %c0_249 = arith.constant 0 : index
    %561 = vector.load %arg2[%c1752, %c0_249] : memref<2560x128xf32, #tpu.memory_space<vmem>>, vector<1x32xf32>
    %562 = vector.broadcast %561 : vector<1x32xf32> to vector<16x32xf32>
    %563 = arith.addf %560, %562 : vector<16x32xf32>
    %564 = arith.addf %525, %563 : vector<16x32xf32>
    %c1760 = arith.constant 1760 : index
    %c0_250 = arith.constant 0 : index
    %565 = vector.load %arg2[%c1760, %c0_250] : memref<2560x128xf32, #tpu.memory_space<vmem>>, vector<1x32xf32>
    %c1768 = arith.constant 1768 : index
    %c0_251 = arith.constant 0 : index
    %566 = vector.load %arg2[%c1768, %c0_251] : memref<2560x128xf32, #tpu.memory_space<vmem>>, vector<1x32xf32>
    %cst_252 = arith.constant dense<0.000000e+00> : vector<16xf32>
    %567 = vector.multi_reduction <add>, %564, %cst_252 [1] : vector<16x32xf32> to vector<16xf32>
    %568 = vector.shape_cast %567 : vector<16xf32> to vector<16x1xf32>
    %cst_253 = arith.constant 3.200000e+01 : f32
    %569 = vector.broadcast %cst_253 : f32 to vector<16x1xf32>
    %570 = arith.divf %568, %569 : vector<16x1xf32>
    %571 = arith.mulf %564, %564 : vector<16x32xf32>
    %cst_254 = arith.constant dense<0.000000e+00> : vector<16xf32>
    %572 = vector.multi_reduction <add>, %571, %cst_254 [1] : vector<16x32xf32> to vector<16xf32>
    %573 = vector.shape_cast %572 : vector<16xf32> to vector<16x1xf32>
    %cst_255 = arith.constant 3.200000e+01 : f32
    %574 = vector.broadcast %cst_255 : f32 to vector<16x1xf32>
    %575 = arith.divf %573, %574 : vector<16x1xf32>
    %576 = arith.mulf %570, %570 : vector<16x1xf32>
    %577 = arith.subf %575, %576 : vector<16x1xf32>
    %578 = vector.broadcast %570 : vector<16x1xf32> to vector<16x32xf32>
    %579 = arith.subf %564, %578 : vector<16x32xf32>
    %cst_256 = arith.constant 9.99999974E-6 : f32
    %580 = vector.broadcast %cst_256 : f32 to vector<16x1xf32>
    %581 = arith.addf %577, %580 : vector<16x1xf32>
    %582 = math.rsqrt %581 : vector<16x1xf32>
    %583 = vector.broadcast %582 : vector<16x1xf32> to vector<16x32xf32>
    %584 = arith.mulf %579, %583 : vector<16x32xf32>
    %585 = vector.broadcast %565 : vector<1x32xf32> to vector<16x32xf32>
    %586 = arith.mulf %584, %585 : vector<16x32xf32>
    %587 = vector.broadcast %566 : vector<1x32xf32> to vector<16x32xf32>
    %588 = arith.addf %586, %587 : vector<16x32xf32>
    %c1776 = arith.constant 1776 : index
    %c0_257 = arith.constant 0 : index
    %589 = vector.load %arg2[%c1776, %c0_257] : memref<2560x128xf32, #tpu.memory_space<vmem>>, vector<32x32xf32>
    %cst_258 = arith.constant dense<0.000000e+00> : vector<16x32xf32>
    %590 = tpu.matmul %588, %589, %cst_258 {dimension_numbers = #tpu.dot_dimension_numbers<[1], [0], [0], [1], [0, 0, 1, 1], [], []>} : vector<16x32xf32>, vector<32x32xf32>, vector<16x32xf32> -> vector<16x32xf32>
    %c1808 = arith.constant 1808 : index
    %c0_259 = arith.constant 0 : index
    %591 = vector.load %arg2[%c1808, %c0_259] : memref<2560x128xf32, #tpu.memory_space<vmem>>, vector<1x32xf32>
    %592 = vector.broadcast %591 : vector<1x32xf32> to vector<16x32xf32>
    %593 = arith.addf %590, %592 : vector<16x32xf32>
    %c1816 = arith.constant 1816 : index
    %c0_260 = arith.constant 0 : index
    %594 = vector.load %arg2[%c1816, %c0_260] : memref<2560x128xf32, #tpu.memory_space<vmem>>, vector<32x32xf32>
    %cst_261 = arith.constant dense<0.000000e+00> : vector<16x32xf32>
    %595 = tpu.matmul %351, %594, %cst_261 {dimension_numbers = #tpu.dot_dimension_numbers<[1], [0], [0], [1], [0, 0, 1, 1], [], []>} : vector<16x32xf32>, vector<32x32xf32>, vector<16x32xf32> -> vector<16x32xf32>
    %c1848 = arith.constant 1848 : index
    %c0_262 = arith.constant 0 : index
    %596 = vector.load %arg2[%c1848, %c0_262] : memref<2560x128xf32, #tpu.memory_space<vmem>>, vector<1x32xf32>
    %597 = vector.broadcast %596 : vector<1x32xf32> to vector<16x32xf32>
    %598 = arith.addf %595, %597 : vector<16x32xf32>
    %c1856 = arith.constant 1856 : index
    %c0_263 = arith.constant 0 : index
    %599 = vector.load %arg2[%c1856, %c0_263] : memref<2560x128xf32, #tpu.memory_space<vmem>>, vector<32x32xf32>
    %cst_264 = arith.constant dense<0.000000e+00> : vector<16x32xf32>
    %600 = tpu.matmul %351, %599, %cst_264 {dimension_numbers = #tpu.dot_dimension_numbers<[1], [0], [0], [1], [0, 0, 1, 1], [], []>} : vector<16x32xf32>, vector<32x32xf32>, vector<16x32xf32> -> vector<16x32xf32>
    %c1888 = arith.constant 1888 : index
    %c0_265 = arith.constant 0 : index
    %601 = vector.load %arg2[%c1888, %c0_265] : memref<2560x128xf32, #tpu.memory_space<vmem>>, vector<1x32xf32>
    %602 = vector.broadcast %601 : vector<1x32xf32> to vector<16x32xf32>
    %603 = arith.addf %600, %602 : vector<16x32xf32>
    %c0_266 = arith.constant 0 : index
    %c0_267 = arith.constant 0 : index
    %604 = vector.load %arg2[%c0_266, %c0_267] : memref<2560x128xf32, #tpu.memory_space<vmem>>, vector<64x16xf32>
    %c64_268 = arith.constant 64 : index
    %c0_269 = arith.constant 0 : index
    %605 = vector.load %arg2[%c64_268, %c0_269] : memref<2560x128xf32, #tpu.memory_space<vmem>>, vector<64x32xf32>
    %c128_270 = arith.constant 128 : index
    %c0_271 = arith.constant 0 : index
    %606 = vector.load %arg2[%c128_270, %c0_271] : memref<2560x128xf32, #tpu.memory_space<vmem>>, vector<16x64xf32>
    %cst_272 = arith.constant dense<0.000000e+00> : vector<64x32xf32>
    %607 = tpu.matmul %604, %598, %cst_272 {dimension_numbers = #tpu.dot_dimension_numbers<[1], [0], [0], [1], [0, 0, 1, 1], [], []>} : vector<64x16xf32>, vector<16x32xf32>, vector<64x32xf32> -> vector<64x32xf32>
    %608 = arith.mulf %607, %605 : vector<64x32xf32>
    %cst_273 = arith.constant dense<0.000000e+00> : vector<64x32xf32>
    %609 = tpu.matmul %604, %603, %cst_273 {dimension_numbers = #tpu.dot_dimension_numbers<[1], [0], [0], [1], [0, 0, 1, 1], [], []>} : vector<64x16xf32>, vector<16x32xf32>, vector<64x32xf32> -> vector<64x32xf32>
    %610 = arith.mulf %609, %605 : vector<64x32xf32>
    %cst_274 = arith.constant dense<0.000000e+00> : vector<16x64xf32>
    %611 = tpu.matmul %593, %608, %cst_274 {dimension_numbers = #tpu.dot_dimension_numbers<[1], [1], [0], [0], [0, 0, 1, 0], [], []>} : vector<16x32xf32>, vector<64x32xf32>, vector<16x64xf32> -> vector<16x64xf32>
    %612 = arith.addf %611, %606 : vector<16x64xf32>
    %cst_275 = arith.constant dense<0xFF800000> : vector<16xf32>
    %613 = vector.multi_reduction <maximumf>, %612, %cst_275 [1] : vector<16x64xf32> to vector<16xf32>
    %614 = vector.shape_cast %613 : vector<16xf32> to vector<16x1xf32>
    %615 = vector.broadcast %614 : vector<16x1xf32> to vector<16x64xf32>
    %616 = arith.subf %612, %615 : vector<16x64xf32>
    %617 = math.exp %616 : vector<16x64xf32>
    %cst_276 = arith.constant dense<0.000000e+00> : vector<16x32xf32>
    %618 = tpu.matmul %617, %610, %cst_276 {dimension_numbers = #tpu.dot_dimension_numbers<[1], [0], [0], [1], [0, 0, 1, 1], [], []>} : vector<16x64xf32>, vector<64x32xf32>, vector<16x32xf32> -> vector<16x32xf32>
    %cst_277 = arith.constant dense<0.000000e+00> : vector<16x32xf32>
    %619 = tpu.matmul %617, %605, %cst_277 {dimension_numbers = #tpu.dot_dimension_numbers<[1], [0], [0], [1], [0, 0, 1, 1], [], []>} : vector<16x64xf32>, vector<64x32xf32>, vector<16x32xf32> -> vector<16x32xf32>
    %620 = tpu.reciprocal %619 {approx = true} : vector<16x32xf32> -> vector<16x32xf32>
    %621 = arith.mulf %618, %620 : vector<16x32xf32>
    %c1896 = arith.constant 1896 : index
    %c0_278 = arith.constant 0 : index
    %622 = vector.load %arg2[%c1896, %c0_278] : memref<2560x128xf32, #tpu.memory_space<vmem>>, vector<32x32xf32>
    %cst_279 = arith.constant dense<0.000000e+00> : vector<16x32xf32>
    %623 = tpu.matmul %621, %622, %cst_279 {dimension_numbers = #tpu.dot_dimension_numbers<[1], [0], [0], [1], [0, 0, 1, 1], [], []>} : vector<16x32xf32>, vector<32x32xf32>, vector<16x32xf32> -> vector<16x32xf32>
    %c1928 = arith.constant 1928 : index
    %c0_280 = arith.constant 0 : index
    %624 = vector.load %arg2[%c1928, %c0_280] : memref<2560x128xf32, #tpu.memory_space<vmem>>, vector<1x32xf32>
    %625 = vector.broadcast %624 : vector<1x32xf32> to vector<16x32xf32>
    %626 = arith.addf %623, %625 : vector<16x32xf32>
    %627 = arith.addf %588, %626 : vector<16x32xf32>
    %c1936 = arith.constant 1936 : index
    %c0_281 = arith.constant 0 : index
    %628 = vector.load %arg2[%c1936, %c0_281] : memref<2560x128xf32, #tpu.memory_space<vmem>>, vector<1x32xf32>
    %c1944 = arith.constant 1944 : index
    %c0_282 = arith.constant 0 : index
    %629 = vector.load %arg2[%c1944, %c0_282] : memref<2560x128xf32, #tpu.memory_space<vmem>>, vector<1x32xf32>
    %cst_283 = arith.constant dense<0.000000e+00> : vector<16xf32>
    %630 = vector.multi_reduction <add>, %627, %cst_283 [1] : vector<16x32xf32> to vector<16xf32>
    %631 = vector.shape_cast %630 : vector<16xf32> to vector<16x1xf32>
    %cst_284 = arith.constant 3.200000e+01 : f32
    %632 = vector.broadcast %cst_284 : f32 to vector<16x1xf32>
    %633 = arith.divf %631, %632 : vector<16x1xf32>
    %634 = arith.mulf %627, %627 : vector<16x32xf32>
    %cst_285 = arith.constant dense<0.000000e+00> : vector<16xf32>
    %635 = vector.multi_reduction <add>, %634, %cst_285 [1] : vector<16x32xf32> to vector<16xf32>
    %636 = vector.shape_cast %635 : vector<16xf32> to vector<16x1xf32>
    %cst_286 = arith.constant 3.200000e+01 : f32
    %637 = vector.broadcast %cst_286 : f32 to vector<16x1xf32>
    %638 = arith.divf %636, %637 : vector<16x1xf32>
    %639 = arith.mulf %633, %633 : vector<16x1xf32>
    %640 = arith.subf %638, %639 : vector<16x1xf32>
    %641 = vector.broadcast %633 : vector<16x1xf32> to vector<16x32xf32>
    %642 = arith.subf %627, %641 : vector<16x32xf32>
    %cst_287 = arith.constant 9.99999974E-6 : f32
    %643 = vector.broadcast %cst_287 : f32 to vector<16x1xf32>
    %644 = arith.addf %640, %643 : vector<16x1xf32>
    %645 = math.rsqrt %644 : vector<16x1xf32>
    %646 = vector.broadcast %645 : vector<16x1xf32> to vector<16x32xf32>
    %647 = arith.mulf %642, %646 : vector<16x32xf32>
    %648 = vector.broadcast %628 : vector<1x32xf32> to vector<16x32xf32>
    %649 = arith.mulf %647, %648 : vector<16x32xf32>
    %650 = vector.broadcast %629 : vector<1x32xf32> to vector<16x32xf32>
    %651 = arith.addf %649, %650 : vector<16x32xf32>
    %c1952 = arith.constant 1952 : index
    %c0_288 = arith.constant 0 : index
    %652 = vector.load %arg2[%c1952, %c0_288] : memref<2560x128xf32, #tpu.memory_space<vmem>>, vector<32x64xf32>
    %cst_289 = arith.constant dense<0.000000e+00> : vector<16x64xf32>
    %653 = tpu.matmul %651, %652, %cst_289 {dimension_numbers = #tpu.dot_dimension_numbers<[1], [0], [0], [1], [0, 0, 1, 1], [], []>} : vector<16x32xf32>, vector<32x64xf32>, vector<16x64xf32> -> vector<16x64xf32>
    %c1984 = arith.constant 1984 : index
    %c0_290 = arith.constant 0 : index
    %654 = vector.load %arg2[%c1984, %c0_290] : memref<2560x128xf32, #tpu.memory_space<vmem>>, vector<1x64xf32>
    %655 = vector.broadcast %654 : vector<1x64xf32> to vector<16x64xf32>
    %656 = arith.addf %653, %655 : vector<16x64xf32>
    %cst_291 = arith.constant 5.000000e-01 : f32
    %657 = vector.broadcast %cst_291 : f32 to vector<16x64xf32>
    %658 = arith.mulf %657, %656 : vector<16x64xf32>
    %cst_292 = arith.constant 4.471500e-02 : f32
    %659 = vector.broadcast %cst_292 : f32 to vector<16x64xf32>
    %660 = arith.mulf %659, %656 : vector<16x64xf32>
    %661 = arith.mulf %660, %656 : vector<16x64xf32>
    %662 = arith.mulf %661, %656 : vector<16x64xf32>
    %663 = arith.addf %656, %662 : vector<16x64xf32>
    %cst_293 = arith.constant 0.797884583 : f32
    %664 = vector.broadcast %cst_293 : f32 to vector<16x64xf32>
    %665 = arith.mulf %664, %663 : vector<16x64xf32>
    %666 = math.tanh %665 : vector<16x64xf32>
    %cst_294 = arith.constant 1.000000e+00 : f32
    %667 = vector.broadcast %cst_294 : f32 to vector<16x64xf32>
    %668 = arith.addf %667, %666 : vector<16x64xf32>
    %669 = arith.mulf %658, %668 : vector<16x64xf32>
    %c1992 = arith.constant 1992 : index
    %c0_295 = arith.constant 0 : index
    %670 = vector.load %arg2[%c1992, %c0_295] : memref<2560x128xf32, #tpu.memory_space<vmem>>, vector<64x32xf32>
    %cst_296 = arith.constant dense<0.000000e+00> : vector<16x32xf32>
    %671 = tpu.matmul %669, %670, %cst_296 {dimension_numbers = #tpu.dot_dimension_numbers<[1], [0], [0], [1], [0, 0, 1, 1], [], []>} : vector<16x64xf32>, vector<64x32xf32>, vector<16x32xf32> -> vector<16x32xf32>
    %c2056 = arith.constant 2056 : index
    %c0_297 = arith.constant 0 : index
    %672 = vector.load %arg2[%c2056, %c0_297] : memref<2560x128xf32, #tpu.memory_space<vmem>>, vector<1x32xf32>
    %673 = vector.broadcast %672 : vector<1x32xf32> to vector<16x32xf32>
    %674 = arith.addf %671, %673 : vector<16x32xf32>
    %675 = arith.addf %651, %674 : vector<16x32xf32>
    %c2064 = arith.constant 2064 : index
    %c0_298 = arith.constant 0 : index
    %676 = vector.load %arg2[%c2064, %c0_298] : memref<2560x128xf32, #tpu.memory_space<vmem>>, vector<1x32xf32>
    %c2072 = arith.constant 2072 : index
    %c0_299 = arith.constant 0 : index
    %677 = vector.load %arg2[%c2072, %c0_299] : memref<2560x128xf32, #tpu.memory_space<vmem>>, vector<1x32xf32>
    %cst_300 = arith.constant dense<0.000000e+00> : vector<16xf32>
    %678 = vector.multi_reduction <add>, %675, %cst_300 [1] : vector<16x32xf32> to vector<16xf32>
    %679 = vector.shape_cast %678 : vector<16xf32> to vector<16x1xf32>
    %cst_301 = arith.constant 3.200000e+01 : f32
    %680 = vector.broadcast %cst_301 : f32 to vector<16x1xf32>
    %681 = arith.divf %679, %680 : vector<16x1xf32>
    %682 = arith.mulf %675, %675 : vector<16x32xf32>
    %cst_302 = arith.constant dense<0.000000e+00> : vector<16xf32>
    %683 = vector.multi_reduction <add>, %682, %cst_302 [1] : vector<16x32xf32> to vector<16xf32>
    %684 = vector.shape_cast %683 : vector<16xf32> to vector<16x1xf32>
    %cst_303 = arith.constant 3.200000e+01 : f32
    %685 = vector.broadcast %cst_303 : f32 to vector<16x1xf32>
    %686 = arith.divf %684, %685 : vector<16x1xf32>
    %687 = arith.mulf %681, %681 : vector<16x1xf32>
    %688 = arith.subf %686, %687 : vector<16x1xf32>
    %689 = vector.broadcast %681 : vector<16x1xf32> to vector<16x32xf32>
    %690 = arith.subf %675, %689 : vector<16x32xf32>
    %cst_304 = arith.constant 9.99999974E-6 : f32
    %691 = vector.broadcast %cst_304 : f32 to vector<16x1xf32>
    %692 = arith.addf %688, %691 : vector<16x1xf32>
    %693 = math.rsqrt %692 : vector<16x1xf32>
    %694 = vector.broadcast %693 : vector<16x1xf32> to vector<16x32xf32>
    %695 = arith.mulf %690, %694 : vector<16x32xf32>
    %696 = vector.broadcast %676 : vector<1x32xf32> to vector<16x32xf32>
    %697 = arith.mulf %695, %696 : vector<16x32xf32>
    %698 = vector.broadcast %677 : vector<1x32xf32> to vector<16x32xf32>
    %699 = arith.addf %697, %698 : vector<16x32xf32>
    %c2080 = arith.constant 2080 : index
    %c0_305 = arith.constant 0 : index
    %700 = vector.load %arg2[%c2080, %c0_305] : memref<2560x128xf32, #tpu.memory_space<vmem>>, vector<32x32xf32>
    %cst_306 = arith.constant dense<0.000000e+00> : vector<16x32xf32>
    %701 = tpu.matmul %699, %700, %cst_306 {dimension_numbers = #tpu.dot_dimension_numbers<[1], [0], [0], [1], [0, 0, 1, 1], [], []>} : vector<16x32xf32>, vector<32x32xf32>, vector<16x32xf32> -> vector<16x32xf32>
    %c2112 = arith.constant 2112 : index
    %c0_307 = arith.constant 0 : index
    %702 = vector.load %arg2[%c2112, %c0_307] : memref<2560x128xf32, #tpu.memory_space<vmem>>, vector<1x32xf32>
    %703 = vector.broadcast %702 : vector<1x32xf32> to vector<16x32xf32>
    %704 = arith.addf %701, %703 : vector<16x32xf32>
    %c2120 = arith.constant 2120 : index
    %c0_308 = arith.constant 0 : index
    %705 = vector.load %arg2[%c2120, %c0_308] : memref<2560x128xf32, #tpu.memory_space<vmem>>, vector<32x32xf32>
    %cst_309 = arith.constant dense<0.000000e+00> : vector<16x32xf32>
    %706 = tpu.matmul %699, %705, %cst_309 {dimension_numbers = #tpu.dot_dimension_numbers<[1], [0], [0], [1], [0, 0, 1, 1], [], []>} : vector<16x32xf32>, vector<32x32xf32>, vector<16x32xf32> -> vector<16x32xf32>
    %c2152 = arith.constant 2152 : index
    %c0_310 = arith.constant 0 : index
    %707 = vector.load %arg2[%c2152, %c0_310] : memref<2560x128xf32, #tpu.memory_space<vmem>>, vector<1x32xf32>
    %708 = vector.broadcast %707 : vector<1x32xf32> to vector<16x32xf32>
    %709 = arith.addf %706, %708 : vector<16x32xf32>
    %c2160 = arith.constant 2160 : index
    %c0_311 = arith.constant 0 : index
    %710 = vector.load %arg2[%c2160, %c0_311] : memref<2560x128xf32, #tpu.memory_space<vmem>>, vector<32x32xf32>
    %cst_312 = arith.constant dense<0.000000e+00> : vector<16x32xf32>
    %711 = tpu.matmul %699, %710, %cst_312 {dimension_numbers = #tpu.dot_dimension_numbers<[1], [0], [0], [1], [0, 0, 1, 1], [], []>} : vector<16x32xf32>, vector<32x32xf32>, vector<16x32xf32> -> vector<16x32xf32>
    %c2192 = arith.constant 2192 : index
    %c0_313 = arith.constant 0 : index
    %712 = vector.load %arg2[%c2192, %c0_313] : memref<2560x128xf32, #tpu.memory_space<vmem>>, vector<1x32xf32>
    %713 = vector.broadcast %712 : vector<1x32xf32> to vector<16x32xf32>
    %714 = arith.addf %711, %713 : vector<16x32xf32>
    %c0_314 = arith.constant 0 : index
    %c0_315 = arith.constant 0 : index
    %715 = vector.load %arg2[%c0_314, %c0_315] : memref<2560x128xf32, #tpu.memory_space<vmem>>, vector<64x16xf32>
    %c64_316 = arith.constant 64 : index
    %c0_317 = arith.constant 0 : index
    %716 = vector.load %arg2[%c64_316, %c0_317] : memref<2560x128xf32, #tpu.memory_space<vmem>>, vector<64x32xf32>
    %c128_318 = arith.constant 128 : index
    %c0_319 = arith.constant 0 : index
    %717 = vector.load %arg2[%c128_318, %c0_319] : memref<2560x128xf32, #tpu.memory_space<vmem>>, vector<16x64xf32>
    %cst_320 = arith.constant dense<0.000000e+00> : vector<64x32xf32>
    %718 = tpu.matmul %715, %709, %cst_320 {dimension_numbers = #tpu.dot_dimension_numbers<[1], [0], [0], [1], [0, 0, 1, 1], [], []>} : vector<64x16xf32>, vector<16x32xf32>, vector<64x32xf32> -> vector<64x32xf32>
    %719 = arith.mulf %718, %716 : vector<64x32xf32>
    %cst_321 = arith.constant dense<0.000000e+00> : vector<64x32xf32>
    %720 = tpu.matmul %715, %714, %cst_321 {dimension_numbers = #tpu.dot_dimension_numbers<[1], [0], [0], [1], [0, 0, 1, 1], [], []>} : vector<64x16xf32>, vector<16x32xf32>, vector<64x32xf32> -> vector<64x32xf32>
    %721 = arith.mulf %720, %716 : vector<64x32xf32>
    %cst_322 = arith.constant dense<0.000000e+00> : vector<16x64xf32>
    %722 = tpu.matmul %704, %719, %cst_322 {dimension_numbers = #tpu.dot_dimension_numbers<[1], [1], [0], [0], [0, 0, 1, 0], [], []>} : vector<16x32xf32>, vector<64x32xf32>, vector<16x64xf32> -> vector<16x64xf32>
    %723 = arith.addf %722, %717 : vector<16x64xf32>
    %cst_323 = arith.constant dense<0xFF800000> : vector<16xf32>
    %724 = vector.multi_reduction <maximumf>, %723, %cst_323 [1] : vector<16x64xf32> to vector<16xf32>
    %725 = vector.shape_cast %724 : vector<16xf32> to vector<16x1xf32>
    %726 = vector.broadcast %725 : vector<16x1xf32> to vector<16x64xf32>
    %727 = arith.subf %723, %726 : vector<16x64xf32>
    %728 = math.exp %727 : vector<16x64xf32>
    %cst_324 = arith.constant dense<0.000000e+00> : vector<16x32xf32>
    %729 = tpu.matmul %728, %721, %cst_324 {dimension_numbers = #tpu.dot_dimension_numbers<[1], [0], [0], [1], [0, 0, 1, 1], [], []>} : vector<16x64xf32>, vector<64x32xf32>, vector<16x32xf32> -> vector<16x32xf32>
    %cst_325 = arith.constant dense<0.000000e+00> : vector<16x32xf32>
    %730 = tpu.matmul %728, %716, %cst_325 {dimension_numbers = #tpu.dot_dimension_numbers<[1], [0], [0], [1], [0, 0, 1, 1], [], []>} : vector<16x64xf32>, vector<64x32xf32>, vector<16x32xf32> -> vector<16x32xf32>
    %731 = tpu.reciprocal %730 {approx = true} : vector<16x32xf32> -> vector<16x32xf32>
    %732 = arith.mulf %729, %731 : vector<16x32xf32>
    %c2200 = arith.constant 2200 : index
    %c0_326 = arith.constant 0 : index
    %733 = vector.load %arg2[%c2200, %c0_326] : memref<2560x128xf32, #tpu.memory_space<vmem>>, vector<32x32xf32>
    %cst_327 = arith.constant dense<0.000000e+00> : vector<16x32xf32>
    %734 = tpu.matmul %732, %733, %cst_327 {dimension_numbers = #tpu.dot_dimension_numbers<[1], [0], [0], [1], [0, 0, 1, 1], [], []>} : vector<16x32xf32>, vector<32x32xf32>, vector<16x32xf32> -> vector<16x32xf32>
    %c2232 = arith.constant 2232 : index
    %c0_328 = arith.constant 0 : index
    %735 = vector.load %arg2[%c2232, %c0_328] : memref<2560x128xf32, #tpu.memory_space<vmem>>, vector<1x32xf32>
    %736 = vector.broadcast %735 : vector<1x32xf32> to vector<16x32xf32>
    %737 = arith.addf %734, %736 : vector<16x32xf32>
    %738 = arith.addf %699, %737 : vector<16x32xf32>
    %c2240 = arith.constant 2240 : index
    %c0_329 = arith.constant 0 : index
    %739 = vector.load %arg2[%c2240, %c0_329] : memref<2560x128xf32, #tpu.memory_space<vmem>>, vector<1x32xf32>
    %c2248 = arith.constant 2248 : index
    %c0_330 = arith.constant 0 : index
    %740 = vector.load %arg2[%c2248, %c0_330] : memref<2560x128xf32, #tpu.memory_space<vmem>>, vector<1x32xf32>
    %cst_331 = arith.constant dense<0.000000e+00> : vector<16xf32>
    %741 = vector.multi_reduction <add>, %738, %cst_331 [1] : vector<16x32xf32> to vector<16xf32>
    %742 = vector.shape_cast %741 : vector<16xf32> to vector<16x1xf32>
    %cst_332 = arith.constant 3.200000e+01 : f32
    %743 = vector.broadcast %cst_332 : f32 to vector<16x1xf32>
    %744 = arith.divf %742, %743 : vector<16x1xf32>
    %745 = arith.mulf %738, %738 : vector<16x32xf32>
    %cst_333 = arith.constant dense<0.000000e+00> : vector<16xf32>
    %746 = vector.multi_reduction <add>, %745, %cst_333 [1] : vector<16x32xf32> to vector<16xf32>
    %747 = vector.shape_cast %746 : vector<16xf32> to vector<16x1xf32>
    %cst_334 = arith.constant 3.200000e+01 : f32
    %748 = vector.broadcast %cst_334 : f32 to vector<16x1xf32>
    %749 = arith.divf %747, %748 : vector<16x1xf32>
    %750 = arith.mulf %744, %744 : vector<16x1xf32>
    %751 = arith.subf %749, %750 : vector<16x1xf32>
    %752 = vector.broadcast %744 : vector<16x1xf32> to vector<16x32xf32>
    %753 = arith.subf %738, %752 : vector<16x32xf32>
    %cst_335 = arith.constant 9.99999974E-6 : f32
    %754 = vector.broadcast %cst_335 : f32 to vector<16x1xf32>
    %755 = arith.addf %751, %754 : vector<16x1xf32>
    %756 = math.rsqrt %755 : vector<16x1xf32>
    %757 = vector.broadcast %756 : vector<16x1xf32> to vector<16x32xf32>
    %758 = arith.mulf %753, %757 : vector<16x32xf32>
    %759 = vector.broadcast %739 : vector<1x32xf32> to vector<16x32xf32>
    %760 = arith.mulf %758, %759 : vector<16x32xf32>
    %761 = vector.broadcast %740 : vector<1x32xf32> to vector<16x32xf32>
    %762 = arith.addf %760, %761 : vector<16x32xf32>
    %c2256 = arith.constant 2256 : index
    %c0_336 = arith.constant 0 : index
    %763 = vector.load %arg2[%c2256, %c0_336] : memref<2560x128xf32, #tpu.memory_space<vmem>>, vector<32x32xf32>
    %cst_337 = arith.constant dense<0.000000e+00> : vector<16x32xf32>
    %764 = tpu.matmul %762, %763, %cst_337 {dimension_numbers = #tpu.dot_dimension_numbers<[1], [0], [0], [1], [0, 0, 1, 1], [], []>} : vector<16x32xf32>, vector<32x32xf32>, vector<16x32xf32> -> vector<16x32xf32>
    %c2288 = arith.constant 2288 : index
    %c0_338 = arith.constant 0 : index
    %765 = vector.load %arg2[%c2288, %c0_338] : memref<2560x128xf32, #tpu.memory_space<vmem>>, vector<1x32xf32>
    %766 = vector.broadcast %765 : vector<1x32xf32> to vector<16x32xf32>
    %767 = arith.addf %764, %766 : vector<16x32xf32>
    %c2296 = arith.constant 2296 : index
    %c0_339 = arith.constant 0 : index
    %768 = vector.load %arg2[%c2296, %c0_339] : memref<2560x128xf32, #tpu.memory_space<vmem>>, vector<32x32xf32>
    %cst_340 = arith.constant dense<0.000000e+00> : vector<16x32xf32>
    %769 = tpu.matmul %351, %768, %cst_340 {dimension_numbers = #tpu.dot_dimension_numbers<[1], [0], [0], [1], [0, 0, 1, 1], [], []>} : vector<16x32xf32>, vector<32x32xf32>, vector<16x32xf32> -> vector<16x32xf32>
    %c2328 = arith.constant 2328 : index
    %c0_341 = arith.constant 0 : index
    %770 = vector.load %arg2[%c2328, %c0_341] : memref<2560x128xf32, #tpu.memory_space<vmem>>, vector<1x32xf32>
    %771 = vector.broadcast %770 : vector<1x32xf32> to vector<16x32xf32>
    %772 = arith.addf %769, %771 : vector<16x32xf32>
    %c2336 = arith.constant 2336 : index
    %c0_342 = arith.constant 0 : index
    %773 = vector.load %arg2[%c2336, %c0_342] : memref<2560x128xf32, #tpu.memory_space<vmem>>, vector<32x32xf32>
    %cst_343 = arith.constant dense<0.000000e+00> : vector<16x32xf32>
    %774 = tpu.matmul %351, %773, %cst_343 {dimension_numbers = #tpu.dot_dimension_numbers<[1], [0], [0], [1], [0, 0, 1, 1], [], []>} : vector<16x32xf32>, vector<32x32xf32>, vector<16x32xf32> -> vector<16x32xf32>
    %c2368 = arith.constant 2368 : index
    %c0_344 = arith.constant 0 : index
    %775 = vector.load %arg2[%c2368, %c0_344] : memref<2560x128xf32, #tpu.memory_space<vmem>>, vector<1x32xf32>
    %776 = vector.broadcast %775 : vector<1x32xf32> to vector<16x32xf32>
    %777 = arith.addf %774, %776 : vector<16x32xf32>
    %c0_345 = arith.constant 0 : index
    %c0_346 = arith.constant 0 : index
    %778 = vector.load %arg2[%c0_345, %c0_346] : memref<2560x128xf32, #tpu.memory_space<vmem>>, vector<64x16xf32>
    %c64_347 = arith.constant 64 : index
    %c0_348 = arith.constant 0 : index
    %779 = vector.load %arg2[%c64_347, %c0_348] : memref<2560x128xf32, #tpu.memory_space<vmem>>, vector<64x32xf32>
    %c128_349 = arith.constant 128 : index
    %c0_350 = arith.constant 0 : index
    %780 = vector.load %arg2[%c128_349, %c0_350] : memref<2560x128xf32, #tpu.memory_space<vmem>>, vector<16x64xf32>
    %cst_351 = arith.constant dense<0.000000e+00> : vector<64x32xf32>
    %781 = tpu.matmul %778, %772, %cst_351 {dimension_numbers = #tpu.dot_dimension_numbers<[1], [0], [0], [1], [0, 0, 1, 1], [], []>} : vector<64x16xf32>, vector<16x32xf32>, vector<64x32xf32> -> vector<64x32xf32>
    %782 = arith.mulf %781, %779 : vector<64x32xf32>
    %cst_352 = arith.constant dense<0.000000e+00> : vector<64x32xf32>
    %783 = tpu.matmul %778, %777, %cst_352 {dimension_numbers = #tpu.dot_dimension_numbers<[1], [0], [0], [1], [0, 0, 1, 1], [], []>} : vector<64x16xf32>, vector<16x32xf32>, vector<64x32xf32> -> vector<64x32xf32>
    %784 = arith.mulf %783, %779 : vector<64x32xf32>
    %cst_353 = arith.constant dense<0.000000e+00> : vector<16x64xf32>
    %785 = tpu.matmul %767, %782, %cst_353 {dimension_numbers = #tpu.dot_dimension_numbers<[1], [1], [0], [0], [0, 0, 1, 0], [], []>} : vector<16x32xf32>, vector<64x32xf32>, vector<16x64xf32> -> vector<16x64xf32>
    %786 = arith.addf %785, %780 : vector<16x64xf32>
    %cst_354 = arith.constant dense<0xFF800000> : vector<16xf32>
    %787 = vector.multi_reduction <maximumf>, %786, %cst_354 [1] : vector<16x64xf32> to vector<16xf32>
    %788 = vector.shape_cast %787 : vector<16xf32> to vector<16x1xf32>
    %789 = vector.broadcast %788 : vector<16x1xf32> to vector<16x64xf32>
    %790 = arith.subf %786, %789 : vector<16x64xf32>
    %791 = math.exp %790 : vector<16x64xf32>
    %cst_355 = arith.constant dense<0.000000e+00> : vector<16x32xf32>
    %792 = tpu.matmul %791, %784, %cst_355 {dimension_numbers = #tpu.dot_dimension_numbers<[1], [0], [0], [1], [0, 0, 1, 1], [], []>} : vector<16x64xf32>, vector<64x32xf32>, vector<16x32xf32> -> vector<16x32xf32>
    %cst_356 = arith.constant dense<0.000000e+00> : vector<16x32xf32>
    %793 = tpu.matmul %791, %779, %cst_356 {dimension_numbers = #tpu.dot_dimension_numbers<[1], [0], [0], [1], [0, 0, 1, 1], [], []>} : vector<16x64xf32>, vector<64x32xf32>, vector<16x32xf32> -> vector<16x32xf32>
    %794 = tpu.reciprocal %793 {approx = true} : vector<16x32xf32> -> vector<16x32xf32>
    %795 = arith.mulf %792, %794 : vector<16x32xf32>
    %c2376 = arith.constant 2376 : index
    %c0_357 = arith.constant 0 : index
    %796 = vector.load %arg2[%c2376, %c0_357] : memref<2560x128xf32, #tpu.memory_space<vmem>>, vector<32x32xf32>
    %cst_358 = arith.constant dense<0.000000e+00> : vector<16x32xf32>
    %797 = tpu.matmul %795, %796, %cst_358 {dimension_numbers = #tpu.dot_dimension_numbers<[1], [0], [0], [1], [0, 0, 1, 1], [], []>} : vector<16x32xf32>, vector<32x32xf32>, vector<16x32xf32> -> vector<16x32xf32>
    %c2408 = arith.constant 2408 : index
    %c0_359 = arith.constant 0 : index
    %798 = vector.load %arg2[%c2408, %c0_359] : memref<2560x128xf32, #tpu.memory_space<vmem>>, vector<1x32xf32>
    %799 = vector.broadcast %798 : vector<1x32xf32> to vector<16x32xf32>
    %800 = arith.addf %797, %799 : vector<16x32xf32>
    %801 = arith.addf %762, %800 : vector<16x32xf32>
    %c2416 = arith.constant 2416 : index
    %c0_360 = arith.constant 0 : index
    %802 = vector.load %arg2[%c2416, %c0_360] : memref<2560x128xf32, #tpu.memory_space<vmem>>, vector<1x32xf32>
    %c2424 = arith.constant 2424 : index
    %c0_361 = arith.constant 0 : index
    %803 = vector.load %arg2[%c2424, %c0_361] : memref<2560x128xf32, #tpu.memory_space<vmem>>, vector<1x32xf32>
    %cst_362 = arith.constant dense<0.000000e+00> : vector<16xf32>
    %804 = vector.multi_reduction <add>, %801, %cst_362 [1] : vector<16x32xf32> to vector<16xf32>
    %805 = vector.shape_cast %804 : vector<16xf32> to vector<16x1xf32>
    %cst_363 = arith.constant 3.200000e+01 : f32
    %806 = vector.broadcast %cst_363 : f32 to vector<16x1xf32>
    %807 = arith.divf %805, %806 : vector<16x1xf32>
    %808 = arith.mulf %801, %801 : vector<16x32xf32>
    %cst_364 = arith.constant dense<0.000000e+00> : vector<16xf32>
    %809 = vector.multi_reduction <add>, %808, %cst_364 [1] : vector<16x32xf32> to vector<16xf32>
    %810 = vector.shape_cast %809 : vector<16xf32> to vector<16x1xf32>
    %cst_365 = arith.constant 3.200000e+01 : f32
    %811 = vector.broadcast %cst_365 : f32 to vector<16x1xf32>
    %812 = arith.divf %810, %811 : vector<16x1xf32>
    %813 = arith.mulf %807, %807 : vector<16x1xf32>
    %814 = arith.subf %812, %813 : vector<16x1xf32>
    %815 = vector.broadcast %807 : vector<16x1xf32> to vector<16x32xf32>
    %816 = arith.subf %801, %815 : vector<16x32xf32>
    %cst_366 = arith.constant 9.99999974E-6 : f32
    %817 = vector.broadcast %cst_366 : f32 to vector<16x1xf32>
    %818 = arith.addf %814, %817 : vector<16x1xf32>
    %819 = math.rsqrt %818 : vector<16x1xf32>
    %820 = vector.broadcast %819 : vector<16x1xf32> to vector<16x32xf32>
    %821 = arith.mulf %816, %820 : vector<16x32xf32>
    %822 = vector.broadcast %802 : vector<1x32xf32> to vector<16x32xf32>
    %823 = arith.mulf %821, %822 : vector<16x32xf32>
    %824 = vector.broadcast %803 : vector<1x32xf32> to vector<16x32xf32>
    %825 = arith.addf %823, %824 : vector<16x32xf32>
    %c2432 = arith.constant 2432 : index
    %c0_367 = arith.constant 0 : index
    %826 = vector.load %arg2[%c2432, %c0_367] : memref<2560x128xf32, #tpu.memory_space<vmem>>, vector<32x64xf32>
    %cst_368 = arith.constant dense<0.000000e+00> : vector<16x64xf32>
    %827 = tpu.matmul %825, %826, %cst_368 {dimension_numbers = #tpu.dot_dimension_numbers<[1], [0], [0], [1], [0, 0, 1, 1], [], []>} : vector<16x32xf32>, vector<32x64xf32>, vector<16x64xf32> -> vector<16x64xf32>
    %c2464 = arith.constant 2464 : index
    %c0_369 = arith.constant 0 : index
    %828 = vector.load %arg2[%c2464, %c0_369] : memref<2560x128xf32, #tpu.memory_space<vmem>>, vector<1x64xf32>
    %829 = vector.broadcast %828 : vector<1x64xf32> to vector<16x64xf32>
    %830 = arith.addf %827, %829 : vector<16x64xf32>
    %cst_370 = arith.constant 5.000000e-01 : f32
    %831 = vector.broadcast %cst_370 : f32 to vector<16x64xf32>
    %832 = arith.mulf %831, %830 : vector<16x64xf32>
    %cst_371 = arith.constant 4.471500e-02 : f32
    %833 = vector.broadcast %cst_371 : f32 to vector<16x64xf32>
    %834 = arith.mulf %833, %830 : vector<16x64xf32>
    %835 = arith.mulf %834, %830 : vector<16x64xf32>
    %836 = arith.mulf %835, %830 : vector<16x64xf32>
    %837 = arith.addf %830, %836 : vector<16x64xf32>
    %cst_372 = arith.constant 0.797884583 : f32
    %838 = vector.broadcast %cst_372 : f32 to vector<16x64xf32>
    %839 = arith.mulf %838, %837 : vector<16x64xf32>
    %840 = math.tanh %839 : vector<16x64xf32>
    %cst_373 = arith.constant 1.000000e+00 : f32
    %841 = vector.broadcast %cst_373 : f32 to vector<16x64xf32>
    %842 = arith.addf %841, %840 : vector<16x64xf32>
    %843 = arith.mulf %832, %842 : vector<16x64xf32>
    %c2472 = arith.constant 2472 : index
    %c0_374 = arith.constant 0 : index
    %844 = vector.load %arg2[%c2472, %c0_374] : memref<2560x128xf32, #tpu.memory_space<vmem>>, vector<64x32xf32>
    %cst_375 = arith.constant dense<0.000000e+00> : vector<16x32xf32>
    %845 = tpu.matmul %843, %844, %cst_375 {dimension_numbers = #tpu.dot_dimension_numbers<[1], [0], [0], [1], [0, 0, 1, 1], [], []>} : vector<16x64xf32>, vector<64x32xf32>, vector<16x32xf32> -> vector<16x32xf32>
    %c2536 = arith.constant 2536 : index
    %c0_376 = arith.constant 0 : index
    %846 = vector.load %arg2[%c2536, %c0_376] : memref<2560x128xf32, #tpu.memory_space<vmem>>, vector<1x32xf32>
    %847 = vector.broadcast %846 : vector<1x32xf32> to vector<16x32xf32>
    %848 = arith.addf %845, %847 : vector<16x32xf32>
    %849 = arith.addf %825, %848 : vector<16x32xf32>
    %c2544 = arith.constant 2544 : index
    %c0_377 = arith.constant 0 : index
    %850 = vector.load %arg2[%c2544, %c0_377] : memref<2560x128xf32, #tpu.memory_space<vmem>>, vector<1x32xf32>
    %c2552 = arith.constant 2552 : index
    %c0_378 = arith.constant 0 : index
    %851 = vector.load %arg2[%c2552, %c0_378] : memref<2560x128xf32, #tpu.memory_space<vmem>>, vector<1x32xf32>
    %cst_379 = arith.constant dense<0.000000e+00> : vector<16xf32>
    %852 = vector.multi_reduction <add>, %849, %cst_379 [1] : vector<16x32xf32> to vector<16xf32>
    %853 = vector.shape_cast %852 : vector<16xf32> to vector<16x1xf32>
    %cst_380 = arith.constant 3.200000e+01 : f32
    %854 = vector.broadcast %cst_380 : f32 to vector<16x1xf32>
    %855 = arith.divf %853, %854 : vector<16x1xf32>
    %856 = arith.mulf %849, %849 : vector<16x32xf32>
    %cst_381 = arith.constant dense<0.000000e+00> : vector<16xf32>
    %857 = vector.multi_reduction <add>, %856, %cst_381 [1] : vector<16x32xf32> to vector<16xf32>
    %858 = vector.shape_cast %857 : vector<16xf32> to vector<16x1xf32>
    %cst_382 = arith.constant 3.200000e+01 : f32
    %859 = vector.broadcast %cst_382 : f32 to vector<16x1xf32>
    %860 = arith.divf %858, %859 : vector<16x1xf32>
    %861 = arith.mulf %855, %855 : vector<16x1xf32>
    %862 = arith.subf %860, %861 : vector<16x1xf32>
    %863 = vector.broadcast %855 : vector<16x1xf32> to vector<16x32xf32>
    %864 = arith.subf %849, %863 : vector<16x32xf32>
    %cst_383 = arith.constant 9.99999974E-6 : f32
    %865 = vector.broadcast %cst_383 : f32 to vector<16x1xf32>
    %866 = arith.addf %862, %865 : vector<16x1xf32>
    %867 = math.rsqrt %866 : vector<16x1xf32>
    %868 = vector.broadcast %867 : vector<16x1xf32> to vector<16x32xf32>
    %869 = arith.mulf %864, %868 : vector<16x32xf32>
    %870 = vector.broadcast %850 : vector<1x32xf32> to vector<16x32xf32>
    %871 = arith.mulf %869, %870 : vector<16x32xf32>
    %872 = vector.broadcast %851 : vector<1x32xf32> to vector<16x32xf32>
    %873 = arith.addf %871, %872 : vector<16x32xf32>
    %c168 = arith.constant 168 : index
    %c0_384 = arith.constant 0 : index
    %874 = vector.load %arg2[%c168, %c0_384] : memref<2560x128xf32, #tpu.memory_space<vmem>>, vector<32x128xf32>
    %cst_385 = arith.constant dense<0.000000e+00> : vector<16x128xf32>
    %875 = tpu.matmul %873, %874, %cst_385 {dimension_numbers = #tpu.dot_dimension_numbers<[1], [0], [0], [1], [0, 0, 1, 1], [], []>} : vector<16x32xf32>, vector<32x128xf32>, vector<16x128xf32> -> vector<16x128xf32>
    %c200 = arith.constant 200 : index
    %c0_386 = arith.constant 0 : index
    %876 = vector.load %arg2[%c200, %c0_386] : memref<2560x128xf32, #tpu.memory_space<vmem>>, vector<1x128xf32>
    %877 = vector.broadcast %876 : vector<1x128xf32> to vector<16x128xf32>
    %878 = arith.addf %875, %877 : vector<16x128xf32>
    %c0_387 = arith.constant 0 : index
    %c0_388 = arith.constant 0 : index
    %879 = vector.load %arg3[%c0_387, %c0_388] : memref<16x128xf32, #tpu.memory_space<vmem>>, vector<16x128xf32>
    tpu.vector_store %arg3[%c0_387, %c0_388], %878 {strides = array<i32>} : memref<16x128xf32, #tpu.memory_space<vmem>>, vector<16x128xf32>,
    return
  }
}

</mosaic_0001>

<llo_original>
// kernel: tpu_custom_call.1
$region0: #{tpu_custom_call.1}
  #allocation0 [shape = 'u32[]', space=smem, size = 0x4, offset = 0x4, fixed_abs, tag = 'smem constant byte address 0x4 - core index']
  #allocation1 [shape = 'u32[72,128]{1,0:T(1,128)}', space=vmem, size = 0x9000, scoped, tag = 'internal scratch']
  %s0 = inlined_call_operand.vmem [shape: f32[16,4], index: 0, kind: input, shape index: {}]
  %s1 = inlined_call_operand.hbm [shape: f32[2], index: 1, kind: input, shape index: {}]
  %s2 = inlined_call_operand.hbm [shape: f32[2560,128], index: 2, kind: input, shape index: {}]
  %s3 = inlined_call_operand.hbm [shape: f32[16,128], index: 3, kind: output, shape index: {}]
  %s4 = sld [smem:[#allocation0]]
  $region30: #{tpu_custom_call.1} parent=0
    _
  %s6 = ssub.s32 1, %s4
  %s7 = scalar_select 0, %s6, %s4
  $region1: #{tpu_custom_call.1} parent=0
    #allocation2 [shape = 'u8[512]{0}', space=smem, size = 0x200, scoped, tag = 'input window, operand 1, single buffered']
    #allocation3 [shape = 's32[1]{0}', space=sflag, size = 0x4, scoped, tag = 'scoped memory for tpu_custom_call.1']
    #allocation4 [shape = 's32[1]{0}', space=sflag, size = 0x4, scoped, tag = 'scoped memory for tpu_custom_call.1']
    #allocation5 [shape = 's32[1]{0}', space=sflag, size = 0x4, scoped, tag = 'scoped memory for tpu_custom_call.1']
    #allocation6 [shape = 'u8[1310720]{0}', space=vmem, size = 0x140000, scoped, tag = 'input window, operand 2, single buffered']
    #allocation7 [shape = 'u8[8192]{0}', space=vmem, size = 0x2000, scoped, tag = 'output window, operand 0, single buffered']
    %8 = vsyncpa [#allocation5], 0
    %9 = vsyncpa [#allocation3], 0
    %10 = vsyncpa [#allocation4], 0
    // Predicated region
    $region2: #{tpu_custom_call.1} parent=1 // pred_check
      _
    $region3: #{tpu_custom_call.1} parent=1 // pred_check_branch
      %12 = sbr.rel (0) target = $region5
    $region4: #{tpu_custom_call.1} parent=1 // pred_region
      _
    $region5: #{tpu_custom_call.1} parent=1 // pred_fallthru
      _
    // Predicated region
    $region6: #{tpu_custom_call.1} parent=1 // pred_check
      _
    $region7: #{tpu_custom_call.1} parent=1 // pred_check_branch
      %14 = sbr.rel (0) target = $region9
    $region8: #{tpu_custom_call.1} parent=1 // pred_region
      %16 = vsyncadd [#allocation5], 0
      %s18 = sshll.u32 %s1, 4
      %s19 = int_to_ptr.hbm [resolvable:$true] %s18
      %21 = dma.hbm_to_smem %s19, 16, [#allocation2], [#allocation5]
    $region9: #{tpu_custom_call.1} parent=1 // pred_fallthru
      _
    // Predicated region
    $region10: #{tpu_custom_call.1} parent=1 // pred_check
      _
    $region11: #{tpu_custom_call.1} parent=1 // pred_check_branch
      %23 = sbr.rel (0) target = $region13
    $region12: #{tpu_custom_call.1} parent=1 // pred_region
      %25 = vsyncadd [#allocation3], 0
      %s26 = sshll.u32 %s2, 4
      %s27 = int_to_ptr.hbm [resolvable:$true] %s26
      %s28 = sshll.u32 [#allocation6], 4
      %s29 = int_to_ptr.vmem [resolvable:$true] %s28
      %34 = dma.hbm_to_vmem [thread:$0]  %s27, 40960, %s29, [#allocation3], 128, 128, 8
    $region13: #{tpu_custom_call.1} parent=1 // pred_fallthru
      _
    // Predicated region
    $region14: #{tpu_custom_call.1} parent=1 // pred_check
      _
    $region15: #{tpu_custom_call.1} parent=1 // pred_check_branch
      %36 = sbr.rel (0) target = $region17
    $region16: #{tpu_custom_call.1} parent=1 // pred_region
      %38 = dma.done [#allocation5], 16
    $region17: #{tpu_custom_call.1} parent=1 // pred_fallthru
      _
    // Predicated region
    $region18: #{tpu_custom_call.1} parent=1 // pred_check
      _
    $region19: #{tpu_custom_call.1} parent=1 // pred_check_branch
      %40 = sbr.rel (0) target = $region21
    $region20: #{tpu_custom_call.1} parent=1 // pred_region
      %42 = dma.done [#allocation3], 40960
    $region21: #{tpu_custom_call.1} parent=1 // pred_fallthru
      _
    %43 = sfence
    %v44 = vld [vmem:[%s0] sm:$0xff]
    %v45 = vld [vmem:[%s0 + $0x8] sm:$0xff]
    %v46 = vld [vmem:[#allocation6 + $0x90] sm:$0xf]
    %v47 = vlaneseq
    %v48 = vshrl.u32 %v47, 7
    %v49 = vadd.s32 %v48, 8
    %v50 = vlaneseq
    %v51 = vand.u32 %v50, 127
    %vm52 = vcmp.lt.s32.totalorder %v48, 8
    %vm53 = vcmp.lt.s32.totalorder %v49, 8
    %s54 = sld [smem:[#allocation2]]
    %s55 = sld [smem:[#allocation2 + $0x1]]
    %v56 = vstv %s54
    %v57 = vstv %s55
    %v58 = vsel %vm52, %v56, %v57
    %v59 = vsel %vm53, %v56, %v57
    %v60 = vld [vmem:[#allocation6 + $0x98] sm:$0xff]
    %v61 = vld [vmem:[#allocation6 + $0xa0] sm:$0xff]
    %vm62 = vcmask 31744
    %v64 = vsel %vm62, %v44, 0
    %v67 = vsel %vm62, %v45, 0
    %vm69 = vcmask 1043456
    %v71 = vsel %vm69, %v46, 0
    %73 = vmatpush.msra.mxu0 0.0
    %74 = vmatpush.msra.mxu0 0.0
    %75 = vmatpush.msra.mxu0 0.0
    %76 = vmatpush.msra.mxu0 0.0
    %77 = vmatpush.msra.mxu0 0.0
    %78 = vmatpush.msra.mxu0 0.0
    %79 = vmatpush.msra.mxu0 0.0
    %80 = vmatpush.msra.mxu0 0.0
    %81 = vmatpush.msra.mxu0 0.0
    %82 = vmatpush.msra.mxu0 0.0
    %83 = vmatpush.msra.mxu0 0.0
    %84 = vmatpush.msra.mxu0 0.0
    %85 = vmatpush.msra.mxu0 0.0
    %86 = vmatpush.msra.mxu0 0.0
    %87 = vmatpush.msra.mxu0 0.0
    %88 = vmatpush.msra.mxu0 %v71
    %89 = vmatmul.f32.gmra.mxu0 %v64
    %v90 = vpop.f32.mrf.mxu0
    %v91 = vadd.f32 %v60, %v90
    %92 = vmatmul.f32.gmra.mxu0 %v67
    %v93 = vpop.f32.mrf.mxu0
    %v94 = vadd.f32 %v61, %v93
    %95 = vdwg.mxu0
    %vm96 = vcmp.eq.s32.totalorder %v51, 31
    %v97 = vsel %vm96, %v58, 0.0
    %v98 = vsel %vm96, %v59, 0.0
    %v99 = vadd.f32 %v91, %v97
    %v100 = vadd.f32 %v94, %v98
    %v101 = vld [vmem:[#allocation6 + $0xd0] sm:$0xff]
    %v102 = vld [vmem:[#allocation6 + $0xd8] sm:$0xff]
    %v103 = vld [vmem:[#allocation6 + $0xe0] sm:$0xff]
    %v104 = vld [vmem:[#allocation6 + $0xe8] sm:$0xff]
    %v105 = vld [vmem:[#allocation6 + $0xf0] sm:$0x1]
    %v106 = vperm.slane %v105, 0
    %vm107 = vcmask 261120
    %v109 = vsel %vm107, %v99, 0
    %v112 = vsel %vm107, %v100, 0
    %114 = vmatpush.msra.mxu0 0.0
    %115 = vmatpush.msra.mxu0 0.0
    %116 = vmatpush.msra.mxu0 0.0
    %117 = vmatpush.msra.mxu0 0.0
    %118 = vmatpush.msra.mxu0 0.0
    %119 = vmatpush.msra.mxu0 0.0
    %120 = vmatpush.msra.mxu0 0.0
    %121 = vmatpush.msra.mxu0 0.0
    %122 = vmatpush.msra.mxu0 0.0
    %123 = vmatpush.msra.mxu0 0.0
    %124 = vmatpush.msra.mxu0 0.0
    %125 = vmatpush.msra.mxu0 0.0
    %126 = vmatpush.msra.mxu0 %v104
    %127 = vmatpush.msra.mxu0 %v103
    %128 = vmatpush.msra.mxu0 %v102
    %129 = vmatpush.msra.mxu0 %v101
    %130 = vmatmul.f32.gmra.mxu0 %v109
    %v131 = vpop.f32.mrf.mxu0
    %v132 = vadd.f32 %v106, %v131
    %133 = vmatmul.f32.gmra.mxu0 %v112
    %v134 = vpop.f32.mrf.mxu0
    %v135 = vadd.f32 %v106, %v134
    %136 = vdwg.mxu0
    %v137 = vld [vmem:[#allocation6 + $0xf8] sm:$0xff]
    %v138 = vld [vmem:[#allocation6 + $0x100] sm:$0xff]
    %v139 = vld [vmem:[#allocation6 + $0x108] sm:$0xff]
    %v140 = vld [vmem:[#allocation6 + $0x110] sm:$0xff]
    %v141 = vld [vmem:[#allocation6 + $0x118] sm:$0x1]
    %v142 = vperm.slane %v141, 0
    %143 = vmatpush.msra.mxu0 0.0
    %144 = vmatpush.msra.mxu0 0.0
    %145 = vmatpush.msra.mxu0 0.0
    %146 = vmatpush.msra.mxu0 0.0
    %147 = vmatpush.msra.mxu0 0.0
    %148 = vmatpush.msra.mxu0 0.0
    %149 = vmatpush.msra.mxu0 0.0
    %150 = vmatpush.msra.mxu0 0.0
    %151 = vmatpush.msra.mxu0 0.0
    %152 = vmatpush.msra.mxu0 0.0
    %153 = vmatpush.msra.mxu0 0.0
    %154 = vmatpush.msra.mxu0 0.0
    %155 = vmatpush.msra.mxu0 %v140
    %156 = vmatpush.msra.mxu0 %v139
    %157 = vmatpush.msra.mxu0 %v138
    %158 = vmatpush.msra.mxu0 %v137
    %159 = vmatmul.f32.gmra.mxu0 %v109
    %v160 = vpop.f32.mrf.mxu0
    %v161 = vadd.f32 %v142, %v160
    %162 = vmatmul.f32.gmra.mxu0 %v112
    %v163 = vpop.f32.mrf.mxu0
    %v164 = vadd.f32 %v142, %v163
    %165 = vdwg.mxu0
    %v166 = vld [vmem:[#allocation6 + $0x120] sm:$0xff]
    %v167 = vld [vmem:[#allocation6 + $0x128] sm:$0xff]
    %v168 = vld [vmem:[#allocation6 + $0x130] sm:$0xff]
    %v169 = vld [vmem:[#allocation6 + $0x138] sm:$0xff]
    %v170 = vld [vmem:[#allocation6 + $0x140] sm:$0x1]
    %v171 = vperm.slane %v170, 0
    %172 = vmatpush.msra.mxu0 0.0
    %173 = vmatpush.msra.mxu0 0.0
    %174 = vmatpush.msra.mxu0 0.0
    %175 = vmatpush.msra.mxu0 0.0
    %176 = vmatpush.msra.mxu0 0.0
    %177 = vmatpush.msra.mxu0 0.0
    %178 = vmatpush.msra.mxu0 0.0
    %179 = vmatpush.msra.mxu0 0.0
    %180 = vmatpush.msra.mxu0 0.0
    %181 = vmatpush.msra.mxu0 0.0
    %182 = vmatpush.msra.mxu0 0.0
    %183 = vmatpush.msra.mxu0 0.0
    %184 = vmatpush.msra.mxu0 %v169
    %185 = vmatpush.msra.mxu0 %v168
    %186 = vmatpush.msra.mxu0 %v167
    %187 = vmatpush.msra.mxu0 %v166
    %188 = vmatmul.f32.gmra.mxu0 %v109
    %v189 = vpop.f32.mrf.mxu0
    %v190 = vadd.f32 %v171, %v189
    %191 = vmatmul.f32.gmra.mxu0 %v112
    %v192 = vpop.f32.mrf.mxu0
    %v193 = vadd.f32 %v171, %v192
    %194 = vdwg.mxu0
    %v195 = vld [vmem:[#allocation6] sm:$0xff]
    %v196 = vld [vmem:[#allocation6 + $0x8] sm:$0xff]
    %v197 = vld [vmem:[#allocation6 + $0x10] sm:$0xff]
    %v198 = vld [vmem:[#allocation6 + $0x18] sm:$0xff]
    %v199 = vld [vmem:[#allocation6 + $0x20] sm:$0xff]
    %v200 = vld [vmem:[#allocation6 + $0x28] sm:$0xff]
    %v201 = vld [vmem:[#allocation6 + $0x30] sm:$0xff]
    %v202 = vld [vmem:[#allocation6 + $0x38] sm:$0xff]
    %v203 = vld [vmem:[#allocation6 + $0x40] sm:$0xff]
    %v204 = vld [vmem:[#allocation6 + $0x48] sm:$0xff]
    %v205 = vld [vmem:[#allocation6 + $0x50] sm:$0xff]
    %v206 = vld [vmem:[#allocation6 + $0x58] sm:$0xff]
    %v207 = vld [vmem:[#allocation6 + $0x60] sm:$0xff]
    %v208 = vld [vmem:[#allocation6 + $0x68] sm:$0xff]
    %v209 = vld [vmem:[#allocation6 + $0x70] sm:$0xff]
    %v210 = vld [vmem:[#allocation6 + $0x78] sm:$0xff]
    %v211 = vld [vmem:[#allocation6 + $0x80] sm:$0xff]
    %v212 = vld [vmem:[#allocation6 + $0x88] sm:$0xff]
    %vm213 = vcmask 130048
    %v215 = vsel %vm213, %v195, 0
    %v218 = vsel %vm213, %v196, 0
    %v221 = vsel %vm213, %v197, 0
    %v224 = vsel %vm213, %v198, 0
    %v227 = vsel %vm213, %v199, 0
    %v230 = vsel %vm213, %v200, 0
    %v233 = vsel %vm213, %v201, 0
    %v236 = vsel %vm213, %v202, 0
    %238 = vmatpush.msra.mxu0 0.0
    %239 = vmatpush.msra.mxu0 0.0
    %240 = vmatpush.msra.mxu0 0.0
    %241 = vmatpush.msra.mxu0 0.0
    %242 = vmatpush.msra.mxu0 0.0
    %243 = vmatpush.msra.mxu0 0.0
    %244 = vmatpush.msra.mxu0 0.0
    %245 = vmatpush.msra.mxu0 0.0
    %246 = vmatpush.msra.mxu0 0.0
    %247 = vmatpush.msra.mxu0 0.0
    %248 = vmatpush.msra.mxu0 0.0
    %249 = vmatpush.msra.mxu0 0.0
    %250 = vmatpush.msra.mxu0 0.0
    %251 = vmatpush.msra.mxu0 0.0
    %252 = vmatpush.msra.mxu0 %v164
    %253 = vmatpush.msra.mxu0 %v161
    %254 = vmatmul.f32.gmra.mxu0 %v215
    %v255 = vpop.f32.mrf.mxu0
    %v256 = vadd.f32 0.0, %v255
    %257 = vmatmul.f32.gmra.mxu0 %v218
    %v258 = vpop.f32.mrf.mxu0
    %v259 = vadd.f32 0.0, %v258
    %260 = vmatmul.f32.gmra.mxu0 %v221
    %v261 = vpop.f32.mrf.mxu0
    %v262 = vadd.f32 0.0, %v261
    %263 = vmatmul.f32.gmra.mxu0 %v224
    %v264 = vpop.f32.mrf.mxu0
    %v265 = vadd.f32 0.0, %v264
    %266 = vmatmul.f32.gmra.mxu0 %v227
    %v267 = vpop.f32.mrf.mxu0
    %v268 = vadd.f32 0.0, %v267
    %269 = vmatmul.f32.gmra.mxu0 %v230
    %v270 = vpop.f32.mrf.mxu0
    %v271 = vadd.f32 0.0, %v270
    %272 = vmatmul.f32.gmra.mxu0 %v233
    %v273 = vpop.f32.mrf.mxu0
    %v274 = vadd.f32 0.0, %v273
    %275 = vmatmul.f32.gmra.mxu0 %v236
    %v276 = vpop.f32.mrf.mxu0
    %v277 = vadd.f32 0.0, %v276
    %278 = vdwg.mxu0
    %v279 = vmul.f32 %v256, %v203
    %v280 = vmul.f32 %v259, %v204
    %v281 = vmul.f32 %v262, %v205
    %v282 = vmul.f32 %v265, %v206
    %v283 = vmul.f32 %v268, %v207
    %v284 = vmul.f32 %v271, %v208
    %v285 = vmul.f32 %v274, %v209
    %v286 = vmul.f32 %v277, %v210
    %287 = vmatpush.msra.mxu0 0.0
    %288 = vmatpush.msra.mxu0 0.0
    %289 = vmatpush.msra.mxu0 0.0
    %290 = vmatpush.msra.mxu0 0.0
    %291 = vmatpush.msra.mxu0 0.0
    %292 = vmatpush.msra.mxu0 0.0
    %293 = vmatpush.msra.mxu0 0.0
    %294 = vmatpush.msra.mxu0 0.0
    %295 = vmatpush.msra.mxu0 0.0
    %296 = vmatpush.msra.mxu0 0.0
    %297 = vmatpush.msra.mxu0 0.0
    %298 = vmatpush.msra.mxu0 0.0
    %299 = vmatpush.msra.mxu0 0.0
    %300 = vmatpush.msra.mxu0 0.0
    %301 = vmatpush.msra.mxu0 %v193
    %302 = vmatpush.msra.mxu0 %v190
    %303 = vmatmul.f32.gmra.mxu0 %v215
    %v304 = vpop.f32.mrf.mxu0
    %v305 = vadd.f32 0.0, %v304
    %306 = vmatmul.f32.gmra.mxu0 %v218
    %v307 = vpop.f32.mrf.mxu0
    %v308 = vadd.f32 0.0, %v307
    %309 = vmatmul.f32.gmra.mxu0 %v221
    %v310 = vpop.f32.mrf.mxu0
    %v311 = vadd.f32 0.0, %v310
    %312 = vmatmul.f32.gmra.mxu0 %v224
    %v313 = vpop.f32.mrf.mxu0
    %v314 = vadd.f32 0.0, %v313
    %315 = vmatmul.f32.gmra.mxu0 %v227
    %v316 = vpop.f32.mrf.mxu0
    %v317 = vadd.f32 0.0, %v316
    %318 = vmatmul.f32.gmra.mxu0 %v230
    %v319 = vpop.f32.mrf.mxu0
    %v320 = vadd.f32 0.0, %v319
    %321 = vmatmul.f32.gmra.mxu0 %v233
    %v322 = vpop.f32.mrf.mxu0
    %v323 = vadd.f32 0.0, %v322
    %324 = vmatmul.f32.gmra.mxu0 %v236
    %v325 = vpop.f32.mrf.mxu0
    %v326 = vadd.f32 0.0, %v325
    %327 = vdwg.mxu0
    %v328 = vmul.f32 %v305, %v203
    %v329 = vmul.f32 %v308, %v204
    %v330 = vmul.f32 %v311, %v205
    %v331 = vmul.f32 %v314, %v206
    %v332 = vmul.f32 %v317, %v207
    %v333 = vmul.f32 %v320, %v208
    %v334 = vmul.f32 %v323, %v209
    %v335 = vmul.f32 %v326, %v210
    %v337 = vsel %vm107, %v132, 0
    %v340 = vsel %vm107, %v135, 0
    %v343 = vsel %vm107, %v279, 0
    %v346 = vsel %vm107, %v280, 0
    %v349 = vsel %vm107, %v281, 0
    %v352 = vsel %vm107, %v282, 0
    %v355 = vsel %vm107, %v283, 0
    %v358 = vsel %vm107, %v284, 0
    %v361 = vsel %vm107, %v285, 0
    %v364 = vsel %vm107, %v286, 0
    %366 = vmatpush.xpose.msra.mxu0 0.0
    %367 = vmatpush.xpose.msra.mxu0 0.0
    %368 = vmatpush.xpose.msra.mxu0 0.0
    %369 = vmatpush.xpose.msra.mxu0 0.0
    %370 = vmatpush.xpose.msra.mxu0 0.0
    %371 = vmatpush.xpose.msra.mxu0 0.0
    %372 = vmatpush.xpose.msra.mxu0 0.0
    %373 = vmatpush.xpose.msra.mxu0 0.0
    %374 = vmatpush.xpose.msra.mxu0 %v364
    %375 = vmatpush.xpose.msra.mxu0 %v361
    %376 = vmatpush.xpose.msra.mxu0 %v358
    %377 = vmatpush.xpose.msra.mxu0 %v355
    %378 = vmatpush.xpose.msra.mxu0 %v352
    %379 = vmatpush.xpose.msra.mxu0 %v349
    %380 = vmatpush.xpose.msra.mxu0 %v346
    %381 = vmatpush.xpose.msra.mxu0 %v343
    %382 = vmatmul.f32.gmra.mxu0 %v337
    %v383 = vpop.f32.mrf.mxu0
    %v384 = vadd.f32 %v211, %v383
    %385 = vmatmul.f32.gmra.mxu0 %v340
    %v386 = vpop.f32.mrf.mxu0
    %v387 = vadd.f32 %v212, %v386
    %388 = vdwg.mxu0
    %vm389 = vcmask 523264
    %v390 = vsel %vm389, %v384, -inf
    %391 = vmax.xlane.f32.xlu0 %v390
    %v392 = vpop.xlane.xlu0 %391
    %v393 = vsel %vm389, %v387, -inf
    %394 = vmax.xlane.f32.xlu0 %v393
    %v395 = vpop.xlane.xlu0 %394
    %v396 = vsub.f32 %v384, %v392
    %v397 = vsub.f32 %v387, %v395
    %v398 = vmul.f32 %v396, 1.442695
    %v399 = vpow.pop %v398
    %v400 = vmul.f32 %v397, 1.442695
    %v401 = vpow.pop %v400
    %v403 = vsel %vm389, %v399, 0
    %v406 = vsel %vm389, %v401, 0
    %408 = vmatpush.msra.mxu0 0.0
    %409 = vmatpush.msra.mxu0 0.0
    %410 = vmatpush.msra.mxu0 0.0
    %411 = vmatpush.msra.mxu0 0.0
    %412 = vmatpush.msra.mxu0 0.0
    %413 = vmatpush.msra.mxu0 0.0
    %414 = vmatpush.msra.mxu0 0.0
    %415 = vmatpush.msra.mxu0 0.0
    %416 = vmatpush.msra.mxu0 %v335
    %417 = vmatpush.msra.mxu0 %v334
    %418 = vmatpush.msra.mxu0 %v333
    %419 = vmatpush.msra.mxu0 %v332
    %420 = vmatpush.msra.mxu0 %v331
    %421 = vmatpush.msra.mxu0 %v330
    %422 = vmatpush.msra.mxu0 %v329
    %423 = vmatpush.msra.mxu0 %v328
    %424 = vmatmul.f32.gmra.mxu0 %v403
    %v425 = vpop.f32.mrf.mxu0
    %v426 = vadd.f32 0.0, %v425
    %427 = vmatmul.f32.gmra.mxu0 %v406
    %v428 = vpop.f32.mrf.mxu0
    %v429 = vadd.f32 0.0, %v428
    %430 = vdwg.mxu0
    %431 = vmatpush.msra.mxu0 0.0
    %432 = vmatpush.msra.mxu0 0.0
    %433 = vmatpush.msra.mxu0 0.0
    %434 = vmatpush.msra.mxu0 0.0
    %435 = vmatpush.msra.mxu0 0.0
    %436 = vmatpush.msra.mxu0 0.0
    %437 = vmatpush.msra.mxu0 0.0
    %438 = vmatpush.msra.mxu0 0.0
    %439 = vmatpush.msra.mxu0 %v210
    %440 = vmatpush.msra.mxu0 %v209
    %441 = vmatpush.msra.mxu0 %v208
    %442 = vmatpush.msra.mxu0 %v207
    %443 = vmatpush.msra.mxu0 %v206
    %444 = vmatpush.msra.mxu0 %v205
    %445 = vmatpush.msra.mxu0 %v204
    %446 = vmatpush.msra.mxu0 %v203
    %447 = vmatmul.f32.gmra.mxu0 %v403
    %v448 = vpop.f32.mrf.mxu0
    %v449 = vadd.f32 0.0, %v448
    %450 = vmatmul.f32.gmra.mxu0 %v406
    %v451 = vpop.f32.mrf.mxu0
    %v452 = vadd.f32 0.0, %v451
    %453 = vdwg.mxu0
    %v454 = vrcp.pop %v449
    %v455 = vrcp.pop %v452
    %v456 = vmul.f32 %v426, %v454
    %v457 = vmul.f32 %v429, %v455
    %v458 = vld [vmem:[#allocation6 + $0x148] sm:$0xff]
    %v459 = vld [vmem:[#allocation6 + $0x150] sm:$0xff]
    %v460 = vld [vmem:[#allocation6 + $0x158] sm:$0xff]
    %v461 = vld [vmem:[#allocation6 + $0x160] sm:$0xff]
    %v462 = vld [vmem:[#allocation6 + $0x168] sm:$0x1]
    %v463 = vperm.slane %v462, 0
    %v465 = vsel %vm107, %v456, 0
    %v468 = vsel %vm107, %v457, 0
    %470 = vmatpush.msra.mxu0 0.0
    %471 = vmatpush.msra.mxu0 0.0
    %472 = vmatpush.msra.mxu0 0.0
    %473 = vmatpush.msra.mxu0 0.0
    %474 = vmatpush.msra.mxu0 0.0
    %475 = vmatpush.msra.mxu0 0.0
    %476 = vmatpush.msra.mxu0 0.0
    %477 = vmatpush.msra.mxu0 0.0
    %478 = vmatpush.msra.mxu0 0.0
    %479 = vmatpush.msra.mxu0 0.0
    %480 = vmatpush.msra.mxu0 0.0
    %481 = vmatpush.msra.mxu0 0.0
    %482 = vmatpush.msra.mxu0 %v461
    %483 = vmatpush.msra.mxu0 %v460
    %484 = vmatpush.msra.mxu0 %v459
    %485 = vmatpush.msra.mxu0 %v458
    %486 = vmatmul.f32.gmra.mxu0 %v465
    %v487 = vpop.f32.mrf.mxu0
    %v488 = vadd.f32 %v463, %v487
    %489 = vmatmul.f32.gmra.mxu0 %v468
    %v490 = vpop.f32.mrf.mxu0
    %v491 = vadd.f32 %v463, %v490
    %492 = vdwg.mxu0
    %v493 = vadd.f32 %v99, %v488
    %v494 = vadd.f32 %v100, %v491
    %v495 = vld [vmem:[#allocation6 + $0x170] sm:$0x1]
    %v496 = vld [vmem:[#allocation6 + $0x178] sm:$0x1]
    %v497 = vsel %vm107, %v493, 0.0
    %498 = vadd.xlane.f32.xlu0 %v497
    %v499 = vpop.xlane.xlu0 %498
    %v500 = vsel %vm107, %v494, 0.0
    %501 = vadd.xlane.f32.xlu0 %v500
    %v502 = vpop.xlane.xlu0 %501
    %v503 = vrcp.pop 32.0
    %v504 = vmul.f32 32.0, %v503
    %v505 = vsub.f32 1.0, %v504
    %v506 = vmul.f32 %v503, %v505
    %v507 = vadd.f32 %v503, %v506
    %vm508 = vweird.f32 %v503
    %v509 = vsel %vm508, %v503, %v507
    %v510 = vmul.f32 %v499, %v509
    %v511 = vmul.f32 %v502, %v509
    %v512 = vmul.f32 %v493, %v493
    %v513 = vmul.f32 %v494, %v494
    %v514 = vsel %vm107, %v512, 0.0
    %515 = vadd.xlane.f32.xlu0 %v514
    %v516 = vpop.xlane.xlu0 %515
    %v517 = vsel %vm107, %v513, 0.0
    %518 = vadd.xlane.f32.xlu0 %v517
    %v519 = vpop.xlane.xlu0 %518
    %v520 = vmul.f32 %v516, %v509
    %v521 = vmul.f32 %v519, %v509
    %v522 = vmul.f32 %v510, %v510
    %v523 = vmul.f32 %v511, %v511
    %v524 = vsub.f32 %v520, %v522
    %v525 = vsub.f32 %v521, %v523
    %v526 = vsub.f32 %v493, %v510
    %v527 = vsub.f32 %v494, %v511
    %v528 = vadd.f32 %v524, 1e-05
    %v529 = vadd.f32 %v525, 1e-05
    %v530 = vrsqrt.pop %v528
    %v531 = vmul.f32 %v530, %v528
    %v532 = vmul.f32 %v531, %v530
    %v533 = vmul.f32 0.5, %v532
    %v534 = vsub.f32 1.5, %v533
    %v535 = vmul.f32 %v530, %v534
    %vm536 = vweird.f32 %v528
    %vm537 = vweird.f32 %v530
    %vm538 = vmor %vm536, %vm537
    %v539 = vsel %vm538, %v530, %v535
    %v540 = vrsqrt.pop %v529
    %v541 = vmul.f32 %v540, %v529
    %v542 = vmul.f32 %v541, %v540
    %v543 = vmul.f32 0.5, %v542
    %v544 = vsub.f32 1.5, %v543
    %v545 = vmul.f32 %v540, %v544
    %vm546 = vweird.f32 %v529
    %vm547 = vweird.f32 %v540
    %vm548 = vmor %vm546, %vm547
    %v549 = vsel %vm548, %v540, %v545
    %v550 = vmul.f32 %v526, %v539
    %v551 = vmul.f32 %v527, %v549
    %v552 = vperm.slane %v495, 0
    %v553 = vmul.f32 %v550, %v552
    %v554 = vmul.f32 %v551, %v552
    %v555 = vperm.slane %v496, 0
    %v556 = vadd.f32 %v553, %v555
    %v557 = vadd.f32 %v554, %v555
    %v558 = vld [vmem:[#allocation6 + $0x180] sm:$0xff]
    %v559 = vld [vmem:[#allocation6 + $0x188] sm:$0xff]
    %v560 = vld [vmem:[#allocation6 + $0x190] sm:$0xff]
    %v561 = vld [vmem:[#allocation6 + $0x198] sm:$0xff]
    %v562 = vld [vmem:[#allocation6 + $0x1a0] sm:$0x1]
    %v563 = vperm.slane %v562, 0
    %v565 = vsel %vm107, %v556, 0
    %v568 = vsel %vm107, %v557, 0
    %570 = vmatpush.msra.mxu0 0.0
    %571 = vmatpush.msra.mxu0 0.0
    %572 = vmatpush.msra.mxu0 0.0
    %573 = vmatpush.msra.mxu0 0.0
    %574 = vmatpush.msra.mxu0 0.0
    %575 = vmatpush.msra.mxu0 0.0
    %576 = vmatpush.msra.mxu0 0.0
    %577 = vmatpush.msra.mxu0 0.0
    %578 = vmatpush.msra.mxu0 0.0
    %579 = vmatpush.msra.mxu0 0.0
    %580 = vmatpush.msra.mxu0 0.0
    %581 = vmatpush.msra.mxu0 0.0
    %582 = vmatpush.msra.mxu0 %v561
    %583 = vmatpush.msra.mxu0 %v560
    %584 = vmatpush.msra.mxu0 %v559
    %585 = vmatpush.msra.mxu0 %v558
    %586 = vmatmul.f32.gmra.mxu0 %v565
    %v587 = vpop.f32.mrf.mxu0
    %v588 = vadd.f32 %v563, %v587
    %589 = vmatmul.f32.gmra.mxu0 %v568
    %v590 = vpop.f32.mrf.mxu0
    %v591 = vadd.f32 %v563, %v590
    %592 = vdwg.mxu0
    %v593 = vmul.f32 %v588, 0.5
    %v594 = vmul.f32 %v591, 0.5
    %v595 = vmul.f32 %v588, 0.044715
    %v596 = vmul.f32 %v591, 0.044715
    %v597 = vmul.f32 %v595, %v588
    %v598 = vmul.f32 %v596, %v591
    %v599 = vmul.f32 %v597, %v588
    %v600 = vmul.f32 %v598, %v591
    %v601 = vadd.f32 %v588, %v599
    %v602 = vadd.f32 %v591, %v600
    %v603 = vmul.f32 %v601, 0.7978846
    %v604 = vmul.f32 %v602, 0.7978846
    %v605 = vtanh.pop %v603
    %v606 = vtanh.pop %v604
    %v607 = vadd.f32 %v605, 1.0
    %v608 = vadd.f32 %v606, 1.0
    %v609 = vmul.f32 %v593, %v607
    %v610 = vmul.f32 %v594, %v608
    %v611 = vld [vmem:[#allocation6 + $0x1a8] sm:$0xff]
    %v612 = vld [vmem:[#allocation6 + $0x1b0] sm:$0xff]
    %v613 = vld [vmem:[#allocation6 + $0x1b8] sm:$0xff]
    %v614 = vld [vmem:[#allocation6 + $0x1c0] sm:$0xff]
    %v615 = vld [vmem:[#allocation6 + $0x1c8] sm:$0xff]
    %v616 = vld [vmem:[#allocation6 + $0x1d0] sm:$0xff]
    %v617 = vld [vmem:[#allocation6 + $0x1d8] sm:$0xff]
    %v618 = vld [vmem:[#allocation6 + $0x1e0] sm:$0xff]
    %v619 = vld [vmem:[#allocation6 + $0x1e8] sm:$0x1]
    %v620 = vperm.slane %v619, 0
    %v622 = vsel %vm389, %v609, 0
    %v625 = vsel %vm389, %v610, 0
    %627 = vmatpush.msra.mxu0 0.0
    %628 = vmatpush.msra.mxu0 0.0
    %629 = vmatpush.msra.mxu0 0.0
    %630 = vmatpush.msra.mxu0 0.0
    %631 = vmatpush.msra.mxu0 0.0
    %632 = vmatpush.msra.mxu0 0.0
    %633 = vmatpush.msra.mxu0 0.0
    %634 = vmatpush.msra.mxu0 0.0
    %635 = vmatpush.msra.mxu0 %v618
    %636 = vmatpush.msra.mxu0 %v617
    %637 = vmatpush.msra.mxu0 %v616
    %638 = vmatpush.msra.mxu0 %v615
    %639 = vmatpush.msra.mxu0 %v614
    %640 = vmatpush.msra.mxu0 %v613
    %641 = vmatpush.msra.mxu0 %v612
    %642 = vmatpush.msra.mxu0 %v611
    %643 = vmatmul.f32.gmra.mxu0 %v622
    %v644 = vpop.f32.mrf.mxu0
    %v645 = vadd.f32 %v620, %v644
    %646 = vmatmul.f32.gmra.mxu0 %v625
    %v647 = vpop.f32.mrf.mxu0
    %v648 = vadd.f32 %v620, %v647
    %649 = vdwg.mxu0
    %v650 = vadd.f32 %v556, %v645
    %v651 = vadd.f32 %v557, %v648
    %v652 = vld [vmem:[#allocation6 + $0x1f0] sm:$0x1]
    %v653 = vld [vmem:[#allocation6 + $0x1f8] sm:$0x1]
    %v654 = vsel %vm107, %v650, 0.0
    %655 = vadd.xlane.f32.xlu0 %v654
    %v656 = vpop.xlane.xlu0 %655
    %v657 = vsel %vm107, %v651, 0.0
    %658 = vadd.xlane.f32.xlu0 %v657
    %v659 = vpop.xlane.xlu0 %658
    %v660 = vmul.f32 %v656, %v509
    %v661 = vmul.f32 %v659, %v509
    %v662 = vmul.f32 %v650, %v650
    %v663 = vmul.f32 %v651, %v651
    %v664 = vsel %vm107, %v662, 0.0
    %665 = vadd.xlane.f32.xlu0 %v664
    %v666 = vpop.xlane.xlu0 %665
    %v667 = vsel %vm107, %v663, 0.0
    %668 = vadd.xlane.f32.xlu0 %v667
    %v669 = vpop.xlane.xlu0 %668
    %v670 = vmul.f32 %v666, %v509
    %v671 = vmul.f32 %v669, %v509
    %v672 = vmul.f32 %v660, %v660
    %v673 = vmul.f32 %v661, %v661
    %v674 = vsub.f32 %v670, %v672
    %v675 = vsub.f32 %v671, %v673
    %v676 = vsub.f32 %v650, %v660
    %v677 = vsub.f32 %v651, %v661
    %v678 = vadd.f32 %v674, 1e-05
    %v679 = vadd.f32 %v675, 1e-05
    %v680 = vrsqrt.pop %v678
    %v681 = vmul.f32 %v680, %v678
    %v682 = vmul.f32 %v681, %v680
    %v683 = vmul.f32 0.5, %v682
    %v684 = vsub.f32 1.5, %v683
    %v685 = vmul.f32 %v680, %v684
    %vm686 = vweird.f32 %v678
    %vm687 = vweird.f32 %v680
    %vm688 = vmor %vm686, %vm687
    %v689 = vsel %vm688, %v680, %v685
    %v690 = vrsqrt.pop %v679
    %v691 = vmul.f32 %v690, %v679
    %v692 = vmul.f32 %v691, %v690
    %v693 = vmul.f32 0.5, %v692
    %v694 = vsub.f32 1.5, %v693
    %v695 = vmul.f32 %v690, %v694
    %vm696 = vweird.f32 %v679
    %vm697 = vweird.f32 %v690
    %vm698 = vmor %vm696, %vm697
    %v699 = vsel %vm698, %v690, %v695
    %v700 = vmul.f32 %v676, %v689
    %v701 = vmul.f32 %v677, %v699
    %v702 = vperm.slane %v652, 0
    %v703 = vmul.f32 %v700, %v702
    %v704 = vmul.f32 %v701, %v702
    %v705 = vperm.slane %v653, 0
    %v706 = vadd.f32 %v703, %v705
    %v707 = vadd.f32 %v704, %v705
    %v708 = vld [vmem:[#allocation6 + $0x200] sm:$0xff]
    %v709 = vld [vmem:[#allocation6 + $0x208] sm:$0xff]
    %v710 = vld [vmem:[#allocation6 + $0x210] sm:$0xff]
    %v711 = vld [vmem:[#allocation6 + $0x218] sm:$0xff]
    %v712 = vld [vmem:[#allocation6 + $0x220] sm:$0x1]
    %v713 = vperm.slane %v712, 0
    %v715 = vsel %vm107, %v706, 0
    %v718 = vsel %vm107, %v707, 0
    %720 = vmatpush.msra.mxu0 0.0
    %721 = vmatpush.msra.mxu0 0.0
    %722 = vmatpush.msra.mxu0 0.0
    %723 = vmatpush.msra.mxu0 0.0
    %724 = vmatpush.msra.mxu0 0.0
    %725 = vmatpush.msra.mxu0 0.0
    %726 = vmatpush.msra.mxu0 0.0
    %727 = vmatpush.msra.mxu0 0.0
    %728 = vmatpush.msra.mxu0 0.0
    %729 = vmatpush.msra.mxu0 0.0
    %730 = vmatpush.msra.mxu0 0.0
    %731 = vmatpush.msra.mxu0 0.0
    %732 = vmatpush.msra.mxu0 %v711
    %733 = vmatpush.msra.mxu0 %v710
    %734 = vmatpush.msra.mxu0 %v709
    %735 = vmatpush.msra.mxu0 %v708
    %736 = vmatmul.f32.gmra.mxu0 %v715
    %v737 = vpop.f32.mrf.mxu0
    %v738 = vadd.f32 %v713, %v737
    %739 = vmatmul.f32.gmra.mxu0 %v718
    %v740 = vpop.f32.mrf.mxu0
    %v741 = vadd.f32 %v713, %v740
    %742 = vdwg.mxu0
    %v743 = vld [vmem:[#allocation6 + $0x228] sm:$0xff]
    %v744 = vld [vmem:[#allocation6 + $0x230] sm:$0xff]
    %v745 = vld [vmem:[#allocation6 + $0x238] sm:$0xff]
    %v746 = vld [vmem:[#allocation6 + $0x240] sm:$0xff]
    %v747 = vld [vmem:[#allocation6 + $0x248] sm:$0x1]
    %v748 = vperm.slane %v747, 0
    %749 = vmatpush.msra.mxu0 0.0
    %750 = vmatpush.msra.mxu0 0.0
    %751 = vmatpush.msra.mxu0 0.0
    %752 = vmatpush.msra.mxu0 0.0
    %753 = vmatpush.msra.mxu0 0.0
    %754 = vmatpush.msra.mxu0 0.0
    %755 = vmatpush.msra.mxu0 0.0
    %756 = vmatpush.msra.mxu0 0.0
    %757 = vmatpush.msra.mxu0 0.0
    %758 = vmatpush.msra.mxu0 0.0
    %759 = vmatpush.msra.mxu0 0.0
    %760 = vmatpush.msra.mxu0 0.0
    %761 = vmatpush.msra.mxu0 %v746
    %762 = vmatpush.msra.mxu0 %v745
    %763 = vmatpush.msra.mxu0 %v744
    %764 = vmatpush.msra.mxu0 %v743
    %765 = vmatmul.f32.gmra.mxu0 %v715
    %v766 = vpop.f32.mrf.mxu0
    %v767 = vadd.f32 %v748, %v766
    %768 = vmatmul.f32.gmra.mxu0 %v718
    %v769 = vpop.f32.mrf.mxu0
    %v770 = vadd.f32 %v748, %v769
    %771 = vdwg.mxu0
    %v772 = vld [vmem:[#allocation6 + $0x250] sm:$0xff]
    %v773 = vld [vmem:[#allocation6 + $0x258] sm:$0xff]
    %v774 = vld [vmem:[#allocation6 + $0x260] sm:$0xff]
    %v775 = vld [vmem:[#allocation6 + $0x268] sm:$0xff]
    %v776 = vld [vmem:[#allocation6 + $0x270] sm:$0x1]
    %v777 = vperm.slane %v776, 0
    %778 = vmatpush.msra.mxu0 0.0
    %779 = vmatpush.msra.mxu0 0.0
    %780 = vmatpush.msra.mxu0 0.0
    %781 = vmatpush.msra.mxu0 0.0
    %782 = vmatpush.msra.mxu0 0.0
    %783 = vmatpush.msra.mxu0 0.0
    %784 = vmatpush.msra.mxu0 0.0
    %785 = vmatpush.msra.mxu0 0.0
    %786 = vmatpush.msra.mxu0 0.0
    %787 = vmatpush.msra.mxu0 0.0
    %788 = vmatpush.msra.mxu0 0.0
    %789 = vmatpush.msra.mxu0 0.0
    %790 = vmatpush.msra.mxu0 %v775
    %791 = vmatpush.msra.mxu0 %v774
    %792 = vmatpush.msra.mxu0 %v773
    %793 = vmatpush.msra.mxu0 %v772
    %794 = vmatmul.f32.gmra.mxu0 %v715
    %v795 = vpop.f32.mrf.mxu0
    %v796 = vadd.f32 %v777, %v795
    %797 = vmatmul.f32.gmra.mxu0 %v718
    %v798 = vpop.f32.mrf.mxu0
    %v799 = vadd.f32 %v777, %v798
    %800 = vdwg.mxu0
    %801 = vmatpush.msra.mxu0 0.0
    %802 = vmatpush.msra.mxu0 0.0
    %803 = vmatpush.msra.mxu0 0.0
    %804 = vmatpush.msra.mxu0 0.0
    %805 = vmatpush.msra.mxu0 0.0
    %806 = vmatpush.msra.mxu0 0.0
    %807 = vmatpush.msra.mxu0 0.0
    %808 = vmatpush.msra.mxu0 0.0
    %809 = vmatpush.msra.mxu0 0.0
    %810 = vmatpush.msra.mxu0 0.0
    %811 = vmatpush.msra.mxu0 0.0
    %812 = vmatpush.msra.mxu0 0.0
    %813 = vmatpush.msra.mxu0 0.0
    %814 = vmatpush.msra.mxu0 0.0
    %815 = vmatpush.msra.mxu0 %v770
    %816 = vmatpush.msra.mxu0 %v767
    %817 = vmatmul.f32.gmra.mxu0 %v215
    %v818 = vpop.f32.mrf.mxu0
    %v819 = vadd.f32 0.0, %v818
    %820 = vmatmul.f32.gmra.mxu0 %v218
    %v821 = vpop.f32.mrf.mxu0
    %v822 = vadd.f32 0.0, %v821
    %823 = vmatmul.f32.gmra.mxu0 %v221
    %v824 = vpop.f32.mrf.mxu0
    %v825 = vadd.f32 0.0, %v824
    %826 = vmatmul.f32.gmra.mxu0 %v224
    %v827 = vpop.f32.mrf.mxu0
    %v828 = vadd.f32 0.0, %v827
    %829 = vmatmul.f32.gmra.mxu0 %v227
    %v830 = vpop.f32.mrf.mxu0
    %v831 = vadd.f32 0.0, %v830
    %832 = vmatmul.f32.gmra.mxu0 %v230
    %v833 = vpop.f32.mrf.mxu0
    %v834 = vadd.f32 0.0, %v833
    %835 = vmatmul.f32.gmra.mxu0 %v233
    %v836 = vpop.f32.mrf.mxu0
    %v837 = vadd.f32 0.0, %v836
    %838 = vmatmul.f32.gmra.mxu0 %v236
    %v839 = vpop.f32.mrf.mxu0
    %v840 = vadd.f32 0.0, %v839
    %841 = vdwg.mxu0
    %v842 = vmul.f32 %v819, %v203
    %v843 = vmul.f32 %v822, %v204
    %v844 = vmul.f32 %v825, %v205
    %v845 = vmul.f32 %v828, %v206
    %v846 = vmul.f32 %v831, %v207
    %v847 = vmul.f32 %v834, %v208
    %v848 = vmul.f32 %v837, %v209
    %v849 = vmul.f32 %v840, %v210
    %850 = vmatpush.msra.mxu0 0.0
    %851 = vmatpush.msra.mxu0 0.0
    %852 = vmatpush.msra.mxu0 0.0
    %853 = vmatpush.msra.mxu0 0.0
    %854 = vmatpush.msra.mxu0 0.0
    %855 = vmatpush.msra.mxu0 0.0
    %856 = vmatpush.msra.mxu0 0.0
    %857 = vmatpush.msra.mxu0 0.0
    %858 = vmatpush.msra.mxu0 0.0
    %859 = vmatpush.msra.mxu0 0.0
    %860 = vmatpush.msra.mxu0 0.0
    %861 = vmatpush.msra.mxu0 0.0
    %862 = vmatpush.msra.mxu0 0.0
    %863 = vmatpush.msra.mxu0 0.0
    %864 = vmatpush.msra.mxu0 %v799
    %865 = vmatpush.msra.mxu0 %v796
    %866 = vmatmul.f32.gmra.mxu0 %v215
    %v867 = vpop.f32.mrf.mxu0
    %v868 = vadd.f32 0.0, %v867
    %869 = vmatmul.f32.gmra.mxu0 %v218
    %v870 = vpop.f32.mrf.mxu0
    %v871 = vadd.f32 0.0, %v870
    %872 = vmatmul.f32.gmra.mxu0 %v221
    %v873 = vpop.f32.mrf.mxu0
    %v874 = vadd.f32 0.0, %v873
    %875 = vmatmul.f32.gmra.mxu0 %v224
    %v876 = vpop.f32.mrf.mxu0
    %v877 = vadd.f32 0.0, %v876
    %878 = vmatmul.f32.gmra.mxu0 %v227
    %v879 = vpop.f32.mrf.mxu0
    %v880 = vadd.f32 0.0, %v879
    %881 = vmatmul.f32.gmra.mxu0 %v230
    %v882 = vpop.f32.mrf.mxu0
    %v883 = vadd.f32 0.0, %v882
    %884 = vmatmul.f32.gmra.mxu0 %v233
    %v885 = vpop.f32.mrf.mxu0
    %v886 = vadd.f32 0.0, %v885
    %887 = vmatmul.f32.gmra.mxu0 %v236
    %v888 = vpop.f32.mrf.mxu0
    %v889 = vadd.f32 0.0, %v888
    %890 = vdwg.mxu0
    %v891 = vmul.f32 %v868, %v203
    %v892 = vmul.f32 %v871, %v204
    %v893 = vmul.f32 %v874, %v205
    %v894 = vmul.f32 %v877, %v206
    %v895 = vmul.f32 %v880, %v207
    %v896 = vmul.f32 %v883, %v208
    %v897 = vmul.f32 %v886, %v209
    %v898 = vmul.f32 %v889, %v210
    %v900 = vsel %vm107, %v738, 0
    %v903 = vsel %vm107, %v741, 0
    %v906 = vsel %vm107, %v842, 0
    %v909 = vsel %vm107, %v843, 0
    %v912 = vsel %vm107, %v844, 0
    %v915 = vsel %vm107, %v845, 0
    %v918 = vsel %vm107, %v846, 0
    %v921 = vsel %vm107, %v847, 0
    %v924 = vsel %vm107, %v848, 0
    %v927 = vsel %vm107, %v849, 0
    %929 = vmatpush.xpose.msra.mxu0 0.0
    %930 = vmatpush.xpose.msra.mxu0 0.0
    %931 = vmatpush.xpose.msra.mxu0 0.0
    %932 = vmatpush.xpose.msra.mxu0 0.0
    %933 = vmatpush.xpose.msra.mxu0 0.0
    %934 = vmatpush.xpose.msra.mxu0 0.0
    %935 = vmatpush.xpose.msra.mxu0 0.0
    %936 = vmatpush.xpose.msra.mxu0 0.0
    %937 = vmatpush.xpose.msra.mxu0 %v927
    %938 = vmatpush.xpose.msra.mxu0 %v924
    %939 = vmatpush.xpose.msra.mxu0 %v921
    %940 = vmatpush.xpose.msra.mxu0 %v918
    %941 = vmatpush.xpose.msra.mxu0 %v915
    %942 = vmatpush.xpose.msra.mxu0 %v912
    %943 = vmatpush.xpose.msra.mxu0 %v909
    %944 = vmatpush.xpose.msra.mxu0 %v906
    %945 = vmatmul.f32.gmra.mxu0 %v900
    %v946 = vpop.f32.mrf.mxu0
    %v947 = vadd.f32 %v211, %v946
    %948 = vmatmul.f32.gmra.mxu0 %v903
    %v949 = vpop.f32.mrf.mxu0
    %v950 = vadd.f32 %v212, %v949
    %951 = vdwg.mxu0
    %v952 = vsel %vm389, %v947, -inf
    %953 = vmax.xlane.f32.xlu0 %v952
    %v954 = vpop.xlane.xlu0 %953
    %v955 = vsel %vm389, %v950, -inf
    %956 = vmax.xlane.f32.xlu0 %v955
    %v957 = vpop.xlane.xlu0 %956
    %v958 = vsub.f32 %v947, %v954
    %v959 = vsub.f32 %v950, %v957
    %v960 = vmul.f32 %v958, 1.442695
    %v961 = vpow.pop %v960
    %v962 = vmul.f32 %v959, 1.442695
    %v963 = vpow.pop %v962
    %v965 = vsel %vm389, %v961, 0
    %v968 = vsel %vm389, %v963, 0
    %970 = vmatpush.msra.mxu0 0.0
    %971 = vmatpush.msra.mxu0 0.0
    %972 = vmatpush.msra.mxu0 0.0
    %973 = vmatpush.msra.mxu0 0.0
    %974 = vmatpush.msra.mxu0 0.0
    %975 = vmatpush.msra.mxu0 0.0
    %976 = vmatpush.msra.mxu0 0.0
    %977 = vmatpush.msra.mxu0 0.0
    %978 = vmatpush.msra.mxu0 %v898
    %979 = vmatpush.msra.mxu0 %v897
    %980 = vmatpush.msra.mxu0 %v896
    %981 = vmatpush.msra.mxu0 %v895
    %982 = vmatpush.msra.mxu0 %v894
    %983 = vmatpush.msra.mxu0 %v893
    %984 = vmatpush.msra.mxu0 %v892
    %985 = vmatpush.msra.mxu0 %v891
    %986 = vmatmul.f32.gmra.mxu0 %v965
    %v987 = vpop.f32.mrf.mxu0
    %v988 = vadd.f32 0.0, %v987
    %989 = vmatmul.f32.gmra.mxu0 %v968
    %v990 = vpop.f32.mrf.mxu0
    %v991 = vadd.f32 0.0, %v990
    %992 = vdwg.mxu0
    %993 = vmatpush.msra.mxu0 0.0
    %994 = vmatpush.msra.mxu0 0.0
    %995 = vmatpush.msra.mxu0 0.0
    %996 = vmatpush.msra.mxu0 0.0
    %997 = vmatpush.msra.mxu0 0.0
    %998 = vmatpush.msra.mxu0 0.0
    %999 = vmatpush.msra.mxu0 0.0
    %1000 = vmatpush.msra.mxu0 0.0
    %1001 = vmatpush.msra.mxu0 %v210
    %1002 = vmatpush.msra.mxu0 %v209
    %1003 = vmatpush.msra.mxu0 %v208
    %1004 = vmatpush.msra.mxu0 %v207
    %1005 = vmatpush.msra.mxu0 %v206
    %1006 = vmatpush.msra.mxu0 %v205
    %1007 = vmatpush.msra.mxu0 %v204
    %1008 = vmatpush.msra.mxu0 %v203
    %1009 = vmatmul.f32.gmra.mxu0 %v965
    %v1010 = vpop.f32.mrf.mxu0
    %v1011 = vadd.f32 0.0, %v1010
    %1012 = vmatmul.f32.gmra.mxu0 %v968
    %v1013 = vpop.f32.mrf.mxu0
    %v1014 = vadd.f32 0.0, %v1013
    %1015 = vdwg.mxu0
    %v1016 = vrcp.pop %v1011
    %v1017 = vrcp.pop %v1014
    %v1018 = vmul.f32 %v988, %v1016
    %v1019 = vmul.f32 %v991, %v1017
    %v1020 = vld [vmem:[#allocation6 + $0x278] sm:$0xff]
    %v1021 = vld [vmem:[#allocation6 + $0x280] sm:$0xff]
    %v1022 = vld [vmem:[#allocation6 + $0x288] sm:$0xff]
    %v1023 = vld [vmem:[#allocation6 + $0x290] sm:$0xff]
    %v1024 = vld [vmem:[#allocation6 + $0x298] sm:$0x1]
    %v1025 = vperm.slane %v1024, 0
    %v1027 = vsel %vm107, %v1018, 0
    %v1030 = vsel %vm107, %v1019, 0
    %1032 = vmatpush.msra.mxu0 0.0
    %1033 = vmatpush.msra.mxu0 0.0
    %1034 = vmatpush.msra.mxu0 0.0
    %1035 = vmatpush.msra.mxu0 0.0
    %1036 = vmatpush.msra.mxu0 0.0
    %1037 = vmatpush.msra.mxu0 0.0
    %1038 = vmatpush.msra.mxu0 0.0
    %1039 = vmatpush.msra.mxu0 0.0
    %1040 = vmatpush.msra.mxu0 0.0
    %1041 = vmatpush.msra.mxu0 0.0
    %1042 = vmatpush.msra.mxu0 0.0
    %1043 = vmatpush.msra.mxu0 0.0
    %1044 = vmatpush.msra.mxu0 %v1023
    %1045 = vmatpush.msra.mxu0 %v1022
    %1046 = vmatpush.msra.mxu0 %v1021
    %1047 = vmatpush.msra.mxu0 %v1020
    %1048 = vmatmul.f32.gmra.mxu0 %v1027
    %v1049 = vpop.f32.mrf.mxu0
    %v1050 = vadd.f32 %v1025, %v1049
    %1051 = vmatmul.f32.gmra.mxu0 %v1030
    %v1052 = vpop.f32.mrf.mxu0
    %v1053 = vadd.f32 %v1025, %v1052
    %1054 = vdwg.mxu0
    %v1055 = vadd.f32 %v706, %v1050
    %v1056 = vadd.f32 %v707, %v1053
    %v1057 = vld [vmem:[#allocation6 + $0x2a0] sm:$0x1]
    %v1058 = vld [vmem:[#allocation6 + $0x2a8] sm:$0x1]
    %v1059 = vsel %vm107, %v1055, 0.0
    %1060 = vadd.xlane.f32.xlu0 %v1059
    %v1061 = vpop.xlane.xlu0 %1060
    %v1062 = vsel %vm107, %v1056, 0.0
    %1063 = vadd.xlane.f32.xlu0 %v1062
    %v1064 = vpop.xlane.xlu0 %1063
    %v1065 = vmul.f32 %v1061, %v509
    %v1066 = vmul.f32 %v1064, %v509
    %v1067 = vmul.f32 %v1055, %v1055
    %v1068 = vmul.f32 %v1056, %v1056
    %v1069 = vsel %vm107, %v1067, 0.0
    %1070 = vadd.xlane.f32.xlu0 %v1069
    %v1071 = vpop.xlane.xlu0 %1070
    %v1072 = vsel %vm107, %v1068, 0.0
    %1073 = vadd.xlane.f32.xlu0 %v1072
    %v1074 = vpop.xlane.xlu0 %1073
    %v1075 = vmul.f32 %v1071, %v509
    %v1076 = vmul.f32 %v1074, %v509
    %v1077 = vmul.f32 %v1065, %v1065
    %v1078 = vmul.f32 %v1066, %v1066
    %v1079 = vsub.f32 %v1075, %v1077
    %v1080 = vsub.f32 %v1076, %v1078
    %v1081 = vsub.f32 %v1055, %v1065
    %v1082 = vsub.f32 %v1056, %v1066
    %v1083 = vadd.f32 %v1079, 1e-05
    %v1084 = vadd.f32 %v1080, 1e-05
    %v1085 = vrsqrt.pop %v1083
    %v1086 = vmul.f32 %v1085, %v1083
    %v1087 = vmul.f32 %v1086, %v1085
    %v1088 = vmul.f32 0.5, %v1087
    %v1089 = vsub.f32 1.5, %v1088
    %v1090 = vmul.f32 %v1085, %v1089
    %vm1091 = vweird.f32 %v1083
    %vm1092 = vweird.f32 %v1085
    %vm1093 = vmor %vm1091, %vm1092
    %v1094 = vsel %vm1093, %v1085, %v1090
    %v1095 = vrsqrt.pop %v1084
    %v1096 = vmul.f32 %v1095, %v1084
    %v1097 = vmul.f32 %v1096, %v1095
    %v1098 = vmul.f32 0.5, %v1097
    %v1099 = vsub.f32 1.5, %v1098
    %v1100 = vmul.f32 %v1095, %v1099
    %vm1101 = vweird.f32 %v1084
    %vm1102 = vweird.f32 %v1095
    %vm1103 = vmor %vm1101, %vm1102
    %v1104 = vsel %vm1103, %v1095, %v1100
    %v1105 = vmul.f32 %v1081, %v1094
    %v1106 = vmul.f32 %v1082, %v1104
    %v1107 = vperm.slane %v1057, 0
    %v1108 = vmul.f32 %v1105, %v1107
    %v1109 = vmul.f32 %v1106, %v1107
    %v1110 = vperm.slane %v1058, 0
    %v1111 = vadd.f32 %v1108, %v1110
    %v1112 = vadd.f32 %v1109, %v1110
    %v1113 = vld [vmem:[#allocation6 + $0x2b0] sm:$0xff]
    %v1114 = vld [vmem:[#allocation6 + $0x2b8] sm:$0xff]
    %v1115 = vld [vmem:[#allocation6 + $0x2c0] sm:$0xff]
    %v1116 = vld [vmem:[#allocation6 + $0x2c8] sm:$0xff]
    %v1117 = vld [vmem:[#allocation6 + $0x2d0] sm:$0x1]
    %v1118 = vperm.slane %v1117, 0
    %v1120 = vsel %vm107, %v1111, 0
    %v1123 = vsel %vm107, %v1112, 0
    %1125 = vmatpush.msra.mxu0 0.0
    %1126 = vmatpush.msra.mxu0 0.0
    %1127 = vmatpush.msra.mxu0 0.0
    %1128 = vmatpush.msra.mxu0 0.0
    %1129 = vmatpush.msra.mxu0 0.0
    %1130 = vmatpush.msra.mxu0 0.0
    %1131 = vmatpush.msra.mxu0 0.0
    %1132 = vmatpush.msra.mxu0 0.0
    %1133 = vmatpush.msra.mxu0 0.0
    %1134 = vmatpush.msra.mxu0 0.0
    %1135 = vmatpush.msra.mxu0 0.0
    %1136 = vmatpush.msra.mxu0 0.0
    %1137 = vmatpush.msra.mxu0 %v1116
    %1138 = vmatpush.msra.mxu0 %v1115
    %1139 = vmatpush.msra.mxu0 %v1114
    %1140 = vmatpush.msra.mxu0 %v1113
    %1141 = vmatmul.f32.gmra.mxu0 %v1120
    %v1142 = vpop.f32.mrf.mxu0
    %v1143 = vadd.f32 %v1118, %v1142
    %1144 = vmatmul.f32.gmra.mxu0 %v1123
    %v1145 = vpop.f32.mrf.mxu0
    %v1146 = vadd.f32 %v1118, %v1145
    %1147 = vdwg.mxu0
    %v1148 = vmul.f32 %v1143, 0.5
    %v1149 = vmul.f32 %v1146, 0.5
    %v1150 = vmul.f32 %v1143, 0.044715
    %v1151 = vmul.f32 %v1146, 0.044715
    %v1152 = vmul.f32 %v1150, %v1143
    %v1153 = vmul.f32 %v1151, %v1146
    %v1154 = vmul.f32 %v1152, %v1143
    %v1155 = vmul.f32 %v1153, %v1146
    %v1156 = vadd.f32 %v1143, %v1154
    %v1157 = vadd.f32 %v1146, %v1155
    %v1158 = vmul.f32 %v1156, 0.7978846
    %v1159 = vmul.f32 %v1157, 0.7978846
    %v1160 = vtanh.pop %v1158
    %v1161 = vtanh.pop %v1159
    %v1162 = vadd.f32 %v1160, 1.0
    %v1163 = vadd.f32 %v1161, 1.0
    %v1164 = vmul.f32 %v1148, %v1162
    %v1165 = vmul.f32 %v1149, %v1163
    %v1166 = vld [vmem:[#allocation6 + $0x2d8] sm:$0xff]
    %v1167 = vld [vmem:[#allocation6 + $0x2e0] sm:$0xff]
    %v1168 = vld [vmem:[#allocation6 + $0x2e8] sm:$0xff]
    %v1169 = vld [vmem:[#allocation6 + $0x2f0] sm:$0xff]
    %v1170 = vld [vmem:[#allocation6 + $0x2f8] sm:$0xff]
    %v1171 = vld [vmem:[#allocation6 + $0x300] sm:$0xff]
    %v1172 = vld [vmem:[#allocation6 + $0x308] sm:$0xff]
    %v1173 = vld [vmem:[#allocation6 + $0x310] sm:$0xff]
    %v1174 = vld [vmem:[#allocation6 + $0x318] sm:$0x1]
    %v1175 = vperm.slane %v1174, 0
    %v1177 = vsel %vm389, %v1164, 0
    %v1180 = vsel %vm389, %v1165, 0
    %1182 = vmatpush.msra.mxu0 0.0
    %1183 = vmatpush.msra.mxu0 0.0
    %1184 = vmatpush.msra.mxu0 0.0
    %1185 = vmatpush.msra.mxu0 0.0
    %1186 = vmatpush.msra.mxu0 0.0
    %1187 = vmatpush.msra.mxu0 0.0
    %1188 = vmatpush.msra.mxu0 0.0
    %1189 = vmatpush.msra.mxu0 0.0
    %1190 = vmatpush.msra.mxu0 %v1173
    %1191 = vmatpush.msra.mxu0 %v1172
    %1192 = vmatpush.msra.mxu0 %v1171
    %1193 = vmatpush.msra.mxu0 %v1170
    %1194 = vmatpush.msra.mxu0 %v1169
    %1195 = vmatpush.msra.mxu0 %v1168
    %1196 = vmatpush.msra.mxu0 %v1167
    %1197 = vmatpush.msra.mxu0 %v1166
    %1198 = vmatmul.f32.gmra.mxu0 %v1177
    %v1199 = vpop.f32.mrf.mxu0
    %v1200 = vadd.f32 %v1175, %v1199
    %1201 = vmatmul.f32.gmra.mxu0 %v1180
    %v1202 = vpop.f32.mrf.mxu0
    %v1203 = vadd.f32 %v1175, %v1202
    %1204 = vdwg.mxu0
    %v1205 = vadd.f32 %v1111, %v1200
    %v1206 = vadd.f32 %v1112, %v1203
    %v1207 = vld [vmem:[#allocation6 + $0x320] sm:$0x1]
    %v1208 = vld [vmem:[#allocation6 + $0x328] sm:$0x1]
    %v1209 = vsel %vm107, %v1205, 0.0
    %1210 = vadd.xlane.f32.xlu0 %v1209
    %v1211 = vpop.xlane.xlu0 %1210
    %v1212 = vsel %vm107, %v1206, 0.0
    %1213 = vadd.xlane.f32.xlu0 %v1212
    %v1214 = vpop.xlane.xlu0 %1213
    %v1215 = vmul.f32 %v1211, %v509
    %v1216 = vmul.f32 %v1214, %v509
    %v1217 = vmul.f32 %v1205, %v1205
    %v1218 = vmul.f32 %v1206, %v1206
    %v1219 = vsel %vm107, %v1217, 0.0
    %1220 = vadd.xlane.f32.xlu0 %v1219
    %v1221 = vpop.xlane.xlu0 %1220
    %v1222 = vsel %vm107, %v1218, 0.0
    %1223 = vadd.xlane.f32.xlu0 %v1222
    %v1224 = vpop.xlane.xlu0 %1223
    %v1225 = vmul.f32 %v1221, %v509
    %v1226 = vmul.f32 %v1224, %v509
    %v1227 = vmul.f32 %v1215, %v1215
    %v1228 = vmul.f32 %v1216, %v1216
    %v1229 = vsub.f32 %v1225, %v1227
    %v1230 = vsub.f32 %v1226, %v1228
    %v1231 = vsub.f32 %v1205, %v1215
    %v1232 = vsub.f32 %v1206, %v1216
    %v1233 = vadd.f32 %v1229, 1e-05
    %v1234 = vadd.f32 %v1230, 1e-05
    %v1235 = vrsqrt.pop %v1233
    %v1236 = vmul.f32 %v1235, %v1233
    %v1237 = vmul.f32 %v1236, %v1235
    %v1238 = vmul.f32 0.5, %v1237
    %v1239 = vsub.f32 1.5, %v1238
    %v1240 = vmul.f32 %v1235, %v1239
    %vm1241 = vweird.f32 %v1233
    %vm1242 = vweird.f32 %v1235
    %vm1243 = vmor %vm1241, %vm1242
    %v1244 = vsel %vm1243, %v1235, %v1240
    %v1245 = vrsqrt.pop %v1234
    %v1246 = vmul.f32 %v1245, %v1234
    %v1247 = vmul.f32 %v1246, %v1245
    %v1248 = vmul.f32 0.5, %v1247
    %v1249 = vsub.f32 1.5, %v1248
    %v1250 = vmul.f32 %v1245, %v1249
    %vm1251 = vweird.f32 %v1234
    %vm1252 = vweird.f32 %v1245
    %vm1253 = vmor %vm1251, %vm1252
    %v1254 = vsel %vm1253, %v1245, %v1250
    %v1255 = vmul.f32 %v1231, %v1244
    %v1256 = vmul.f32 %v1232, %v1254
    %v1257 = vperm.slane %v1207, 0
    %v1258 = vmul.f32 %v1255, %v1257
    %v1259 = vmul.f32 %v1256, %v1257
    %v1260 = vperm.slane %v1208, 0
    %v1261 = vadd.f32 %v1258, %v1260
    %v1262 = vadd.f32 %v1259, %v1260
    %v1263 = vld [vmem:[#allocation6 + $0x330] sm:$0xff]
    %v1264 = vld [vmem:[#allocation6 + $0x338] sm:$0xff]
    %v1265 = vld [vmem:[#allocation6 + $0x340] sm:$0xff]
    %v1266 = vld [vmem:[#allocation6 + $0x348] sm:$0xff]
    %v1267 = vld [vmem:[#allocation6 + $0x350] sm:$0x1]
    %v1268 = vperm.slane %v1267, 0
    %v1270 = vsel %vm107, %v1261, 0
    %v1273 = vsel %vm107, %v1262, 0
    %1275 = vmatpush.msra.mxu0 0.0
    %1276 = vmatpush.msra.mxu0 0.0
    %1277 = vmatpush.msra.mxu0 0.0
    %1278 = vmatpush.msra.mxu0 0.0
    %1279 = vmatpush.msra.mxu0 0.0
    %1280 = vmatpush.msra.mxu0 0.0
    %1281 = vmatpush.msra.mxu0 0.0
    %1282 = vmatpush.msra.mxu0 0.0
    %1283 = vmatpush.msra.mxu0 0.0
    %1284 = vmatpush.msra.mxu0 0.0
    %1285 = vmatpush.msra.mxu0 0.0
    %1286 = vmatpush.msra.mxu0 0.0
    %1287 = vmatpush.msra.mxu0 %v1266
    %1288 = vmatpush.msra.mxu0 %v1265
    %1289 = vmatpush.msra.mxu0 %v1264
    %1290 = vmatpush.msra.mxu0 %v1263
    %1291 = vmatmul.f32.gmra.mxu0 %v1270
    %v1292 = vpop.f32.mrf.mxu0
    %v1293 = vadd.f32 %v1268, %v1292
    %1294 = vmatmul.f32.gmra.mxu0 %v1273
    %v1295 = vpop.f32.mrf.mxu0
    %v1296 = vadd.f32 %v1268, %v1295
    %1297 = vdwg.mxu0
    %v1298 = vld [vmem:[#allocation6 + $0x358] sm:$0xff]
    %v1299 = vld [vmem:[#allocation6 + $0x360] sm:$0xff]
    %v1300 = vld [vmem:[#allocation6 + $0x368] sm:$0xff]
    %v1301 = vld [vmem:[#allocation6 + $0x370] sm:$0xff]
    %v1302 = vld [vmem:[#allocation6 + $0x378] sm:$0x1]
    %v1303 = vperm.slane %v1302, 0
    %1304 = vmatpush.msra.mxu0 0.0
    %1305 = vmatpush.msra.mxu0 0.0
    %1306 = vmatpush.msra.mxu0 0.0
    %1307 = vmatpush.msra.mxu0 0.0
    %1308 = vmatpush.msra.mxu0 0.0
    %1309 = vmatpush.msra.mxu0 0.0
    %1310 = vmatpush.msra.mxu0 0.0
    %1311 = vmatpush.msra.mxu0 0.0
    %1312 = vmatpush.msra.mxu0 0.0
    %1313 = vmatpush.msra.mxu0 0.0
    %1314 = vmatpush.msra.mxu0 0.0
    %1315 = vmatpush.msra.mxu0 0.0
    %1316 = vmatpush.msra.mxu0 %v1301
    %1317 = vmatpush.msra.mxu0 %v1300
    %1318 = vmatpush.msra.mxu0 %v1299
    %1319 = vmatpush.msra.mxu0 %v1298
    %1320 = vmatmul.f32.gmra.mxu0 %v1270
    %v1321 = vpop.f32.mrf.mxu0
    %v1322 = vadd.f32 %v1303, %v1321
    %1323 = vmatmul.f32.gmra.mxu0 %v1273
    %v1324 = vpop.f32.mrf.mxu0
    %v1325 = vadd.f32 %v1303, %v1324
    %1326 = vdwg.mxu0
    %v1327 = vld [vmem:[#allocation6 + $0x380] sm:$0xff]
    %v1328 = vld [vmem:[#allocation6 + $0x388] sm:$0xff]
    %v1329 = vld [vmem:[#allocation6 + $0x390] sm:$0xff]
    %v1330 = vld [vmem:[#allocation6 + $0x398] sm:$0xff]
    %v1331 = vld [vmem:[#allocation6 + $0x3a0] sm:$0x1]
    %v1332 = vperm.slane %v1331, 0
    %1333 = vmatpush.msra.mxu0 0.0
    %1334 = vmatpush.msra.mxu0 0.0
    %1335 = vmatpush.msra.mxu0 0.0
    %1336 = vmatpush.msra.mxu0 0.0
    %1337 = vmatpush.msra.mxu0 0.0
    %1338 = vmatpush.msra.mxu0 0.0
    %1339 = vmatpush.msra.mxu0 0.0
    %1340 = vmatpush.msra.mxu0 0.0
    %1341 = vmatpush.msra.mxu0 0.0
    %1342 = vmatpush.msra.mxu0 0.0
    %1343 = vmatpush.msra.mxu0 0.0
    %1344 = vmatpush.msra.mxu0 0.0
    %1345 = vmatpush.msra.mxu0 %v1330
    %1346 = vmatpush.msra.mxu0 %v1329
    %1347 = vmatpush.msra.mxu0 %v1328
    %1348 = vmatpush.msra.mxu0 %v1327
    %1349 = vmatmul.f32.gmra.mxu0 %v1270
    %v1350 = vpop.f32.mrf.mxu0
    %v1351 = vadd.f32 %v1332, %v1350
    %1352 = vmatmul.f32.gmra.mxu0 %v1273
    %v1353 = vpop.f32.mrf.mxu0
    %v1354 = vadd.f32 %v1332, %v1353
    %1355 = vdwg.mxu0
    %1356 = vmatpush.msra.mxu0 0.0
    %1357 = vmatpush.msra.mxu0 0.0
    %1358 = vmatpush.msra.mxu0 0.0
    %1359 = vmatpush.msra.mxu0 0.0
    %1360 = vmatpush.msra.mxu0 0.0
    %1361 = vmatpush.msra.mxu0 0.0
    %1362 = vmatpush.msra.mxu0 0.0
    %1363 = vmatpush.msra.mxu0 0.0
    %1364 = vmatpush.msra.mxu0 0.0
    %1365 = vmatpush.msra.mxu0 0.0
    %1366 = vmatpush.msra.mxu0 0.0
    %1367 = vmatpush.msra.mxu0 0.0
    %1368 = vmatpush.msra.mxu0 0.0
    %1369 = vmatpush.msra.mxu0 0.0
    %1370 = vmatpush.msra.mxu0 %v1325
    %1371 = vmatpush.msra.mxu0 %v1322
    %1372 = vmatmul.f32.gmra.mxu0 %v215
    %v1373 = vpop.f32.mrf.mxu0
    %v1374 = vadd.f32 0.0, %v1373
    %1375 = vmatmul.f32.gmra.mxu0 %v218
    %v1376 = vpop.f32.mrf.mxu0
    %v1377 = vadd.f32 0.0, %v1376
    %1378 = vmatmul.f32.gmra.mxu0 %v221
    %v1379 = vpop.f32.mrf.mxu0
    %v1380 = vadd.f32 0.0, %v1379
    %1381 = vmatmul.f32.gmra.mxu0 %v224
    %v1382 = vpop.f32.mrf.mxu0
    %v1383 = vadd.f32 0.0, %v1382
    %1384 = vmatmul.f32.gmra.mxu0 %v227
    %v1385 = vpop.f32.mrf.mxu0
    %v1386 = vadd.f32 0.0, %v1385
    %1387 = vmatmul.f32.gmra.mxu0 %v230
    %v1388 = vpop.f32.mrf.mxu0
    %v1389 = vadd.f32 0.0, %v1388
    %1390 = vmatmul.f32.gmra.mxu0 %v233
    %v1391 = vpop.f32.mrf.mxu0
    %v1392 = vadd.f32 0.0, %v1391
    %1393 = vmatmul.f32.gmra.mxu0 %v236
    %v1394 = vpop.f32.mrf.mxu0
    %v1395 = vadd.f32 0.0, %v1394
    %1396 = vdwg.mxu0
    %v1397 = vmul.f32 %v1374, %v203
    %v1398 = vmul.f32 %v1377, %v204
    %v1399 = vmul.f32 %v1380, %v205
    %v1400 = vmul.f32 %v1383, %v206
    %v1401 = vmul.f32 %v1386, %v207
    %v1402 = vmul.f32 %v1389, %v208
    %v1403 = vmul.f32 %v1392, %v209
    %v1404 = vmul.f32 %v1395, %v210
    %1405 = vmatpush.msra.mxu0 0.0
    %1406 = vmatpush.msra.mxu0 0.0
    %1407 = vmatpush.msra.mxu0 0.0
    %1408 = vmatpush.msra.mxu0 0.0
    %1409 = vmatpush.msra.mxu0 0.0
    %1410 = vmatpush.msra.mxu0 0.0
    %1411 = vmatpush.msra.mxu0 0.0
    %1412 = vmatpush.msra.mxu0 0.0
    %1413 = vmatpush.msra.mxu0 0.0
    %1414 = vmatpush.msra.mxu0 0.0
    %1415 = vmatpush.msra.mxu0 0.0
    %1416 = vmatpush.msra.mxu0 0.0
    %1417 = vmatpush.msra.mxu0 0.0
    %1418 = vmatpush.msra.mxu0 0.0
    %1419 = vmatpush.msra.mxu0 %v1354
    %1420 = vmatpush.msra.mxu0 %v1351
    %1421 = vmatmul.f32.gmra.mxu0 %v215
    %v1422 = vpop.f32.mrf.mxu0
    %v1423 = vadd.f32 0.0, %v1422
    %1424 = vmatmul.f32.gmra.mxu0 %v218
    %v1425 = vpop.f32.mrf.mxu0
    %v1426 = vadd.f32 0.0, %v1425
    %1427 = vmatmul.f32.gmra.mxu0 %v221
    %v1428 = vpop.f32.mrf.mxu0
    %v1429 = vadd.f32 0.0, %v1428
    %1430 = vmatmul.f32.gmra.mxu0 %v224
    %v1431 = vpop.f32.mrf.mxu0
    %v1432 = vadd.f32 0.0, %v1431
    %1433 = vmatmul.f32.gmra.mxu0 %v227
    %v1434 = vpop.f32.mrf.mxu0
    %v1435 = vadd.f32 0.0, %v1434
    %1436 = vmatmul.f32.gmra.mxu0 %v230
    %v1437 = vpop.f32.mrf.mxu0
    %v1438 = vadd.f32 0.0, %v1437
    %1439 = vmatmul.f32.gmra.mxu0 %v233
    %v1440 = vpop.f32.mrf.mxu0
    %v1441 = vadd.f32 0.0, %v1440
    %1442 = vmatmul.f32.gmra.mxu0 %v236
    %v1443 = vpop.f32.mrf.mxu0
    %v1444 = vadd.f32 0.0, %v1443
    %1445 = vdwg.mxu0
    %v1446 = vmul.f32 %v1423, %v203
    %v1447 = vmul.f32 %v1426, %v204
    %v1448 = vmul.f32 %v1429, %v205
    %v1449 = vmul.f32 %v1432, %v206
    %v1450 = vmul.f32 %v1435, %v207
    %v1451 = vmul.f32 %v1438, %v208
    %v1452 = vmul.f32 %v1441, %v209
    %v1453 = vmul.f32 %v1444, %v210
    %v1455 = vsel %vm107, %v1293, 0
    %v1458 = vsel %vm107, %v1296, 0
    %v1461 = vsel %vm107, %v1397, 0
    %v1464 = vsel %vm107, %v1398, 0
    %v1467 = vsel %vm107, %v1399, 0
    %v1470 = vsel %vm107, %v1400, 0
    %v1473 = vsel %vm107, %v1401, 0
    %v1476 = vsel %vm107, %v1402, 0
    %v1479 = vsel %vm107, %v1403, 0
    %v1482 = vsel %vm107, %v1404, 0
    %1484 = vmatpush.xpose.msra.mxu0 0.0
    %1485 = vmatpush.xpose.msra.mxu0 0.0
    %1486 = vmatpush.xpose.msra.mxu0 0.0
    %1487 = vmatpush.xpose.msra.mxu0 0.0
    %1488 = vmatpush.xpose.msra.mxu0 0.0
    %1489 = vmatpush.xpose.msra.mxu0 0.0
    %1490 = vmatpush.xpose.msra.mxu0 0.0
    %1491 = vmatpush.xpose.msra.mxu0 0.0
    %1492 = vmatpush.xpose.msra.mxu0 %v1482
    %1493 = vmatpush.xpose.msra.mxu0 %v1479
    %1494 = vmatpush.xpose.msra.mxu0 %v1476
    %1495 = vmatpush.xpose.msra.mxu0 %v1473
    %1496 = vmatpush.xpose.msra.mxu0 %v1470
    %1497 = vmatpush.xpose.msra.mxu0 %v1467
    %1498 = vmatpush.xpose.msra.mxu0 %v1464
    %1499 = vmatpush.xpose.msra.mxu0 %v1461
    %1500 = vmatmul.f32.gmra.mxu0 %v1455
    %v1501 = vpop.f32.mrf.mxu0
    %v1502 = vadd.f32 %v211, %v1501
    %1503 = vmatmul.f32.gmra.mxu0 %v1458
    %v1504 = vpop.f32.mrf.mxu0
    %v1505 = vadd.f32 %v212, %v1504
    %1506 = vdwg.mxu0
    %v1507 = vsel %vm389, %v1502, -inf
    %1508 = vmax.xlane.f32.xlu0 %v1507
    %v1509 = vpop.xlane.xlu0 %1508
    %v1510 = vsel %vm389, %v1505, -inf
    %1511 = vmax.xlane.f32.xlu0 %v1510
    %v1512 = vpop.xlane.xlu0 %1511
    %v1513 = vsub.f32 %v1502, %v1509
    %v1514 = vsub.f32 %v1505, %v1512
    %v1515 = vmul.f32 %v1513, 1.442695
    %v1516 = vpow.pop %v1515
    %v1517 = vmul.f32 %v1514, 1.442695
    %v1518 = vpow.pop %v1517
    %v1520 = vsel %vm389, %v1516, 0
    %v1523 = vsel %vm389, %v1518, 0
    %1525 = vmatpush.msra.mxu0 0.0
    %1526 = vmatpush.msra.mxu0 0.0
    %1527 = vmatpush.msra.mxu0 0.0
    %1528 = vmatpush.msra.mxu0 0.0
    %1529 = vmatpush.msra.mxu0 0.0
    %1530 = vmatpush.msra.mxu0 0.0
    %1531 = vmatpush.msra.mxu0 0.0
    %1532 = vmatpush.msra.mxu0 0.0
    %1533 = vmatpush.msra.mxu0 %v1453
    %1534 = vmatpush.msra.mxu0 %v1452
    %1535 = vmatpush.msra.mxu0 %v1451
    %1536 = vmatpush.msra.mxu0 %v1450
    %1537 = vmatpush.msra.mxu0 %v1449
    %1538 = vmatpush.msra.mxu0 %v1448
    %1539 = vmatpush.msra.mxu0 %v1447
    %1540 = vmatpush.msra.mxu0 %v1446
    %1541 = vmatmul.f32.gmra.mxu0 %v1520
    %v1542 = vpop.f32.mrf.mxu0
    %v1543 = vadd.f32 0.0, %v1542
    %1544 = vmatmul.f32.gmra.mxu0 %v1523
    %v1545 = vpop.f32.mrf.mxu0
    %v1546 = vadd.f32 0.0, %v1545
    %1547 = vdwg.mxu0
    %1548 = vmatpush.msra.mxu0 0.0
    %1549 = vmatpush.msra.mxu0 0.0
    %1550 = vmatpush.msra.mxu0 0.0
    %1551 = vmatpush.msra.mxu0 0.0
    %1552 = vmatpush.msra.mxu0 0.0
    %1553 = vmatpush.msra.mxu0 0.0
    %1554 = vmatpush.msra.mxu0 0.0
    %1555 = vmatpush.msra.mxu0 0.0
    %1556 = vmatpush.msra.mxu0 %v210
    %1557 = vmatpush.msra.mxu0 %v209
    %1558 = vmatpush.msra.mxu0 %v208
    %1559 = vmatpush.msra.mxu0 %v207
    %1560 = vmatpush.msra.mxu0 %v206
    %1561 = vmatpush.msra.mxu0 %v205
    %1562 = vmatpush.msra.mxu0 %v204
    %1563 = vmatpush.msra.mxu0 %v203
    %1564 = vmatmul.f32.gmra.mxu0 %v1520
    %v1565 = vpop.f32.mrf.mxu0
    %v1566 = vadd.f32 0.0, %v1565
    %1567 = vmatmul.f32.gmra.mxu0 %v1523
    %v1568 = vpop.f32.mrf.mxu0
    %v1569 = vadd.f32 0.0, %v1568
    %1570 = vdwg.mxu0
    %v1571 = vrcp.pop %v1566
    %v1572 = vrcp.pop %v1569
    %v1573 = vmul.f32 %v1543, %v1571
    %v1574 = vmul.f32 %v1546, %v1572
    %v1575 = vld [vmem:[#allocation6 + $0x3a8] sm:$0xff]
    %v1576 = vld [vmem:[#allocation6 + $0x3b0] sm:$0xff]
    %v1577 = vld [vmem:[#allocation6 + $0x3b8] sm:$0xff]
    %v1578 = vld [vmem:[#allocation6 + $0x3c0] sm:$0xff]
    %v1579 = vld [vmem:[#allocation6 + $0x3c8] sm:$0x1]
    %v1580 = vperm.slane %v1579, 0
    %v1582 = vsel %vm107, %v1573, 0
    %v1585 = vsel %vm107, %v1574, 0
    %1587 = vmatpush.msra.mxu0 0.0
    %1588 = vmatpush.msra.mxu0 0.0
    %1589 = vmatpush.msra.mxu0 0.0
    %1590 = vmatpush.msra.mxu0 0.0
    %1591 = vmatpush.msra.mxu0 0.0
    %1592 = vmatpush.msra.mxu0 0.0
    %1593 = vmatpush.msra.mxu0 0.0
    %1594 = vmatpush.msra.mxu0 0.0
    %1595 = vmatpush.msra.mxu0 0.0
    %1596 = vmatpush.msra.mxu0 0.0
    %1597 = vmatpush.msra.mxu0 0.0
    %1598 = vmatpush.msra.mxu0 0.0
    %1599 = vmatpush.msra.mxu0 %v1578
    %1600 = vmatpush.msra.mxu0 %v1577
    %1601 = vmatpush.msra.mxu0 %v1576
    %1602 = vmatpush.msra.mxu0 %v1575
    %1603 = vmatmul.f32.gmra.mxu0 %v1582
    %v1604 = vpop.f32.mrf.mxu0
    %v1605 = vadd.f32 %v1580, %v1604
    %1606 = vmatmul.f32.gmra.mxu0 %v1585
    %v1607 = vpop.f32.mrf.mxu0
    %v1608 = vadd.f32 %v1580, %v1607
    %1609 = vdwg.mxu0
    %v1610 = vadd.f32 %v1261, %v1605
    %v1611 = vadd.f32 %v1262, %v1608
    %v1612 = vld [vmem:[#allocation6 + $0x3d0] sm:$0x1]
    %v1613 = vld [vmem:[#allocation6 + $0x3d8] sm:$0x1]
    %v1614 = vsel %vm107, %v1610, 0.0
    %1615 = vadd.xlane.f32.xlu0 %v1614
    %v1616 = vpop.xlane.xlu0 %1615
    %v1617 = vsel %vm107, %v1611, 0.0
    %1618 = vadd.xlane.f32.xlu0 %v1617
    %v1619 = vpop.xlane.xlu0 %1618
    %v1620 = vmul.f32 %v1616, %v509
    %v1621 = vmul.f32 %v1619, %v509
    %v1622 = vmul.f32 %v1610, %v1610
    %v1623 = vmul.f32 %v1611, %v1611
    %v1624 = vsel %vm107, %v1622, 0.0
    %1625 = vadd.xlane.f32.xlu0 %v1624
    %v1626 = vpop.xlane.xlu0 %1625
    %v1627 = vsel %vm107, %v1623, 0.0
    %1628 = vadd.xlane.f32.xlu0 %v1627
    %v1629 = vpop.xlane.xlu0 %1628
    %v1630 = vmul.f32 %v1626, %v509
    %v1631 = vmul.f32 %v1629, %v509
    %v1632 = vmul.f32 %v1620, %v1620
    %v1633 = vmul.f32 %v1621, %v1621
    %v1634 = vsub.f32 %v1630, %v1632
    %v1635 = vsub.f32 %v1631, %v1633
    %v1636 = vsub.f32 %v1610, %v1620
    %v1637 = vsub.f32 %v1611, %v1621
    %v1638 = vadd.f32 %v1634, 1e-05
    %v1639 = vadd.f32 %v1635, 1e-05
    %v1640 = vrsqrt.pop %v1638
    %v1641 = vmul.f32 %v1640, %v1638
    %v1642 = vmul.f32 %v1641, %v1640
    %v1643 = vmul.f32 0.5, %v1642
    %v1644 = vsub.f32 1.5, %v1643
    %v1645 = vmul.f32 %v1640, %v1644
    %vm1646 = vweird.f32 %v1638
    %vm1647 = vweird.f32 %v1640
    %vm1648 = vmor %vm1646, %vm1647
    %v1649 = vsel %vm1648, %v1640, %v1645
    %v1650 = vrsqrt.pop %v1639
    %v1651 = vmul.f32 %v1650, %v1639
    %v1652 = vmul.f32 %v1651, %v1650
    %v1653 = vmul.f32 0.5, %v1652
    %v1654 = vsub.f32 1.5, %v1653
    %v1655 = vmul.f32 %v1650, %v1654
    %vm1656 = vweird.f32 %v1639
    %vm1657 = vweird.f32 %v1650
    %vm1658 = vmor %vm1656, %vm1657
    %v1659 = vsel %vm1658, %v1650, %v1655
    %v1660 = vmul.f32 %v1636, %v1649
    %v1661 = vmul.f32 %v1637, %v1659
    %v1662 = vperm.slane %v1612, 0
    %v1663 = vmul.f32 %v1660, %v1662
    %v1664 = vmul.f32 %v1661, %v1662
    %v1665 = vperm.slane %v1613, 0
    %v1666 = vadd.f32 %v1663, %v1665
    %v1667 = vadd.f32 %v1664, %v1665
    %v1668 = vld [vmem:[#allocation6 + $0x3e0] sm:$0xff]
    %v1669 = vld [vmem:[#allocation6 + $0x3e8] sm:$0xff]
    %v1670 = vld [vmem:[#allocation6 + $0x3f0] sm:$0xff]
    %v1671 = vld [vmem:[#allocation6 + $0x3f8] sm:$0xff]
    %v1672 = vld [vmem:[#allocation6 + $0x400] sm:$0x1]
    %v1673 = vperm.slane %v1672, 0
    %v1675 = vsel %vm107, %v1666, 0
    %v1678 = vsel %vm107, %v1667, 0
    %1680 = vmatpush.msra.mxu0 0.0
    %1681 = vmatpush.msra.mxu0 0.0
    %1682 = vmatpush.msra.mxu0 0.0
    %1683 = vmatpush.msra.mxu0 0.0
    %1684 = vmatpush.msra.mxu0 0.0
    %1685 = vmatpush.msra.mxu0 0.0
    %1686 = vmatpush.msra.mxu0 0.0
    %1687 = vmatpush.msra.mxu0 0.0
    %1688 = vmatpush.msra.mxu0 0.0
    %1689 = vmatpush.msra.mxu0 0.0
    %1690 = vmatpush.msra.mxu0 0.0
    %1691 = vmatpush.msra.mxu0 0.0
    %1692 = vmatpush.msra.mxu0 %v1671
    %1693 = vmatpush.msra.mxu0 %v1670
    %1694 = vmatpush.msra.mxu0 %v1669
    %1695 = vmatpush.msra.mxu0 %v1668
    %1696 = vmatmul.f32.gmra.mxu0 %v1675
    %v1697 = vpop.f32.mrf.mxu0
    %v1698 = vadd.f32 %v1673, %v1697
    %1699 = vmatmul.f32.gmra.mxu0 %v1678
    %v1700 = vpop.f32.mrf.mxu0
    %v1701 = vadd.f32 %v1673, %v1700
    %1702 = vdwg.mxu0
    %v1703 = vmul.f32 %v1698, 0.5
    %v1704 = vmul.f32 %v1701, 0.5
    %v1705 = vmul.f32 %v1698, 0.044715
    %v1706 = vmul.f32 %v1701, 0.044715
    %v1707 = vmul.f32 %v1705, %v1698
    %v1708 = vmul.f32 %v1706, %v1701
    %v1709 = vmul.f32 %v1707, %v1698
    %v1710 = vmul.f32 %v1708, %v1701
    %v1711 = vadd.f32 %v1698, %v1709
    %v1712 = vadd.f32 %v1701, %v1710
    %v1713 = vmul.f32 %v1711, 0.7978846
    %v1714 = vmul.f32 %v1712, 0.7978846
    %v1715 = vtanh.pop %v1713
    %v1716 = vtanh.pop %v1714
    %v1717 = vadd.f32 %v1715, 1.0
    %v1718 = vadd.f32 %v1716, 1.0
    %v1719 = vmul.f32 %v1703, %v1717
    %v1720 = vmul.f32 %v1704, %v1718
    %v1721 = vld [vmem:[#allocation6 + $0x408] sm:$0xff]
    %v1722 = vld [vmem:[#allocation6 + $0x410] sm:$0xff]
    %v1723 = vld [vmem:[#allocation6 + $0x418] sm:$0xff]
    %v1724 = vld [vmem:[#allocation6 + $0x420] sm:$0xff]
    %v1725 = vld [vmem:[#allocation6 + $0x428] sm:$0xff]
    %v1726 = vld [vmem:[#allocation6 + $0x430] sm:$0xff]
    %v1727 = vld [vmem:[#allocation6 + $0x438] sm:$0xff]
    %v1728 = vld [vmem:[#allocation6 + $0x440] sm:$0xff]
    %v1729 = vld [vmem:[#allocation6 + $0x448] sm:$0x1]
    %v1730 = vperm.slane %v1729, 0
    %v1732 = vsel %vm389, %v1719, 0
    %v1735 = vsel %vm389, %v1720, 0
    %1737 = vmatpush.msra.mxu0 0.0
    %1738 = vmatpush.msra.mxu0 0.0
    %1739 = vmatpush.msra.mxu0 0.0
    %1740 = vmatpush.msra.mxu0 0.0
    %1741 = vmatpush.msra.mxu0 0.0
    %1742 = vmatpush.msra.mxu0 0.0
    %1743 = vmatpush.msra.mxu0 0.0
    %1744 = vmatpush.msra.mxu0 0.0
    %1745 = vmatpush.msra.mxu0 %v1728
    %1746 = vmatpush.msra.mxu0 %v1727
    %1747 = vmatpush.msra.mxu0 %v1726
    %1748 = vmatpush.msra.mxu0 %v1725
    %1749 = vmatpush.msra.mxu0 %v1724
    %1750 = vmatpush.msra.mxu0 %v1723
    %1751 = vmatpush.msra.mxu0 %v1722
    %1752 = vmatpush.msra.mxu0 %v1721
    %1753 = vmatmul.f32.gmra.mxu0 %v1732
    %v1754 = vpop.f32.mrf.mxu0
    %v1755 = vadd.f32 %v1730, %v1754
    %1756 = vmatmul.f32.gmra.mxu0 %v1735
    %v1757 = vpop.f32.mrf.mxu0
    %v1758 = vadd.f32 %v1730, %v1757
    %1759 = vdwg.mxu0
    %v1760 = vadd.f32 %v1666, %v1755
    %v1761 = vadd.f32 %v1667, %v1758
    %v1762 = vld [vmem:[#allocation6 + $0x450] sm:$0x1]
    %v1763 = vld [vmem:[#allocation6 + $0x458] sm:$0x1]
    %v1764 = vsel %vm107, %v1760, 0.0
    %1765 = vadd.xlane.f32.xlu0 %v1764
    %v1766 = vpop.xlane.xlu0 %1765
    %v1767 = vsel %vm107, %v1761, 0.0
    %1768 = vadd.xlane.f32.xlu0 %v1767
    %v1769 = vpop.xlane.xlu0 %1768
    %v1770 = vmul.f32 %v1766, %v509
    %v1771 = vmul.f32 %v1769, %v509
    %v1772 = vmul.f32 %v1760, %v1760
    %v1773 = vmul.f32 %v1761, %v1761
    %v1774 = vsel %vm107, %v1772, 0.0
    %1775 = vadd.xlane.f32.xlu0 %v1774
    %v1776 = vpop.xlane.xlu0 %1775
    %v1777 = vsel %vm107, %v1773, 0.0
    %1778 = vadd.xlane.f32.xlu0 %v1777
    %v1779 = vpop.xlane.xlu0 %1778
    %v1780 = vmul.f32 %v1776, %v509
    %v1781 = vmul.f32 %v1779, %v509
    %v1782 = vmul.f32 %v1770, %v1770
    %v1783 = vmul.f32 %v1771, %v1771
    %v1784 = vsub.f32 %v1780, %v1782
    %v1785 = vsub.f32 %v1781, %v1783
    %v1786 = vsub.f32 %v1760, %v1770
    %v1787 = vsub.f32 %v1761, %v1771
    %v1788 = vadd.f32 %v1784, 1e-05
    %v1789 = vadd.f32 %v1785, 1e-05
    %v1790 = vrsqrt.pop %v1788
    %v1791 = vmul.f32 %v1790, %v1788
    %v1792 = vmul.f32 %v1791, %v1790
    %v1793 = vmul.f32 0.5, %v1792
    %v1794 = vsub.f32 1.5, %v1793
    %v1795 = vmul.f32 %v1790, %v1794
    %vm1796 = vweird.f32 %v1788
    %vm1797 = vweird.f32 %v1790
    %vm1798 = vmor %vm1796, %vm1797
    %v1799 = vsel %vm1798, %v1790, %v1795
    %v1800 = vrsqrt.pop %v1789
    %v1801 = vmul.f32 %v1800, %v1789
    %v1802 = vmul.f32 %v1801, %v1800
    %v1803 = vmul.f32 0.5, %v1802
    %v1804 = vsub.f32 1.5, %v1803
    %v1805 = vmul.f32 %v1800, %v1804
    %vm1806 = vweird.f32 %v1789
    %vm1807 = vweird.f32 %v1800
    %vm1808 = vmor %vm1806, %vm1807
    %v1809 = vsel %vm1808, %v1800, %v1805
    %v1810 = vmul.f32 %v1786, %v1799
    %v1811 = vmul.f32 %v1787, %v1809
    %v1812 = vperm.slane %v1762, 0
    %v1813 = vmul.f32 %v1810, %v1812
    %v1814 = vmul.f32 %v1811, %v1812
    %v1815 = vperm.slane %v1763, 0
    %v1816 = vadd.f32 %v1813, %v1815
    %v1817 = vadd.f32 %v1814, %v1815
    %v1818 = vld [vmem:[#allocation6 + $0x460] sm:$0xff]
    %v1819 = vld [vmem:[#allocation6 + $0x468] sm:$0xff]
    %v1820 = vld [vmem:[#allocation6 + $0x470] sm:$0xff]
    %v1821 = vld [vmem:[#allocation6 + $0x478] sm:$0xff]
    %v1822 = vld [vmem:[#allocation6 + $0x480] sm:$0x1]
    %v1823 = vperm.slane %v1822, 0
    %v1825 = vsel %vm107, %v1816, 0
    %v1828 = vsel %vm107, %v1817, 0
    %1830 = vmatpush.msra.mxu0 0.0
    %1831 = vmatpush.msra.mxu0 0.0
    %1832 = vmatpush.msra.mxu0 0.0
    %1833 = vmatpush.msra.mxu0 0.0
    %1834 = vmatpush.msra.mxu0 0.0
    %1835 = vmatpush.msra.mxu0 0.0
    %1836 = vmatpush.msra.mxu0 0.0
    %1837 = vmatpush.msra.mxu0 0.0
    %1838 = vmatpush.msra.mxu0 0.0
    %1839 = vmatpush.msra.mxu0 0.0
    %1840 = vmatpush.msra.mxu0 0.0
    %1841 = vmatpush.msra.mxu0 0.0
    %1842 = vmatpush.msra.mxu0 %v1821
    %1843 = vmatpush.msra.mxu0 %v1820
    %1844 = vmatpush.msra.mxu0 %v1819
    %1845 = vmatpush.msra.mxu0 %v1818
    %1846 = vmatmul.f32.gmra.mxu0 %v1825
    %v1847 = vpop.f32.mrf.mxu0
    %v1848 = vadd.f32 %v1823, %v1847
    %1849 = vmatmul.f32.gmra.mxu0 %v1828
    %v1850 = vpop.f32.mrf.mxu0
    %v1851 = vadd.f32 %v1823, %v1850
    %1852 = vdwg.mxu0
    %v1853 = vld [vmem:[#allocation6 + $0x488] sm:$0xff]
    %v1854 = vld [vmem:[#allocation6 + $0x490] sm:$0xff]
    %v1855 = vld [vmem:[#allocation6 + $0x498] sm:$0xff]
    %v1856 = vld [vmem:[#allocation6 + $0x4a0] sm:$0xff]
    %v1857 = vld [vmem:[#allocation6 + $0x4a8] sm:$0x1]
    %v1858 = vperm.slane %v1857, 0
    %1859 = vmatpush.msra.mxu0 0.0
    %1860 = vmatpush.msra.mxu0 0.0
    %1861 = vmatpush.msra.mxu0 0.0
    %1862 = vmatpush.msra.mxu0 0.0
    %1863 = vmatpush.msra.mxu0 0.0
    %1864 = vmatpush.msra.mxu0 0.0
    %1865 = vmatpush.msra.mxu0 0.0
    %1866 = vmatpush.msra.mxu0 0.0
    %1867 = vmatpush.msra.mxu0 0.0
    %1868 = vmatpush.msra.mxu0 0.0
    %1869 = vmatpush.msra.mxu0 0.0
    %1870 = vmatpush.msra.mxu0 0.0
    %1871 = vmatpush.msra.mxu0 %v1856
    %1872 = vmatpush.msra.mxu0 %v1855
    %1873 = vmatpush.msra.mxu0 %v1854
    %1874 = vmatpush.msra.mxu0 %v1853
    %1875 = vmatmul.f32.gmra.mxu0 %v1825
    %v1876 = vpop.f32.mrf.mxu0
    %v1877 = vadd.f32 %v1858, %v1876
    %1878 = vmatmul.f32.gmra.mxu0 %v1828
    %v1879 = vpop.f32.mrf.mxu0
    %v1880 = vadd.f32 %v1858, %v1879
    %1881 = vdwg.mxu0
    %v1882 = vld [vmem:[#allocation6 + $0x4b0] sm:$0xff]
    %v1883 = vld [vmem:[#allocation6 + $0x4b8] sm:$0xff]
    %v1884 = vld [vmem:[#allocation6 + $0x4c0] sm:$0xff]
    %v1885 = vld [vmem:[#allocation6 + $0x4c8] sm:$0xff]
    %v1886 = vld [vmem:[#allocation6 + $0x4d0] sm:$0x1]
    %v1887 = vperm.slane %v1886, 0
    %1888 = vmatpush.msra.mxu0 0.0
    %1889 = vmatpush.msra.mxu0 0.0
    %1890 = vmatpush.msra.mxu0 0.0
    %1891 = vmatpush.msra.mxu0 0.0
    %1892 = vmatpush.msra.mxu0 0.0
    %1893 = vmatpush.msra.mxu0 0.0
    %1894 = vmatpush.msra.mxu0 0.0
    %1895 = vmatpush.msra.mxu0 0.0
    %1896 = vmatpush.msra.mxu0 0.0
    %1897 = vmatpush.msra.mxu0 0.0
    %1898 = vmatpush.msra.mxu0 0.0
    %1899 = vmatpush.msra.mxu0 0.0
    %1900 = vmatpush.msra.mxu0 %v1885
    %1901 = vmatpush.msra.mxu0 %v1884
    %1902 = vmatpush.msra.mxu0 %v1883
    %1903 = vmatpush.msra.mxu0 %v1882
    %1904 = vmatmul.f32.gmra.mxu0 %v1825
    %v1905 = vpop.f32.mrf.mxu0
    %v1906 = vadd.f32 %v1887, %v1905
    %1907 = vmatmul.f32.gmra.mxu0 %v1828
    %v1908 = vpop.f32.mrf.mxu0
    %v1909 = vadd.f32 %v1887, %v1908
    %1910 = vdwg.mxu0
    %1911 = vmatpush.msra.mxu0 0.0
    %1912 = vmatpush.msra.mxu0 0.0
    %1913 = vmatpush.msra.mxu0 0.0
    %1914 = vmatpush.msra.mxu0 0.0
    %1915 = vmatpush.msra.mxu0 0.0
    %1916 = vmatpush.msra.mxu0 0.0
    %1917 = vmatpush.msra.mxu0 0.0
    %1918 = vmatpush.msra.mxu0 0.0
    %1919 = vmatpush.msra.mxu0 0.0
    %1920 = vmatpush.msra.mxu0 0.0
    %1921 = vmatpush.msra.mxu0 0.0
    %1922 = vmatpush.msra.mxu0 0.0
    %1923 = vmatpush.msra.mxu0 0.0
    %1924 = vmatpush.msra.mxu0 0.0
    %1925 = vmatpush.msra.mxu0 %v1880
    %1926 = vmatpush.msra.mxu0 %v1877
    %1927 = vmatmul.f32.gmra.mxu0 %v215
    %v1928 = vpop.f32.mrf.mxu0
    %v1929 = vadd.f32 0.0, %v1928
    %1930 = vmatmul.f32.gmra.mxu0 %v218
    %v1931 = vpop.f32.mrf.mxu0
    %v1932 = vadd.f32 0.0, %v1931
    %1933 = vmatmul.f32.gmra.mxu0 %v221
    %v1934 = vpop.f32.mrf.mxu0
    %v1935 = vadd.f32 0.0, %v1934
    %1936 = vmatmul.f32.gmra.mxu0 %v224
    %v1937 = vpop.f32.mrf.mxu0
    %v1938 = vadd.f32 0.0, %v1937
    %1939 = vmatmul.f32.gmra.mxu0 %v227
    %v1940 = vpop.f32.mrf.mxu0
    %v1941 = vadd.f32 0.0, %v1940
    %1942 = vmatmul.f32.gmra.mxu0 %v230
    %v1943 = vpop.f32.mrf.mxu0
    %v1944 = vadd.f32 0.0, %v1943
    %1945 = vmatmul.f32.gmra.mxu0 %v233
    %v1946 = vpop.f32.mrf.mxu0
    %v1947 = vadd.f32 0.0, %v1946
    %1948 = vmatmul.f32.gmra.mxu0 %v236
    %v1949 = vpop.f32.mrf.mxu0
    %v1950 = vadd.f32 0.0, %v1949
    %1951 = vdwg.mxu0
    %v1952 = vmul.f32 %v1929, %v203
    %v1953 = vmul.f32 %v1932, %v204
    %v1954 = vmul.f32 %v1935, %v205
    %v1955 = vmul.f32 %v1938, %v206
    %v1956 = vmul.f32 %v1941, %v207
    %v1957 = vmul.f32 %v1944, %v208
    %v1958 = vmul.f32 %v1947, %v209
    %v1959 = vmul.f32 %v1950, %v210
    %1960 = vmatpush.msra.mxu0 0.0
    %1961 = vmatpush.msra.mxu0 0.0
    %1962 = vmatpush.msra.mxu0 0.0
    %1963 = vmatpush.msra.mxu0 0.0
    %1964 = vmatpush.msra.mxu0 0.0
    %1965 = vmatpush.msra.mxu0 0.0
    %1966 = vmatpush.msra.mxu0 0.0
    %1967 = vmatpush.msra.mxu0 0.0
    %1968 = vmatpush.msra.mxu0 0.0
    %1969 = vmatpush.msra.mxu0 0.0
    %1970 = vmatpush.msra.mxu0 0.0
    %1971 = vmatpush.msra.mxu0 0.0
    %1972 = vmatpush.msra.mxu0 0.0
    %1973 = vmatpush.msra.mxu0 0.0
    %1974 = vmatpush.msra.mxu0 %v1909
    %1975 = vmatpush.msra.mxu0 %v1906
    %1976 = vmatmul.f32.gmra.mxu0 %v215
    %v1977 = vpop.f32.mrf.mxu0
    %v1978 = vadd.f32 0.0, %v1977
    %1979 = vmatmul.f32.gmra.mxu0 %v218
    %v1980 = vpop.f32.mrf.mxu0
    %v1981 = vadd.f32 0.0, %v1980
    %1982 = vmatmul.f32.gmra.mxu0 %v221
    %v1983 = vpop.f32.mrf.mxu0
    %v1984 = vadd.f32 0.0, %v1983
    %1985 = vmatmul.f32.gmra.mxu0 %v224
    %v1986 = vpop.f32.mrf.mxu0
    %v1987 = vadd.f32 0.0, %v1986
    %1988 = vmatmul.f32.gmra.mxu0 %v227
    %v1989 = vpop.f32.mrf.mxu0
    %v1990 = vadd.f32 0.0, %v1989
    %1991 = vmatmul.f32.gmra.mxu0 %v230
    %v1992 = vpop.f32.mrf.mxu0
    %v1993 = vadd.f32 0.0, %v1992
    %1994 = vmatmul.f32.gmra.mxu0 %v233
    %v1995 = vpop.f32.mrf.mxu0
    %v1996 = vadd.f32 0.0, %v1995
    %1997 = vmatmul.f32.gmra.mxu0 %v236
    %v1998 = vpop.f32.mrf.mxu0
    %v1999 = vadd.f32 0.0, %v1998
    %2000 = vdwg.mxu0
    %v2001 = vmul.f32 %v1978, %v203
    %v2002 = vmul.f32 %v1981, %v204
    %v2003 = vmul.f32 %v1984, %v205
    %v2004 = vmul.f32 %v1987, %v206
    %v2005 = vmul.f32 %v1990, %v207
    %v2006 = vmul.f32 %v1993, %v208
    %v2007 = vmul.f32 %v1996, %v209
    %v2008 = vmul.f32 %v1999, %v210
    %v2010 = vsel %vm107, %v1848, 0
    %v2013 = vsel %vm107, %v1851, 0
    %v2016 = vsel %vm107, %v1952, 0
    %v2019 = vsel %vm107, %v1953, 0
    %v2022 = vsel %vm107, %v1954, 0
    %v2025 = vsel %vm107, %v1955, 0
    %v2028 = vsel %vm107, %v1956, 0
    %v2031 = vsel %vm107, %v1957, 0
    %v2034 = vsel %vm107, %v1958, 0
    %v2037 = vsel %vm107, %v1959, 0
    %2039 = vmatpush.xpose.msra.mxu0 0.0
    %2040 = vmatpush.xpose.msra.mxu0 0.0
    %2041 = vmatpush.xpose.msra.mxu0 0.0
    %2042 = vmatpush.xpose.msra.mxu0 0.0
    %2043 = vmatpush.xpose.msra.mxu0 0.0
    %2044 = vmatpush.xpose.msra.mxu0 0.0
    %2045 = vmatpush.xpose.msra.mxu0 0.0
    %2046 = vmatpush.xpose.msra.mxu0 0.0
    %2047 = vmatpush.xpose.msra.mxu0 %v2037
    %2048 = vmatpush.xpose.msra.mxu0 %v2034
    %2049 = vmatpush.xpose.msra.mxu0 %v2031
    %2050 = vmatpush.xpose.msra.mxu0 %v2028
    %2051 = vmatpush.xpose.msra.mxu0 %v2025
    %2052 = vmatpush.xpose.msra.mxu0 %v2022
    %2053 = vmatpush.xpose.msra.mxu0 %v2019
    %2054 = vmatpush.xpose.msra.mxu0 %v2016
    %2055 = vmatmul.f32.gmra.mxu0 %v2010
    %v2056 = vpop.f32.mrf.mxu0
    %v2057 = vadd.f32 %v211, %v2056
    %2058 = vmatmul.f32.gmra.mxu0 %v2013
    %v2059 = vpop.f32.mrf.mxu0
    %v2060 = vadd.f32 %v212, %v2059
    %2061 = vdwg.mxu0
    %v2062 = vsel %vm389, %v2057, -inf
    %2063 = vmax.xlane.f32.xlu0 %v2062
    %v2064 = vpop.xlane.xlu0 %2063
    %v2065 = vsel %vm389, %v2060, -inf
    %2066 = vmax.xlane.f32.xlu0 %v2065
    %v2067 = vpop.xlane.xlu0 %2066
    %v2068 = vsub.f32 %v2057, %v2064
    %v2069 = vsub.f32 %v2060, %v2067
    %v2070 = vmul.f32 %v2068, 1.442695
    %v2071 = vpow.pop %v2070
    %v2072 = vmul.f32 %v2069, 1.442695
    %v2073 = vpow.pop %v2072
    %v2075 = vsel %vm389, %v2071, 0
    %v2078 = vsel %vm389, %v2073, 0
    %2080 = vmatpush.msra.mxu0 0.0
    %2081 = vmatpush.msra.mxu0 0.0
    %2082 = vmatpush.msra.mxu0 0.0
    %2083 = vmatpush.msra.mxu0 0.0
    %2084 = vmatpush.msra.mxu0 0.0
    %2085 = vmatpush.msra.mxu0 0.0
    %2086 = vmatpush.msra.mxu0 0.0
    %2087 = vmatpush.msra.mxu0 0.0
    %2088 = vmatpush.msra.mxu0 %v2008
    %2089 = vmatpush.msra.mxu0 %v2007
    %2090 = vmatpush.msra.mxu0 %v2006
    %2091 = vmatpush.msra.mxu0 %v2005
    %2092 = vmatpush.msra.mxu0 %v2004
    %2093 = vmatpush.msra.mxu0 %v2003
    %2094 = vmatpush.msra.mxu0 %v2002
    %2095 = vmatpush.msra.mxu0 %v2001
    %2096 = vmatmul.f32.gmra.mxu0 %v2075
    %v2097 = vpop.f32.mrf.mxu0
    %v2098 = vadd.f32 0.0, %v2097
    %2099 = vmatmul.f32.gmra.mxu0 %v2078
    %v2100 = vpop.f32.mrf.mxu0
    %v2101 = vadd.f32 0.0, %v2100
    %2102 = vdwg.mxu0
    %2103 = vmatpush.msra.mxu0 0.0
    %2104 = vmatpush.msra.mxu0 0.0
    %2105 = vmatpush.msra.mxu0 0.0
    %2106 = vmatpush.msra.mxu0 0.0
    %2107 = vmatpush.msra.mxu0 0.0
    %2108 = vmatpush.msra.mxu0 0.0
    %2109 = vmatpush.msra.mxu0 0.0
    %2110 = vmatpush.msra.mxu0 0.0
    %2111 = vmatpush.msra.mxu0 %v210
    %2112 = vmatpush.msra.mxu0 %v209
    %2113 = vmatpush.msra.mxu0 %v208
    %2114 = vmatpush.msra.mxu0 %v207
    %2115 = vmatpush.msra.mxu0 %v206
    %2116 = vmatpush.msra.mxu0 %v205
    %2117 = vmatpush.msra.mxu0 %v204
    %2118 = vmatpush.msra.mxu0 %v203
    %2119 = vmatmul.f32.gmra.mxu0 %v2075
    %v2120 = vpop.f32.mrf.mxu0
    %v2121 = vadd.f32 0.0, %v2120
    %2122 = vmatmul.f32.gmra.mxu0 %v2078
    %v2123 = vpop.f32.mrf.mxu0
    %v2124 = vadd.f32 0.0, %v2123
    %2125 = vdwg.mxu0
    %v2126 = vrcp.pop %v2121
    %v2127 = vrcp.pop %v2124
    %v2128 = vmul.f32 %v2098, %v2126
    %v2129 = vmul.f32 %v2101, %v2127
    %v2130 = vld [vmem:[#allocation6 + $0x4d8] sm:$0xff]
    %v2131 = vld [vmem:[#allocation6 + $0x4e0] sm:$0xff]
    %v2132 = vld [vmem:[#allocation6 + $0x4e8] sm:$0xff]
    %v2133 = vld [vmem:[#allocation6 + $0x4f0] sm:$0xff]
    %v2134 = vld [vmem:[#allocation6 + $0x4f8] sm:$0x1]
    %v2135 = vperm.slane %v2134, 0
    %v2137 = vsel %vm107, %v2128, 0
    %v2140 = vsel %vm107, %v2129, 0
    %2142 = vmatpush.msra.mxu0 0.0
    %2143 = vmatpush.msra.mxu0 0.0
    %2144 = vmatpush.msra.mxu0 0.0
    %2145 = vmatpush.msra.mxu0 0.0
    %2146 = vmatpush.msra.mxu0 0.0
    %2147 = vmatpush.msra.mxu0 0.0
    %2148 = vmatpush.msra.mxu0 0.0
    %2149 = vmatpush.msra.mxu0 0.0
    %2150 = vmatpush.msra.mxu0 0.0
    %2151 = vmatpush.msra.mxu0 0.0
    %2152 = vmatpush.msra.mxu0 0.0
    %2153 = vmatpush.msra.mxu0 0.0
    %2154 = vmatpush.msra.mxu0 %v2133
    %2155 = vmatpush.msra.mxu0 %v2132
    %2156 = vmatpush.msra.mxu0 %v2131
    %2157 = vmatpush.msra.mxu0 %v2130
    %2158 = vmatmul.f32.gmra.mxu0 %v2137
    %v2159 = vpop.f32.mrf.mxu0
    %v2160 = vadd.f32 %v2135, %v2159
    %2161 = vmatmul.f32.gmra.mxu0 %v2140
    %v2162 = vpop.f32.mrf.mxu0
    %v2163 = vadd.f32 %v2135, %v2162
    %2164 = vdwg.mxu0
    %v2165 = vadd.f32 %v1816, %v2160
    %v2166 = vadd.f32 %v1817, %v2163
    %v2167 = vld [vmem:[#allocation6 + $0x500] sm:$0x1]
    %v2168 = vld [vmem:[#allocation6 + $0x508] sm:$0x1]
    %v2169 = vsel %vm107, %v2165, 0.0
    %2170 = vadd.xlane.f32.xlu0 %v2169
    %v2171 = vpop.xlane.xlu0 %2170
    %v2172 = vsel %vm107, %v2166, 0.0
    %2173 = vadd.xlane.f32.xlu0 %v2172
    %v2174 = vpop.xlane.xlu0 %2173
    %v2175 = vmul.f32 %v2171, %v509
    %v2176 = vmul.f32 %v2174, %v509
    %v2177 = vmul.f32 %v2165, %v2165
    %v2178 = vmul.f32 %v2166, %v2166
    %v2179 = vsel %vm107, %v2177, 0.0
    %2180 = vadd.xlane.f32.xlu0 %v2179
    %v2181 = vpop.xlane.xlu0 %2180
    %v2182 = vsel %vm107, %v2178, 0.0
    %2183 = vadd.xlane.f32.xlu0 %v2182
    %v2184 = vpop.xlane.xlu0 %2183
    %v2185 = vmul.f32 %v2181, %v509
    %v2186 = vmul.f32 %v2184, %v509
    %v2187 = vmul.f32 %v2175, %v2175
    %v2188 = vmul.f32 %v2176, %v2176
    %v2189 = vsub.f32 %v2185, %v2187
    %v2190 = vsub.f32 %v2186, %v2188
    %v2191 = vsub.f32 %v2165, %v2175
    %v2192 = vsub.f32 %v2166, %v2176
    %v2193 = vadd.f32 %v2189, 1e-05
    %v2194 = vadd.f32 %v2190, 1e-05
    %v2195 = vrsqrt.pop %v2193
    %v2196 = vmul.f32 %v2195, %v2193
    %v2197 = vmul.f32 %v2196, %v2195
    %v2198 = vmul.f32 0.5, %v2197
    %v2199 = vsub.f32 1.5, %v2198
    %v2200 = vmul.f32 %v2195, %v2199
    %vm2201 = vweird.f32 %v2193
    %vm2202 = vweird.f32 %v2195
    %vm2203 = vmor %vm2201, %vm2202
    %v2204 = vsel %vm2203, %v2195, %v2200
    %v2205 = vrsqrt.pop %v2194
    %v2206 = vmul.f32 %v2205, %v2194
    %v2207 = vmul.f32 %v2206, %v2205
    %v2208 = vmul.f32 0.5, %v2207
    %v2209 = vsub.f32 1.5, %v2208
    %v2210 = vmul.f32 %v2205, %v2209
    %vm2211 = vweird.f32 %v2194
    %vm2212 = vweird.f32 %v2205
    %vm2213 = vmor %vm2211, %vm2212
    %v2214 = vsel %vm2213, %v2205, %v2210
    %v2215 = vmul.f32 %v2191, %v2204
    %v2216 = vmul.f32 %v2192, %v2214
    %v2217 = vperm.slane %v2167, 0
    %v2218 = vmul.f32 %v2215, %v2217
    %v2219 = vmul.f32 %v2216, %v2217
    %v2220 = vperm.slane %v2168, 0
    %v2221 = vadd.f32 %v2218, %v2220
    %v2222 = vadd.f32 %v2219, %v2220
    %v2223 = vld [vmem:[#allocation6 + $0x510] sm:$0xff]
    %v2224 = vld [vmem:[#allocation6 + $0x518] sm:$0xff]
    %v2225 = vld [vmem:[#allocation6 + $0x520] sm:$0xff]
    %v2226 = vld [vmem:[#allocation6 + $0x528] sm:$0xff]
    %v2227 = vld [vmem:[#allocation6 + $0x530] sm:$0x1]
    %v2228 = vperm.slane %v2227, 0
    %v2230 = vsel %vm107, %v2221, 0
    %v2233 = vsel %vm107, %v2222, 0
    %2235 = vmatpush.msra.mxu0 0.0
    %2236 = vmatpush.msra.mxu0 0.0
    %2237 = vmatpush.msra.mxu0 0.0
    %2238 = vmatpush.msra.mxu0 0.0
    %2239 = vmatpush.msra.mxu0 0.0
    %2240 = vmatpush.msra.mxu0 0.0
    %2241 = vmatpush.msra.mxu0 0.0
    %2242 = vmatpush.msra.mxu0 0.0
    %2243 = vmatpush.msra.mxu0 0.0
    %2244 = vmatpush.msra.mxu0 0.0
    %2245 = vmatpush.msra.mxu0 0.0
    %2246 = vmatpush.msra.mxu0 0.0
    %2247 = vmatpush.msra.mxu0 %v2226
    %2248 = vmatpush.msra.mxu0 %v2225
    %2249 = vmatpush.msra.mxu0 %v2224
    %2250 = vmatpush.msra.mxu0 %v2223
    %2251 = vmatmul.f32.gmra.mxu0 %v2230
    %v2252 = vpop.f32.mrf.mxu0
    %v2253 = vadd.f32 %v2228, %v2252
    %2254 = vmatmul.f32.gmra.mxu0 %v2233
    %v2255 = vpop.f32.mrf.mxu0
    %v2256 = vadd.f32 %v2228, %v2255
    %2257 = vdwg.mxu0
    %v2258 = vld [vmem:[#allocation6 + $0x538] sm:$0xff]
    %v2259 = vld [vmem:[#allocation6 + $0x540] sm:$0xff]
    %v2260 = vld [vmem:[#allocation6 + $0x548] sm:$0xff]
    %v2261 = vld [vmem:[#allocation6 + $0x550] sm:$0xff]
    %v2262 = vld [vmem:[#allocation6 + $0x558] sm:$0x1]
    %v2263 = vperm.slane %v2262, 0
    %2264 = vmatpush.msra.mxu0 0.0
    %2265 = vmatpush.msra.mxu0 0.0
    %2266 = vmatpush.msra.mxu0 0.0
    %2267 = vmatpush.msra.mxu0 0.0
    %2268 = vmatpush.msra.mxu0 0.0
    %2269 = vmatpush.msra.mxu0 0.0
    %2270 = vmatpush.msra.mxu0 0.0
    %2271 = vmatpush.msra.mxu0 0.0
    %2272 = vmatpush.msra.mxu0 0.0
    %2273 = vmatpush.msra.mxu0 0.0
    %2274 = vmatpush.msra.mxu0 0.0
    %2275 = vmatpush.msra.mxu0 0.0
    %2276 = vmatpush.msra.mxu0 %v2261
    %2277 = vmatpush.msra.mxu0 %v2260
    %2278 = vmatpush.msra.mxu0 %v2259
    %2279 = vmatpush.msra.mxu0 %v2258
    %2280 = vmatmul.f32.gmra.mxu0 %v1825
    %v2281 = vpop.f32.mrf.mxu0
    %v2282 = vadd.f32 %v2263, %v2281
    %2283 = vmatmul.f32.gmra.mxu0 %v1828
    %v2284 = vpop.f32.mrf.mxu0
    %v2285 = vadd.f32 %v2263, %v2284
    %2286 = vdwg.mxu0
    %v2287 = vld [vmem:[#allocation6 + $0x560] sm:$0xff]
    %v2288 = vld [vmem:[#allocation6 + $0x568] sm:$0xff]
    %v2289 = vld [vmem:[#allocation6 + $0x570] sm:$0xff]
    %v2290 = vld [vmem:[#allocation6 + $0x578] sm:$0xff]
    %v2291 = vld [vmem:[#allocation6 + $0x580] sm:$0x1]
    %v2292 = vperm.slane %v2291, 0
    %2293 = vmatpush.msra.mxu0 0.0
    %2294 = vmatpush.msra.mxu0 0.0
    %2295 = vmatpush.msra.mxu0 0.0
    %2296 = vmatpush.msra.mxu0 0.0
    %2297 = vmatpush.msra.mxu0 0.0
    %2298 = vmatpush.msra.mxu0 0.0
    %2299 = vmatpush.msra.mxu0 0.0
    %2300 = vmatpush.msra.mxu0 0.0
    %2301 = vmatpush.msra.mxu0 0.0
    %2302 = vmatpush.msra.mxu0 0.0
    %2303 = vmatpush.msra.mxu0 0.0
    %2304 = vmatpush.msra.mxu0 0.0
    %2305 = vmatpush.msra.mxu0 %v2290
    %2306 = vmatpush.msra.mxu0 %v2289
    %2307 = vmatpush.msra.mxu0 %v2288
    %2308 = vmatpush.msra.mxu0 %v2287
    %2309 = vmatmul.f32.gmra.mxu0 %v1825
    %v2310 = vpop.f32.mrf.mxu0
    %v2311 = vadd.f32 %v2292, %v2310
    %2312 = vmatmul.f32.gmra.mxu0 %v1828
    %v2313 = vpop.f32.mrf.mxu0
    %v2314 = vadd.f32 %v2292, %v2313
    %2315 = vdwg.mxu0
    %2316 = vmatpush.msra.mxu0 0.0
    %2317 = vmatpush.msra.mxu0 0.0
    %2318 = vmatpush.msra.mxu0 0.0
    %2319 = vmatpush.msra.mxu0 0.0
    %2320 = vmatpush.msra.mxu0 0.0
    %2321 = vmatpush.msra.mxu0 0.0
    %2322 = vmatpush.msra.mxu0 0.0
    %2323 = vmatpush.msra.mxu0 0.0
    %2324 = vmatpush.msra.mxu0 0.0
    %2325 = vmatpush.msra.mxu0 0.0
    %2326 = vmatpush.msra.mxu0 0.0
    %2327 = vmatpush.msra.mxu0 0.0
    %2328 = vmatpush.msra.mxu0 0.0
    %2329 = vmatpush.msra.mxu0 0.0
    %2330 = vmatpush.msra.mxu0 %v2285
    %2331 = vmatpush.msra.mxu0 %v2282
    %2332 = vmatmul.f32.gmra.mxu0 %v215
    %v2333 = vpop.f32.mrf.mxu0
    %v2334 = vadd.f32 0.0, %v2333
    %2335 = vmatmul.f32.gmra.mxu0 %v218
    %v2336 = vpop.f32.mrf.mxu0
    %v2337 = vadd.f32 0.0, %v2336
    %2338 = vmatmul.f32.gmra.mxu0 %v221
    %v2339 = vpop.f32.mrf.mxu0
    %v2340 = vadd.f32 0.0, %v2339
    %2341 = vmatmul.f32.gmra.mxu0 %v224
    %v2342 = vpop.f32.mrf.mxu0
    %v2343 = vadd.f32 0.0, %v2342
    %2344 = vmatmul.f32.gmra.mxu0 %v227
    %v2345 = vpop.f32.mrf.mxu0
    %v2346 = vadd.f32 0.0, %v2345
    %2347 = vmatmul.f32.gmra.mxu0 %v230
    %v2348 = vpop.f32.mrf.mxu0
    %v2349 = vadd.f32 0.0, %v2348
    %2350 = vmatmul.f32.gmra.mxu0 %v233
    %v2351 = vpop.f32.mrf.mxu0
    %v2352 = vadd.f32 0.0, %v2351
    %2353 = vmatmul.f32.gmra.mxu0 %v236
    %v2354 = vpop.f32.mrf.mxu0
    %v2355 = vadd.f32 0.0, %v2354
    %2356 = vdwg.mxu0
    %v2357 = vmul.f32 %v2334, %v203
    %v2358 = vmul.f32 %v2337, %v204
    %v2359 = vmul.f32 %v2340, %v205
    %v2360 = vmul.f32 %v2343, %v206
    %v2361 = vmul.f32 %v2346, %v207
    %v2362 = vmul.f32 %v2349, %v208
    %v2363 = vmul.f32 %v2352, %v209
    %v2364 = vmul.f32 %v2355, %v210
    %2365 = vmatpush.msra.mxu0 0.0
    %2366 = vmatpush.msra.mxu0 0.0
    %2367 = vmatpush.msra.mxu0 0.0
    %2368 = vmatpush.msra.mxu0 0.0
    %2369 = vmatpush.msra.mxu0 0.0
    %2370 = vmatpush.msra.mxu0 0.0
    %2371 = vmatpush.msra.mxu0 0.0
    %2372 = vmatpush.msra.mxu0 0.0
    %2373 = vmatpush.msra.mxu0 0.0
    %2374 = vmatpush.msra.mxu0 0.0
    %2375 = vmatpush.msra.mxu0 0.0
    %2376 = vmatpush.msra.mxu0 0.0
    %2377 = vmatpush.msra.mxu0 0.0
    %2378 = vmatpush.msra.mxu0 0.0
    %2379 = vmatpush.msra.mxu0 %v2314
    %2380 = vmatpush.msra.mxu0 %v2311
    %2381 = vmatmul.f32.gmra.mxu0 %v215
    %v2382 = vpop.f32.mrf.mxu0
    %v2383 = vadd.f32 0.0, %v2382
    %2384 = vmatmul.f32.gmra.mxu0 %v218
    %v2385 = vpop.f32.mrf.mxu0
    %v2386 = vadd.f32 0.0, %v2385
    %2387 = vmatmul.f32.gmra.mxu0 %v221
    %v2388 = vpop.f32.mrf.mxu0
    %v2389 = vadd.f32 0.0, %v2388
    %2390 = vmatmul.f32.gmra.mxu0 %v224
    %v2391 = vpop.f32.mrf.mxu0
    %v2392 = vadd.f32 0.0, %v2391
    %2393 = vmatmul.f32.gmra.mxu0 %v227
    %v2394 = vpop.f32.mrf.mxu0
    %v2395 = vadd.f32 0.0, %v2394
    %2396 = vmatmul.f32.gmra.mxu0 %v230
    %v2397 = vpop.f32.mrf.mxu0
    %v2398 = vadd.f32 0.0, %v2397
    %2399 = vmatmul.f32.gmra.mxu0 %v233
    %v2400 = vpop.f32.mrf.mxu0
    %v2401 = vadd.f32 0.0, %v2400
    %2402 = vmatmul.f32.gmra.mxu0 %v236
    %v2403 = vpop.f32.mrf.mxu0
    %v2404 = vadd.f32 0.0, %v2403
    %2405 = vdwg.mxu0
    %v2406 = vmul.f32 %v2383, %v203
    %v2407 = vmul.f32 %v2386, %v204
    %v2408 = vmul.f32 %v2389, %v205
    %v2409 = vmul.f32 %v2392, %v206
    %v2410 = vmul.f32 %v2395, %v207
    %v2411 = vmul.f32 %v2398, %v208
    %v2412 = vmul.f32 %v2401, %v209
    %v2413 = vmul.f32 %v2404, %v210
    %v2415 = vsel %vm107, %v2253, 0
    %v2418 = vsel %vm107, %v2256, 0
    %v2421 = vsel %vm107, %v2357, 0
    %v2424 = vsel %vm107, %v2358, 0
    %v2427 = vsel %vm107, %v2359, 0
    %v2430 = vsel %vm107, %v2360, 0
    %v2433 = vsel %vm107, %v2361, 0
    %v2436 = vsel %vm107, %v2362, 0
    %v2439 = vsel %vm107, %v2363, 0
    %v2442 = vsel %vm107, %v2364, 0
    %2444 = vmatpush.xpose.msra.mxu0 0.0
    %2445 = vmatpush.xpose.msra.mxu0 0.0
    %2446 = vmatpush.xpose.msra.mxu0 0.0
    %2447 = vmatpush.xpose.msra.mxu0 0.0
    %2448 = vmatpush.xpose.msra.mxu0 0.0
    %2449 = vmatpush.xpose.msra.mxu0 0.0
    %2450 = vmatpush.xpose.msra.mxu0 0.0
    %2451 = vmatpush.xpose.msra.mxu0 0.0
    %2452 = vmatpush.xpose.msra.mxu0 %v2442
    %2453 = vmatpush.xpose.msra.mxu0 %v2439
    %2454 = vmatpush.xpose.msra.mxu0 %v2436
    %2455 = vmatpush.xpose.msra.mxu0 %v2433
    %2456 = vmatpush.xpose.msra.mxu0 %v2430
    %2457 = vmatpush.xpose.msra.mxu0 %v2427
    %2458 = vmatpush.xpose.msra.mxu0 %v2424
    %2459 = vmatpush.xpose.msra.mxu0 %v2421
    %2460 = vmatmul.f32.gmra.mxu0 %v2415
    %v2461 = vpop.f32.mrf.mxu0
    %v2462 = vadd.f32 %v211, %v2461
    %2463 = vmatmul.f32.gmra.mxu0 %v2418
    %v2464 = vpop.f32.mrf.mxu0
    %v2465 = vadd.f32 %v212, %v2464
    %2466 = vdwg.mxu0
    %v2467 = vsel %vm389, %v2462, -inf
    %2468 = vmax.xlane.f32.xlu0 %v2467
    %v2469 = vpop.xlane.xlu0 %2468
    %v2470 = vsel %vm389, %v2465, -inf
    %2471 = vmax.xlane.f32.xlu0 %v2470
    %v2472 = vpop.xlane.xlu0 %2471
    %v2473 = vsub.f32 %v2462, %v2469
    %v2474 = vsub.f32 %v2465, %v2472
    %v2475 = vmul.f32 %v2473, 1.442695
    %v2476 = vpow.pop %v2475
    %v2477 = vmul.f32 %v2474, 1.442695
    %v2478 = vpow.pop %v2477
    %v2480 = vsel %vm389, %v2476, 0
    %v2483 = vsel %vm389, %v2478, 0
    %2485 = vmatpush.msra.mxu0 0.0
    %2486 = vmatpush.msra.mxu0 0.0
    %2487 = vmatpush.msra.mxu0 0.0
    %2488 = vmatpush.msra.mxu0 0.0
    %2489 = vmatpush.msra.mxu0 0.0
    %2490 = vmatpush.msra.mxu0 0.0
    %2491 = vmatpush.msra.mxu0 0.0
    %2492 = vmatpush.msra.mxu0 0.0
    %2493 = vmatpush.msra.mxu0 %v2413
    %2494 = vmatpush.msra.mxu0 %v2412
    %2495 = vmatpush.msra.mxu0 %v2411
    %2496 = vmatpush.msra.mxu0 %v2410
    %2497 = vmatpush.msra.mxu0 %v2409
    %2498 = vmatpush.msra.mxu0 %v2408
    %2499 = vmatpush.msra.mxu0 %v2407
    %2500 = vmatpush.msra.mxu0 %v2406
    %2501 = vmatmul.f32.gmra.mxu0 %v2480
    %v2502 = vpop.f32.mrf.mxu0
    %v2503 = vadd.f32 0.0, %v2502
    %2504 = vmatmul.f32.gmra.mxu0 %v2483
    %v2505 = vpop.f32.mrf.mxu0
    %v2506 = vadd.f32 0.0, %v2505
    %2507 = vdwg.mxu0
    %2508 = vmatpush.msra.mxu0 0.0
    %2509 = vmatpush.msra.mxu0 0.0
    %2510 = vmatpush.msra.mxu0 0.0
    %2511 = vmatpush.msra.mxu0 0.0
    %2512 = vmatpush.msra.mxu0 0.0
    %2513 = vmatpush.msra.mxu0 0.0
    %2514 = vmatpush.msra.mxu0 0.0
    %2515 = vmatpush.msra.mxu0 0.0
    %2516 = vmatpush.msra.mxu0 %v210
    %2517 = vmatpush.msra.mxu0 %v209
    %2518 = vmatpush.msra.mxu0 %v208
    %2519 = vmatpush.msra.mxu0 %v207
    %2520 = vmatpush.msra.mxu0 %v206
    %2521 = vmatpush.msra.mxu0 %v205
    %2522 = vmatpush.msra.mxu0 %v204
    %2523 = vmatpush.msra.mxu0 %v203
    %2524 = vmatmul.f32.gmra.mxu0 %v2480
    %v2525 = vpop.f32.mrf.mxu0
    %v2526 = vadd.f32 0.0, %v2525
    %2527 = vmatmul.f32.gmra.mxu0 %v2483
    %v2528 = vpop.f32.mrf.mxu0
    %v2529 = vadd.f32 0.0, %v2528
    %2530 = vdwg.mxu0
    %v2531 = vrcp.pop %v2526
    %v2532 = vrcp.pop %v2529
    %v2533 = vmul.f32 %v2503, %v2531
    %v2534 = vmul.f32 %v2506, %v2532
    %v2535 = vld [vmem:[#allocation6 + $0x588] sm:$0xff]
    %v2536 = vld [vmem:[#allocation6 + $0x590] sm:$0xff]
    %v2537 = vld [vmem:[#allocation6 + $0x598] sm:$0xff]
    %v2538 = vld [vmem:[#allocation6 + $0x5a0] sm:$0xff]
    %v2539 = vld [vmem:[#allocation6 + $0x5a8] sm:$0x1]
    %v2540 = vperm.slane %v2539, 0
    %v2542 = vsel %vm107, %v2533, 0
    %v2545 = vsel %vm107, %v2534, 0
    %2547 = vmatpush.msra.mxu0 0.0
    %2548 = vmatpush.msra.mxu0 0.0
    %2549 = vmatpush.msra.mxu0 0.0
    %2550 = vmatpush.msra.mxu0 0.0
    %2551 = vmatpush.msra.mxu0 0.0
    %2552 = vmatpush.msra.mxu0 0.0
    %2553 = vmatpush.msra.mxu0 0.0
    %2554 = vmatpush.msra.mxu0 0.0
    %2555 = vmatpush.msra.mxu0 0.0
    %2556 = vmatpush.msra.mxu0 0.0
    %2557 = vmatpush.msra.mxu0 0.0
    %2558 = vmatpush.msra.mxu0 0.0
    %2559 = vmatpush.msra.mxu0 %v2538
    %2560 = vmatpush.msra.mxu0 %v2537
    %2561 = vmatpush.msra.mxu0 %v2536
    %2562 = vmatpush.msra.mxu0 %v2535
    %2563 = vmatmul.f32.gmra.mxu0 %v2542
    %v2564 = vpop.f32.mrf.mxu0
    %v2565 = vadd.f32 %v2540, %v2564
    %2566 = vmatmul.f32.gmra.mxu0 %v2545
    %v2567 = vpop.f32.mrf.mxu0
    %v2568 = vadd.f32 %v2540, %v2567
    %2569 = vdwg.mxu0
    %v2570 = vadd.f32 %v2221, %v2565
    %v2571 = vadd.f32 %v2222, %v2568
    %v2572 = vld [vmem:[#allocation6 + $0x5b0] sm:$0x1]
    %v2573 = vld [vmem:[#allocation6 + $0x5b8] sm:$0x1]
    %v2574 = vsel %vm107, %v2570, 0.0
    %2575 = vadd.xlane.f32.xlu0 %v2574
    %v2576 = vpop.xlane.xlu0 %2575
    %v2577 = vsel %vm107, %v2571, 0.0
    %2578 = vadd.xlane.f32.xlu0 %v2577
    %v2579 = vpop.xlane.xlu0 %2578
    %v2580 = vmul.f32 %v2576, %v509
    %v2581 = vmul.f32 %v2579, %v509
    %v2582 = vmul.f32 %v2570, %v2570
    %v2583 = vmul.f32 %v2571, %v2571
    %v2584 = vsel %vm107, %v2582, 0.0
    %2585 = vadd.xlane.f32.xlu0 %v2584
    %v2586 = vpop.xlane.xlu0 %2585
    %v2587 = vsel %vm107, %v2583, 0.0
    %2588 = vadd.xlane.f32.xlu0 %v2587
    %v2589 = vpop.xlane.xlu0 %2588
    %v2590 = vmul.f32 %v2586, %v509
    %v2591 = vmul.f32 %v2589, %v509
    %v2592 = vmul.f32 %v2580, %v2580
    %v2593 = vmul.f32 %v2581, %v2581
    %v2594 = vsub.f32 %v2590, %v2592
    %v2595 = vsub.f32 %v2591, %v2593
    %v2596 = vsub.f32 %v2570, %v2580
    %v2597 = vsub.f32 %v2571, %v2581
    %v2598 = vadd.f32 %v2594, 1e-05
    %v2599 = vadd.f32 %v2595, 1e-05
    %v2600 = vrsqrt.pop %v2598
    %v2601 = vmul.f32 %v2600, %v2598
    %v2602 = vmul.f32 %v2601, %v2600
    %v2603 = vmul.f32 0.5, %v2602
    %v2604 = vsub.f32 1.5, %v2603
    %v2605 = vmul.f32 %v2600, %v2604
    %vm2606 = vweird.f32 %v2598
    %vm2607 = vweird.f32 %v2600
    %vm2608 = vmor %vm2606, %vm2607
    %v2609 = vsel %vm2608, %v2600, %v2605
    %v2610 = vrsqrt.pop %v2599
    %v2611 = vmul.f32 %v2610, %v2599
    %v2612 = vmul.f32 %v2611, %v2610
    %v2613 = vmul.f32 0.5, %v2612
    %v2614 = vsub.f32 1.5, %v2613
    %v2615 = vmul.f32 %v2610, %v2614
    %vm2616 = vweird.f32 %v2599
    %vm2617 = vweird.f32 %v2610
    %vm2618 = vmor %vm2616, %vm2617
    %v2619 = vsel %vm2618, %v2610, %v2615
    %v2620 = vmul.f32 %v2596, %v2609
    %v2621 = vmul.f32 %v2597, %v2619
    %v2622 = vperm.slane %v2572, 0
    %v2623 = vmul.f32 %v2620, %v2622
    %v2624 = vmul.f32 %v2621, %v2622
    %v2625 = vperm.slane %v2573, 0
    %v2626 = vadd.f32 %v2623, %v2625
    %v2627 = vadd.f32 %v2624, %v2625
    %v2628 = vld [vmem:[#allocation6 + $0x5c0] sm:$0xff]
    %v2629 = vld [vmem:[#allocation6 + $0x5c8] sm:$0xff]
    %v2630 = vld [vmem:[#allocation6 + $0x5d0] sm:$0xff]
    %v2631 = vld [vmem:[#allocation6 + $0x5d8] sm:$0xff]
    %v2632 = vld [vmem:[#allocation6 + $0x5e0] sm:$0x1]
    %v2633 = vperm.slane %v2632, 0
    %v2635 = vsel %vm107, %v2626, 0
    %v2638 = vsel %vm107, %v2627, 0
    %2640 = vmatpush.msra.mxu0 0.0
    %2641 = vmatpush.msra.mxu0 0.0
    %2642 = vmatpush.msra.mxu0 0.0
    %2643 = vmatpush.msra.mxu0 0.0
    %2644 = vmatpush.msra.mxu0 0.0
    %2645 = vmatpush.msra.mxu0 0.0
    %2646 = vmatpush.msra.mxu0 0.0
    %2647 = vmatpush.msra.mxu0 0.0
    %2648 = vmatpush.msra.mxu0 0.0
    %2649 = vmatpush.msra.mxu0 0.0
    %2650 = vmatpush.msra.mxu0 0.0
    %2651 = vmatpush.msra.mxu0 0.0
    %2652 = vmatpush.msra.mxu0 %v2631
    %2653 = vmatpush.msra.mxu0 %v2630
    %2654 = vmatpush.msra.mxu0 %v2629
    %2655 = vmatpush.msra.mxu0 %v2628
    %2656 = vmatmul.f32.gmra.mxu0 %v2635
    %v2657 = vpop.f32.mrf.mxu0
    %v2658 = vadd.f32 %v2633, %v2657
    %2659 = vmatmul.f32.gmra.mxu0 %v2638
    %v2660 = vpop.f32.mrf.mxu0
    %v2661 = vadd.f32 %v2633, %v2660
    %2662 = vdwg.mxu0
    %v2663 = vmul.f32 %v2658, 0.5
    %v2664 = vmul.f32 %v2661, 0.5
    %v2665 = vmul.f32 %v2658, 0.044715
    %v2666 = vmul.f32 %v2661, 0.044715
    %v2667 = vmul.f32 %v2665, %v2658
    %v2668 = vmul.f32 %v2666, %v2661
    %v2669 = vmul.f32 %v2667, %v2658
    %v2670 = vmul.f32 %v2668, %v2661
    %v2671 = vadd.f32 %v2658, %v2669
    %v2672 = vadd.f32 %v2661, %v2670
    %v2673 = vmul.f32 %v2671, 0.7978846
    %v2674 = vmul.f32 %v2672, 0.7978846
    %v2675 = vtanh.pop %v2673
    %v2676 = vtanh.pop %v2674
    %v2677 = vadd.f32 %v2675, 1.0
    %v2678 = vadd.f32 %v2676, 1.0
    %v2679 = vmul.f32 %v2663, %v2677
    %v2680 = vmul.f32 %v2664, %v2678
    %v2681 = vld [vmem:[#allocation6 + $0x5e8] sm:$0xff]
    %v2682 = vld [vmem:[#allocation6 + $0x5f0] sm:$0xff]
    %v2683 = vld [vmem:[#allocation6 + $0x5f8] sm:$0xff]
    %v2684 = vld [vmem:[#allocation6 + $0x600] sm:$0xff]
    %v2685 = vld [vmem:[#allocation6 + $0x608] sm:$0xff]
    %v2686 = vld [vmem:[#allocation6 + $0x610] sm:$0xff]
    %v2687 = vld [vmem:[#allocation6 + $0x618] sm:$0xff]
    %v2688 = vld [vmem:[#allocation6 + $0x620] sm:$0xff]
    %v2689 = vld [vmem:[#allocation6 + $0x628] sm:$0x1]
    %v2690 = vperm.slane %v2689, 0
    %v2692 = vsel %vm389, %v2679, 0
    %v2695 = vsel %vm389, %v2680, 0
    %2697 = vmatpush.msra.mxu0 0.0
    %2698 = vmatpush.msra.mxu0 0.0
    %2699 = vmatpush.msra.mxu0 0.0
    %2700 = vmatpush.msra.mxu0 0.0
    %2701 = vmatpush.msra.mxu0 0.0
    %2702 = vmatpush.msra.mxu0 0.0
    %2703 = vmatpush.msra.mxu0 0.0
    %2704 = vmatpush.msra.mxu0 0.0
    %2705 = vmatpush.msra.mxu0 %v2688
    %2706 = vmatpush.msra.mxu0 %v2687
    %2707 = vmatpush.msra.mxu0 %v2686
    %2708 = vmatpush.msra.mxu0 %v2685
    %2709 = vmatpush.msra.mxu0 %v2684
    %2710 = vmatpush.msra.mxu0 %v2683
    %2711 = vmatpush.msra.mxu0 %v2682
    %2712 = vmatpush.msra.mxu0 %v2681
    %2713 = vmatmul.f32.gmra.mxu0 %v2692
    %v2714 = vpop.f32.mrf.mxu0
    %v2715 = vadd.f32 %v2690, %v2714
    %2716 = vmatmul.f32.gmra.mxu0 %v2695
    %v2717 = vpop.f32.mrf.mxu0
    %v2718 = vadd.f32 %v2690, %v2717
    %2719 = vdwg.mxu0
    %v2720 = vadd.f32 %v2626, %v2715
    %v2721 = vadd.f32 %v2627, %v2718
    %v2722 = vld [vmem:[#allocation6 + $0x630] sm:$0x1]
    %v2723 = vld [vmem:[#allocation6 + $0x638] sm:$0x1]
    %v2724 = vsel %vm107, %v2720, 0.0
    %2725 = vadd.xlane.f32.xlu0 %v2724
    %v2726 = vpop.xlane.xlu0 %2725
    %v2727 = vsel %vm107, %v2721, 0.0
    %2728 = vadd.xlane.f32.xlu0 %v2727
    %v2729 = vpop.xlane.xlu0 %2728
    %v2730 = vmul.f32 %v2726, %v509
    %v2731 = vmul.f32 %v2729, %v509
    %v2732 = vmul.f32 %v2720, %v2720
    %v2733 = vmul.f32 %v2721, %v2721
    %v2734 = vsel %vm107, %v2732, 0.0
    %2735 = vadd.xlane.f32.xlu0 %v2734
    %v2736 = vpop.xlane.xlu0 %2735
    %v2737 = vsel %vm107, %v2733, 0.0
    %2738 = vadd.xlane.f32.xlu0 %v2737
    %v2739 = vpop.xlane.xlu0 %2738
    %v2740 = vmul.f32 %v2736, %v509
    %v2741 = vmul.f32 %v2739, %v509
    %v2742 = vmul.f32 %v2730, %v2730
    %v2743 = vmul.f32 %v2731, %v2731
    %v2744 = vsub.f32 %v2740, %v2742
    %v2745 = vsub.f32 %v2741, %v2743
    %v2746 = vsub.f32 %v2720, %v2730
    %v2747 = vsub.f32 %v2721, %v2731
    %v2748 = vadd.f32 %v2744, 1e-05
    %v2749 = vadd.f32 %v2745, 1e-05
    %v2750 = vrsqrt.pop %v2748
    %v2751 = vmul.f32 %v2750, %v2748
    %v2752 = vmul.f32 %v2751, %v2750
    %v2753 = vmul.f32 0.5, %v2752
    %v2754 = vsub.f32 1.5, %v2753
    %v2755 = vmul.f32 %v2750, %v2754
    %vm2756 = vweird.f32 %v2748
    %vm2757 = vweird.f32 %v2750
    %vm2758 = vmor %vm2756, %vm2757
    %v2759 = vsel %vm2758, %v2750, %v2755
    %v2760 = vrsqrt.pop %v2749
    %v2761 = vmul.f32 %v2760, %v2749
    %v2762 = vmul.f32 %v2761, %v2760
    %v2763 = vmul.f32 0.5, %v2762
    %v2764 = vsub.f32 1.5, %v2763
    %v2765 = vmul.f32 %v2760, %v2764
    %vm2766 = vweird.f32 %v2749
    %vm2767 = vweird.f32 %v2760
    %vm2768 = vmor %vm2766, %vm2767
    %v2769 = vsel %vm2768, %v2760, %v2765
    %v2770 = vmul.f32 %v2746, %v2759
    %v2771 = vmul.f32 %v2747, %v2769
    %v2772 = vperm.slane %v2722, 0
    %v2773 = vmul.f32 %v2770, %v2772
    %v2774 = vmul.f32 %v2771, %v2772
    %v2775 = vperm.slane %v2723, 0
    %v2776 = vadd.f32 %v2773, %v2775
    %v2777 = vadd.f32 %v2774, %v2775
    %v2778 = vld [vmem:[#allocation6 + $0x640] sm:$0xff]
    %v2779 = vld [vmem:[#allocation6 + $0x648] sm:$0xff]
    %v2780 = vld [vmem:[#allocation6 + $0x650] sm:$0xff]
    %v2781 = vld [vmem:[#allocation6 + $0x658] sm:$0xff]
    %v2782 = vld [vmem:[#allocation6 + $0x660] sm:$0x1]
    %v2783 = vperm.slane %v2782, 0
    %v2785 = vsel %vm107, %v2776, 0
    %v2788 = vsel %vm107, %v2777, 0
    %2790 = vmatpush.msra.mxu0 0.0
    %2791 = vmatpush.msra.mxu0 0.0
    %2792 = vmatpush.msra.mxu0 0.0
    %2793 = vmatpush.msra.mxu0 0.0
    %2794 = vmatpush.msra.mxu0 0.0
    %2795 = vmatpush.msra.mxu0 0.0
    %2796 = vmatpush.msra.mxu0 0.0
    %2797 = vmatpush.msra.mxu0 0.0
    %2798 = vmatpush.msra.mxu0 0.0
    %2799 = vmatpush.msra.mxu0 0.0
    %2800 = vmatpush.msra.mxu0 0.0
    %2801 = vmatpush.msra.mxu0 0.0
    %2802 = vmatpush.msra.mxu0 %v2781
    %2803 = vmatpush.msra.mxu0 %v2780
    %2804 = vmatpush.msra.mxu0 %v2779
    %2805 = vmatpush.msra.mxu0 %v2778
    %2806 = vmatmul.f32.gmra.mxu0 %v2785
    %v2807 = vpop.f32.mrf.mxu0
    %v2808 = vadd.f32 %v2783, %v2807
    %2809 = vmatmul.f32.gmra.mxu0 %v2788
    %v2810 = vpop.f32.mrf.mxu0
    %v2811 = vadd.f32 %v2783, %v2810
    %2812 = vdwg.mxu0
    %v2813 = vld [vmem:[#allocation6 + $0x668] sm:$0xff]
    %v2814 = vld [vmem:[#allocation6 + $0x670] sm:$0xff]
    %v2815 = vld [vmem:[#allocation6 + $0x678] sm:$0xff]
    %v2816 = vld [vmem:[#allocation6 + $0x680] sm:$0xff]
    %v2817 = vld [vmem:[#allocation6 + $0x688] sm:$0x1]
    %v2818 = vperm.slane %v2817, 0
    %2819 = vmatpush.msra.mxu0 0.0
    %2820 = vmatpush.msra.mxu0 0.0
    %2821 = vmatpush.msra.mxu0 0.0
    %2822 = vmatpush.msra.mxu0 0.0
    %2823 = vmatpush.msra.mxu0 0.0
    %2824 = vmatpush.msra.mxu0 0.0
    %2825 = vmatpush.msra.mxu0 0.0
    %2826 = vmatpush.msra.mxu0 0.0
    %2827 = vmatpush.msra.mxu0 0.0
    %2828 = vmatpush.msra.mxu0 0.0
    %2829 = vmatpush.msra.mxu0 0.0
    %2830 = vmatpush.msra.mxu0 0.0
    %2831 = vmatpush.msra.mxu0 %v2816
    %2832 = vmatpush.msra.mxu0 %v2815
    %2833 = vmatpush.msra.mxu0 %v2814
    %2834 = vmatpush.msra.mxu0 %v2813
    %2835 = vmatmul.f32.gmra.mxu0 %v2785
    %v2836 = vpop.f32.mrf.mxu0
    %v2837 = vadd.f32 %v2818, %v2836
    %2838 = vmatmul.f32.gmra.mxu0 %v2788
    %v2839 = vpop.f32.mrf.mxu0
    %v2840 = vadd.f32 %v2818, %v2839
    %2841 = vdwg.mxu0
    %v2842 = vld [vmem:[#allocation6 + $0x690] sm:$0xff]
    %v2843 = vld [vmem:[#allocation6 + $0x698] sm:$0xff]
    %v2844 = vld [vmem:[#allocation6 + $0x6a0] sm:$0xff]
    %v2845 = vld [vmem:[#allocation6 + $0x6a8] sm:$0xff]
    %v2846 = vld [vmem:[#allocation6 + $0x6b0] sm:$0x1]
    %v2847 = vperm.slane %v2846, 0
    %2848 = vmatpush.msra.mxu0 0.0
    %2849 = vmatpush.msra.mxu0 0.0
    %2850 = vmatpush.msra.mxu0 0.0
    %2851 = vmatpush.msra.mxu0 0.0
    %2852 = vmatpush.msra.mxu0 0.0
    %2853 = vmatpush.msra.mxu0 0.0
    %2854 = vmatpush.msra.mxu0 0.0
    %2855 = vmatpush.msra.mxu0 0.0
    %2856 = vmatpush.msra.mxu0 0.0
    %2857 = vmatpush.msra.mxu0 0.0
    %2858 = vmatpush.msra.mxu0 0.0
    %2859 = vmatpush.msra.mxu0 0.0
    %2860 = vmatpush.msra.mxu0 %v2845
    %2861 = vmatpush.msra.mxu0 %v2844
    %2862 = vmatpush.msra.mxu0 %v2843
    %2863 = vmatpush.msra.mxu0 %v2842
    %2864 = vmatmul.f32.gmra.mxu0 %v2785
    %v2865 = vpop.f32.mrf.mxu0
    %v2866 = vadd.f32 %v2847, %v2865
    %2867 = vmatmul.f32.gmra.mxu0 %v2788
    %v2868 = vpop.f32.mrf.mxu0
    %v2869 = vadd.f32 %v2847, %v2868
    %2870 = vdwg.mxu0
    %2871 = vmatpush.msra.mxu0 0.0
    %2872 = vmatpush.msra.mxu0 0.0
    %2873 = vmatpush.msra.mxu0 0.0
    %2874 = vmatpush.msra.mxu0 0.0
    %2875 = vmatpush.msra.mxu0 0.0
    %2876 = vmatpush.msra.mxu0 0.0
    %2877 = vmatpush.msra.mxu0 0.0
    %2878 = vmatpush.msra.mxu0 0.0
    %2879 = vmatpush.msra.mxu0 0.0
    %2880 = vmatpush.msra.mxu0 0.0
    %2881 = vmatpush.msra.mxu0 0.0
    %2882 = vmatpush.msra.mxu0 0.0
    %2883 = vmatpush.msra.mxu0 0.0
    %2884 = vmatpush.msra.mxu0 0.0
    %2885 = vmatpush.msra.mxu0 %v2840
    %2886 = vmatpush.msra.mxu0 %v2837
    %2887 = vmatmul.f32.gmra.mxu0 %v215
    %v2888 = vpop.f32.mrf.mxu0
    %v2889 = vadd.f32 0.0, %v2888
    %2890 = vmatmul.f32.gmra.mxu0 %v218
    %v2891 = vpop.f32.mrf.mxu0
    %v2892 = vadd.f32 0.0, %v2891
    %2893 = vmatmul.f32.gmra.mxu0 %v221
    %v2894 = vpop.f32.mrf.mxu0
    %v2895 = vadd.f32 0.0, %v2894
    %2896 = vmatmul.f32.gmra.mxu0 %v224
    %v2897 = vpop.f32.mrf.mxu0
    %v2898 = vadd.f32 0.0, %v2897
    %2899 = vmatmul.f32.gmra.mxu0 %v227
    %v2900 = vpop.f32.mrf.mxu0
    %v2901 = vadd.f32 0.0, %v2900
    %2902 = vmatmul.f32.gmra.mxu0 %v230
    %v2903 = vpop.f32.mrf.mxu0
    %v2904 = vadd.f32 0.0, %v2903
    %2905 = vmatmul.f32.gmra.mxu0 %v233
    %v2906 = vpop.f32.mrf.mxu0
    %v2907 = vadd.f32 0.0, %v2906
    %2908 = vmatmul.f32.gmra.mxu0 %v236
    %v2909 = vpop.f32.mrf.mxu0
    %v2910 = vadd.f32 0.0, %v2909
    %2911 = vdwg.mxu0
    %v2912 = vmul.f32 %v2889, %v203
    %v2913 = vmul.f32 %v2892, %v204
    %v2914 = vmul.f32 %v2895, %v205
    %v2915 = vmul.f32 %v2898, %v206
    %v2916 = vmul.f32 %v2901, %v207
    %v2917 = vmul.f32 %v2904, %v208
    %v2918 = vmul.f32 %v2907, %v209
    %v2919 = vmul.f32 %v2910, %v210
    %2920 = vmatpush.msra.mxu0 0.0
    %2921 = vmatpush.msra.mxu0 0.0
    %2922 = vmatpush.msra.mxu0 0.0
    %2923 = vmatpush.msra.mxu0 0.0
    %2924 = vmatpush.msra.mxu0 0.0
    %2925 = vmatpush.msra.mxu0 0.0
    %2926 = vmatpush.msra.mxu0 0.0
    %2927 = vmatpush.msra.mxu0 0.0
    %2928 = vmatpush.msra.mxu0 0.0
    %2929 = vmatpush.msra.mxu0 0.0
    %2930 = vmatpush.msra.mxu0 0.0
    %2931 = vmatpush.msra.mxu0 0.0
    %2932 = vmatpush.msra.mxu0 0.0
    %2933 = vmatpush.msra.mxu0 0.0
    %2934 = vmatpush.msra.mxu0 %v2869
    %2935 = vmatpush.msra.mxu0 %v2866
    %2936 = vmatmul.f32.gmra.mxu0 %v215
    %v2937 = vpop.f32.mrf.mxu0
    %v2938 = vadd.f32 0.0, %v2937
    %2939 = vmatmul.f32.gmra.mxu0 %v218
    %v2940 = vpop.f32.mrf.mxu0
    %v2941 = vadd.f32 0.0, %v2940
    %2942 = vmatmul.f32.gmra.mxu0 %v221
    %v2943 = vpop.f32.mrf.mxu0
    %v2944 = vadd.f32 0.0, %v2943
    %2945 = vmatmul.f32.gmra.mxu0 %v224
    %v2946 = vpop.f32.mrf.mxu0
    %v2947 = vadd.f32 0.0, %v2946
    %2948 = vmatmul.f32.gmra.mxu0 %v227
    %v2949 = vpop.f32.mrf.mxu0
    %v2950 = vadd.f32 0.0, %v2949
    %2951 = vmatmul.f32.gmra.mxu0 %v230
    %v2952 = vpop.f32.mrf.mxu0
    %v2953 = vadd.f32 0.0, %v2952
    %2954 = vmatmul.f32.gmra.mxu0 %v233
    %v2955 = vpop.f32.mrf.mxu0
    %v2956 = vadd.f32 0.0, %v2955
    %2957 = vmatmul.f32.gmra.mxu0 %v236
    %v2958 = vpop.f32.mrf.mxu0
    %v2959 = vadd.f32 0.0, %v2958
    %2960 = vdwg.mxu0
    %v2961 = vmul.f32 %v2938, %v203
    %v2962 = vmul.f32 %v2941, %v204
    %v2963 = vmul.f32 %v2944, %v205
    %v2964 = vmul.f32 %v2947, %v206
    %v2965 = vmul.f32 %v2950, %v207
    %v2966 = vmul.f32 %v2953, %v208
    %v2967 = vmul.f32 %v2956, %v209
    %v2968 = vmul.f32 %v2959, %v210
    %v2970 = vsel %vm107, %v2808, 0
    %v2973 = vsel %vm107, %v2811, 0
    %v2976 = vsel %vm107, %v2912, 0
    %v2979 = vsel %vm107, %v2913, 0
    %v2982 = vsel %vm107, %v2914, 0
    %v2985 = vsel %vm107, %v2915, 0
    %v2988 = vsel %vm107, %v2916, 0
    %v2991 = vsel %vm107, %v2917, 0
    %v2994 = vsel %vm107, %v2918, 0
    %v2997 = vsel %vm107, %v2919, 0
    %2999 = vmatpush.xpose.msra.mxu0 0.0
    %3000 = vmatpush.xpose.msra.mxu0 0.0
    %3001 = vmatpush.xpose.msra.mxu0 0.0
    %3002 = vmatpush.xpose.msra.mxu0 0.0
    %3003 = vmatpush.xpose.msra.mxu0 0.0
    %3004 = vmatpush.xpose.msra.mxu0 0.0
    %3005 = vmatpush.xpose.msra.mxu0 0.0
    %3006 = vmatpush.xpose.msra.mxu0 0.0
    %3007 = vmatpush.xpose.msra.mxu0 %v2997
    %3008 = vmatpush.xpose.msra.mxu0 %v2994
    %3009 = vmatpush.xpose.msra.mxu0 %v2991
    %3010 = vmatpush.xpose.msra.mxu0 %v2988
    %3011 = vmatpush.xpose.msra.mxu0 %v2985
    %3012 = vmatpush.xpose.msra.mxu0 %v2982
    %3013 = vmatpush.xpose.msra.mxu0 %v2979
    %3014 = vmatpush.xpose.msra.mxu0 %v2976
    %3015 = vmatmul.f32.gmra.mxu0 %v2970
    %v3016 = vpop.f32.mrf.mxu0
    %v3017 = vadd.f32 %v211, %v3016
    %3018 = vmatmul.f32.gmra.mxu0 %v2973
    %v3019 = vpop.f32.mrf.mxu0
    %v3020 = vadd.f32 %v212, %v3019
    %3021 = vdwg.mxu0
    %v3022 = vsel %vm389, %v3017, -inf
    %3023 = vmax.xlane.f32.xlu0 %v3022
    %v3024 = vpop.xlane.xlu0 %3023
    %v3025 = vsel %vm389, %v3020, -inf
    %3026 = vmax.xlane.f32.xlu0 %v3025
    %v3027 = vpop.xlane.xlu0 %3026
    %v3028 = vsub.f32 %v3017, %v3024
    %v3029 = vsub.f32 %v3020, %v3027
    %v3030 = vmul.f32 %v3028, 1.442695
    %v3031 = vpow.pop %v3030
    %v3032 = vmul.f32 %v3029, 1.442695
    %v3033 = vpow.pop %v3032
    %v3035 = vsel %vm389, %v3031, 0
    %v3038 = vsel %vm389, %v3033, 0
    %3040 = vmatpush.msra.mxu0 0.0
    %3041 = vmatpush.msra.mxu0 0.0
    %3042 = vmatpush.msra.mxu0 0.0
    %3043 = vmatpush.msra.mxu0 0.0
    %3044 = vmatpush.msra.mxu0 0.0
    %3045 = vmatpush.msra.mxu0 0.0
    %3046 = vmatpush.msra.mxu0 0.0
    %3047 = vmatpush.msra.mxu0 0.0
    %3048 = vmatpush.msra.mxu0 %v2968
    %3049 = vmatpush.msra.mxu0 %v2967
    %3050 = vmatpush.msra.mxu0 %v2966
    %3051 = vmatpush.msra.mxu0 %v2965
    %3052 = vmatpush.msra.mxu0 %v2964
    %3053 = vmatpush.msra.mxu0 %v2963
    %3054 = vmatpush.msra.mxu0 %v2962
    %3055 = vmatpush.msra.mxu0 %v2961
    %3056 = vmatmul.f32.gmra.mxu0 %v3035
    %v3057 = vpop.f32.mrf.mxu0
    %v3058 = vadd.f32 0.0, %v3057
    %3059 = vmatmul.f32.gmra.mxu0 %v3038
    %v3060 = vpop.f32.mrf.mxu0
    %v3061 = vadd.f32 0.0, %v3060
    %3062 = vdwg.mxu0
    %3063 = vmatpush.msra.mxu0 0.0
    %3064 = vmatpush.msra.mxu0 0.0
    %3065 = vmatpush.msra.mxu0 0.0
    %3066 = vmatpush.msra.mxu0 0.0
    %3067 = vmatpush.msra.mxu0 0.0
    %3068 = vmatpush.msra.mxu0 0.0
    %3069 = vmatpush.msra.mxu0 0.0
    %3070 = vmatpush.msra.mxu0 0.0
    %3071 = vmatpush.msra.mxu0 %v210
    %3072 = vmatpush.msra.mxu0 %v209
    %3073 = vmatpush.msra.mxu0 %v208
    %3074 = vmatpush.msra.mxu0 %v207
    %3075 = vmatpush.msra.mxu0 %v206
    %3076 = vmatpush.msra.mxu0 %v205
    %3077 = vmatpush.msra.mxu0 %v204
    %3078 = vmatpush.msra.mxu0 %v203
    %3079 = vmatmul.f32.gmra.mxu0 %v3035
    %v3080 = vpop.f32.mrf.mxu0
    %v3081 = vadd.f32 0.0, %v3080
    %3082 = vmatmul.f32.gmra.mxu0 %v3038
    %v3083 = vpop.f32.mrf.mxu0
    %v3084 = vadd.f32 0.0, %v3083
    %3085 = vdwg.mxu0
    %v3086 = vrcp.pop %v3081
    %v3087 = vrcp.pop %v3084
    %v3088 = vmul.f32 %v3058, %v3086
    %v3089 = vmul.f32 %v3061, %v3087
    %v3090 = vld [vmem:[#allocation6 + $0x6b8] sm:$0xff]
    %v3091 = vld [vmem:[#allocation6 + $0x6c0] sm:$0xff]
    %v3092 = vld [vmem:[#allocation6 + $0x6c8] sm:$0xff]
    %v3093 = vld [vmem:[#allocation6 + $0x6d0] sm:$0xff]
    %v3094 = vld [vmem:[#allocation6 + $0x6d8] sm:$0x1]
    %v3095 = vperm.slane %v3094, 0
    %v3097 = vsel %vm107, %v3088, 0
    %v3100 = vsel %vm107, %v3089, 0
    %3102 = vmatpush.msra.mxu0 0.0
    %3103 = vmatpush.msra.mxu0 0.0
    %3104 = vmatpush.msra.mxu0 0.0
    %3105 = vmatpush.msra.mxu0 0.0
    %3106 = vmatpush.msra.mxu0 0.0
    %3107 = vmatpush.msra.mxu0 0.0
    %3108 = vmatpush.msra.mxu0 0.0
    %3109 = vmatpush.msra.mxu0 0.0
    %3110 = vmatpush.msra.mxu0 0.0
    %3111 = vmatpush.msra.mxu0 0.0
    %3112 = vmatpush.msra.mxu0 0.0
    %3113 = vmatpush.msra.mxu0 0.0
    %3114 = vmatpush.msra.mxu0 %v3093
    %3115 = vmatpush.msra.mxu0 %v3092
    %3116 = vmatpush.msra.mxu0 %v3091
    %3117 = vmatpush.msra.mxu0 %v3090
    %3118 = vmatmul.f32.gmra.mxu0 %v3097
    %v3119 = vpop.f32.mrf.mxu0
    %v3120 = vadd.f32 %v3095, %v3119
    %3121 = vmatmul.f32.gmra.mxu0 %v3100
    %v3122 = vpop.f32.mrf.mxu0
    %v3123 = vadd.f32 %v3095, %v3122
    %3124 = vdwg.mxu0
    %v3125 = vadd.f32 %v2776, %v3120
    %v3126 = vadd.f32 %v2777, %v3123
    %v3127 = vld [vmem:[#allocation6 + $0x6e0] sm:$0x1]
    %v3128 = vld [vmem:[#allocation6 + $0x6e8] sm:$0x1]
    %v3129 = vsel %vm107, %v3125, 0.0
    %3130 = vadd.xlane.f32.xlu0 %v3129
    %v3131 = vpop.xlane.xlu0 %3130
    %v3132 = vsel %vm107, %v3126, 0.0
    %3133 = vadd.xlane.f32.xlu0 %v3132
    %v3134 = vpop.xlane.xlu0 %3133
    %v3135 = vmul.f32 %v3131, %v509
    %v3136 = vmul.f32 %v3134, %v509
    %v3137 = vmul.f32 %v3125, %v3125
    %v3138 = vmul.f32 %v3126, %v3126
    %v3139 = vsel %vm107, %v3137, 0.0
    %3140 = vadd.xlane.f32.xlu0 %v3139
    %v3141 = vpop.xlane.xlu0 %3140
    %v3142 = vsel %vm107, %v3138, 0.0
    %3143 = vadd.xlane.f32.xlu0 %v3142
    %v3144 = vpop.xlane.xlu0 %3143
    %v3145 = vmul.f32 %v3141, %v509
    %v3146 = vmul.f32 %v3144, %v509
    %v3147 = vmul.f32 %v3135, %v3135
    %v3148 = vmul.f32 %v3136, %v3136
    %v3149 = vsub.f32 %v3145, %v3147
    %v3150 = vsub.f32 %v3146, %v3148
    %v3151 = vsub.f32 %v3125, %v3135
    %v3152 = vsub.f32 %v3126, %v3136
    %v3153 = vadd.f32 %v3149, 1e-05
    %v3154 = vadd.f32 %v3150, 1e-05
    %v3155 = vrsqrt.pop %v3153
    %v3156 = vmul.f32 %v3155, %v3153
    %v3157 = vmul.f32 %v3156, %v3155
    %v3158 = vmul.f32 0.5, %v3157
    %v3159 = vsub.f32 1.5, %v3158
    %v3160 = vmul.f32 %v3155, %v3159
    %vm3161 = vweird.f32 %v3153
    %vm3162 = vweird.f32 %v3155
    %vm3163 = vmor %vm3161, %vm3162
    %v3164 = vsel %vm3163, %v3155, %v3160
    %v3165 = vrsqrt.pop %v3154
    %v3166 = vmul.f32 %v3165, %v3154
    %v3167 = vmul.f32 %v3166, %v3165
    %v3168 = vmul.f32 0.5, %v3167
    %v3169 = vsub.f32 1.5, %v3168
    %v3170 = vmul.f32 %v3165, %v3169
    %vm3171 = vweird.f32 %v3154
    %vm3172 = vweird.f32 %v3165
    %vm3173 = vmor %vm3171, %vm3172
    %v3174 = vsel %vm3173, %v3165, %v3170
    %v3175 = vmul.f32 %v3151, %v3164
    %v3176 = vmul.f32 %v3152, %v3174
    %v3177 = vperm.slane %v3127, 0
    %v3178 = vmul.f32 %v3175, %v3177
    %v3179 = vmul.f32 %v3176, %v3177
    %v3180 = vperm.slane %v3128, 0
    %v3181 = vadd.f32 %v3178, %v3180
    %v3182 = vadd.f32 %v3179, %v3180
    %v3183 = vld [vmem:[#allocation6 + $0x6f0] sm:$0xff]
    %v3184 = vld [vmem:[#allocation6 + $0x6f8] sm:$0xff]
    %v3185 = vld [vmem:[#allocation6 + $0x700] sm:$0xff]
    %v3186 = vld [vmem:[#allocation6 + $0x708] sm:$0xff]
    %v3187 = vld [vmem:[#allocation6 + $0x710] sm:$0x1]
    %v3188 = vperm.slane %v3187, 0
    %v3190 = vsel %vm107, %v3181, 0
    %v3193 = vsel %vm107, %v3182, 0
    %3195 = vmatpush.msra.mxu0 0.0
    %3196 = vmatpush.msra.mxu0 0.0
    %3197 = vmatpush.msra.mxu0 0.0
    %3198 = vmatpush.msra.mxu0 0.0
    %3199 = vmatpush.msra.mxu0 0.0
    %3200 = vmatpush.msra.mxu0 0.0
    %3201 = vmatpush.msra.mxu0 0.0
    %3202 = vmatpush.msra.mxu0 0.0
    %3203 = vmatpush.msra.mxu0 0.0
    %3204 = vmatpush.msra.mxu0 0.0
    %3205 = vmatpush.msra.mxu0 0.0
    %3206 = vmatpush.msra.mxu0 0.0
    %3207 = vmatpush.msra.mxu0 %v3186
    %3208 = vmatpush.msra.mxu0 %v3185
    %3209 = vmatpush.msra.mxu0 %v3184
    %3210 = vmatpush.msra.mxu0 %v3183
    %3211 = vmatmul.f32.gmra.mxu0 %v3190
    %v3212 = vpop.f32.mrf.mxu0
    %v3213 = vadd.f32 %v3188, %v3212
    %3214 = vmatmul.f32.gmra.mxu0 %v3193
    %v3215 = vpop.f32.mrf.mxu0
    %v3216 = vadd.f32 %v3188, %v3215
    %3217 = vdwg.mxu0
    %v3218 = vld [vmem:[#allocation6 + $0x718] sm:$0xff]
    %v3219 = vld [vmem:[#allocation6 + $0x720] sm:$0xff]
    %v3220 = vld [vmem:[#allocation6 + $0x728] sm:$0xff]
    %v3221 = vld [vmem:[#allocation6 + $0x730] sm:$0xff]
    %v3222 = vld [vmem:[#allocation6 + $0x738] sm:$0x1]
    %v3223 = vperm.slane %v3222, 0
    %3224 = vmatpush.msra.mxu0 0.0
    %3225 = vmatpush.msra.mxu0 0.0
    %3226 = vmatpush.msra.mxu0 0.0
    %3227 = vmatpush.msra.mxu0 0.0
    %3228 = vmatpush.msra.mxu0 0.0
    %3229 = vmatpush.msra.mxu0 0.0
    %3230 = vmatpush.msra.mxu0 0.0
    %3231 = vmatpush.msra.mxu0 0.0
    %3232 = vmatpush.msra.mxu0 0.0
    %3233 = vmatpush.msra.mxu0 0.0
    %3234 = vmatpush.msra.mxu0 0.0
    %3235 = vmatpush.msra.mxu0 0.0
    %3236 = vmatpush.msra.mxu0 %v3221
    %3237 = vmatpush.msra.mxu0 %v3220
    %3238 = vmatpush.msra.mxu0 %v3219
    %3239 = vmatpush.msra.mxu0 %v3218
    %3240 = vmatmul.f32.gmra.mxu0 %v1825
    %v3241 = vpop.f32.mrf.mxu0
    %v3242 = vadd.f32 %v3223, %v3241
    %3243 = vmatmul.f32.gmra.mxu0 %v1828
    %v3244 = vpop.f32.mrf.mxu0
    %v3245 = vadd.f32 %v3223, %v3244
    %3246 = vdwg.mxu0
    %v3247 = vld [vmem:[#allocation6 + $0x740] sm:$0xff]
    %v3248 = vld [vmem:[#allocation6 + $0x748] sm:$0xff]
    %v3249 = vld [vmem:[#allocation6 + $0x750] sm:$0xff]
    %v3250 = vld [vmem:[#allocation6 + $0x758] sm:$0xff]
    %v3251 = vld [vmem:[#allocation6 + $0x760] sm:$0x1]
    %v3252 = vperm.slane %v3251, 0
    %3253 = vmatpush.msra.mxu0 0.0
    %3254 = vmatpush.msra.mxu0 0.0
    %3255 = vmatpush.msra.mxu0 0.0
    %3256 = vmatpush.msra.mxu0 0.0
    %3257 = vmatpush.msra.mxu0 0.0
    %3258 = vmatpush.msra.mxu0 0.0
    %3259 = vmatpush.msra.mxu0 0.0
    %3260 = vmatpush.msra.mxu0 0.0
    %3261 = vmatpush.msra.mxu0 0.0
    %3262 = vmatpush.msra.mxu0 0.0
    %3263 = vmatpush.msra.mxu0 0.0
    %3264 = vmatpush.msra.mxu0 0.0
    %3265 = vmatpush.msra.mxu0 %v3250
    %3266 = vmatpush.msra.mxu0 %v3249
    %3267 = vmatpush.msra.mxu0 %v3248
    %3268 = vmatpush.msra.mxu0 %v3247
    %3269 = vmatmul.f32.gmra.mxu0 %v1825
    %v3270 = vpop.f32.mrf.mxu0
    %v3271 = vadd.f32 %v3252, %v3270
    %3272 = vmatmul.f32.gmra.mxu0 %v1828
    %v3273 = vpop.f32.mrf.mxu0
    %v3274 = vadd.f32 %v3252, %v3273
    %3275 = vdwg.mxu0
    %3276 = vmatpush.msra.mxu0 0.0
    %3277 = vmatpush.msra.mxu0 0.0
    %3278 = vmatpush.msra.mxu0 0.0
    %3279 = vmatpush.msra.mxu0 0.0
    %3280 = vmatpush.msra.mxu0 0.0
    %3281 = vmatpush.msra.mxu0 0.0
    %3282 = vmatpush.msra.mxu0 0.0
    %3283 = vmatpush.msra.mxu0 0.0
    %3284 = vmatpush.msra.mxu0 0.0
    %3285 = vmatpush.msra.mxu0 0.0
    %3286 = vmatpush.msra.mxu0 0.0
    %3287 = vmatpush.msra.mxu0 0.0
    %3288 = vmatpush.msra.mxu0 0.0
    %3289 = vmatpush.msra.mxu0 0.0
    %3290 = vmatpush.msra.mxu0 %v3245
    %3291 = vmatpush.msra.mxu0 %v3242
    %3292 = vmatmul.f32.gmra.mxu0 %v215
    %v3293 = vpop.f32.mrf.mxu0
    %v3294 = vadd.f32 0.0, %v3293
    %3295 = vmatmul.f32.gmra.mxu0 %v218
    %v3296 = vpop.f32.mrf.mxu0
    %v3297 = vadd.f32 0.0, %v3296
    %3298 = vmatmul.f32.gmra.mxu0 %v221
    %v3299 = vpop.f32.mrf.mxu0
    %v3300 = vadd.f32 0.0, %v3299
    %3301 = vmatmul.f32.gmra.mxu0 %v224
    %v3302 = vpop.f32.mrf.mxu0
    %v3303 = vadd.f32 0.0, %v3302
    %3304 = vmatmul.f32.gmra.mxu0 %v227
    %v3305 = vpop.f32.mrf.mxu0
    %v3306 = vadd.f32 0.0, %v3305
    %3307 = vmatmul.f32.gmra.mxu0 %v230
    %v3308 = vpop.f32.mrf.mxu0
    %v3309 = vadd.f32 0.0, %v3308
    %3310 = vmatmul.f32.gmra.mxu0 %v233
    %v3311 = vpop.f32.mrf.mxu0
    %v3312 = vadd.f32 0.0, %v3311
    %3313 = vmatmul.f32.gmra.mxu0 %v236
    %v3314 = vpop.f32.mrf.mxu0
    %v3315 = vadd.f32 0.0, %v3314
    %3316 = vdwg.mxu0
    %v3317 = vmul.f32 %v3294, %v203
    %v3318 = vmul.f32 %v3297, %v204
    %v3319 = vmul.f32 %v3300, %v205
    %v3320 = vmul.f32 %v3303, %v206
    %v3321 = vmul.f32 %v3306, %v207
    %v3322 = vmul.f32 %v3309, %v208
    %v3323 = vmul.f32 %v3312, %v209
    %v3324 = vmul.f32 %v3315, %v210
    %3325 = vmatpush.msra.mxu0 0.0
    %3326 = vmatpush.msra.mxu0 0.0
    %3327 = vmatpush.msra.mxu0 0.0
    %3328 = vmatpush.msra.mxu0 0.0
    %3329 = vmatpush.msra.mxu0 0.0
    %3330 = vmatpush.msra.mxu0 0.0
    %3331 = vmatpush.msra.mxu0 0.0
    %3332 = vmatpush.msra.mxu0 0.0
    %3333 = vmatpush.msra.mxu0 0.0
    %3334 = vmatpush.msra.mxu0 0.0
    %3335 = vmatpush.msra.mxu0 0.0
    %3336 = vmatpush.msra.mxu0 0.0
    %3337 = vmatpush.msra.mxu0 0.0
    %3338 = vmatpush.msra.mxu0 0.0
    %3339 = vmatpush.msra.mxu0 %v3274
    %3340 = vmatpush.msra.mxu0 %v3271
    %3341 = vmatmul.f32.gmra.mxu0 %v215
    %v3342 = vpop.f32.mrf.mxu0
    %v3343 = vadd.f32 0.0, %v3342
    %3344 = vmatmul.f32.gmra.mxu0 %v218
    %v3345 = vpop.f32.mrf.mxu0
    %v3346 = vadd.f32 0.0, %v3345
    %3347 = vmatmul.f32.gmra.mxu0 %v221
    %v3348 = vpop.f32.mrf.mxu0
    %v3349 = vadd.f32 0.0, %v3348
    %3350 = vmatmul.f32.gmra.mxu0 %v224
    %v3351 = vpop.f32.mrf.mxu0
    %v3352 = vadd.f32 0.0, %v3351
    %3353 = vmatmul.f32.gmra.mxu0 %v227
    %v3354 = vpop.f32.mrf.mxu0
    %v3355 = vadd.f32 0.0, %v3354
    %3356 = vmatmul.f32.gmra.mxu0 %v230
    %v3357 = vpop.f32.mrf.mxu0
    %v3358 = vadd.f32 0.0, %v3357
    %3359 = vmatmul.f32.gmra.mxu0 %v233
    %v3360 = vpop.f32.mrf.mxu0
    %v3361 = vadd.f32 0.0, %v3360
    %3362 = vmatmul.f32.gmra.mxu0 %v236
    %v3363 = vpop.f32.mrf.mxu0
    %v3364 = vadd.f32 0.0, %v3363
    %3365 = vdwg.mxu0
    %v3366 = vmul.f32 %v3343, %v203
    %v3367 = vmul.f32 %v3346, %v204
    %v3368 = vmul.f32 %v3349, %v205
    %v3369 = vmul.f32 %v3352, %v206
    %v3370 = vmul.f32 %v3355, %v207
    %v3371 = vmul.f32 %v3358, %v208
    %v3372 = vmul.f32 %v3361, %v209
    %v3373 = vmul.f32 %v3364, %v210
    %v3375 = vsel %vm107, %v3213, 0
    %v3378 = vsel %vm107, %v3216, 0
    %v3381 = vsel %vm107, %v3317, 0
    %v3384 = vsel %vm107, %v3318, 0
    %v3387 = vsel %vm107, %v3319, 0
    %v3390 = vsel %vm107, %v3320, 0
    %v3393 = vsel %vm107, %v3321, 0
    %v3396 = vsel %vm107, %v3322, 0
    %v3399 = vsel %vm107, %v3323, 0
    %v3402 = vsel %vm107, %v3324, 0
    %3404 = vmatpush.xpose.msra.mxu0 0.0
    %3405 = vmatpush.xpose.msra.mxu0 0.0
    %3406 = vmatpush.xpose.msra.mxu0 0.0
    %3407 = vmatpush.xpose.msra.mxu0 0.0
    %3408 = vmatpush.xpose.msra.mxu0 0.0
    %3409 = vmatpush.xpose.msra.mxu0 0.0
    %3410 = vmatpush.xpose.msra.mxu0 0.0
    %3411 = vmatpush.xpose.msra.mxu0 0.0
    %3412 = vmatpush.xpose.msra.mxu0 %v3402
    %3413 = vmatpush.xpose.msra.mxu0 %v3399
    %3414 = vmatpush.xpose.msra.mxu0 %v3396
    %3415 = vmatpush.xpose.msra.mxu0 %v3393
    %3416 = vmatpush.xpose.msra.mxu0 %v3390
    %3417 = vmatpush.xpose.msra.mxu0 %v3387
    %3418 = vmatpush.xpose.msra.mxu0 %v3384
    %3419 = vmatpush.xpose.msra.mxu0 %v3381
    %3420 = vmatmul.f32.gmra.mxu0 %v3375
    %v3421 = vpop.f32.mrf.mxu0
    %v3422 = vadd.f32 %v211, %v3421
    %3423 = vmatmul.f32.gmra.mxu0 %v3378
    %v3424 = vpop.f32.mrf.mxu0
    %v3425 = vadd.f32 %v212, %v3424
    %3426 = vdwg.mxu0
    %v3427 = vsel %vm389, %v3422, -inf
    %3428 = vmax.xlane.f32.xlu0 %v3427
    %v3429 = vpop.xlane.xlu0 %3428
    %v3430 = vsel %vm389, %v3425, -inf
    %3431 = vmax.xlane.f32.xlu0 %v3430
    %v3432 = vpop.xlane.xlu0 %3431
    %v3433 = vsub.f32 %v3422, %v3429
    %v3434 = vsub.f32 %v3425, %v3432
    %v3435 = vmul.f32 %v3433, 1.442695
    %v3436 = vpow.pop %v3435
    %v3437 = vmul.f32 %v3434, 1.442695
    %v3438 = vpow.pop %v3437
    %v3440 = vsel %vm389, %v3436, 0
    %v3443 = vsel %vm389, %v3438, 0
    %3445 = vmatpush.msra.mxu0 0.0
    %3446 = vmatpush.msra.mxu0 0.0
    %3447 = vmatpush.msra.mxu0 0.0
    %3448 = vmatpush.msra.mxu0 0.0
    %3449 = vmatpush.msra.mxu0 0.0
    %3450 = vmatpush.msra.mxu0 0.0
    %3451 = vmatpush.msra.mxu0 0.0
    %3452 = vmatpush.msra.mxu0 0.0
    %3453 = vmatpush.msra.mxu0 %v3373
    %3454 = vmatpush.msra.mxu0 %v3372
    %3455 = vmatpush.msra.mxu0 %v3371
    %3456 = vmatpush.msra.mxu0 %v3370
    %3457 = vmatpush.msra.mxu0 %v3369
    %3458 = vmatpush.msra.mxu0 %v3368
    %3459 = vmatpush.msra.mxu0 %v3367
    %3460 = vmatpush.msra.mxu0 %v3366
    %3461 = vmatmul.f32.gmra.mxu0 %v3440
    %v3462 = vpop.f32.mrf.mxu0
    %v3463 = vadd.f32 0.0, %v3462
    %3464 = vmatmul.f32.gmra.mxu0 %v3443
    %v3465 = vpop.f32.mrf.mxu0
    %v3466 = vadd.f32 0.0, %v3465
    %3467 = vdwg.mxu0
    %3468 = vmatpush.msra.mxu0 0.0
    %3469 = vmatpush.msra.mxu0 0.0
    %3470 = vmatpush.msra.mxu0 0.0
    %3471 = vmatpush.msra.mxu0 0.0
    %3472 = vmatpush.msra.mxu0 0.0
    %3473 = vmatpush.msra.mxu0 0.0
    %3474 = vmatpush.msra.mxu0 0.0
    %3475 = vmatpush.msra.mxu0 0.0
    %3476 = vmatpush.msra.mxu0 %v210
    %3477 = vmatpush.msra.mxu0 %v209
    %3478 = vmatpush.msra.mxu0 %v208
    %3479 = vmatpush.msra.mxu0 %v207
    %3480 = vmatpush.msra.mxu0 %v206
    %3481 = vmatpush.msra.mxu0 %v205
    %3482 = vmatpush.msra.mxu0 %v204
    %3483 = vmatpush.msra.mxu0 %v203
    %3484 = vmatmul.f32.gmra.mxu0 %v3440
    %v3485 = vpop.f32.mrf.mxu0
    %v3486 = vadd.f32 0.0, %v3485
    %3487 = vmatmul.f32.gmra.mxu0 %v3443
    %v3488 = vpop.f32.mrf.mxu0
    %v3489 = vadd.f32 0.0, %v3488
    %3490 = vdwg.mxu0
    %v3491 = vrcp.pop %v3486
    %v3492 = vrcp.pop %v3489
    %v3493 = vmul.f32 %v3463, %v3491
    %v3494 = vmul.f32 %v3466, %v3492
    %v3495 = vld [vmem:[#allocation6 + $0x768] sm:$0xff]
    %v3496 = vld [vmem:[#allocation6 + $0x770] sm:$0xff]
    %v3497 = vld [vmem:[#allocation6 + $0x778] sm:$0xff]
    %v3498 = vld [vmem:[#allocation6 + $0x780] sm:$0xff]
    %v3499 = vld [vmem:[#allocation6 + $0x788] sm:$0x1]
    %v3500 = vperm.slane %v3499, 0
    %v3502 = vsel %vm107, %v3493, 0
    %v3505 = vsel %vm107, %v3494, 0
    %3507 = vmatpush.msra.mxu0 0.0
    %3508 = vmatpush.msra.mxu0 0.0
    %3509 = vmatpush.msra.mxu0 0.0
    %3510 = vmatpush.msra.mxu0 0.0
    %3511 = vmatpush.msra.mxu0 0.0
    %3512 = vmatpush.msra.mxu0 0.0
    %3513 = vmatpush.msra.mxu0 0.0
    %3514 = vmatpush.msra.mxu0 0.0
    %3515 = vmatpush.msra.mxu0 0.0
    %3516 = vmatpush.msra.mxu0 0.0
    %3517 = vmatpush.msra.mxu0 0.0
    %3518 = vmatpush.msra.mxu0 0.0
    %3519 = vmatpush.msra.mxu0 %v3498
    %3520 = vmatpush.msra.mxu0 %v3497
    %3521 = vmatpush.msra.mxu0 %v3496
    %3522 = vmatpush.msra.mxu0 %v3495
    %3523 = vmatmul.f32.gmra.mxu0 %v3502
    %v3524 = vpop.f32.mrf.mxu0
    %v3525 = vadd.f32 %v3500, %v3524
    %3526 = vmatmul.f32.gmra.mxu0 %v3505
    %v3527 = vpop.f32.mrf.mxu0
    %v3528 = vadd.f32 %v3500, %v3527
    %3529 = vdwg.mxu0
    %v3530 = vadd.f32 %v3181, %v3525
    %v3531 = vadd.f32 %v3182, %v3528
    %v3532 = vld [vmem:[#allocation6 + $0x790] sm:$0x1]
    %v3533 = vld [vmem:[#allocation6 + $0x798] sm:$0x1]
    %v3534 = vsel %vm107, %v3530, 0.0
    %3535 = vadd.xlane.f32.xlu0 %v3534
    %v3536 = vpop.xlane.xlu0 %3535
    %v3537 = vsel %vm107, %v3531, 0.0
    %3538 = vadd.xlane.f32.xlu0 %v3537
    %v3539 = vpop.xlane.xlu0 %3538
    %v3540 = vmul.f32 %v3536, %v509
    %v3541 = vmul.f32 %v3539, %v509
    %v3542 = vmul.f32 %v3530, %v3530
    %v3543 = vmul.f32 %v3531, %v3531
    %v3544 = vsel %vm107, %v3542, 0.0
    %3545 = vadd.xlane.f32.xlu0 %v3544
    %v3546 = vpop.xlane.xlu0 %3545
    %v3547 = vsel %vm107, %v3543, 0.0
    %3548 = vadd.xlane.f32.xlu0 %v3547
    %v3549 = vpop.xlane.xlu0 %3548
    %v3550 = vmul.f32 %v3546, %v509
    %v3551 = vmul.f32 %v3549, %v509
    %v3552 = vmul.f32 %v3540, %v3540
    %v3553 = vmul.f32 %v3541, %v3541
    %v3554 = vsub.f32 %v3550, %v3552
    %v3555 = vsub.f32 %v3551, %v3553
    %v3556 = vsub.f32 %v3530, %v3540
    %v3557 = vsub.f32 %v3531, %v3541
    %v3558 = vadd.f32 %v3554, 1e-05
    %v3559 = vadd.f32 %v3555, 1e-05
    %v3560 = vrsqrt.pop %v3558
    %v3561 = vmul.f32 %v3560, %v3558
    %v3562 = vmul.f32 %v3561, %v3560
    %v3563 = vmul.f32 0.5, %v3562
    %v3564 = vsub.f32 1.5, %v3563
    %v3565 = vmul.f32 %v3560, %v3564
    %vm3566 = vweird.f32 %v3558
    %vm3567 = vweird.f32 %v3560
    %vm3568 = vmor %vm3566, %vm3567
    %v3569 = vsel %vm3568, %v3560, %v3565
    %v3570 = vrsqrt.pop %v3559
    %v3571 = vmul.f32 %v3570, %v3559
    %v3572 = vmul.f32 %v3571, %v3570
    %v3573 = vmul.f32 0.5, %v3572
    %v3574 = vsub.f32 1.5, %v3573
    %v3575 = vmul.f32 %v3570, %v3574
    %vm3576 = vweird.f32 %v3559
    %vm3577 = vweird.f32 %v3570
    %vm3578 = vmor %vm3576, %vm3577
    %v3579 = vsel %vm3578, %v3570, %v3575
    %v3580 = vmul.f32 %v3556, %v3569
    %v3581 = vmul.f32 %v3557, %v3579
    %v3582 = vperm.slane %v3532, 0
    %v3583 = vmul.f32 %v3580, %v3582
    %v3584 = vmul.f32 %v3581, %v3582
    %v3585 = vperm.slane %v3533, 0
    %v3586 = vadd.f32 %v3583, %v3585
    %v3587 = vadd.f32 %v3584, %v3585
    %v3588 = vld [vmem:[#allocation6 + $0x7a0] sm:$0xff]
    %v3589 = vld [vmem:[#allocation6 + $0x7a8] sm:$0xff]
    %v3590 = vld [vmem:[#allocation6 + $0x7b0] sm:$0xff]
    %v3591 = vld [vmem:[#allocation6 + $0x7b8] sm:$0xff]
    %v3592 = vld [vmem:[#allocation6 + $0x7c0] sm:$0x1]
    %v3593 = vperm.slane %v3592, 0
    %v3595 = vsel %vm107, %v3586, 0
    %v3598 = vsel %vm107, %v3587, 0
    %3600 = vmatpush.msra.mxu0 0.0
    %3601 = vmatpush.msra.mxu0 0.0
    %3602 = vmatpush.msra.mxu0 0.0
    %3603 = vmatpush.msra.mxu0 0.0
    %3604 = vmatpush.msra.mxu0 0.0
    %3605 = vmatpush.msra.mxu0 0.0
    %3606 = vmatpush.msra.mxu0 0.0
    %3607 = vmatpush.msra.mxu0 0.0
    %3608 = vmatpush.msra.mxu0 0.0
    %3609 = vmatpush.msra.mxu0 0.0
    %3610 = vmatpush.msra.mxu0 0.0
    %3611 = vmatpush.msra.mxu0 0.0
    %3612 = vmatpush.msra.mxu0 %v3591
    %3613 = vmatpush.msra.mxu0 %v3590
    %3614 = vmatpush.msra.mxu0 %v3589
    %3615 = vmatpush.msra.mxu0 %v3588
    %3616 = vmatmul.f32.gmra.mxu0 %v3595
    %v3617 = vpop.f32.mrf.mxu0
    %v3618 = vadd.f32 %v3593, %v3617
    %3619 = vmatmul.f32.gmra.mxu0 %v3598
    %v3620 = vpop.f32.mrf.mxu0
    %v3621 = vadd.f32 %v3593, %v3620
    %3622 = vdwg.mxu0
    %v3623 = vmul.f32 %v3618, 0.5
    %v3624 = vmul.f32 %v3621, 0.5
    %v3625 = vmul.f32 %v3618, 0.044715
    %v3626 = vmul.f32 %v3621, 0.044715
    %v3627 = vmul.f32 %v3625, %v3618
    %v3628 = vmul.f32 %v3626, %v3621
    %v3629 = vmul.f32 %v3627, %v3618
    %v3630 = vmul.f32 %v3628, %v3621
    %v3631 = vadd.f32 %v3618, %v3629
    %v3632 = vadd.f32 %v3621, %v3630
    %v3633 = vmul.f32 %v3631, 0.7978846
    %v3634 = vmul.f32 %v3632, 0.7978846
    %v3635 = vtanh.pop %v3633
    %v3636 = vtanh.pop %v3634
    %v3637 = vadd.f32 %v3635, 1.0
    %v3638 = vadd.f32 %v3636, 1.0
    %v3639 = vmul.f32 %v3623, %v3637
    %v3640 = vmul.f32 %v3624, %v3638
    %v3641 = vld [vmem:[#allocation6 + $0x7c8] sm:$0xff]
    %v3642 = vld [vmem:[#allocation6 + $0x7d0] sm:$0xff]
    %v3643 = vld [vmem:[#allocation6 + $0x7d8] sm:$0xff]
    %v3644 = vld [vmem:[#allocation6 + $0x7e0] sm:$0xff]
    %v3645 = vld [vmem:[#allocation6 + $0x7e8] sm:$0xff]
    %v3646 = vld [vmem:[#allocation6 + $0x7f0] sm:$0xff]
    %v3647 = vld [vmem:[#allocation6 + $0x7f8] sm:$0xff]
    %v3648 = vld [vmem:[#allocation6 + $0x800] sm:$0xff]
    %v3649 = vld [vmem:[#allocation6 + $0x808] sm:$0x1]
    %v3650 = vperm.slane %v3649, 0
    %v3652 = vsel %vm389, %v3639, 0
    %v3655 = vsel %vm389, %v3640, 0
    %3657 = vmatpush.msra.mxu0 0.0
    %3658 = vmatpush.msra.mxu0 0.0
    %3659 = vmatpush.msra.mxu0 0.0
    %3660 = vmatpush.msra.mxu0 0.0
    %3661 = vmatpush.msra.mxu0 0.0
    %3662 = vmatpush.msra.mxu0 0.0
    %3663 = vmatpush.msra.mxu0 0.0
    %3664 = vmatpush.msra.mxu0 0.0
    %3665 = vmatpush.msra.mxu0 %v3648
    %3666 = vmatpush.msra.mxu0 %v3647
    %3667 = vmatpush.msra.mxu0 %v3646
    %3668 = vmatpush.msra.mxu0 %v3645
    %3669 = vmatpush.msra.mxu0 %v3644
    %3670 = vmatpush.msra.mxu0 %v3643
    %3671 = vmatpush.msra.mxu0 %v3642
    %3672 = vmatpush.msra.mxu0 %v3641
    %3673 = vmatmul.f32.gmra.mxu0 %v3652
    %v3674 = vpop.f32.mrf.mxu0
    %v3675 = vadd.f32 %v3650, %v3674
    %3676 = vmatmul.f32.gmra.mxu0 %v3655
    %v3677 = vpop.f32.mrf.mxu0
    %v3678 = vadd.f32 %v3650, %v3677
    %3679 = vdwg.mxu0
    %v3680 = vadd.f32 %v3586, %v3675
    %v3681 = vadd.f32 %v3587, %v3678
    %v3682 = vld [vmem:[#allocation6 + $0x810] sm:$0x1]
    %v3683 = vld [vmem:[#allocation6 + $0x818] sm:$0x1]
    %v3684 = vsel %vm107, %v3680, 0.0
    %3685 = vadd.xlane.f32.xlu0 %v3684
    %v3686 = vpop.xlane.xlu0 %3685
    %v3687 = vsel %vm107, %v3681, 0.0
    %3688 = vadd.xlane.f32.xlu0 %v3687
    %v3689 = vpop.xlane.xlu0 %3688
    %v3690 = vmul.f32 %v3686, %v509
    %v3691 = vmul.f32 %v3689, %v509
    %v3692 = vmul.f32 %v3680, %v3680
    %v3693 = vmul.f32 %v3681, %v3681
    %v3694 = vsel %vm107, %v3692, 0.0
    %3695 = vadd.xlane.f32.xlu0 %v3694
    %v3696 = vpop.xlane.xlu0 %3695
    %v3697 = vsel %vm107, %v3693, 0.0
    %3698 = vadd.xlane.f32.xlu0 %v3697
    %v3699 = vpop.xlane.xlu0 %3698
    %v3700 = vmul.f32 %v3696, %v509
    %v3701 = vmul.f32 %v3699, %v509
    %v3702 = vmul.f32 %v3690, %v3690
    %v3703 = vmul.f32 %v3691, %v3691
    %v3704 = vsub.f32 %v3700, %v3702
    %v3705 = vsub.f32 %v3701, %v3703
    %v3706 = vsub.f32 %v3680, %v3690
    %v3707 = vsub.f32 %v3681, %v3691
    %v3708 = vadd.f32 %v3704, 1e-05
    %v3709 = vadd.f32 %v3705, 1e-05
    %v3710 = vrsqrt.pop %v3708
    %v3711 = vmul.f32 %v3710, %v3708
    %v3712 = vmul.f32 %v3711, %v3710
    %v3713 = vmul.f32 0.5, %v3712
    %v3714 = vsub.f32 1.5, %v3713
    %v3715 = vmul.f32 %v3710, %v3714
    %vm3716 = vweird.f32 %v3708
    %vm3717 = vweird.f32 %v3710
    %vm3718 = vmor %vm3716, %vm3717
    %v3719 = vsel %vm3718, %v3710, %v3715
    %v3720 = vrsqrt.pop %v3709
    %v3721 = vmul.f32 %v3720, %v3709
    %v3722 = vmul.f32 %v3721, %v3720
    %v3723 = vmul.f32 0.5, %v3722
    %v3724 = vsub.f32 1.5, %v3723
    %v3725 = vmul.f32 %v3720, %v3724
    %vm3726 = vweird.f32 %v3709
    %vm3727 = vweird.f32 %v3720
    %vm3728 = vmor %vm3726, %vm3727
    %v3729 = vsel %vm3728, %v3720, %v3725
    %v3730 = vmul.f32 %v3706, %v3719
    %v3731 = vmul.f32 %v3707, %v3729
    %v3732 = vperm.slane %v3682, 0
    %v3733 = vmul.f32 %v3730, %v3732
    %v3734 = vmul.f32 %v3731, %v3732
    %v3735 = vperm.slane %v3683, 0
    %v3736 = vadd.f32 %v3733, %v3735
    %v3737 = vadd.f32 %v3734, %v3735
    %v3738 = vld [vmem:[#allocation6 + $0x820] sm:$0xff]
    %v3739 = vld [vmem:[#allocation6 + $0x828] sm:$0xff]
    %v3740 = vld [vmem:[#allocation6 + $0x830] sm:$0xff]
    %v3741 = vld [vmem:[#allocation6 + $0x838] sm:$0xff]
    %v3742 = vld [vmem:[#allocation6 + $0x840] sm:$0x1]
    %v3743 = vperm.slane %v3742, 0
    %v3745 = vsel %vm107, %v3736, 0
    %v3748 = vsel %vm107, %v3737, 0
    %3750 = vmatpush.msra.mxu0 0.0
    %3751 = vmatpush.msra.mxu0 0.0
    %3752 = vmatpush.msra.mxu0 0.0
    %3753 = vmatpush.msra.mxu0 0.0
    %3754 = vmatpush.msra.mxu0 0.0
    %3755 = vmatpush.msra.mxu0 0.0
    %3756 = vmatpush.msra.mxu0 0.0
    %3757 = vmatpush.msra.mxu0 0.0
    %3758 = vmatpush.msra.mxu0 0.0
    %3759 = vmatpush.msra.mxu0 0.0
    %3760 = vmatpush.msra.mxu0 0.0
    %3761 = vmatpush.msra.mxu0 0.0
    %3762 = vmatpush.msra.mxu0 %v3741
    %3763 = vmatpush.msra.mxu0 %v3740
    %3764 = vmatpush.msra.mxu0 %v3739
    %3765 = vmatpush.msra.mxu0 %v3738
    %3766 = vmatmul.f32.gmra.mxu0 %v3745
    %v3767 = vpop.f32.mrf.mxu0
    %v3768 = vadd.f32 %v3743, %v3767
    %3769 = vmatmul.f32.gmra.mxu0 %v3748
    %v3770 = vpop.f32.mrf.mxu0
    %v3771 = vadd.f32 %v3743, %v3770
    %3772 = vdwg.mxu0
    %v3773 = vld [vmem:[#allocation6 + $0x848] sm:$0xff]
    %v3774 = vld [vmem:[#allocation6 + $0x850] sm:$0xff]
    %v3775 = vld [vmem:[#allocation6 + $0x858] sm:$0xff]
    %v3776 = vld [vmem:[#allocation6 + $0x860] sm:$0xff]
    %v3777 = vld [vmem:[#allocation6 + $0x868] sm:$0x1]
    %v3778 = vperm.slane %v3777, 0
    %3779 = vmatpush.msra.mxu0 0.0
    %3780 = vmatpush.msra.mxu0 0.0
    %3781 = vmatpush.msra.mxu0 0.0
    %3782 = vmatpush.msra.mxu0 0.0
    %3783 = vmatpush.msra.mxu0 0.0
    %3784 = vmatpush.msra.mxu0 0.0
    %3785 = vmatpush.msra.mxu0 0.0
    %3786 = vmatpush.msra.mxu0 0.0
    %3787 = vmatpush.msra.mxu0 0.0
    %3788 = vmatpush.msra.mxu0 0.0
    %3789 = vmatpush.msra.mxu0 0.0
    %3790 = vmatpush.msra.mxu0 0.0
    %3791 = vmatpush.msra.mxu0 %v3776
    %3792 = vmatpush.msra.mxu0 %v3775
    %3793 = vmatpush.msra.mxu0 %v3774
    %3794 = vmatpush.msra.mxu0 %v3773
    %3795 = vmatmul.f32.gmra.mxu0 %v3745
    %v3796 = vpop.f32.mrf.mxu0
    %v3797 = vadd.f32 %v3778, %v3796
    %3798 = vmatmul.f32.gmra.mxu0 %v3748
    %v3799 = vpop.f32.mrf.mxu0
    %v3800 = vadd.f32 %v3778, %v3799
    %3801 = vdwg.mxu0
    %v3802 = vld [vmem:[#allocation6 + $0x870] sm:$0xff]
    %v3803 = vld [vmem:[#allocation6 + $0x878] sm:$0xff]
    %v3804 = vld [vmem:[#allocation6 + $0x880] sm:$0xff]
    %v3805 = vld [vmem:[#allocation6 + $0x888] sm:$0xff]
    %v3806 = vld [vmem:[#allocation6 + $0x890] sm:$0x1]
    %v3807 = vperm.slane %v3806, 0
    %3808 = vmatpush.msra.mxu0 0.0
    %3809 = vmatpush.msra.mxu0 0.0
    %3810 = vmatpush.msra.mxu0 0.0
    %3811 = vmatpush.msra.mxu0 0.0
    %3812 = vmatpush.msra.mxu0 0.0
    %3813 = vmatpush.msra.mxu0 0.0
    %3814 = vmatpush.msra.mxu0 0.0
    %3815 = vmatpush.msra.mxu0 0.0
    %3816 = vmatpush.msra.mxu0 0.0
    %3817 = vmatpush.msra.mxu0 0.0
    %3818 = vmatpush.msra.mxu0 0.0
    %3819 = vmatpush.msra.mxu0 0.0
    %3820 = vmatpush.msra.mxu0 %v3805
    %3821 = vmatpush.msra.mxu0 %v3804
    %3822 = vmatpush.msra.mxu0 %v3803
    %3823 = vmatpush.msra.mxu0 %v3802
    %3824 = vmatmul.f32.gmra.mxu0 %v3745
    %v3825 = vpop.f32.mrf.mxu0
    %v3826 = vadd.f32 %v3807, %v3825
    %3827 = vmatmul.f32.gmra.mxu0 %v3748
    %v3828 = vpop.f32.mrf.mxu0
    %v3829 = vadd.f32 %v3807, %v3828
    %3830 = vdwg.mxu0
    %3831 = vmatpush.msra.mxu0 0.0
    %3832 = vmatpush.msra.mxu0 0.0
    %3833 = vmatpush.msra.mxu0 0.0
    %3834 = vmatpush.msra.mxu0 0.0
    %3835 = vmatpush.msra.mxu0 0.0
    %3836 = vmatpush.msra.mxu0 0.0
    %3837 = vmatpush.msra.mxu0 0.0
    %3838 = vmatpush.msra.mxu0 0.0
    %3839 = vmatpush.msra.mxu0 0.0
    %3840 = vmatpush.msra.mxu0 0.0
    %3841 = vmatpush.msra.mxu0 0.0
    %3842 = vmatpush.msra.mxu0 0.0
    %3843 = vmatpush.msra.mxu0 0.0
    %3844 = vmatpush.msra.mxu0 0.0
    %3845 = vmatpush.msra.mxu0 %v3800
    %3846 = vmatpush.msra.mxu0 %v3797
    %3847 = vmatmul.f32.gmra.mxu0 %v215
    %v3848 = vpop.f32.mrf.mxu0
    %v3849 = vadd.f32 0.0, %v3848
    %3850 = vmatmul.f32.gmra.mxu0 %v218
    %v3851 = vpop.f32.mrf.mxu0
    %v3852 = vadd.f32 0.0, %v3851
    %3853 = vmatmul.f32.gmra.mxu0 %v221
    %v3854 = vpop.f32.mrf.mxu0
    %v3855 = vadd.f32 0.0, %v3854
    %3856 = vmatmul.f32.gmra.mxu0 %v224
    %v3857 = vpop.f32.mrf.mxu0
    %v3858 = vadd.f32 0.0, %v3857
    %3859 = vmatmul.f32.gmra.mxu0 %v227
    %v3860 = vpop.f32.mrf.mxu0
    %v3861 = vadd.f32 0.0, %v3860
    %3862 = vmatmul.f32.gmra.mxu0 %v230
    %v3863 = vpop.f32.mrf.mxu0
    %v3864 = vadd.f32 0.0, %v3863
    %3865 = vmatmul.f32.gmra.mxu0 %v233
    %v3866 = vpop.f32.mrf.mxu0
    %v3867 = vadd.f32 0.0, %v3866
    %3868 = vmatmul.f32.gmra.mxu0 %v236
    %v3869 = vpop.f32.mrf.mxu0
    %v3870 = vadd.f32 0.0, %v3869
    %3871 = vdwg.mxu0
    %v3872 = vmul.f32 %v3849, %v203
    %v3873 = vmul.f32 %v3852, %v204
    %v3874 = vmul.f32 %v3855, %v205
    %v3875 = vmul.f32 %v3858, %v206
    %v3876 = vmul.f32 %v3861, %v207
    %v3877 = vmul.f32 %v3864, %v208
    %v3878 = vmul.f32 %v3867, %v209
    %v3879 = vmul.f32 %v3870, %v210
    %3880 = vmatpush.msra.mxu0 0.0
    %3881 = vmatpush.msra.mxu0 0.0
    %3882 = vmatpush.msra.mxu0 0.0
    %3883 = vmatpush.msra.mxu0 0.0
    %3884 = vmatpush.msra.mxu0 0.0
    %3885 = vmatpush.msra.mxu0 0.0
    %3886 = vmatpush.msra.mxu0 0.0
    %3887 = vmatpush.msra.mxu0 0.0
    %3888 = vmatpush.msra.mxu0 0.0
    %3889 = vmatpush.msra.mxu0 0.0
    %3890 = vmatpush.msra.mxu0 0.0
    %3891 = vmatpush.msra.mxu0 0.0
    %3892 = vmatpush.msra.mxu0 0.0
    %3893 = vmatpush.msra.mxu0 0.0
    %3894 = vmatpush.msra.mxu0 %v3829
    %3895 = vmatpush.msra.mxu0 %v3826
    %3896 = vmatmul.f32.gmra.mxu0 %v215
    %v3897 = vpop.f32.mrf.mxu0
    %v3898 = vadd.f32 0.0, %v3897
    %3899 = vmatmul.f32.gmra.mxu0 %v218
    %v3900 = vpop.f32.mrf.mxu0
    %v3901 = vadd.f32 0.0, %v3900
    %3902 = vmatmul.f32.gmra.mxu0 %v221
    %v3903 = vpop.f32.mrf.mxu0
    %v3904 = vadd.f32 0.0, %v3903
    %3905 = vmatmul.f32.gmra.mxu0 %v224
    %v3906 = vpop.f32.mrf.mxu0
    %v3907 = vadd.f32 0.0, %v3906
    %3908 = vmatmul.f32.gmra.mxu0 %v227
    %v3909 = vpop.f32.mrf.mxu0
    %v3910 = vadd.f32 0.0, %v3909
    %3911 = vmatmul.f32.gmra.mxu0 %v230
    %v3912 = vpop.f32.mrf.mxu0
    %v3913 = vadd.f32 0.0, %v3912
    %3914 = vmatmul.f32.gmra.mxu0 %v233
    %v3915 = vpop.f32.mrf.mxu0
    %v3916 = vadd.f32 0.0, %v3915
    %3917 = vmatmul.f32.gmra.mxu0 %v236
    %v3918 = vpop.f32.mrf.mxu0
    %v3919 = vadd.f32 0.0, %v3918
    %3920 = vdwg.mxu0
    %v3921 = vmul.f32 %v3898, %v203
    %v3922 = vmul.f32 %v3901, %v204
    %v3923 = vmul.f32 %v3904, %v205
    %v3924 = vmul.f32 %v3907, %v206
    %v3925 = vmul.f32 %v3910, %v207
    %v3926 = vmul.f32 %v3913, %v208
    %v3927 = vmul.f32 %v3916, %v209
    %v3928 = vmul.f32 %v3919, %v210
    %v3930 = vsel %vm107, %v3768, 0
    %v3933 = vsel %vm107, %v3771, 0
    %v3936 = vsel %vm107, %v3872, 0
    %v3939 = vsel %vm107, %v3873, 0
    %v3942 = vsel %vm107, %v3874, 0
    %v3945 = vsel %vm107, %v3875, 0
    %v3948 = vsel %vm107, %v3876, 0
    %v3951 = vsel %vm107, %v3877, 0
    %v3954 = vsel %vm107, %v3878, 0
    %v3957 = vsel %vm107, %v3879, 0
    %3959 = vmatpush.xpose.msra.mxu0 0.0
    %3960 = vmatpush.xpose.msra.mxu0 0.0
    %3961 = vmatpush.xpose.msra.mxu0 0.0
    %3962 = vmatpush.xpose.msra.mxu0 0.0
    %3963 = vmatpush.xpose.msra.mxu0 0.0
    %3964 = vmatpush.xpose.msra.mxu0 0.0
    %3965 = vmatpush.xpose.msra.mxu0 0.0
    %3966 = vmatpush.xpose.msra.mxu0 0.0
    %3967 = vmatpush.xpose.msra.mxu0 %v3957
    %3968 = vmatpush.xpose.msra.mxu0 %v3954
    %3969 = vmatpush.xpose.msra.mxu0 %v3951
    %3970 = vmatpush.xpose.msra.mxu0 %v3948
    %3971 = vmatpush.xpose.msra.mxu0 %v3945
    %3972 = vmatpush.xpose.msra.mxu0 %v3942
    %3973 = vmatpush.xpose.msra.mxu0 %v3939
    %3974 = vmatpush.xpose.msra.mxu0 %v3936
    %3975 = vmatmul.f32.gmra.mxu0 %v3930
    %v3976 = vpop.f32.mrf.mxu0
    %v3977 = vadd.f32 %v211, %v3976
    %3978 = vmatmul.f32.gmra.mxu0 %v3933
    %v3979 = vpop.f32.mrf.mxu0
    %v3980 = vadd.f32 %v212, %v3979
    %3981 = vdwg.mxu0
    %v3982 = vsel %vm389, %v3977, -inf
    %3983 = vmax.xlane.f32.xlu0 %v3982
    %v3984 = vpop.xlane.xlu0 %3983
    %v3985 = vsel %vm389, %v3980, -inf
    %3986 = vmax.xlane.f32.xlu0 %v3985
    %v3987 = vpop.xlane.xlu0 %3986
    %v3988 = vsub.f32 %v3977, %v3984
    %v3989 = vsub.f32 %v3980, %v3987
    %v3990 = vmul.f32 %v3988, 1.442695
    %v3991 = vpow.pop %v3990
    %v3992 = vmul.f32 %v3989, 1.442695
    %v3993 = vpow.pop %v3992
    %v3995 = vsel %vm389, %v3991, 0
    %v3998 = vsel %vm389, %v3993, 0
    %4000 = vmatpush.msra.mxu0 0.0
    %4001 = vmatpush.msra.mxu0 0.0
    %4002 = vmatpush.msra.mxu0 0.0
    %4003 = vmatpush.msra.mxu0 0.0
    %4004 = vmatpush.msra.mxu0 0.0
    %4005 = vmatpush.msra.mxu0 0.0
    %4006 = vmatpush.msra.mxu0 0.0
    %4007 = vmatpush.msra.mxu0 0.0
    %4008 = vmatpush.msra.mxu0 %v3928
    %4009 = vmatpush.msra.mxu0 %v3927
    %4010 = vmatpush.msra.mxu0 %v3926
    %4011 = vmatpush.msra.mxu0 %v3925
    %4012 = vmatpush.msra.mxu0 %v3924
    %4013 = vmatpush.msra.mxu0 %v3923
    %4014 = vmatpush.msra.mxu0 %v3922
    %4015 = vmatpush.msra.mxu0 %v3921
    %4016 = vmatmul.f32.gmra.mxu0 %v3995
    %v4017 = vpop.f32.mrf.mxu0
    %v4018 = vadd.f32 0.0, %v4017
    %4019 = vmatmul.f32.gmra.mxu0 %v3998
    %v4020 = vpop.f32.mrf.mxu0
    %v4021 = vadd.f32 0.0, %v4020
    %4022 = vdwg.mxu0
    %4023 = vmatpush.msra.mxu0 0.0
    %4024 = vmatpush.msra.mxu0 0.0
    %4025 = vmatpush.msra.mxu0 0.0
    %4026 = vmatpush.msra.mxu0 0.0
    %4027 = vmatpush.msra.mxu0 0.0
    %4028 = vmatpush.msra.mxu0 0.0
    %4029 = vmatpush.msra.mxu0 0.0
    %4030 = vmatpush.msra.mxu0 0.0
    %4031 = vmatpush.msra.mxu0 %v210
    %4032 = vmatpush.msra.mxu0 %v209
    %4033 = vmatpush.msra.mxu0 %v208
    %4034 = vmatpush.msra.mxu0 %v207
    %4035 = vmatpush.msra.mxu0 %v206
    %4036 = vmatpush.msra.mxu0 %v205
    %4037 = vmatpush.msra.mxu0 %v204
    %4038 = vmatpush.msra.mxu0 %v203
    %4039 = vmatmul.f32.gmra.mxu0 %v3995
    %v4040 = vpop.f32.mrf.mxu0
    %v4041 = vadd.f32 0.0, %v4040
    %4042 = vmatmul.f32.gmra.mxu0 %v3998
    %v4043 = vpop.f32.mrf.mxu0
    %v4044 = vadd.f32 0.0, %v4043
    %4045 = vdwg.mxu0
    %v4046 = vrcp.pop %v4041
    %v4047 = vrcp.pop %v4044
    %v4048 = vmul.f32 %v4018, %v4046
    %v4049 = vmul.f32 %v4021, %v4047
    %v4050 = vld [vmem:[#allocation6 + $0x898] sm:$0xff]
    %v4051 = vld [vmem:[#allocation6 + $0x8a0] sm:$0xff]
    %v4052 = vld [vmem:[#allocation6 + $0x8a8] sm:$0xff]
    %v4053 = vld [vmem:[#allocation6 + $0x8b0] sm:$0xff]
    %v4054 = vld [vmem:[#allocation6 + $0x8b8] sm:$0x1]
    %v4055 = vperm.slane %v4054, 0
    %v4057 = vsel %vm107, %v4048, 0
    %v4060 = vsel %vm107, %v4049, 0
    %4062 = vmatpush.msra.mxu0 0.0
    %4063 = vmatpush.msra.mxu0 0.0
    %4064 = vmatpush.msra.mxu0 0.0
    %4065 = vmatpush.msra.mxu0 0.0
    %4066 = vmatpush.msra.mxu0 0.0
    %4067 = vmatpush.msra.mxu0 0.0
    %4068 = vmatpush.msra.mxu0 0.0
    %4069 = vmatpush.msra.mxu0 0.0
    %4070 = vmatpush.msra.mxu0 0.0
    %4071 = vmatpush.msra.mxu0 0.0
    %4072 = vmatpush.msra.mxu0 0.0
    %4073 = vmatpush.msra.mxu0 0.0
    %4074 = vmatpush.msra.mxu0 %v4053
    %4075 = vmatpush.msra.mxu0 %v4052
    %4076 = vmatpush.msra.mxu0 %v4051
    %4077 = vmatpush.msra.mxu0 %v4050
    %4078 = vmatmul.f32.gmra.mxu0 %v4057
    %v4079 = vpop.f32.mrf.mxu0
    %v4080 = vadd.f32 %v4055, %v4079
    %4081 = vmatmul.f32.gmra.mxu0 %v4060
    %v4082 = vpop.f32.mrf.mxu0
    %v4083 = vadd.f32 %v4055, %v4082
    %4084 = vdwg.mxu0
    %v4085 = vadd.f32 %v3736, %v4080
    %v4086 = vadd.f32 %v3737, %v4083
    %v4087 = vld [vmem:[#allocation6 + $0x8c0] sm:$0x1]
    %v4088 = vld [vmem:[#allocation6 + $0x8c8] sm:$0x1]
    %v4089 = vsel %vm107, %v4085, 0.0
    %4090 = vadd.xlane.f32.xlu0 %v4089
    %v4091 = vpop.xlane.xlu0 %4090
    %v4092 = vsel %vm107, %v4086, 0.0
    %4093 = vadd.xlane.f32.xlu0 %v4092
    %v4094 = vpop.xlane.xlu0 %4093
    %v4095 = vmul.f32 %v4091, %v509
    %v4096 = vmul.f32 %v4094, %v509
    %v4097 = vmul.f32 %v4085, %v4085
    %v4098 = vmul.f32 %v4086, %v4086
    %v4099 = vsel %vm107, %v4097, 0.0
    %4100 = vadd.xlane.f32.xlu0 %v4099
    %v4101 = vpop.xlane.xlu0 %4100
    %v4102 = vsel %vm107, %v4098, 0.0
    %4103 = vadd.xlane.f32.xlu0 %v4102
    %v4104 = vpop.xlane.xlu0 %4103
    %v4105 = vmul.f32 %v4101, %v509
    %v4106 = vmul.f32 %v4104, %v509
    %v4107 = vmul.f32 %v4095, %v4095
    %v4108 = vmul.f32 %v4096, %v4096
    %v4109 = vsub.f32 %v4105, %v4107
    %v4110 = vsub.f32 %v4106, %v4108
    %v4111 = vsub.f32 %v4085, %v4095
    %v4112 = vsub.f32 %v4086, %v4096
    %v4113 = vadd.f32 %v4109, 1e-05
    %v4114 = vadd.f32 %v4110, 1e-05
    %v4115 = vrsqrt.pop %v4113
    %v4116 = vmul.f32 %v4115, %v4113
    %v4117 = vmul.f32 %v4116, %v4115
    %v4118 = vmul.f32 0.5, %v4117
    %v4119 = vsub.f32 1.5, %v4118
    %v4120 = vmul.f32 %v4115, %v4119
    %vm4121 = vweird.f32 %v4113
    %vm4122 = vweird.f32 %v4115
    %vm4123 = vmor %vm4121, %vm4122
    %v4124 = vsel %vm4123, %v4115, %v4120
    %v4125 = vrsqrt.pop %v4114
    %v4126 = vmul.f32 %v4125, %v4114
    %v4127 = vmul.f32 %v4126, %v4125
    %v4128 = vmul.f32 0.5, %v4127
    %v4129 = vsub.f32 1.5, %v4128
    %v4130 = vmul.f32 %v4125, %v4129
    %vm4131 = vweird.f32 %v4114
    %vm4132 = vweird.f32 %v4125
    %vm4133 = vmor %vm4131, %vm4132
    %v4134 = vsel %vm4133, %v4125, %v4130
    %v4135 = vmul.f32 %v4111, %v4124
    %v4136 = vmul.f32 %v4112, %v4134
    %v4137 = vperm.slane %v4087, 0
    %v4138 = vmul.f32 %v4135, %v4137
    %v4139 = vmul.f32 %v4136, %v4137
    %v4140 = vperm.slane %v4088, 0
    %v4141 = vadd.f32 %v4138, %v4140
    %v4142 = vadd.f32 %v4139, %v4140
    %v4143 = vld [vmem:[#allocation6 + $0x8d0] sm:$0xff]
    %v4144 = vld [vmem:[#allocation6 + $0x8d8] sm:$0xff]
    %v4145 = vld [vmem:[#allocation6 + $0x8e0] sm:$0xff]
    %v4146 = vld [vmem:[#allocation6 + $0x8e8] sm:$0xff]
    %v4147 = vld [vmem:[#allocation6 + $0x8f0] sm:$0x1]
    %v4148 = vperm.slane %v4147, 0
    %v4150 = vsel %vm107, %v4141, 0
    %v4153 = vsel %vm107, %v4142, 0
    %4155 = vmatpush.msra.mxu0 0.0
    %4156 = vmatpush.msra.mxu0 0.0
    %4157 = vmatpush.msra.mxu0 0.0
    %4158 = vmatpush.msra.mxu0 0.0
    %4159 = vmatpush.msra.mxu0 0.0
    %4160 = vmatpush.msra.mxu0 0.0
    %4161 = vmatpush.msra.mxu0 0.0
    %4162 = vmatpush.msra.mxu0 0.0
    %4163 = vmatpush.msra.mxu0 0.0
    %4164 = vmatpush.msra.mxu0 0.0
    %4165 = vmatpush.msra.mxu0 0.0
    %4166 = vmatpush.msra.mxu0 0.0
    %4167 = vmatpush.msra.mxu0 %v4146
    %4168 = vmatpush.msra.mxu0 %v4145
    %4169 = vmatpush.msra.mxu0 %v4144
    %4170 = vmatpush.msra.mxu0 %v4143
    %4171 = vmatmul.f32.gmra.mxu0 %v4150
    %v4172 = vpop.f32.mrf.mxu0
    %v4173 = vadd.f32 %v4148, %v4172
    %4174 = vmatmul.f32.gmra.mxu0 %v4153
    %v4175 = vpop.f32.mrf.mxu0
    %v4176 = vadd.f32 %v4148, %v4175
    %4177 = vdwg.mxu0
    %v4178 = vld [vmem:[#allocation6 + $0x8f8] sm:$0xff]
    %v4179 = vld [vmem:[#allocation6 + $0x900] sm:$0xff]
    %v4180 = vld [vmem:[#allocation6 + $0x908] sm:$0xff]
    %v4181 = vld [vmem:[#allocation6 + $0x910] sm:$0xff]
    %v4182 = vld [vmem:[#allocation6 + $0x918] sm:$0x1]
    %v4183 = vperm.slane %v4182, 0
    %4184 = vmatpush.msra.mxu0 0.0
    %4185 = vmatpush.msra.mxu0 0.0
    %4186 = vmatpush.msra.mxu0 0.0
    %4187 = vmatpush.msra.mxu0 0.0
    %4188 = vmatpush.msra.mxu0 0.0
    %4189 = vmatpush.msra.mxu0 0.0
    %4190 = vmatpush.msra.mxu0 0.0
    %4191 = vmatpush.msra.mxu0 0.0
    %4192 = vmatpush.msra.mxu0 0.0
    %4193 = vmatpush.msra.mxu0 0.0
    %4194 = vmatpush.msra.mxu0 0.0
    %4195 = vmatpush.msra.mxu0 0.0
    %4196 = vmatpush.msra.mxu0 %v4181
    %4197 = vmatpush.msra.mxu0 %v4180
    %4198 = vmatpush.msra.mxu0 %v4179
    %4199 = vmatpush.msra.mxu0 %v4178
    %4200 = vmatmul.f32.gmra.mxu0 %v1825
    %v4201 = vpop.f32.mrf.mxu0
    %v4202 = vadd.f32 %v4183, %v4201
    %4203 = vmatmul.f32.gmra.mxu0 %v1828
    %v4204 = vpop.f32.mrf.mxu0
    %v4205 = vadd.f32 %v4183, %v4204
    %4206 = vdwg.mxu0
    %v4207 = vld [vmem:[#allocation6 + $0x920] sm:$0xff]
    %v4208 = vld [vmem:[#allocation6 + $0x928] sm:$0xff]
    %v4209 = vld [vmem:[#allocation6 + $0x930] sm:$0xff]
    %v4210 = vld [vmem:[#allocation6 + $0x938] sm:$0xff]
    %v4211 = vld [vmem:[#allocation6 + $0x940] sm:$0x1]
    %v4212 = vperm.slane %v4211, 0
    %4213 = vmatpush.msra.mxu0 0.0
    %4214 = vmatpush.msra.mxu0 0.0
    %4215 = vmatpush.msra.mxu0 0.0
    %4216 = vmatpush.msra.mxu0 0.0
    %4217 = vmatpush.msra.mxu0 0.0
    %4218 = vmatpush.msra.mxu0 0.0
    %4219 = vmatpush.msra.mxu0 0.0
    %4220 = vmatpush.msra.mxu0 0.0
    %4221 = vmatpush.msra.mxu0 0.0
    %4222 = vmatpush.msra.mxu0 0.0
    %4223 = vmatpush.msra.mxu0 0.0
    %4224 = vmatpush.msra.mxu0 0.0
    %4225 = vmatpush.msra.mxu0 %v4210
    %4226 = vmatpush.msra.mxu0 %v4209
    %4227 = vmatpush.msra.mxu0 %v4208
    %4228 = vmatpush.msra.mxu0 %v4207
    %4229 = vmatmul.f32.gmra.mxu0 %v1825
    %v4230 = vpop.f32.mrf.mxu0
    %v4231 = vadd.f32 %v4212, %v4230
    %4232 = vmatmul.f32.gmra.mxu0 %v1828
    %v4233 = vpop.f32.mrf.mxu0
    %v4234 = vadd.f32 %v4212, %v4233
    %4235 = vdwg.mxu0
    %4236 = vmatpush.msra.mxu0 0.0
    %4237 = vmatpush.msra.mxu0 0.0
    %4238 = vmatpush.msra.mxu0 0.0
    %4239 = vmatpush.msra.mxu0 0.0
    %4240 = vmatpush.msra.mxu0 0.0
    %4241 = vmatpush.msra.mxu0 0.0
    %4242 = vmatpush.msra.mxu0 0.0
    %4243 = vmatpush.msra.mxu0 0.0
    %4244 = vmatpush.msra.mxu0 0.0
    %4245 = vmatpush.msra.mxu0 0.0
    %4246 = vmatpush.msra.mxu0 0.0
    %4247 = vmatpush.msra.mxu0 0.0
    %4248 = vmatpush.msra.mxu0 0.0
    %4249 = vmatpush.msra.mxu0 0.0
    %4250 = vmatpush.msra.mxu0 %v4205
    %4251 = vmatpush.msra.mxu0 %v4202
    %4252 = vmatmul.f32.gmra.mxu0 %v215
    %v4253 = vpop.f32.mrf.mxu0
    %v4254 = vadd.f32 0.0, %v4253
    %4255 = vmatmul.f32.gmra.mxu0 %v218
    %v4256 = vpop.f32.mrf.mxu0
    %v4257 = vadd.f32 0.0, %v4256
    %4258 = vmatmul.f32.gmra.mxu0 %v221
    %v4259 = vpop.f32.mrf.mxu0
    %v4260 = vadd.f32 0.0, %v4259
    %4261 = vmatmul.f32.gmra.mxu0 %v224
    %v4262 = vpop.f32.mrf.mxu0
    %v4263 = vadd.f32 0.0, %v4262
    %4264 = vmatmul.f32.gmra.mxu0 %v227
    %v4265 = vpop.f32.mrf.mxu0
    %v4266 = vadd.f32 0.0, %v4265
    %4267 = vmatmul.f32.gmra.mxu0 %v230
    %v4268 = vpop.f32.mrf.mxu0
    %v4269 = vadd.f32 0.0, %v4268
    %4270 = vmatmul.f32.gmra.mxu0 %v233
    %v4271 = vpop.f32.mrf.mxu0
    %v4272 = vadd.f32 0.0, %v4271
    %4273 = vmatmul.f32.gmra.mxu0 %v236
    %v4274 = vpop.f32.mrf.mxu0
    %v4275 = vadd.f32 0.0, %v4274
    %4276 = vdwg.mxu0
    %v4277 = vmul.f32 %v4254, %v203
    %v4278 = vmul.f32 %v4257, %v204
    %v4279 = vmul.f32 %v4260, %v205
    %v4280 = vmul.f32 %v4263, %v206
    %v4281 = vmul.f32 %v4266, %v207
    %v4282 = vmul.f32 %v4269, %v208
    %v4283 = vmul.f32 %v4272, %v209
    %v4284 = vmul.f32 %v4275, %v210
    %4285 = vmatpush.msra.mxu0 0.0
    %4286 = vmatpush.msra.mxu0 0.0
    %4287 = vmatpush.msra.mxu0 0.0
    %4288 = vmatpush.msra.mxu0 0.0
    %4289 = vmatpush.msra.mxu0 0.0
    %4290 = vmatpush.msra.mxu0 0.0
    %4291 = vmatpush.msra.mxu0 0.0
    %4292 = vmatpush.msra.mxu0 0.0
    %4293 = vmatpush.msra.mxu0 0.0
    %4294 = vmatpush.msra.mxu0 0.0
    %4295 = vmatpush.msra.mxu0 0.0
    %4296 = vmatpush.msra.mxu0 0.0
    %4297 = vmatpush.msra.mxu0 0.0
    %4298 = vmatpush.msra.mxu0 0.0
    %4299 = vmatpush.msra.mxu0 %v4234
    %4300 = vmatpush.msra.mxu0 %v4231
    %4301 = vmatmul.f32.gmra.mxu0 %v215
    %v4302 = vpop.f32.mrf.mxu0
    %v4303 = vadd.f32 0.0, %v4302
    %4304 = vmatmul.f32.gmra.mxu0 %v218
    %v4305 = vpop.f32.mrf.mxu0
    %v4306 = vadd.f32 0.0, %v4305
    %4307 = vmatmul.f32.gmra.mxu0 %v221
    %v4308 = vpop.f32.mrf.mxu0
    %v4309 = vadd.f32 0.0, %v4308
    %4310 = vmatmul.f32.gmra.mxu0 %v224
    %v4311 = vpop.f32.mrf.mxu0
    %v4312 = vadd.f32 0.0, %v4311
    %4313 = vmatmul.f32.gmra.mxu0 %v227
    %v4314 = vpop.f32.mrf.mxu0
    %v4315 = vadd.f32 0.0, %v4314
    %4316 = vmatmul.f32.gmra.mxu0 %v230
    %v4317 = vpop.f32.mrf.mxu0
    %v4318 = vadd.f32 0.0, %v4317
    %4319 = vmatmul.f32.gmra.mxu0 %v233
    %v4320 = vpop.f32.mrf.mxu0
    %v4321 = vadd.f32 0.0, %v4320
    %4322 = vmatmul.f32.gmra.mxu0 %v236
    %v4323 = vpop.f32.mrf.mxu0
    %v4324 = vadd.f32 0.0, %v4323
    %4325 = vdwg.mxu0
    %v4326 = vmul.f32 %v4303, %v203
    %v4327 = vmul.f32 %v4306, %v204
    %v4328 = vmul.f32 %v4309, %v205
    %v4329 = vmul.f32 %v4312, %v206
    %v4330 = vmul.f32 %v4315, %v207
    %v4331 = vmul.f32 %v4318, %v208
    %v4332 = vmul.f32 %v4321, %v209
    %v4333 = vmul.f32 %v4324, %v210
    %v4335 = vsel %vm107, %v4173, 0
    %v4338 = vsel %vm107, %v4176, 0
    %v4341 = vsel %vm107, %v4277, 0
    %v4344 = vsel %vm107, %v4278, 0
    %v4347 = vsel %vm107, %v4279, 0
    %v4350 = vsel %vm107, %v4280, 0
    %v4353 = vsel %vm107, %v4281, 0
    %v4356 = vsel %vm107, %v4282, 0
    %v4359 = vsel %vm107, %v4283, 0
    %v4362 = vsel %vm107, %v4284, 0
    %4364 = vmatpush.xpose.msra.mxu0 0.0
    %4365 = vmatpush.xpose.msra.mxu0 0.0
    %4366 = vmatpush.xpose.msra.mxu0 0.0
    %4367 = vmatpush.xpose.msra.mxu0 0.0
    %4368 = vmatpush.xpose.msra.mxu0 0.0
    %4369 = vmatpush.xpose.msra.mxu0 0.0
    %4370 = vmatpush.xpose.msra.mxu0 0.0
    %4371 = vmatpush.xpose.msra.mxu0 0.0
    %4372 = vmatpush.xpose.msra.mxu0 %v4362
    %4373 = vmatpush.xpose.msra.mxu0 %v4359
    %4374 = vmatpush.xpose.msra.mxu0 %v4356
    %4375 = vmatpush.xpose.msra.mxu0 %v4353
    %4376 = vmatpush.xpose.msra.mxu0 %v4350
    %4377 = vmatpush.xpose.msra.mxu0 %v4347
    %4378 = vmatpush.xpose.msra.mxu0 %v4344
    %4379 = vmatpush.xpose.msra.mxu0 %v4341
    %4380 = vmatmul.f32.gmra.mxu0 %v4335
    %v4381 = vpop.f32.mrf.mxu0
    %v4382 = vadd.f32 %v211, %v4381
    %4383 = vmatmul.f32.gmra.mxu0 %v4338
    %v4384 = vpop.f32.mrf.mxu0
    %v4385 = vadd.f32 %v212, %v4384
    %4386 = vdwg.mxu0
    %v4387 = vsel %vm389, %v4382, -inf
    %4388 = vmax.xlane.f32.xlu0 %v4387
    %v4389 = vpop.xlane.xlu0 %4388
    %v4390 = vsel %vm389, %v4385, -inf
    %4391 = vmax.xlane.f32.xlu0 %v4390
    %v4392 = vpop.xlane.xlu0 %4391
    %v4393 = vsub.f32 %v4382, %v4389
    %v4394 = vsub.f32 %v4385, %v4392
    %v4395 = vmul.f32 %v4393, 1.442695
    %v4396 = vpow.pop %v4395
    %v4397 = vmul.f32 %v4394, 1.442695
    %v4398 = vpow.pop %v4397
    %v4400 = vsel %vm389, %v4396, 0
    %v4403 = vsel %vm389, %v4398, 0
    %4405 = vmatpush.msra.mxu0 0.0
    %4406 = vmatpush.msra.mxu0 0.0
    %4407 = vmatpush.msra.mxu0 0.0
    %4408 = vmatpush.msra.mxu0 0.0
    %4409 = vmatpush.msra.mxu0 0.0
    %4410 = vmatpush.msra.mxu0 0.0
    %4411 = vmatpush.msra.mxu0 0.0
    %4412 = vmatpush.msra.mxu0 0.0
    %4413 = vmatpush.msra.mxu0 %v4333
    %4414 = vmatpush.msra.mxu0 %v4332
    %4415 = vmatpush.msra.mxu0 %v4331
    %4416 = vmatpush.msra.mxu0 %v4330
    %4417 = vmatpush.msra.mxu0 %v4329
    %4418 = vmatpush.msra.mxu0 %v4328
    %4419 = vmatpush.msra.mxu0 %v4327
    %4420 = vmatpush.msra.mxu0 %v4326
    %4421 = vmatmul.f32.gmra.mxu0 %v4400
    %v4422 = vpop.f32.mrf.mxu0
    %v4423 = vadd.f32 0.0, %v4422
    %4424 = vmatmul.f32.gmra.mxu0 %v4403
    %v4425 = vpop.f32.mrf.mxu0
    %v4426 = vadd.f32 0.0, %v4425
    %4427 = vdwg.mxu0
    %4428 = vmatpush.msra.mxu0 0.0
    %4429 = vmatpush.msra.mxu0 0.0
    %4430 = vmatpush.msra.mxu0 0.0
    %4431 = vmatpush.msra.mxu0 0.0
    %4432 = vmatpush.msra.mxu0 0.0
    %4433 = vmatpush.msra.mxu0 0.0
    %4434 = vmatpush.msra.mxu0 0.0
    %4435 = vmatpush.msra.mxu0 0.0
    %4436 = vmatpush.msra.mxu0 %v210
    %4437 = vmatpush.msra.mxu0 %v209
    %4438 = vmatpush.msra.mxu0 %v208
    %4439 = vmatpush.msra.mxu0 %v207
    %4440 = vmatpush.msra.mxu0 %v206
    %4441 = vmatpush.msra.mxu0 %v205
    %4442 = vmatpush.msra.mxu0 %v204
    %4443 = vmatpush.msra.mxu0 %v203
    %4444 = vmatmul.f32.gmra.mxu0 %v4400
    %v4445 = vpop.f32.mrf.mxu0
    %v4446 = vadd.f32 0.0, %v4445
    %4447 = vmatmul.f32.gmra.mxu0 %v4403
    %v4448 = vpop.f32.mrf.mxu0
    %v4449 = vadd.f32 0.0, %v4448
    %4450 = vdwg.mxu0
    %v4451 = vrcp.pop %v4446
    %v4452 = vrcp.pop %v4449
    %v4453 = vmul.f32 %v4423, %v4451
    %v4454 = vmul.f32 %v4426, %v4452
    %v4455 = vld [vmem:[#allocation6 + $0x948] sm:$0xff]
    %v4456 = vld [vmem:[#allocation6 + $0x950] sm:$0xff]
    %v4457 = vld [vmem:[#allocation6 + $0x958] sm:$0xff]
    %v4458 = vld [vmem:[#allocation6 + $0x960] sm:$0xff]
    %v4459 = vld [vmem:[#allocation6 + $0x968] sm:$0x1]
    %v4460 = vperm.slane %v4459, 0
    %v4462 = vsel %vm107, %v4453, 0
    %v4465 = vsel %vm107, %v4454, 0
    %4467 = vmatpush.msra.mxu0 0.0
    %4468 = vmatpush.msra.mxu0 0.0
    %4469 = vmatpush.msra.mxu0 0.0
    %4470 = vmatpush.msra.mxu0 0.0
    %4471 = vmatpush.msra.mxu0 0.0
    %4472 = vmatpush.msra.mxu0 0.0
    %4473 = vmatpush.msra.mxu0 0.0
    %4474 = vmatpush.msra.mxu0 0.0
    %4475 = vmatpush.msra.mxu0 0.0
    %4476 = vmatpush.msra.mxu0 0.0
    %4477 = vmatpush.msra.mxu0 0.0
    %4478 = vmatpush.msra.mxu0 0.0
    %4479 = vmatpush.msra.mxu0 %v4458
    %4480 = vmatpush.msra.mxu0 %v4457
    %4481 = vmatpush.msra.mxu0 %v4456
    %4482 = vmatpush.msra.mxu0 %v4455
    %4483 = vmatmul.f32.gmra.mxu0 %v4462
    %v4484 = vpop.f32.mrf.mxu0
    %v4485 = vadd.f32 %v4460, %v4484
    %4486 = vmatmul.f32.gmra.mxu0 %v4465
    %v4487 = vpop.f32.mrf.mxu0
    %v4488 = vadd.f32 %v4460, %v4487
    %4489 = vdwg.mxu0
    %v4490 = vadd.f32 %v4141, %v4485
    %v4491 = vadd.f32 %v4142, %v4488
    %v4492 = vld [vmem:[#allocation6 + $0x970] sm:$0x1]
    %v4493 = vld [vmem:[#allocation6 + $0x978] sm:$0x1]
    %v4494 = vsel %vm107, %v4490, 0.0
    %4495 = vadd.xlane.f32.xlu0 %v4494
    %v4496 = vpop.xlane.xlu0 %4495
    %v4497 = vsel %vm107, %v4491, 0.0
    %4498 = vadd.xlane.f32.xlu0 %v4497
    %v4499 = vpop.xlane.xlu0 %4498
    %v4500 = vmul.f32 %v4496, %v509
    %v4501 = vmul.f32 %v4499, %v509
    %v4502 = vmul.f32 %v4490, %v4490
    %v4503 = vmul.f32 %v4491, %v4491
    %v4504 = vsel %vm107, %v4502, 0.0
    %4505 = vadd.xlane.f32.xlu0 %v4504
    %v4506 = vpop.xlane.xlu0 %4505
    %v4507 = vsel %vm107, %v4503, 0.0
    %4508 = vadd.xlane.f32.xlu0 %v4507
    %v4509 = vpop.xlane.xlu0 %4508
    %v4510 = vmul.f32 %v4506, %v509
    %v4511 = vmul.f32 %v4509, %v509
    %v4512 = vmul.f32 %v4500, %v4500
    %v4513 = vmul.f32 %v4501, %v4501
    %v4514 = vsub.f32 %v4510, %v4512
    %v4515 = vsub.f32 %v4511, %v4513
    %v4516 = vsub.f32 %v4490, %v4500
    %v4517 = vsub.f32 %v4491, %v4501
    %v4518 = vadd.f32 %v4514, 1e-05
    %v4519 = vadd.f32 %v4515, 1e-05
    %v4520 = vrsqrt.pop %v4518
    %v4521 = vmul.f32 %v4520, %v4518
    %v4522 = vmul.f32 %v4521, %v4520
    %v4523 = vmul.f32 0.5, %v4522
    %v4524 = vsub.f32 1.5, %v4523
    %v4525 = vmul.f32 %v4520, %v4524
    %vm4526 = vweird.f32 %v4518
    %vm4527 = vweird.f32 %v4520
    %vm4528 = vmor %vm4526, %vm4527
    %v4529 = vsel %vm4528, %v4520, %v4525
    %v4530 = vrsqrt.pop %v4519
    %v4531 = vmul.f32 %v4530, %v4519
    %v4532 = vmul.f32 %v4531, %v4530
    %v4533 = vmul.f32 0.5, %v4532
    %v4534 = vsub.f32 1.5, %v4533
    %v4535 = vmul.f32 %v4530, %v4534
    %vm4536 = vweird.f32 %v4519
    %vm4537 = vweird.f32 %v4530
    %vm4538 = vmor %vm4536, %vm4537
    %v4539 = vsel %vm4538, %v4530, %v4535
    %v4540 = vmul.f32 %v4516, %v4529
    %v4541 = vmul.f32 %v4517, %v4539
    %v4542 = vperm.slane %v4492, 0
    %v4543 = vmul.f32 %v4540, %v4542
    %v4544 = vmul.f32 %v4541, %v4542
    %v4545 = vperm.slane %v4493, 0
    %v4546 = vadd.f32 %v4543, %v4545
    %v4547 = vadd.f32 %v4544, %v4545
    %v4548 = vld [vmem:[#allocation6 + $0x980] sm:$0xff]
    %v4549 = vld [vmem:[#allocation6 + $0x988] sm:$0xff]
    %v4550 = vld [vmem:[#allocation6 + $0x990] sm:$0xff]
    %v4551 = vld [vmem:[#allocation6 + $0x998] sm:$0xff]
    %v4552 = vld [vmem:[#allocation6 + $0x9a0] sm:$0x1]
    %v4553 = vperm.slane %v4552, 0
    %v4555 = vsel %vm107, %v4546, 0
    %v4558 = vsel %vm107, %v4547, 0
    %4560 = vmatpush.msra.mxu0 0.0
    %4561 = vmatpush.msra.mxu0 0.0
    %4562 = vmatpush.msra.mxu0 0.0
    %4563 = vmatpush.msra.mxu0 0.0
    %4564 = vmatpush.msra.mxu0 0.0
    %4565 = vmatpush.msra.mxu0 0.0
    %4566 = vmatpush.msra.mxu0 0.0
    %4567 = vmatpush.msra.mxu0 0.0
    %4568 = vmatpush.msra.mxu0 0.0
    %4569 = vmatpush.msra.mxu0 0.0
    %4570 = vmatpush.msra.mxu0 0.0
    %4571 = vmatpush.msra.mxu0 0.0
    %4572 = vmatpush.msra.mxu0 %v4551
    %4573 = vmatpush.msra.mxu0 %v4550
    %4574 = vmatpush.msra.mxu0 %v4549
    %4575 = vmatpush.msra.mxu0 %v4548
    %4576 = vmatmul.f32.gmra.mxu0 %v4555
    %v4577 = vpop.f32.mrf.mxu0
    %v4578 = vadd.f32 %v4553, %v4577
    %4579 = vmatmul.f32.gmra.mxu0 %v4558
    %v4580 = vpop.f32.mrf.mxu0
    %v4581 = vadd.f32 %v4553, %v4580
    %4582 = vdwg.mxu0
    %v4583 = vmul.f32 %v4578, 0.5
    %v4584 = vmul.f32 %v4581, 0.5
    %v4585 = vmul.f32 %v4578, 0.044715
    %v4586 = vmul.f32 %v4581, 0.044715
    %v4587 = vmul.f32 %v4585, %v4578
    %v4588 = vmul.f32 %v4586, %v4581
    %v4589 = vmul.f32 %v4587, %v4578
    %v4590 = vmul.f32 %v4588, %v4581
    %v4591 = vadd.f32 %v4578, %v4589
    %v4592 = vadd.f32 %v4581, %v4590
    %v4593 = vmul.f32 %v4591, 0.7978846
    %v4594 = vmul.f32 %v4592, 0.7978846
    %v4595 = vtanh.pop %v4593
    %v4596 = vtanh.pop %v4594
    %v4597 = vadd.f32 %v4595, 1.0
    %v4598 = vadd.f32 %v4596, 1.0
    %v4599 = vmul.f32 %v4583, %v4597
    %v4600 = vmul.f32 %v4584, %v4598
    %v4601 = vld [vmem:[#allocation6 + $0x9a8] sm:$0xff]
    %v4602 = vld [vmem:[#allocation6 + $0x9b0] sm:$0xff]
    %v4603 = vld [vmem:[#allocation6 + $0x9b8] sm:$0xff]
    %v4604 = vld [vmem:[#allocation6 + $0x9c0] sm:$0xff]
    %v4605 = vld [vmem:[#allocation6 + $0x9c8] sm:$0xff]
    %v4606 = vld [vmem:[#allocation6 + $0x9d0] sm:$0xff]
    %v4607 = vld [vmem:[#allocation6 + $0x9d8] sm:$0xff]
    %v4608 = vld [vmem:[#allocation6 + $0x9e0] sm:$0xff]
    %v4609 = vld [vmem:[#allocation6 + $0x9e8] sm:$0x1]
    %v4610 = vperm.slane %v4609, 0
    %v4612 = vsel %vm389, %v4599, 0
    %v4615 = vsel %vm389, %v4600, 0
    %4617 = vmatpush.msra.mxu0 0.0
    %4618 = vmatpush.msra.mxu0 0.0
    %4619 = vmatpush.msra.mxu0 0.0
    %4620 = vmatpush.msra.mxu0 0.0
    %4621 = vmatpush.msra.mxu0 0.0
    %4622 = vmatpush.msra.mxu0 0.0
    %4623 = vmatpush.msra.mxu0 0.0
    %4624 = vmatpush.msra.mxu0 0.0
    %4625 = vmatpush.msra.mxu0 %v4608
    %4626 = vmatpush.msra.mxu0 %v4607
    %4627 = vmatpush.msra.mxu0 %v4606
    %4628 = vmatpush.msra.mxu0 %v4605
    %4629 = vmatpush.msra.mxu0 %v4604
    %4630 = vmatpush.msra.mxu0 %v4603
    %4631 = vmatpush.msra.mxu0 %v4602
    %4632 = vmatpush.msra.mxu0 %v4601
    %4633 = vmatmul.f32.gmra.mxu0 %v4612
    %v4634 = vpop.f32.mrf.mxu0
    %v4635 = vadd.f32 %v4610, %v4634
    %4636 = vmatmul.f32.gmra.mxu0 %v4615
    %v4637 = vpop.f32.mrf.mxu0
    %v4638 = vadd.f32 %v4610, %v4637
    %4639 = vdwg.mxu0
    %v4640 = vadd.f32 %v4546, %v4635
    %v4641 = vadd.f32 %v4547, %v4638
    %v4642 = vld [vmem:[#allocation6 + $0x9f0] sm:$0x1]
    %v4643 = vld [vmem:[#allocation6 + $0x9f8] sm:$0x1]
    %v4644 = vsel %vm107, %v4640, 0.0
    %4645 = vadd.xlane.f32.xlu0 %v4644
    %v4646 = vpop.xlane.xlu0 %4645
    %v4647 = vsel %vm107, %v4641, 0.0
    %4648 = vadd.xlane.f32.xlu0 %v4647
    %v4649 = vpop.xlane.xlu0 %4648
    %v4650 = vmul.f32 %v4646, %v509
    %v4651 = vmul.f32 %v4649, %v509
    %v4652 = vmul.f32 %v4640, %v4640
    %v4653 = vmul.f32 %v4641, %v4641
    %v4654 = vsel %vm107, %v4652, 0.0
    %4655 = vadd.xlane.f32.xlu0 %v4654
    %v4656 = vpop.xlane.xlu0 %4655
    %v4657 = vsel %vm107, %v4653, 0.0
    %4658 = vadd.xlane.f32.xlu0 %v4657
    %v4659 = vpop.xlane.xlu0 %4658
    %v4660 = vmul.f32 %v4656, %v509
    %v4661 = vmul.f32 %v4659, %v509
    %v4662 = vmul.f32 %v4650, %v4650
    %v4663 = vmul.f32 %v4651, %v4651
    %v4664 = vsub.f32 %v4660, %v4662
    %v4665 = vsub.f32 %v4661, %v4663
    %v4666 = vsub.f32 %v4640, %v4650
    %v4667 = vsub.f32 %v4641, %v4651
    %v4668 = vadd.f32 %v4664, 1e-05
    %v4669 = vadd.f32 %v4665, 1e-05
    %v4670 = vrsqrt.pop %v4668
    %v4671 = vmul.f32 %v4670, %v4668
    %v4672 = vmul.f32 %v4671, %v4670
    %v4673 = vmul.f32 0.5, %v4672
    %v4674 = vsub.f32 1.5, %v4673
    %v4675 = vmul.f32 %v4670, %v4674
    %vm4676 = vweird.f32 %v4668
    %vm4677 = vweird.f32 %v4670
    %vm4678 = vmor %vm4676, %vm4677
    %v4679 = vsel %vm4678, %v4670, %v4675
    %v4680 = vrsqrt.pop %v4669
    %v4681 = vmul.f32 %v4680, %v4669
    %v4682 = vmul.f32 %v4681, %v4680
    %v4683 = vmul.f32 0.5, %v4682
    %v4684 = vsub.f32 1.5, %v4683
    %v4685 = vmul.f32 %v4680, %v4684
    %vm4686 = vweird.f32 %v4669
    %vm4687 = vweird.f32 %v4680
    %vm4688 = vmor %vm4686, %vm4687
    %v4689 = vsel %vm4688, %v4680, %v4685
    %v4690 = vmul.f32 %v4666, %v4679
    %v4691 = vmul.f32 %v4667, %v4689
    %v4692 = vperm.slane %v4642, 0
    %v4693 = vmul.f32 %v4690, %v4692
    %v4694 = vmul.f32 %v4691, %v4692
    %v4695 = vperm.slane %v4643, 0
    %v4696 = vadd.f32 %v4693, %v4695
    %v4697 = vadd.f32 %v4694, %v4695
    %v4698 = vld [vmem:[#allocation6 + $0xa8] sm:$0xff]
    %v4699 = vld [vmem:[#allocation6 + $0xb0] sm:$0xff]
    %v4700 = vld [vmem:[#allocation6 + $0xb8] sm:$0xff]
    %v4701 = vld [vmem:[#allocation6 + $0xc0] sm:$0xff]
    %v4702 = vld [vmem:[#allocation6 + $0xc8] sm:$0x1]
    %v4703 = vperm.slane %v4702, 0
    %v4705 = vsel %vm107, %v4696, 0
    %v4708 = vsel %vm107, %v4697, 0
    %4710 = vmatpush.msra.mxu0 0.0
    %4711 = vmatpush.msra.mxu0 0.0
    %4712 = vmatpush.msra.mxu0 0.0
    %4713 = vmatpush.msra.mxu0 0.0
    %4714 = vmatpush.msra.mxu0 0.0
    %4715 = vmatpush.msra.mxu0 0.0
    %4716 = vmatpush.msra.mxu0 0.0
    %4717 = vmatpush.msra.mxu0 0.0
    %4718 = vmatpush.msra.mxu0 0.0
    %4719 = vmatpush.msra.mxu0 0.0
    %4720 = vmatpush.msra.mxu0 0.0
    %4721 = vmatpush.msra.mxu0 0.0
    %4722 = vmatpush.msra.mxu0 %v4701
    %4723 = vmatpush.msra.mxu0 %v4700
    %4724 = vmatpush.msra.mxu0 %v4699
    %4725 = vmatpush.msra.mxu0 %v4698
    %4726 = vmatmul.f32.gmra.mxu0 %v4705
    %v4727 = vpop.f32.mrf.mxu0
    %v4728 = vadd.f32 %v4703, %v4727
    %4729 = vmatmul.f32.gmra.mxu0 %v4708
    %v4730 = vpop.f32.mrf.mxu0
    %v4731 = vadd.f32 %v4703, %v4730
    %4732 = vdwg.mxu0
    %4733 = vst [vmem:[#allocation7] sm:$0xff] %v4728
    %4734 = vst [vmem:[#allocation7 + $0x8] sm:$0xff] %v4731
    // Predicated region
    $region22: #{tpu_custom_call.1} parent=1 // pred_check
      _
    $region23: #{tpu_custom_call.1} parent=1 // pred_check_branch
      %4736 = sbr.rel (0) target = $region25
    $region24: #{tpu_custom_call.1} parent=1 // pred_region
      %4738 = vsyncadd [#allocation4], 0
      %s4739 = sshll.u32 [#allocation7], 4
      %s4740 = int_to_ptr.vmem [resolvable:$true] %s4739
      %s4741 = sshll.u32 %s3, 4
      %s4742 = int_to_ptr.hbm [resolvable:$true] %s4741
      %4747 = dma.vmem_to_hbm [thread:$0]  %s4740, 256, %s4742, [#allocation4], 128, 128, 8
    $region25: #{tpu_custom_call.1} parent=1 // pred_fallthru
      _
    // Predicated region
    $region26: #{tpu_custom_call.1} parent=1 // pred_check
      _
    $region27: #{tpu_custom_call.1} parent=1 // pred_check_branch
      %4749 = sbr.rel (0) target = $region29
    $region28: #{tpu_custom_call.1} parent=1 // pred_region
      %4751 = dma.done [#allocation4], 256
    $region29: #{tpu_custom_call.1} parent=1 // pred_fallthru
      _
    %4752 = vsyncpa [#allocation3], 1
    %4753 = vsyncpa [#allocation4], 1
    %4754 = vsyncpa [#allocation5], 1

</llo_original>
